<compile_context>
chip_gen: v6e
topology: v6e:2x2x1
jax: 0.10.0
libtpu: 0.0.40
codegen_flags: <defaults>
</compile_context>

<pallas_src>
import jax
import jax.numpy as jnp
from jax.experimental import pallas as pl
from jax.experimental.pallas import tpu as pltpu

C_IN = 1632    # conv2d153 in_channels
C_MID = 448    # conv2d153 out_channels / batchnorm2d91 / conv2d159 in_channels
C_OUT = 1792   # conv2d159 out_channels
EPS = 1e-5
N_SLABS = 4                # C_OUT slabs (448 rows each) along the grid axis
C_BLK = C_OUT // N_SLABS


def _fused_kernel(x_ref, w1_ref, gb_ref, r_ref, w2_ref, o_ref, y3_ref):
    """Grid step j computes the (C_BLK, M) output slab j.

    x_ref : (C_IN,  M)      f32   input, channel-major            (shared)
    w1_ref: (C_MID, C_IN)   bf16  conv2d153 weight                (shared)
    gb_ref: (C_MID, 2)      f32   [:,0]=gamma, [:,1]=beta         (shared)
    r_ref : (C_MID, M)      f32   residual x494, channel-major    (shared)
    w2_ref: (C_BLK, C_MID)  bf16  conv2d159 weight slab j
    o_ref : (C_BLK, M)      f32   output slab j
    y3_ref: (C_MID, M)      bf16  VMEM scratch, persists across grid steps
    """
    j = pl.program_id(0)

    # conv1 + BatchNorm(train) + residual add: done once, cached in scratch.
    @pl.when(j == 0)
    def _():
        # conv2d153 (1x1, no bias): (C_MID, C_IN) @ (C_IN, M) on the MXU.
        x_bf = x_ref[...].astype(jnp.bfloat16)
        y1 = jnp.dot(w1_ref[...], x_bf, preferred_element_type=jnp.float32)

        # BatchNorm2d, training mode: biased batch stats per channel over M.
        # Two-pass variance; affine folded into one scale/bias.
        # TODO(synk): running_mean/running_var update (training-time side
        # effect) is not materialized; forward output is unaffected.
        mean = jnp.mean(y1, axis=1, keepdims=True)                    # (C_MID,1)
        var = jnp.mean(jnp.square(y1 - mean), axis=1, keepdims=True)  # (C_MID,1)
        gamma = gb_ref[:, 0:1]
        beta = gb_ref[:, 1:2]
        scale = gamma * jax.lax.rsqrt(var + EPS)
        bias = beta - mean * scale

        # BN + residual (x494 + bn_out); stored bf16 for the second matmul.
        y3_ref[...] = (y1 * scale + bias + r_ref[...]).astype(jnp.bfloat16)

    # conv2d159 (1x1, no bias) slab: (C_BLK, C_MID) @ (C_MID, M).
    o_ref[...] = jnp.dot(w2_ref[...], y3_ref[...],
                         preferred_element_type=jnp.float32)


@jax.jit
def fused_forward(x477, x494, w1, gamma, beta, w2):
    """x477: (N, C_IN, H, W) f32; x494: (N, C_MID, H, W) f32.

    w1: (C_MID, C_IN)  == conv2d153.weight[:, :, 0, 0]   (bf16 recommended)
    w2: (C_OUT, C_MID) == conv2d159.weight[:, :, 0, 0]   (bf16 recommended)
    Returns (N, C_OUT, H, W) f32.
    """
    n, c_in, h, w = x477.shape
    assert c_in == C_IN and x494.shape == (n, C_MID, h, w)
    m = n * h * w

    # NCHW -> channel-major (C, M).  For N == 1 these are free bitcasts.
    x_cm = jnp.moveaxis(x477, 1, 0).reshape(C_IN, m)
    r_cm = jnp.moveaxis(x494, 1, 0).reshape(C_MID, m)
    gb = jnp.stack([gamma, beta], axis=1)          # (C_MID, 2)

    out_cm = pl.pallas_call(
        _fused_kernel,
        out_shape=jax.ShapeDtypeStruct((C_OUT, m), jnp.float32),
        grid=(N_SLABS,),
        in_specs=[
            pl.BlockSpec((C_IN, m), lambda j: (0, 0)),       # x       (shared)
            pl.BlockSpec((C_MID, C_IN), lambda j: (0, 0)),   # w1      (shared)
            pl.BlockSpec((C_MID, 2), lambda j: (0, 0)),      # gamma/beta
            pl.BlockSpec((C_MID, m), lambda j: (0, 0)),      # residual(shared)
            pl.BlockSpec((C_BLK, C_MID), lambda j: (j, 0)),  # w2 slab j
        ],
        out_specs=pl.BlockSpec((C_BLK, m), lambda j: (j, 0)),
        scratch_shapes=[pltpu.VMEM((C_MID, m), jnp.bfloat16)],  # y3 cache
        compiler_params=pltpu.CompilerParams(
            # Must be sequential ("arbitrary"): y3 is computed once at j == 0
            # and reused by every later slab on the same core.
            dimension_semantics=("arbitrary",),
            vmem_limit_bytes=32 << 20,   # ~7 MiB used; <= v7x 64 MiB physical
        ),
    )(x_cm, w1, gb, r_cm, w2)

    # (C_OUT, M) -> NCHW.  For N == 1 this is a free bitcast.
    return jnp.moveaxis(out_cm.reshape(C_OUT, n, h, w), 0, 1)


def reference_forward(x477, x494, w1, gamma, beta, w2):
    """Pure-JAX reference of the PyTorch training-mode forward.

    Matmul inputs are cast to the weights' dtype, so bf16 weights reproduce the
    kernel's precision policy and f32 weights give exact PyTorch-f32 semantics.
    """
    n, _, h, w = x477.shape
    m = n * h * w
    x = jnp.moveaxis(x477, 1, 0).reshape(C_IN, m)
    r = jnp.moveaxis(x494, 1, 0).reshape(C_MID, m).astype(jnp.float32)
    y1 = jnp.dot(w1, x.astype(w1.dtype), preferred_element_type=jnp.float32)
    mean = jnp.mean(y1, axis=1, keepdims=True)
    var = jnp.mean(jnp.square(y1 - mean), axis=1, keepdims=True)
    y2 = (y1 - mean) * jax.lax.rsqrt(var + EPS) * gamma[:, None] + beta[:, None]
    y3 = y2 + r
    out = jnp.dot(w2, y3.astype(w2.dtype), preferred_element_type=jnp.float32)
    return jnp.moveaxis(out.reshape(C_OUT, n, h, w), 0, 1)


if __name__ == "__main__":
    key = jax.random.PRNGKey(0)
    k1, k2, k3, k4, k5, k6 = jax.random.split(key, 6)

    # Inputs consistent with the module: [1, 1632, 7, 7] and [1, 448, 7, 7].
    x477 = jax.random.normal(k1, (1, C_IN, 7, 7), dtype=jnp.float32)
    x494 = jax.random.normal(k2, (1, C_MID, 7, 7), dtype=jnp.float32)

    # Parameters (synthetic; shapes from __init__, PyTorch conv-weight layout).
    w1_f32 = jax.random.normal(k3, (C_MID, C_IN), dtype=jnp.float32) * 0.02
    w2_f32 = jax.random.normal(k4, (C_OUT, C_MID), dtype=jnp.float32) * 0.02
    gamma = jnp.ones((C_MID,), jnp.float32) + \
        0.1 * jax.random.normal(k5, (C_MID,), dtype=jnp.float32)
    beta = 0.1 * jax.random.normal(k6, (C_MID,), dtype=jnp.float32)

    # Store weights as bf16 once (halves the dominant HBM traffic in-kernel).
    w1 = w1_f32.astype(jnp.bfloat16)
    w2 = w2_f32.astype(jnp.bfloat16)

    out = jax.block_until_ready(fused_forward(x477, x494, w1, gamma, beta, w2))
    assert out.shape == (1, C_OUT, 7, 7), out.shape

    # Tight check against a pure-JAX reference using the same bf16 policy.
    ref_bf16 = jax.block_until_ready(
        reference_forward(x477, x494, w1, gamma, beta, w2))
    assert jnp.allclose(out, ref_bf16, atol=2e-3, rtol=2e-3), \
        float(jnp.max(jnp.abs(out - ref_bf16)))

    # Looser sanity check against the full-f32 (PyTorch-exact) reference —
    # bounds the bf16 weight-quantization error.
    ref_f32 = jax.block_until_ready(
        reference_forward(x477, x494, w1_f32, gamma, beta, w2_f32))
    assert jnp.allclose(out, ref_f32, atol=5e-2, rtol=5e-2), \
        float(jnp.max(jnp.abs(out - ref_f32)))

    print("KERNEL_OK")
</pallas_src>

<mosaic_0001>
module attributes {stable_mosaic.version = 11 : i64} {
  func.func @_fused_kernel(%arg0: i32, %arg1: memref<1632x49xf32, #tpu.memory_space<vmem>>, %arg2: memref<448x1632xbf16, #tpu.memory_space<vmem>>, %arg3: memref<448x2xf32, #tpu.memory_space<vmem>>, %arg4: memref<448x49xf32, #tpu.memory_space<vmem>>, %arg5: memref<448x448xbf16, #tpu.memory_space<vmem>>, %arg6: memref<448x49xf32, #tpu.memory_space<vmem>>, %arg7: memref<448x49xbf16, #tpu.memory_space<vmem>>) attributes {dimension_semantics = [#tpu.dimension_semantics<arbitrary>], iteration_bounds = array<i64: 4>, scalar_prefetch = 0 : i64, scratch_operands = 1 : i64, tpu.core_type = #tpu.core_type<tc>, window_params = [{pipeline_mode = #tpu.pipeline_mode<synchronous>, transform_indices = @transform_0, window_bounds = array<i64: 1632, 49>}, {pipeline_mode = #tpu.pipeline_mode<synchronous>, transform_indices = @transform_1, window_bounds = array<i64: 448, 1632>}, {pipeline_mode = #tpu.pipeline_mode<synchronous>, transform_indices = @transform_2, window_bounds = array<i64: 448, 2>}, {pipeline_mode = #tpu.pipeline_mode<synchronous>, transform_indices = @transform_3, window_bounds = array<i64: 448, 49>}, {transform_indices = @transform_4, window_bounds = array<i64: 448, 448>}, {transform_indices = @transform_5, window_bounds = array<i64: 448, 49>}]} {
    %c0_i32 = arith.constant 0 : i32
    %0 = arith.cmpi eq, %arg0, %c0_i32 : i32
    %1 = arith.extui %0 : i1 to i32
    %c0_i32_0 = arith.constant 0 : i32
    %2 = arith.cmpi ne, %1, %c0_i32_0 : i32
    scf.if %2 {
      %c0_6 = arith.constant 0 : index
      %c0_7 = arith.constant 0 : index
      %7 = vector.load %arg1[%c0_6, %c0_7] : memref<1632x49xf32, #tpu.memory_space<vmem>>, vector<1632x49xf32>
      %8 = arith.truncf %7 : vector<1632x49xf32> to vector<1632x49xbf16>
      %c0_8 = arith.constant 0 : index
      %c0_9 = arith.constant 0 : index
      %9 = vector.load %arg2[%c0_8, %c0_9] : memref<448x1632xbf16, #tpu.memory_space<vmem>>, vector<448x1632xbf16>
      %cst_10 = arith.constant dense<0.000000e+00> : vector<448x49xf32>
      %10 = tpu.matmul %9, %8, %cst_10 {dimension_numbers = #tpu.dot_dimension_numbers<[1], [0], [0], [1], [0, 0, 1, 1], [], []>} : vector<448x1632xbf16>, vector<1632x49xbf16>, vector<448x49xf32> -> vector<448x49xf32>
      %cst_11 = arith.constant dense<0.000000e+00> : vector<448xf32>
      %11 = vector.multi_reduction <add>, %10, %cst_11 [1] : vector<448x49xf32> to vector<448xf32>
      %12 = vector.shape_cast %11 : vector<448xf32> to vector<448x1xf32>
      %cst_12 = arith.constant 4.900000e+01 : f32
      %13 = vector.broadcast %cst_12 : f32 to vector<448x1xf32>
      %14 = arith.divf %12, %13 : vector<448x1xf32>
      %15 = vector.broadcast %14 : vector<448x1xf32> to vector<448x49xf32>
      %16 = arith.subf %10, %15 : vector<448x49xf32>
      %17 = arith.mulf %16, %16 : vector<448x49xf32>
      %cst_13 = arith.constant dense<0.000000e+00> : vector<448xf32>
      %18 = vector.multi_reduction <add>, %17, %cst_13 [1] : vector<448x49xf32> to vector<448xf32>
      %19 = vector.shape_cast %18 : vector<448xf32> to vector<448x1xf32>
      %cst_14 = arith.constant 4.900000e+01 : f32
      %20 = vector.broadcast %cst_14 : f32 to vector<448x1xf32>
      %21 = arith.divf %19, %20 : vector<448x1xf32>
      %c0_15 = arith.constant 0 : index
      %c0_16 = arith.constant 0 : index
      %22 = vector.load %arg3[%c0_15, %c0_16] : memref<448x2xf32, #tpu.memory_space<vmem>>, vector<448x1xf32>
      %c0_17 = arith.constant 0 : index
      %c1 = arith.constant 1 : index
      %23 = vector.load %arg3[%c0_17, %c1] : memref<448x2xf32, #tpu.memory_space<vmem>>, vector<448x1xf32>
      %cst_18 = arith.constant 9.99999974E-6 : f32
      %24 = vector.broadcast %cst_18 : f32 to vector<448x1xf32>
      %25 = arith.addf %21, %24 : vector<448x1xf32>
      %26 = math.rsqrt %25 : vector<448x1xf32>
      %27 = arith.mulf %22, %26 : vector<448x1xf32>
      %28 = arith.mulf %14, %27 : vector<448x1xf32>
      %29 = arith.subf %23, %28 : vector<448x1xf32>
      %30 = vector.broadcast %27 : vector<448x1xf32> to vector<448x49xf32>
      %31 = arith.mulf %10, %30 : vector<448x49xf32>
      %32 = vector.broadcast %29 : vector<448x1xf32> to vector<448x49xf32>
      %33 = arith.addf %31, %32 : vector<448x49xf32>
      %c0_19 = arith.constant 0 : index
      %c0_20 = arith.constant 0 : index
      %34 = vector.load %arg4[%c0_19, %c0_20] : memref<448x49xf32, #tpu.memory_space<vmem>>, vector<448x49xf32>
      %35 = arith.addf %33, %34 : vector<448x49xf32>
      %36 = arith.truncf %35 : vector<448x49xf32> to vector<448x49xbf16>
      %c0_21 = arith.constant 0 : index
      %c0_22 = arith.constant 0 : index
      %37 = vector.load %arg7[%c0_21, %c0_22] : memref<448x49xbf16, #tpu.memory_space<vmem>>, vector<448x49xbf16>
      tpu.vector_store %arg7[%c0_21, %c0_22], %36 {strides = array<i32>} : memref<448x49xbf16, #tpu.memory_space<vmem>>, vector<448x49xbf16>,
    } else {
    }
    %c0 = arith.constant 0 : index
    %c0_1 = arith.constant 0 : index
    %3 = vector.load %arg5[%c0, %c0_1] : memref<448x448xbf16, #tpu.memory_space<vmem>>, vector<448x448xbf16>
    %c0_2 = arith.constant 0 : index
    %c0_3 = arith.constant 0 : index
    %4 = vector.load %arg7[%c0_2, %c0_3] : memref<448x49xbf16, #tpu.memory_space<vmem>>, vector<448x49xbf16>
    %cst = arith.constant dense<0.000000e+00> : vector<448x49xf32>
    %5 = tpu.matmul %3, %4, %cst {dimension_numbers = #tpu.dot_dimension_numbers<[1], [0], [0], [1], [0, 0, 1, 1], [], []>} : vector<448x448xbf16>, vector<448x49xbf16>, vector<448x49xf32> -> vector<448x49xf32>
    %c0_4 = arith.constant 0 : index
    %c0_5 = arith.constant 0 : index
    %6 = vector.load %arg6[%c0_4, %c0_5] : memref<448x49xf32, #tpu.memory_space<vmem>>, vector<448x49xf32>
    tpu.vector_store %arg6[%c0_4, %c0_5], %5 {strides = array<i32>} : memref<448x49xf32, #tpu.memory_space<vmem>>, vector<448x49xf32>,
    return
  }
  func.func @transform_0(%arg0: i32) -> (i32, i32) {
    %c0_i32 = arith.constant 0 : i32
    %c0_i32_0 = arith.constant 0 : i32
    %c0_i32_1 = arith.constant 0 : i32
    return %c0_i32, %c0_i32_0 : i32, i32
  }
  func.func @transform_1(%arg0: i32) -> (i32, i32) {
    %c0_i32 = arith.constant 0 : i32
    %c0_i32_0 = arith.constant 0 : i32
    %c0_i32_1 = arith.constant 0 : i32
    return %c0_i32, %c0_i32_0 : i32, i32
  }
  func.func @transform_2(%arg0: i32) -> (i32, i32) {
    %c0_i32 = arith.constant 0 : i32
    %c0_i32_0 = arith.constant 0 : i32
    %c0_i32_1 = arith.constant 0 : i32
    return %c0_i32, %c0_i32_0 : i32, i32
  }
  func.func @transform_3(%arg0: i32) -> (i32, i32) {
    %c0_i32 = arith.constant 0 : i32
    %c0_i32_0 = arith.constant 0 : i32
    %c0_i32_1 = arith.constant 0 : i32
    return %c0_i32, %c0_i32_0 : i32, i32
  }
  func.func @transform_4(%arg0: i32) -> (i32, i32) {
    %c0_i32 = arith.constant 0 : i32
    %c0_i32_0 = arith.constant 0 : i32
    return %arg0, %c0_i32 : i32, i32
  }
  func.func @transform_5(%arg0: i32) -> (i32, i32) {
    %c0_i32 = arith.constant 0 : i32
    %c0_i32_0 = arith.constant 0 : i32
    return %arg0, %c0_i32 : i32, i32
  }
}

</mosaic_0001>

<llo_original>
// kernel: fused_forward.1
$region0: #{fused_forward.1}
  #allocation0 [shape = 'u32[]', space=smem, size = 0x4, offset = 0x4, fixed_abs, tag = 'smem constant byte address 0x4 - core index']
  #allocation1 [shape = 'u32[144,128]{1,0:T(1,128)}', space=vmem, size = 0x12000, scoped, tag = 'internal scratch']
  #allocation2 [shape = 'bf16[448,49]{1,0:T(8,128)(2,1)}', space=vmem, size = 0x1c000, scoped, tag = 'scratch operand']
  %s0 = inlined_call_operand.vmem [shape: f32[1632,49], index: 0, kind: input, shape index: {}]
  %s1 = inlined_call_operand.vmem [shape: bf16[448,1632], index: 1, kind: input, shape index: {}]
  %s2 = inlined_call_operand.vmem [shape: f32[448,2], index: 2, kind: input, shape index: {}]
  %s3 = inlined_call_operand.vmem [shape: f32[448,49], index: 3, kind: input, shape index: {}]
  %s4 = inlined_call_operand.vmem [shape: bf16[1792,448], index: 4, kind: input, shape index: {}]
  %s5 = inlined_call_operand.vmem [shape: f32[1792,49], index: 5, kind: output, shape index: {}]
  %s6 = sld [smem:[#allocation0]]
  $region57: #{fused_forward.1} parent=0
    _
  %s8 = ssub.s32 1, %s6
  %s9 = scalar_select 0, %s8, %s6
  loop: start=0, step=1, limit=6
  $region2: #{fused_forward.1} parent=0 // loop_pre_header
    _
  $region3: #{fused_forward.1} parent=0 // loop_header
    %s11 = sphi 0, %s15
    %p12 = scmp.ge.s32.totalorder %s11, 6
    %s19 = sphi 0, %s19
    %s21 = sphi 0, %s19
    %s22 = sphi 0, %s21
    %s36 = sphi 0, %s22
    %s40 = sphi 0, %s40
    %s42 = sphi 0, %s40
    %s43 = sphi 0, %s42
    %s57 = sphi 0, %s43
    %s61 = sphi 0, %s61
    %s63 = sphi 0, %s61
    %s64 = sphi 0, %s63
    %s78 = sphi 0, %s64
    %s82 = sphi 0, %s82
    %s84 = sphi 0, %s82
    %s85 = sphi 0, %s84
    %s99 = sphi 0, %s85
    %s105 = sphi 0, %s107
    %s108 = sphi 0, %s105
    %s109 = sphi 0, %s108
    %s125 = sphi 0, %s109
    %s131 = sphi 0, %s133
    %s134 = sphi 0, %s131
    %s135 = sphi 0, %s134
    %s151 = sphi 0, %s135
  $region4: #{fused_forward.1} parent=0 // loop_header_branch
    %14 = sbr.rel (%p12) target = $region8
  $region5: #{fused_forward.1} parent=0 // loop_body
    %s16 = ssub.s32 %s11, 1
    %s17 = ssub.s32 %s11, 2
    %s18 = sadd.s32 %s11, 1
    %s20 = sadd.s32 %s19, 1
    %p23 = scmp.eq.s32.totalorder %s11, 3
    %p24 = scmp.ne.s32.totalorder %s19, %s21
    %p25 = scmp.eq.s32.totalorder %s11, 0
    %p26 = por %p24, %p25
    %p27 = scmp.ne.s32.totalorder %s19, %s21
    %p28 = scmp.eq.s32.totalorder %s16, 3
    %p29 = por %p27, %p28
    %p30 = scmp.ne.s32.totalorder %s21, %s22
    %p31 = scmp.eq.s32.totalorder %s16, 0
    %p32 = por %p30, %p31
    %p33 = scmp.ne.s32.totalorder %s21, %s22
    %p34 = scmp.eq.s32.totalorder %s17, 3
    %p35 = por %p33, %p34
    %p37 = scmp.ne.s32.totalorder %s22, %s36
    %p38 = scmp.eq.s32.totalorder %s17, 0
    %p39 = por %p37, %p38
    %s41 = sadd.s32 %s40, 1
    %p44 = scmp.eq.s32.totalorder %s11, 3
    %p45 = scmp.ne.s32.totalorder %s40, %s42
    %p46 = scmp.eq.s32.totalorder %s11, 0
    %p47 = por %p45, %p46
    %p48 = scmp.ne.s32.totalorder %s40, %s42
    %p49 = scmp.eq.s32.totalorder %s16, 3
    %p50 = por %p48, %p49
    %p51 = scmp.ne.s32.totalorder %s42, %s43
    %p52 = scmp.eq.s32.totalorder %s16, 0
    %p53 = por %p51, %p52
    %p54 = scmp.ne.s32.totalorder %s42, %s43
    %p55 = scmp.eq.s32.totalorder %s17, 3
    %p56 = por %p54, %p55
    %p58 = scmp.ne.s32.totalorder %s43, %s57
    %p59 = scmp.eq.s32.totalorder %s17, 0
    %p60 = por %p58, %p59
    %s62 = sadd.s32 %s61, 1
    %p65 = scmp.eq.s32.totalorder %s11, 3
    %p66 = scmp.ne.s32.totalorder %s61, %s63
    %p67 = scmp.eq.s32.totalorder %s11, 0
    %p68 = por %p66, %p67
    %p69 = scmp.ne.s32.totalorder %s61, %s63
    %p70 = scmp.eq.s32.totalorder %s16, 3
    %p71 = por %p69, %p70
    %p72 = scmp.ne.s32.totalorder %s63, %s64
    %p73 = scmp.eq.s32.totalorder %s16, 0
    %p74 = por %p72, %p73
    %p75 = scmp.ne.s32.totalorder %s63, %s64
    %p76 = scmp.eq.s32.totalorder %s17, 3
    %p77 = por %p75, %p76
    %p79 = scmp.ne.s32.totalorder %s64, %s78
    %p80 = scmp.eq.s32.totalorder %s17, 0
    %p81 = por %p79, %p80
    %s83 = sadd.s32 %s82, 1
    %p86 = scmp.eq.s32.totalorder %s11, 3
    %p87 = scmp.ne.s32.totalorder %s82, %s84
    %p88 = scmp.eq.s32.totalorder %s11, 0
    %p89 = por %p87, %p88
    %p90 = scmp.ne.s32.totalorder %s82, %s84
    %p91 = scmp.eq.s32.totalorder %s16, 3
    %p92 = por %p90, %p91
    %p93 = scmp.ne.s32.totalorder %s84, %s85
    %p94 = scmp.eq.s32.totalorder %s16, 0
    %p95 = por %p93, %p94
    %p96 = scmp.ne.s32.totalorder %s84, %s85
    %p97 = scmp.eq.s32.totalorder %s17, 3
    %p98 = por %p96, %p97
    %p100 = scmp.ne.s32.totalorder %s85, %s99
    %p101 = scmp.eq.s32.totalorder %s17, 0
    %p102 = por %p100, %p101
    %s103 = ssub.s32 %s11, %s18
    %p104 = scmp.eq.s32.totalorder %s103, 0
    %s106 = sadd.s32 %s105, 1
    %s107 = scalar_select %p104, %s105, %s106
    %p110 = pneg %p104
    %p111 = scmp.eq.s32.totalorder %s11, 3
    %p112 = por %p110, %p111
    %p113 = scmp.ne.s32.totalorder %s105, %s108
    %p114 = scmp.eq.s32.totalorder %s11, 0
    %p115 = por %p113, %p114
    %p116 = scmp.ne.s32.totalorder %s105, %s108
    %p117 = scmp.eq.s32.totalorder %s16, 3
    %p118 = por %p116, %p117
    %p119 = scmp.ne.s32.totalorder %s108, %s109
    %p120 = scmp.eq.s32.totalorder %s16, 0
    %p121 = por %p119, %p120
    %p122 = scmp.ne.s32.totalorder %s108, %s109
    %p123 = scmp.eq.s32.totalorder %s17, 3
    %p124 = por %p122, %p123
    %p126 = scmp.ne.s32.totalorder %s109, %s125
    %p127 = scmp.eq.s32.totalorder %s17, 0
    %p128 = por %p126, %p127
    %s129 = ssub.s32 %s11, %s18
    %p130 = scmp.eq.s32.totalorder %s129, 0
    %s132 = sadd.s32 %s131, 1
    %s133 = scalar_select %p130, %s131, %s132
    %p136 = pneg %p130
    %p137 = scmp.eq.s32.totalorder %s11, 3
    %p138 = por %p136, %p137
    %p139 = scmp.ne.s32.totalorder %s131, %s134
    %p140 = scmp.eq.s32.totalorder %s11, 0
    %p141 = por %p139, %p140
    %p142 = scmp.ne.s32.totalorder %s131, %s134
    %p143 = scmp.eq.s32.totalorder %s16, 3
    %p144 = por %p142, %p143
    %p145 = scmp.ne.s32.totalorder %s134, %s135
    %p146 = scmp.eq.s32.totalorder %s16, 0
    %p147 = por %p145, %p146
    %p148 = scmp.ne.s32.totalorder %s134, %s135
    %p149 = scmp.eq.s32.totalorder %s17, 3
    %p150 = por %p148, %p149
    %p152 = scmp.ne.s32.totalorder %s135, %s151
    %p153 = scmp.eq.s32.totalorder %s17, 0
    %p154 = por %p152, %p153
    %p155 = scmp.le.s32.totalorder 1, %s11
    %p156 = scmp.lt.s32.totalorder %s11, 5
    %p157 = pnand %p155, %p156
    %p158 = pneg %p157
    // Predicated region
    $region9: #{fused_forward.1} parent=5 // pred_check
      _
    $region10: #{fused_forward.1} parent=5 // pred_check_branch
      %160 = sbr.rel (%p157) target = $region12
    $region11: #{fused_forward.1} parent=5 // pred_region
      %s161 = ssub.s32 %s11, 1
      // Predicated region
      $region13: #{fused_forward.1} parent=11 // pred_check
        %p162 = pneg %p32
      $region14: #{fused_forward.1} parent=11 // pred_check_branch
        %164 = sbr.rel (%p162) target = $region16
      $region15: #{fused_forward.1} parent=11 // pred_region
        _
      $region16: #{fused_forward.1} parent=11 // pred_fallthru
        _
      // Predicated region
      $region17: #{fused_forward.1} parent=11 // pred_check
        %p165 = pneg %p53
      $region18: #{fused_forward.1} parent=11 // pred_check_branch
        %167 = sbr.rel (%p165) target = $region20
      $region19: #{fused_forward.1} parent=11 // pred_region
        _
      $region20: #{fused_forward.1} parent=11 // pred_fallthru
        _
      // Predicated region
      $region21: #{fused_forward.1} parent=11 // pred_check
        %p168 = pneg %p74
      $region22: #{fused_forward.1} parent=11 // pred_check_branch
        %170 = sbr.rel (%p168) target = $region24
      $region23: #{fused_forward.1} parent=11 // pred_region
        _
      $region24: #{fused_forward.1} parent=11 // pred_fallthru
        _
      // Predicated region
      $region25: #{fused_forward.1} parent=11 // pred_check
        %p171 = pneg %p95
      $region26: #{fused_forward.1} parent=11 // pred_check_branch
        %173 = sbr.rel (%p171) target = $region28
      $region27: #{fused_forward.1} parent=11 // pred_region
        _
      $region28: #{fused_forward.1} parent=11 // pred_fallthru
        _
    $region12: #{fused_forward.1} parent=5 // pred_fallthru
      _
    %p174 = scmp.lt.s32.totalorder %s11, 4
    // Predicated region
    $region29: #{fused_forward.1} parent=5 // pred_check
      %p175 = pneg %p174
    $region30: #{fused_forward.1} parent=5 // pred_check_branch
      %177 = sbr.rel (%p175) target = $region32
    $region31: #{fused_forward.1} parent=5 // pred_region
      // Predicated region
      $region33: #{fused_forward.1} parent=31 // pred_check
        %p178 = pneg %p115
      $region34: #{fused_forward.1} parent=31 // pred_check_branch
        %180 = sbr.rel (%p178) target = $region36
      $region35: #{fused_forward.1} parent=31 // pred_region
        %s181 = smul.u32 56, %s11
        %p182 = scmp.lt.s32.totalorder %s181, 223
        %s183 = scalar_select %p182, %s181, 223
        %s184 = smul.addr %s183, 4
        %s185 = smul.addr %s184, 4
        %s186 = scalar_lea.vmem %s4, %s185
        %s187 = smul.u32 56, %s11
      $region36: #{fused_forward.1} parent=31 // pred_fallthru
        _
    $region32: #{fused_forward.1} parent=5 // pred_fallthru
      _
    %p188 = scmp.le.s32.totalorder 1, %s11
    %p189 = scmp.lt.s32.totalorder %s11, 5
    %p190 = pnand %p188, %p189
    %p191 = pneg %p190
    // Predicated region
    $region37: #{fused_forward.1} parent=5 // pred_check
      _
    $region38: #{fused_forward.1} parent=5 // pred_check_branch
      %193 = sbr.rel (%p190) target = $region40
    $region39: #{fused_forward.1} parent=5 // pred_region
      %s194 = ssub.s32 %s11, 1
      %p195 = pneg %p32
      %p196 = pneg %p29
      %p197 = pneg %p53
      %p198 = pneg %p50
      %p199 = pneg %p74
      %p200 = pneg %p71
      %p201 = pneg %p95
      %p202 = pneg %p92
      %s203 = smul.u32 56, %s16
      %p204 = scmp.lt.s32.totalorder %s203, 223
      %s205 = scalar_select %p204, %s203, 223
      %s206 = smul.addr %s205, 4
      %s207 = smul.addr %s206, 4
      %s208 = scalar_lea.vmem %s4, %s207
      %p209 = pneg %p121
      %p210 = pneg %p118
      %p211 = pneg %p147
      %p212 = pneg %p144
      %s213 = smul.u32 56, %s16
      %p214 = scmp.lt.s32.totalorder %s213, 223
      %s215 = scalar_select %p214, %s213, 223
      %s216 = smul.addr %s215, 8
      %s217 = scalar_lea.vmem %s5, %s216
      %s218 = smul.u32 56, %s16
      %p219 = scmp.lt.s32.totalorder %s218, 223
      %s220 = scalar_select %p219, %s218, 223
      %s221 = smul.addr %s220, 4
      %s222 = smul.addr %s221, 4
      %s223 = scalar_lea.vmem %s4, %s222
      %s224 = smul.u32 56, %s16
      %s225 = smul.u32 56, %s16
      %p226 = scmp.lt.s32.totalorder %s225, 223
      %s227 = scalar_select %p226, %s225, 223
      %s228 = smul.addr %s227, 8
      %s229 = scalar_lea.vmem %s5, %s228
      %s230 = smul.u32 56, %s16
      %p232 = scmp.eq.s32.totalorder %s16, 0
      // Predicated region
      $region41: #{fused_forward.1} parent=39 // pred_check
        %p233 = pneg %p232
      $region42: #{fused_forward.1} parent=39 // pred_check_branch
        %235 = sbr.rel (%p233) target = $region44
      $region43: #{fused_forward.1} parent=39 // pred_region
        %v236 = vld [vmem:[%s0] sm:$0xff]
        %v237 = vld [vmem:[%s0 + $0x8] sm:$0xff]
        %v238 = vld [vmem:[%s0 + $0x10] sm:$0xff]
        %v239 = vld [vmem:[%s0 + $0x18] sm:$0xff]
        %v240 = vld [vmem:[%s0 + $0x20] sm:$0xff]
        %v241 = vld [vmem:[%s0 + $0x28] sm:$0xff]
        %v242 = vld [vmem:[%s0 + $0x30] sm:$0xff]
        %v243 = vld [vmem:[%s0 + $0x38] sm:$0xff]
        %v244 = vld [vmem:[%s0 + $0x40] sm:$0xff]
        %v245 = vld [vmem:[%s0 + $0x48] sm:$0xff]
        %v246 = vld [vmem:[%s0 + $0x50] sm:$0xff]
        %v247 = vld [vmem:[%s0 + $0x58] sm:$0xff]
        %v248 = vld [vmem:[%s0 + $0x60] sm:$0xff]
        %v249 = vld [vmem:[%s0 + $0x68] sm:$0xff]
        %v250 = vld [vmem:[%s0 + $0x70] sm:$0xff]
        %v251 = vld [vmem:[%s0 + $0x78] sm:$0xff]
        %v252 = vld [vmem:[%s0 + $0x80] sm:$0xff]
        %v253 = vld [vmem:[%s0 + $0x88] sm:$0xff]
        %v254 = vld [vmem:[%s0 + $0x90] sm:$0xff]
        %v255 = vld [vmem:[%s0 + $0x98] sm:$0xff]
        %v256 = vld [vmem:[%s0 + $0xa0] sm:$0xff]
        %v257 = vld [vmem:[%s0 + $0xa8] sm:$0xff]
        %v258 = vld [vmem:[%s0 + $0xb0] sm:$0xff]
        %v259 = vld [vmem:[%s0 + $0xb8] sm:$0xff]
        %v260 = vld [vmem:[%s0 + $0xc0] sm:$0xff]
        %v261 = vld [vmem:[%s0 + $0xc8] sm:$0xff]
        %v262 = vld [vmem:[%s0 + $0xd0] sm:$0xff]
        %v263 = vld [vmem:[%s0 + $0xd8] sm:$0xff]
        %v264 = vld [vmem:[%s0 + $0xe0] sm:$0xff]
        %v265 = vld [vmem:[%s0 + $0xe8] sm:$0xff]
        %v266 = vld [vmem:[%s0 + $0xf0] sm:$0xff]
        %v267 = vld [vmem:[%s0 + $0xf8] sm:$0xff]
        %v268 = vld [vmem:[%s0 + $0x100] sm:$0xff]
        %v269 = vld [vmem:[%s0 + $0x108] sm:$0xff]
        %v270 = vld [vmem:[%s0 + $0x110] sm:$0xff]
        %v271 = vld [vmem:[%s0 + $0x118] sm:$0xff]
        %v272 = vld [vmem:[%s0 + $0x120] sm:$0xff]
        %v273 = vld [vmem:[%s0 + $0x128] sm:$0xff]
        %v274 = vld [vmem:[%s0 + $0x130] sm:$0xff]
        %v275 = vld [vmem:[%s0 + $0x138] sm:$0xff]
        %v276 = vld [vmem:[%s0 + $0x140] sm:$0xff]
        %v277 = vld [vmem:[%s0 + $0x148] sm:$0xff]
        %v278 = vld [vmem:[%s0 + $0x150] sm:$0xff]
        %v279 = vld [vmem:[%s0 + $0x158] sm:$0xff]
        %v280 = vld [vmem:[%s0 + $0x160] sm:$0xff]
        %v281 = vld [vmem:[%s0 + $0x168] sm:$0xff]
        %v282 = vld [vmem:[%s0 + $0x170] sm:$0xff]
        %v283 = vld [vmem:[%s0 + $0x178] sm:$0xff]
        %v284 = vld [vmem:[%s0 + $0x180] sm:$0xff]
        %v285 = vld [vmem:[%s0 + $0x188] sm:$0xff]
        %v286 = vld [vmem:[%s0 + $0x190] sm:$0xff]
        %v287 = vld [vmem:[%s0 + $0x198] sm:$0xff]
        %v288 = vld [vmem:[%s0 + $0x1a0] sm:$0xff]
        %v289 = vld [vmem:[%s0 + $0x1a8] sm:$0xff]
        %v290 = vld [vmem:[%s0 + $0x1b0] sm:$0xff]
        %v291 = vld [vmem:[%s0 + $0x1b8] sm:$0xff]
        %v292 = vld [vmem:[%s0 + $0x1c0] sm:$0xff]
        %v293 = vld [vmem:[%s0 + $0x1c8] sm:$0xff]
        %v294 = vld [vmem:[%s0 + $0x1d0] sm:$0xff]
        %v295 = vld [vmem:[%s0 + $0x1d8] sm:$0xff]
        %v296 = vld [vmem:[%s0 + $0x1e0] sm:$0xff]
        %v297 = vld [vmem:[%s0 + $0x1e8] sm:$0xff]
        %v298 = vld [vmem:[%s0 + $0x1f0] sm:$0xff]
        %v299 = vld [vmem:[%s0 + $0x1f8] sm:$0xff]
        %v300 = vld [vmem:[%s0 + $0x200] sm:$0xff]
        %v301 = vld [vmem:[%s0 + $0x208] sm:$0xff]
        %v302 = vld [vmem:[%s0 + $0x210] sm:$0xff]
        %v303 = vld [vmem:[%s0 + $0x218] sm:$0xff]
        %v304 = vld [vmem:[%s0 + $0x220] sm:$0xff]
        %v305 = vld [vmem:[%s0 + $0x228] sm:$0xff]
        %v306 = vld [vmem:[%s0 + $0x230] sm:$0xff]
        %v307 = vld [vmem:[%s0 + $0x238] sm:$0xff]
        %v308 = vld [vmem:[%s0 + $0x240] sm:$0xff]
        %v309 = vld [vmem:[%s0 + $0x248] sm:$0xff]
        %v310 = vld [vmem:[%s0 + $0x250] sm:$0xff]
        %v311 = vld [vmem:[%s0 + $0x258] sm:$0xff]
        %v312 = vld [vmem:[%s0 + $0x260] sm:$0xff]
        %v313 = vld [vmem:[%s0 + $0x268] sm:$0xff]
        %v314 = vld [vmem:[%s0 + $0x270] sm:$0xff]
        %v315 = vld [vmem:[%s0 + $0x278] sm:$0xff]
        %v316 = vld [vmem:[%s0 + $0x280] sm:$0xff]
        %v317 = vld [vmem:[%s0 + $0x288] sm:$0xff]
        %v318 = vld [vmem:[%s0 + $0x290] sm:$0xff]
        %v319 = vld [vmem:[%s0 + $0x298] sm:$0xff]
        %v320 = vld [vmem:[%s0 + $0x2a0] sm:$0xff]
        %v321 = vld [vmem:[%s0 + $0x2a8] sm:$0xff]
        %v322 = vld [vmem:[%s0 + $0x2b0] sm:$0xff]
        %v323 = vld [vmem:[%s0 + $0x2b8] sm:$0xff]
        %v324 = vld [vmem:[%s0 + $0x2c0] sm:$0xff]
        %v325 = vld [vmem:[%s0 + $0x2c8] sm:$0xff]
        %v326 = vld [vmem:[%s0 + $0x2d0] sm:$0xff]
        %v327 = vld [vmem:[%s0 + $0x2d8] sm:$0xff]
        %v328 = vld [vmem:[%s0 + $0x2e0] sm:$0xff]
        %v329 = vld [vmem:[%s0 + $0x2e8] sm:$0xff]
        %v330 = vld [vmem:[%s0 + $0x2f0] sm:$0xff]
        %v331 = vld [vmem:[%s0 + $0x2f8] sm:$0xff]
        %v332 = vld [vmem:[%s0 + $0x300] sm:$0xff]
        %v333 = vld [vmem:[%s0 + $0x308] sm:$0xff]
        %v334 = vld [vmem:[%s0 + $0x310] sm:$0xff]
        %v335 = vld [vmem:[%s0 + $0x318] sm:$0xff]
        %v336 = vld [vmem:[%s0 + $0x320] sm:$0xff]
        %v337 = vld [vmem:[%s0 + $0x328] sm:$0xff]
        %v338 = vld [vmem:[%s0 + $0x330] sm:$0xff]
        %v339 = vld [vmem:[%s0 + $0x338] sm:$0xff]
        %v340 = vld [vmem:[%s0 + $0x340] sm:$0xff]
        %v341 = vld [vmem:[%s0 + $0x348] sm:$0xff]
        %v342 = vld [vmem:[%s0 + $0x350] sm:$0xff]
        %v343 = vld [vmem:[%s0 + $0x358] sm:$0xff]
        %v344 = vld [vmem:[%s0 + $0x360] sm:$0xff]
        %v345 = vld [vmem:[%s0 + $0x368] sm:$0xff]
        %v346 = vld [vmem:[%s0 + $0x370] sm:$0xff]
        %v347 = vld [vmem:[%s0 + $0x378] sm:$0xff]
        %v348 = vld [vmem:[%s0 + $0x380] sm:$0xff]
        %v349 = vld [vmem:[%s0 + $0x388] sm:$0xff]
        %v350 = vld [vmem:[%s0 + $0x390] sm:$0xff]
        %v351 = vld [vmem:[%s0 + $0x398] sm:$0xff]
        %v352 = vld [vmem:[%s0 + $0x3a0] sm:$0xff]
        %v353 = vld [vmem:[%s0 + $0x3a8] sm:$0xff]
        %v354 = vld [vmem:[%s0 + $0x3b0] sm:$0xff]
        %v355 = vld [vmem:[%s0 + $0x3b8] sm:$0xff]
        %v356 = vld [vmem:[%s0 + $0x3c0] sm:$0xff]
        %v357 = vld [vmem:[%s0 + $0x3c8] sm:$0xff]
        %v358 = vld [vmem:[%s0 + $0x3d0] sm:$0xff]
        %v359 = vld [vmem:[%s0 + $0x3d8] sm:$0xff]
        %v360 = vld [vmem:[%s0 + $0x3e0] sm:$0xff]
        %v361 = vld [vmem:[%s0 + $0x3e8] sm:$0xff]
        %v362 = vld [vmem:[%s0 + $0x3f0] sm:$0xff]
        %v363 = vld [vmem:[%s0 + $0x3f8] sm:$0xff]
        %v364 = vld [vmem:[%s0 + $0x400] sm:$0xff]
        %v365 = vld [vmem:[%s0 + $0x408] sm:$0xff]
        %v366 = vld [vmem:[%s0 + $0x410] sm:$0xff]
        %v367 = vld [vmem:[%s0 + $0x418] sm:$0xff]
        %v368 = vld [vmem:[%s0 + $0x420] sm:$0xff]
        %v369 = vld [vmem:[%s0 + $0x428] sm:$0xff]
        %v370 = vld [vmem:[%s0 + $0x430] sm:$0xff]
        %v371 = vld [vmem:[%s0 + $0x438] sm:$0xff]
        %v372 = vld [vmem:[%s0 + $0x440] sm:$0xff]
        %v373 = vld [vmem:[%s0 + $0x448] sm:$0xff]
        %v374 = vld [vmem:[%s0 + $0x450] sm:$0xff]
        %v375 = vld [vmem:[%s0 + $0x458] sm:$0xff]
        %v376 = vld [vmem:[%s0 + $0x460] sm:$0xff]
        %v377 = vld [vmem:[%s0 + $0x468] sm:$0xff]
        %v378 = vld [vmem:[%s0 + $0x470] sm:$0xff]
        %v379 = vld [vmem:[%s0 + $0x478] sm:$0xff]
        %v380 = vld [vmem:[%s0 + $0x480] sm:$0xff]
        %v381 = vld [vmem:[%s0 + $0x488] sm:$0xff]
        %v382 = vld [vmem:[%s0 + $0x490] sm:$0xff]
        %v383 = vld [vmem:[%s0 + $0x498] sm:$0xff]
        %v384 = vld [vmem:[%s0 + $0x4a0] sm:$0xff]
        %v385 = vld [vmem:[%s0 + $0x4a8] sm:$0xff]
        %v386 = vld [vmem:[%s0 + $0x4b0] sm:$0xff]
        %v387 = vld [vmem:[%s0 + $0x4b8] sm:$0xff]
        %v388 = vld [vmem:[%s0 + $0x4c0] sm:$0xff]
        %v389 = vld [vmem:[%s0 + $0x4c8] sm:$0xff]
        %v390 = vld [vmem:[%s0 + $0x4d0] sm:$0xff]
        %v391 = vld [vmem:[%s0 + $0x4d8] sm:$0xff]
        %v392 = vld [vmem:[%s0 + $0x4e0] sm:$0xff]
        %v393 = vld [vmem:[%s0 + $0x4e8] sm:$0xff]
        %v394 = vld [vmem:[%s0 + $0x4f0] sm:$0xff]
        %v395 = vld [vmem:[%s0 + $0x4f8] sm:$0xff]
        %v396 = vld [vmem:[%s0 + $0x500] sm:$0xff]
        %v397 = vld [vmem:[%s0 + $0x508] sm:$0xff]
        %v398 = vld [vmem:[%s0 + $0x510] sm:$0xff]
        %v399 = vld [vmem:[%s0 + $0x518] sm:$0xff]
        %v400 = vld [vmem:[%s0 + $0x520] sm:$0xff]
        %v401 = vld [vmem:[%s0 + $0x528] sm:$0xff]
        %v402 = vld [vmem:[%s0 + $0x530] sm:$0xff]
        %v403 = vld [vmem:[%s0 + $0x538] sm:$0xff]
        %v404 = vld [vmem:[%s0 + $0x540] sm:$0xff]
        %v405 = vld [vmem:[%s0 + $0x548] sm:$0xff]
        %v406 = vld [vmem:[%s0 + $0x550] sm:$0xff]
        %v407 = vld [vmem:[%s0 + $0x558] sm:$0xff]
        %v408 = vld [vmem:[%s0 + $0x560] sm:$0xff]
        %v409 = vld [vmem:[%s0 + $0x568] sm:$0xff]
        %v410 = vld [vmem:[%s0 + $0x570] sm:$0xff]
        %v411 = vld [vmem:[%s0 + $0x578] sm:$0xff]
        %v412 = vld [vmem:[%s0 + $0x580] sm:$0xff]
        %v413 = vld [vmem:[%s0 + $0x588] sm:$0xff]
        %v414 = vld [vmem:[%s0 + $0x590] sm:$0xff]
        %v415 = vld [vmem:[%s0 + $0x598] sm:$0xff]
        %v416 = vld [vmem:[%s0 + $0x5a0] sm:$0xff]
        %v417 = vld [vmem:[%s0 + $0x5a8] sm:$0xff]
        %v418 = vld [vmem:[%s0 + $0x5b0] sm:$0xff]
        %v419 = vld [vmem:[%s0 + $0x5b8] sm:$0xff]
        %v420 = vld [vmem:[%s0 + $0x5c0] sm:$0xff]
        %v421 = vld [vmem:[%s0 + $0x5c8] sm:$0xff]
        %v422 = vld [vmem:[%s0 + $0x5d0] sm:$0xff]
        %v423 = vld [vmem:[%s0 + $0x5d8] sm:$0xff]
        %v424 = vld [vmem:[%s0 + $0x5e0] sm:$0xff]
        %v425 = vld [vmem:[%s0 + $0x5e8] sm:$0xff]
        %v426 = vld [vmem:[%s0 + $0x5f0] sm:$0xff]
        %v427 = vld [vmem:[%s0 + $0x5f8] sm:$0xff]
        %v428 = vld [vmem:[%s0 + $0x600] sm:$0xff]
        %v429 = vld [vmem:[%s0 + $0x608] sm:$0xff]
        %v430 = vld [vmem:[%s0 + $0x610] sm:$0xff]
        %v431 = vld [vmem:[%s0 + $0x618] sm:$0xff]
        %v432 = vld [vmem:[%s0 + $0x620] sm:$0xff]
        %v433 = vld [vmem:[%s0 + $0x628] sm:$0xff]
        %v434 = vld [vmem:[%s0 + $0x630] sm:$0xff]
        %v435 = vld [vmem:[%s0 + $0x638] sm:$0xff]
        %v436 = vld [vmem:[%s0 + $0x640] sm:$0xff]
        %v437 = vld [vmem:[%s0 + $0x648] sm:$0xff]
        %v438 = vld [vmem:[%s0 + $0x650] sm:$0xff]
        %v439 = vld [vmem:[%s0 + $0x658] sm:$0xff]
        %v440 = vpack.c.bf16 %v237, %v236
        %v441 = vpack.c.bf16 %v239, %v238
        %v442 = vpack.c.bf16 %v241, %v240
        %v443 = vpack.c.bf16 %v243, %v242
        %v444 = vpack.c.bf16 %v245, %v244
        %v445 = vpack.c.bf16 %v247, %v246
        %v446 = vpack.c.bf16 %v249, %v248
        %v447 = vpack.c.bf16 %v251, %v250
        %v448 = vpack.c.bf16 %v253, %v252
        %v449 = vpack.c.bf16 %v255, %v254
        %v450 = vpack.c.bf16 %v257, %v256
        %v451 = vpack.c.bf16 %v259, %v258
        %v452 = vpack.c.bf16 %v261, %v260
        %v453 = vpack.c.bf16 %v263, %v262
        %v454 = vpack.c.bf16 %v265, %v264
        %v455 = vpack.c.bf16 %v267, %v266
        %v456 = vpack.c.bf16 %v269, %v268
        %v457 = vpack.c.bf16 %v271, %v270
        %v458 = vpack.c.bf16 %v273, %v272
        %v459 = vpack.c.bf16 %v275, %v274
        %v460 = vpack.c.bf16 %v277, %v276
        %v461 = vpack.c.bf16 %v279, %v278
        %v462 = vpack.c.bf16 %v281, %v280
        %v463 = vpack.c.bf16 %v283, %v282
        %v464 = vpack.c.bf16 %v285, %v284
        %v465 = vpack.c.bf16 %v287, %v286
        %v466 = vpack.c.bf16 %v289, %v288
        %v467 = vpack.c.bf16 %v291, %v290
        %v468 = vpack.c.bf16 %v293, %v292
        %v469 = vpack.c.bf16 %v295, %v294
        %v470 = vpack.c.bf16 %v297, %v296
        %v471 = vpack.c.bf16 %v299, %v298
        %v472 = vpack.c.bf16 %v301, %v300
        %v473 = vpack.c.bf16 %v303, %v302
        %v474 = vpack.c.bf16 %v305, %v304
        %v475 = vpack.c.bf16 %v307, %v306
        %v476 = vpack.c.bf16 %v309, %v308
        %v477 = vpack.c.bf16 %v311, %v310
        %v478 = vpack.c.bf16 %v313, %v312
        %v479 = vpack.c.bf16 %v315, %v314
        %v480 = vpack.c.bf16 %v317, %v316
        %v481 = vpack.c.bf16 %v319, %v318
        %v482 = vpack.c.bf16 %v321, %v320
        %v483 = vpack.c.bf16 %v323, %v322
        %v484 = vpack.c.bf16 %v325, %v324
        %v485 = vpack.c.bf16 %v327, %v326
        %v486 = vpack.c.bf16 %v329, %v328
        %v487 = vpack.c.bf16 %v331, %v330
        %v488 = vpack.c.bf16 %v333, %v332
        %v489 = vpack.c.bf16 %v335, %v334
        %v490 = vpack.c.bf16 %v337, %v336
        %v491 = vpack.c.bf16 %v339, %v338
        %v492 = vpack.c.bf16 %v341, %v340
        %v493 = vpack.c.bf16 %v343, %v342
        %v494 = vpack.c.bf16 %v345, %v344
        %v495 = vpack.c.bf16 %v347, %v346
        %v496 = vpack.c.bf16 %v349, %v348
        %v497 = vpack.c.bf16 %v351, %v350
        %v498 = vpack.c.bf16 %v353, %v352
        %v499 = vpack.c.bf16 %v355, %v354
        %v500 = vpack.c.bf16 %v357, %v356
        %v501 = vpack.c.bf16 %v359, %v358
        %v502 = vpack.c.bf16 %v361, %v360
        %v503 = vpack.c.bf16 %v363, %v362
        %v504 = vpack.c.bf16 %v365, %v364
        %v505 = vpack.c.bf16 %v367, %v366
        %v506 = vpack.c.bf16 %v369, %v368
        %v507 = vpack.c.bf16 %v371, %v370
        %v508 = vpack.c.bf16 %v373, %v372
        %v509 = vpack.c.bf16 %v375, %v374
        %v510 = vpack.c.bf16 %v377, %v376
        %v511 = vpack.c.bf16 %v379, %v378
        %v512 = vpack.c.bf16 %v381, %v380
        %v513 = vpack.c.bf16 %v383, %v382
        %v514 = vpack.c.bf16 %v385, %v384
        %v515 = vpack.c.bf16 %v387, %v386
        %v516 = vpack.c.bf16 %v389, %v388
        %v517 = vpack.c.bf16 %v391, %v390
        %v518 = vpack.c.bf16 %v393, %v392
        %v519 = vpack.c.bf16 %v395, %v394
        %v520 = vpack.c.bf16 %v397, %v396
        %v521 = vpack.c.bf16 %v399, %v398
        %v522 = vpack.c.bf16 %v401, %v400
        %v523 = vpack.c.bf16 %v403, %v402
        %v524 = vpack.c.bf16 %v405, %v404
        %v525 = vpack.c.bf16 %v407, %v406
        %v526 = vpack.c.bf16 %v409, %v408
        %v527 = vpack.c.bf16 %v411, %v410
        %v528 = vpack.c.bf16 %v413, %v412
        %v529 = vpack.c.bf16 %v415, %v414
        %v530 = vpack.c.bf16 %v417, %v416
        %v531 = vpack.c.bf16 %v419, %v418
        %v532 = vpack.c.bf16 %v421, %v420
        %v533 = vpack.c.bf16 %v423, %v422
        %v534 = vpack.c.bf16 %v425, %v424
        %v535 = vpack.c.bf16 %v427, %v426
        %v536 = vpack.c.bf16 %v429, %v428
        %v537 = vpack.c.bf16 %v431, %v430
        %v538 = vpack.c.bf16 %v433, %v432
        %v539 = vpack.c.bf16 %v435, %v434
        %v540 = vpack.c.bf16 %v437, %v436
        %v541 = vpack.c.bf16 %v439, %v438
        %v542 = vld [vmem:[%s1] sm:$0xff]
        %v543 = vld [vmem:[%s1 + $0x8] sm:$0xff]
        %v544 = vld [vmem:[%s1 + $0x10] sm:$0xff]
        %v545 = vld [vmem:[%s1 + $0x18] sm:$0xff]
        %v546 = vld [vmem:[%s1 + $0x20] sm:$0xff]
        %v547 = vld [vmem:[%s1 + $0x28] sm:$0xff]
        %v548 = vld [vmem:[%s1 + $0x30] sm:$0xf]
        %v549 = vld [vmem:[%s1 + $0x34] sm:$0xff]
        %v550 = vld [vmem:[%s1 + $0x3c] sm:$0xff]
        %v551 = vld [vmem:[%s1 + $0x44] sm:$0xff]
        %v552 = vld [vmem:[%s1 + $0x4c] sm:$0xff]
        %v553 = vld [vmem:[%s1 + $0x54] sm:$0xff]
        %v554 = vld [vmem:[%s1 + $0x5c] sm:$0xff]
        %v555 = vld [vmem:[%s1 + $0x64] sm:$0xf]
        %v556 = vld [vmem:[%s1 + $0x68] sm:$0xff]
        %v557 = vld [vmem:[%s1 + $0x70] sm:$0xff]
        %v558 = vld [vmem:[%s1 + $0x78] sm:$0xff]
        %v559 = vld [vmem:[%s1 + $0x80] sm:$0xff]
        %v560 = vld [vmem:[%s1 + $0x88] sm:$0xff]
        %v561 = vld [vmem:[%s1 + $0x90] sm:$0xff]
        %v562 = vld [vmem:[%s1 + $0x98] sm:$0xf]
        %v563 = vld [vmem:[%s1 + $0x9c] sm:$0xff]
        %v564 = vld [vmem:[%s1 + $0xa4] sm:$0xff]
        %v565 = vld [vmem:[%s1 + $0xac] sm:$0xff]
        %v566 = vld [vmem:[%s1 + $0xb4] sm:$0xff]
        %v567 = vld [vmem:[%s1 + $0xbc] sm:$0xff]
        %v568 = vld [vmem:[%s1 + $0xc4] sm:$0xff]
        %v569 = vld [vmem:[%s1 + $0xcc] sm:$0xf]
        %v570 = vld [vmem:[%s1 + $0xd0] sm:$0xff]
        %v571 = vld [vmem:[%s1 + $0xd8] sm:$0xff]
        %v572 = vld [vmem:[%s1 + $0xe0] sm:$0xff]
        %v573 = vld [vmem:[%s1 + $0xe8] sm:$0xff]
        %v574 = vld [vmem:[%s1 + $0xf0] sm:$0xff]
        %v575 = vld [vmem:[%s1 + $0xf8] sm:$0xff]
        %v576 = vld [vmem:[%s1 + $0x100] sm:$0xf]
        %v577 = vld [vmem:[%s1 + $0x104] sm:$0xff]
        %v578 = vld [vmem:[%s1 + $0x10c] sm:$0xff]
        %v579 = vld [vmem:[%s1 + $0x114] sm:$0xff]
        %v580 = vld [vmem:[%s1 + $0x11c] sm:$0xff]
        %v581 = vld [vmem:[%s1 + $0x124] sm:$0xff]
        %v582 = vld [vmem:[%s1 + $0x12c] sm:$0xff]
        %v583 = vld [vmem:[%s1 + $0x134] sm:$0xf]
        %v584 = vld [vmem:[%s1 + $0x138] sm:$0xff]
        %v585 = vld [vmem:[%s1 + $0x140] sm:$0xff]
        %v586 = vld [vmem:[%s1 + $0x148] sm:$0xff]
        %v587 = vld [vmem:[%s1 + $0x150] sm:$0xff]
        %v588 = vld [vmem:[%s1 + $0x158] sm:$0xff]
        %v589 = vld [vmem:[%s1 + $0x160] sm:$0xff]
        %v590 = vld [vmem:[%s1 + $0x168] sm:$0xf]
        %v591 = vld [vmem:[%s1 + $0x16c] sm:$0xff]
        %v592 = vld [vmem:[%s1 + $0x174] sm:$0xff]
        %v593 = vld [vmem:[%s1 + $0x17c] sm:$0xff]
        %v594 = vld [vmem:[%s1 + $0x184] sm:$0xff]
        %v595 = vld [vmem:[%s1 + $0x18c] sm:$0xff]
        %v596 = vld [vmem:[%s1 + $0x194] sm:$0xff]
        %v597 = vld [vmem:[%s1 + $0x19c] sm:$0xf]
        %v598 = vld [vmem:[%s1 + $0x1a0] sm:$0xff]
        %v599 = vld [vmem:[%s1 + $0x1a8] sm:$0xff]
        %v600 = vld [vmem:[%s1 + $0x1b0] sm:$0xff]
        %v601 = vld [vmem:[%s1 + $0x1b8] sm:$0xff]
        %v602 = vld [vmem:[%s1 + $0x1c0] sm:$0xff]
        %v603 = vld [vmem:[%s1 + $0x1c8] sm:$0xff]
        %v604 = vld [vmem:[%s1 + $0x1d0] sm:$0xf]
        %v605 = vld [vmem:[%s1 + $0x1d4] sm:$0xff]
        %v606 = vld [vmem:[%s1 + $0x1dc] sm:$0xff]
        %v607 = vld [vmem:[%s1 + $0x1e4] sm:$0xff]
        %v608 = vld [vmem:[%s1 + $0x1ec] sm:$0xff]
        %v609 = vld [vmem:[%s1 + $0x1f4] sm:$0xff]
        %v610 = vld [vmem:[%s1 + $0x1fc] sm:$0xff]
        %v611 = vld [vmem:[%s1 + $0x204] sm:$0xf]
        %v612 = vld [vmem:[%s1 + $0x208] sm:$0xff]
        %v613 = vld [vmem:[%s1 + $0x210] sm:$0xff]
        %v614 = vld [vmem:[%s1 + $0x218] sm:$0xff]
        %v615 = vld [vmem:[%s1 + $0x220] sm:$0xff]
        %v616 = vld [vmem:[%s1 + $0x228] sm:$0xff]
        %v617 = vld [vmem:[%s1 + $0x230] sm:$0xff]
        %v618 = vld [vmem:[%s1 + $0x238] sm:$0xf]
        %v619 = vld [vmem:[%s1 + $0x23c] sm:$0xff]
        %v620 = vld [vmem:[%s1 + $0x244] sm:$0xff]
        %v621 = vld [vmem:[%s1 + $0x24c] sm:$0xff]
        %v622 = vld [vmem:[%s1 + $0x254] sm:$0xff]
        %v623 = vld [vmem:[%s1 + $0x25c] sm:$0xff]
        %v624 = vld [vmem:[%s1 + $0x264] sm:$0xff]
        %v625 = vld [vmem:[%s1 + $0x26c] sm:$0xf]
        %v626 = vld [vmem:[%s1 + $0x270] sm:$0xff]
        %v627 = vld [vmem:[%s1 + $0x278] sm:$0xff]
        %v628 = vld [vmem:[%s1 + $0x280] sm:$0xff]
        %v629 = vld [vmem:[%s1 + $0x288] sm:$0xff]
        %v630 = vld [vmem:[%s1 + $0x290] sm:$0xff]
        %v631 = vld [vmem:[%s1 + $0x298] sm:$0xff]
        %v632 = vld [vmem:[%s1 + $0x2a0] sm:$0xf]
        %v633 = vld [vmem:[%s1 + $0x2a4] sm:$0xff]
        %v634 = vld [vmem:[%s1 + $0x2ac] sm:$0xff]
        %v635 = vld [vmem:[%s1 + $0x2b4] sm:$0xff]
        %v636 = vld [vmem:[%s1 + $0x2bc] sm:$0xff]
        %v637 = vld [vmem:[%s1 + $0x2c4] sm:$0xff]
        %v638 = vld [vmem:[%s1 + $0x2cc] sm:$0xff]
        %v639 = vld [vmem:[%s1 + $0x2d4] sm:$0xf]
        %v640 = vld [vmem:[%s1 + $0x2d8] sm:$0xff]
        %v641 = vld [vmem:[%s1 + $0x2e0] sm:$0xff]
        %v642 = vld [vmem:[%s1 + $0x2e8] sm:$0xff]
        %v643 = vld [vmem:[%s1 + $0x2f0] sm:$0xff]
        %v644 = vld [vmem:[%s1 + $0x2f8] sm:$0xff]
        %v645 = vld [vmem:[%s1 + $0x300] sm:$0xff]
        %v646 = vld [vmem:[%s1 + $0x308] sm:$0xf]
        %v647 = vld [vmem:[%s1 + $0x30c] sm:$0xff]
        %v648 = vld [vmem:[%s1 + $0x314] sm:$0xff]
        %v649 = vld [vmem:[%s1 + $0x31c] sm:$0xff]
        %v650 = vld [vmem:[%s1 + $0x324] sm:$0xff]
        %v651 = vld [vmem:[%s1 + $0x32c] sm:$0xff]
        %v652 = vld [vmem:[%s1 + $0x334] sm:$0xff]
        %v653 = vld [vmem:[%s1 + $0x33c] sm:$0xf]
        %v654 = vld [vmem:[%s1 + $0x340] sm:$0xff]
        %v655 = vld [vmem:[%s1 + $0x348] sm:$0xff]
        %v656 = vld [vmem:[%s1 + $0x350] sm:$0xff]
        %v657 = vld [vmem:[%s1 + $0x358] sm:$0xff]
        %v658 = vld [vmem:[%s1 + $0x360] sm:$0xff]
        %v659 = vld [vmem:[%s1 + $0x368] sm:$0xff]
        %v660 = vld [vmem:[%s1 + $0x370] sm:$0xf]
        %v661 = vld [vmem:[%s1 + $0x374] sm:$0xff]
        %v662 = vld [vmem:[%s1 + $0x37c] sm:$0xff]
        %v663 = vld [vmem:[%s1 + $0x384] sm:$0xff]
        %v664 = vld [vmem:[%s1 + $0x38c] sm:$0xff]
        %v665 = vld [vmem:[%s1 + $0x394] sm:$0xff]
        %v666 = vld [vmem:[%s1 + $0x39c] sm:$0xff]
        %v667 = vld [vmem:[%s1 + $0x3a4] sm:$0xf]
        %v668 = vld [vmem:[%s1 + $0x3a8] sm:$0xff]
        %v669 = vld [vmem:[%s1 + $0x3b0] sm:$0xff]
        %v670 = vld [vmem:[%s1 + $0x3b8] sm:$0xff]
        %v671 = vld [vmem:[%s1 + $0x3c0] sm:$0xff]
        %v672 = vld [vmem:[%s1 + $0x3c8] sm:$0xff]
        %v673 = vld [vmem:[%s1 + $0x3d0] sm:$0xff]
        %v674 = vld [vmem:[%s1 + $0x3d8] sm:$0xf]
        %v675 = vld [vmem:[%s1 + $0x3dc] sm:$0xff]
        %v676 = vld [vmem:[%s1 + $0x3e4] sm:$0xff]
        %v677 = vld [vmem:[%s1 + $0x3ec] sm:$0xff]
        %v678 = vld [vmem:[%s1 + $0x3f4] sm:$0xff]
        %v679 = vld [vmem:[%s1 + $0x3fc] sm:$0xff]
        %v680 = vld [vmem:[%s1 + $0x404] sm:$0xff]
        %v681 = vld [vmem:[%s1 + $0x40c] sm:$0xf]
        %v682 = vld [vmem:[%s1 + $0x410] sm:$0xff]
        %v683 = vld [vmem:[%s1 + $0x418] sm:$0xff]
        %v684 = vld [vmem:[%s1 + $0x420] sm:$0xff]
        %v685 = vld [vmem:[%s1 + $0x428] sm:$0xff]
        %v686 = vld [vmem:[%s1 + $0x430] sm:$0xff]
        %v687 = vld [vmem:[%s1 + $0x438] sm:$0xff]
        %v688 = vld [vmem:[%s1 + $0x440] sm:$0xf]
        %v689 = vld [vmem:[%s1 + $0x444] sm:$0xff]
        %v690 = vld [vmem:[%s1 + $0x44c] sm:$0xff]
        %v691 = vld [vmem:[%s1 + $0x454] sm:$0xff]
        %v692 = vld [vmem:[%s1 + $0x45c] sm:$0xff]
        %v693 = vld [vmem:[%s1 + $0x464] sm:$0xff]
        %v694 = vld [vmem:[%s1 + $0x46c] sm:$0xff]
        %v695 = vld [vmem:[%s1 + $0x474] sm:$0xf]
        %v696 = vld [vmem:[%s1 + $0x478] sm:$0xff]
        %v697 = vld [vmem:[%s1 + $0x480] sm:$0xff]
        %v698 = vld [vmem:[%s1 + $0x488] sm:$0xff]
        %v699 = vld [vmem:[%s1 + $0x490] sm:$0xff]
        %v700 = vld [vmem:[%s1 + $0x498] sm:$0xff]
        %v701 = vld [vmem:[%s1 + $0x4a0] sm:$0xff]
        %v702 = vld [vmem:[%s1 + $0x4a8] sm:$0xf]
        %v703 = vld [vmem:[%s1 + $0x4ac] sm:$0xff]
        %v704 = vld [vmem:[%s1 + $0x4b4] sm:$0xff]
        %v705 = vld [vmem:[%s1 + $0x4bc] sm:$0xff]
        %v706 = vld [vmem:[%s1 + $0x4c4] sm:$0xff]
        %v707 = vld [vmem:[%s1 + $0x4cc] sm:$0xff]
        %v708 = vld [vmem:[%s1 + $0x4d4] sm:$0xff]
        %v709 = vld [vmem:[%s1 + $0x4dc] sm:$0xf]
        %v710 = vld [vmem:[%s1 + $0x4e0] sm:$0xff]
        %v711 = vld [vmem:[%s1 + $0x4e8] sm:$0xff]
        %v712 = vld [vmem:[%s1 + $0x4f0] sm:$0xff]
        %v713 = vld [vmem:[%s1 + $0x4f8] sm:$0xff]
        %v714 = vld [vmem:[%s1 + $0x500] sm:$0xff]
        %v715 = vld [vmem:[%s1 + $0x508] sm:$0xff]
        %v716 = vld [vmem:[%s1 + $0x510] sm:$0xf]
        %v717 = vld [vmem:[%s1 + $0x514] sm:$0xff]
        %v718 = vld [vmem:[%s1 + $0x51c] sm:$0xff]
        %v719 = vld [vmem:[%s1 + $0x524] sm:$0xff]
        %v720 = vld [vmem:[%s1 + $0x52c] sm:$0xff]
        %v721 = vld [vmem:[%s1 + $0x534] sm:$0xff]
        %v722 = vld [vmem:[%s1 + $0x53c] sm:$0xff]
        %v723 = vld [vmem:[%s1 + $0x544] sm:$0xf]
        %v724 = vld [vmem:[%s1 + $0x548] sm:$0xff]
        %v725 = vld [vmem:[%s1 + $0x550] sm:$0xff]
        %v726 = vld [vmem:[%s1 + $0x558] sm:$0xff]
        %v727 = vld [vmem:[%s1 + $0x560] sm:$0xff]
        %v728 = vld [vmem:[%s1 + $0x568] sm:$0xff]
        %v729 = vld [vmem:[%s1 + $0x570] sm:$0xff]
        %v730 = vld [vmem:[%s1 + $0x578] sm:$0xf]
        %v731 = vld [vmem:[%s1 + $0x57c] sm:$0xff]
        %v732 = vld [vmem:[%s1 + $0x584] sm:$0xff]
        %v733 = vld [vmem:[%s1 + $0x58c] sm:$0xff]
        %v734 = vld [vmem:[%s1 + $0x594] sm:$0xff]
        %v735 = vld [vmem:[%s1 + $0x59c] sm:$0xff]
        %v736 = vld [vmem:[%s1 + $0x5a4] sm:$0xff]
        %v737 = vld [vmem:[%s1 + $0x5ac] sm:$0xf]
        %v738 = vld [vmem:[%s1 + $0x5b0] sm:$0xff]
        %v739 = vld [vmem:[%s1 + $0x5b8] sm:$0xff]
        %v740 = vld [vmem:[%s1 + $0x5c0] sm:$0xff]
        %v741 = vld [vmem:[%s1 + $0x5c8] sm:$0xff]
        %v742 = vld [vmem:[%s1 + $0x5d0] sm:$0xff]
        %v743 = vld [vmem:[%s1 + $0x5d8] sm:$0xff]
        %v744 = vld [vmem:[%s1 + $0x5e0] sm:$0xf]
        %v745 = vld [vmem:[%s1 + $0x5e4] sm:$0xff]
        %v746 = vld [vmem:[%s1 + $0x5ec] sm:$0xff]
        %v747 = vld [vmem:[%s1 + $0x5f4] sm:$0xff]
        %v748 = vld [vmem:[%s1 + $0x5fc] sm:$0xff]
        %v749 = vld [vmem:[%s1 + $0x604] sm:$0xff]
        %v750 = vld [vmem:[%s1 + $0x60c] sm:$0xff]
        %v751 = vld [vmem:[%s1 + $0x614] sm:$0xf]
        %v752 = vld [vmem:[%s1 + $0x618] sm:$0xff]
        %v753 = vld [vmem:[%s1 + $0x620] sm:$0xff]
        %v754 = vld [vmem:[%s1 + $0x628] sm:$0xff]
        %v755 = vld [vmem:[%s1 + $0x630] sm:$0xff]
        %v756 = vld [vmem:[%s1 + $0x638] sm:$0xff]
        %v757 = vld [vmem:[%s1 + $0x640] sm:$0xff]
        %v758 = vld [vmem:[%s1 + $0x648] sm:$0xf]
        %v759 = vld [vmem:[%s1 + $0x64c] sm:$0xff]
        %v760 = vld [vmem:[%s1 + $0x654] sm:$0xff]
        %v761 = vld [vmem:[%s1 + $0x65c] sm:$0xff]
        %v762 = vld [vmem:[%s1 + $0x664] sm:$0xff]
        %v763 = vld [vmem:[%s1 + $0x66c] sm:$0xff]
        %v764 = vld [vmem:[%s1 + $0x674] sm:$0xff]
        %v765 = vld [vmem:[%s1 + $0x67c] sm:$0xf]
        %v766 = vld [vmem:[%s1 + $0x680] sm:$0xff]
        %v767 = vld [vmem:[%s1 + $0x688] sm:$0xff]
        %v768 = vld [vmem:[%s1 + $0x690] sm:$0xff]
        %v769 = vld [vmem:[%s1 + $0x698] sm:$0xff]
        %v770 = vld [vmem:[%s1 + $0x6a0] sm:$0xff]
        %v771 = vld [vmem:[%s1 + $0x6a8] sm:$0xff]
        %v772 = vld [vmem:[%s1 + $0x6b0] sm:$0xf]
        %v773 = vld [vmem:[%s1 + $0x6b4] sm:$0xff]
        %v774 = vld [vmem:[%s1 + $0x6bc] sm:$0xff]
        %v775 = vld [vmem:[%s1 + $0x6c4] sm:$0xff]
        %v776 = vld [vmem:[%s1 + $0x6cc] sm:$0xff]
        %v777 = vld [vmem:[%s1 + $0x6d4] sm:$0xff]
        %v778 = vld [vmem:[%s1 + $0x6dc] sm:$0xff]
        %v779 = vld [vmem:[%s1 + $0x6e4] sm:$0xf]
        %v780 = vld [vmem:[%s1 + $0x6e8] sm:$0xff]
        %v781 = vld [vmem:[%s1 + $0x6f0] sm:$0xff]
        %v782 = vld [vmem:[%s1 + $0x6f8] sm:$0xff]
        %v783 = vld [vmem:[%s1 + $0x700] sm:$0xff]
        %v784 = vld [vmem:[%s1 + $0x708] sm:$0xff]
        %v785 = vld [vmem:[%s1 + $0x710] sm:$0xff]
        %v786 = vld [vmem:[%s1 + $0x718] sm:$0xf]
        %v787 = vld [vmem:[%s1 + $0x71c] sm:$0xff]
        %v788 = vld [vmem:[%s1 + $0x724] sm:$0xff]
        %v789 = vld [vmem:[%s1 + $0x72c] sm:$0xff]
        %v790 = vld [vmem:[%s1 + $0x734] sm:$0xff]
        %v791 = vld [vmem:[%s1 + $0x73c] sm:$0xff]
        %v792 = vld [vmem:[%s1 + $0x744] sm:$0xff]
        %v793 = vld [vmem:[%s1 + $0x74c] sm:$0xf]
        %v794 = vld [vmem:[%s1 + $0x750] sm:$0xff]
        %v795 = vld [vmem:[%s1 + $0x758] sm:$0xff]
        %v796 = vld [vmem:[%s1 + $0x760] sm:$0xff]
        %v797 = vld [vmem:[%s1 + $0x768] sm:$0xff]
        %v798 = vld [vmem:[%s1 + $0x770] sm:$0xff]
        %v799 = vld [vmem:[%s1 + $0x778] sm:$0xff]
        %v800 = vld [vmem:[%s1 + $0x780] sm:$0xf]
        %v801 = vld [vmem:[%s1 + $0x784] sm:$0xff]
        %v802 = vld [vmem:[%s1 + $0x78c] sm:$0xff]
        %v803 = vld [vmem:[%s1 + $0x794] sm:$0xff]
        %v804 = vld [vmem:[%s1 + $0x79c] sm:$0xff]
        %v805 = vld [vmem:[%s1 + $0x7a4] sm:$0xff]
        %v806 = vld [vmem:[%s1 + $0x7ac] sm:$0xff]
        %v807 = vld [vmem:[%s1 + $0x7b4] sm:$0xf]
        %v808 = vld [vmem:[%s1 + $0x7b8] sm:$0xff]
        %v809 = vld [vmem:[%s1 + $0x7c0] sm:$0xff]
        %v810 = vld [vmem:[%s1 + $0x7c8] sm:$0xff]
        %v811 = vld [vmem:[%s1 + $0x7d0] sm:$0xff]
        %v812 = vld [vmem:[%s1 + $0x7d8] sm:$0xff]
        %v813 = vld [vmem:[%s1 + $0x7e0] sm:$0xff]
        %v814 = vld [vmem:[%s1 + $0x7e8] sm:$0xf]
        %v815 = vld [vmem:[%s1 + $0x7ec] sm:$0xff]
        %v816 = vld [vmem:[%s1 + $0x7f4] sm:$0xff]
        %v817 = vld [vmem:[%s1 + $0x7fc] sm:$0xff]
        %v818 = vld [vmem:[%s1 + $0x804] sm:$0xff]
        %v819 = vld [vmem:[%s1 + $0x80c] sm:$0xff]
        %v820 = vld [vmem:[%s1 + $0x814] sm:$0xff]
        %v821 = vld [vmem:[%s1 + $0x81c] sm:$0xf]
        %v822 = vld [vmem:[%s1 + $0x820] sm:$0xff]
        %v823 = vld [vmem:[%s1 + $0x828] sm:$0xff]
        %v824 = vld [vmem:[%s1 + $0x830] sm:$0xff]
        %v825 = vld [vmem:[%s1 + $0x838] sm:$0xff]
        %v826 = vld [vmem:[%s1 + $0x840] sm:$0xff]
        %v827 = vld [vmem:[%s1 + $0x848] sm:$0xff]
        %v828 = vld [vmem:[%s1 + $0x850] sm:$0xf]
        %v829 = vld [vmem:[%s1 + $0x854] sm:$0xff]
        %v830 = vld [vmem:[%s1 + $0x85c] sm:$0xff]
        %v831 = vld [vmem:[%s1 + $0x864] sm:$0xff]
        %v832 = vld [vmem:[%s1 + $0x86c] sm:$0xff]
        %v833 = vld [vmem:[%s1 + $0x874] sm:$0xff]
        %v834 = vld [vmem:[%s1 + $0x87c] sm:$0xff]
        %v835 = vld [vmem:[%s1 + $0x884] sm:$0xf]
        %v836 = vld [vmem:[%s1 + $0x888] sm:$0xff]
        %v837 = vld [vmem:[%s1 + $0x890] sm:$0xff]
        %v838 = vld [vmem:[%s1 + $0x898] sm:$0xff]
        %v839 = vld [vmem:[%s1 + $0x8a0] sm:$0xff]
        %v840 = vld [vmem:[%s1 + $0x8a8] sm:$0xff]
        %v841 = vld [vmem:[%s1 + $0x8b0] sm:$0xff]
        %v842 = vld [vmem:[%s1 + $0x8b8] sm:$0xf]
        %v843 = vld [vmem:[%s1 + $0x8bc] sm:$0xff]
        %v844 = vld [vmem:[%s1 + $0x8c4] sm:$0xff]
        %v845 = vld [vmem:[%s1 + $0x8cc] sm:$0xff]
        %v846 = vld [vmem:[%s1 + $0x8d4] sm:$0xff]
        %v847 = vld [vmem:[%s1 + $0x8dc] sm:$0xff]
        %v848 = vld [vmem:[%s1 + $0x8e4] sm:$0xff]
        %v849 = vld [vmem:[%s1 + $0x8ec] sm:$0xf]
        %v850 = vld [vmem:[%s1 + $0x8f0] sm:$0xff]
        %v851 = vld [vmem:[%s1 + $0x8f8] sm:$0xff]
        %v852 = vld [vmem:[%s1 + $0x900] sm:$0xff]
        %v853 = vld [vmem:[%s1 + $0x908] sm:$0xff]
        %v854 = vld [vmem:[%s1 + $0x910] sm:$0xff]
        %v855 = vld [vmem:[%s1 + $0x918] sm:$0xff]
        %v856 = vld [vmem:[%s1 + $0x920] sm:$0xf]
        %v857 = vld [vmem:[%s1 + $0x924] sm:$0xff]
        %v858 = vld [vmem:[%s1 + $0x92c] sm:$0xff]
        %v859 = vld [vmem:[%s1 + $0x934] sm:$0xff]
        %v860 = vld [vmem:[%s1 + $0x93c] sm:$0xff]
        %v861 = vld [vmem:[%s1 + $0x944] sm:$0xff]
        %v862 = vld [vmem:[%s1 + $0x94c] sm:$0xff]
        %v863 = vld [vmem:[%s1 + $0x954] sm:$0xf]
        %v864 = vld [vmem:[%s1 + $0x958] sm:$0xff]
        %v865 = vld [vmem:[%s1 + $0x960] sm:$0xff]
        %v866 = vld [vmem:[%s1 + $0x968] sm:$0xff]
        %v867 = vld [vmem:[%s1 + $0x970] sm:$0xff]
        %v868 = vld [vmem:[%s1 + $0x978] sm:$0xff]
        %v869 = vld [vmem:[%s1 + $0x980] sm:$0xff]
        %v870 = vld [vmem:[%s1 + $0x988] sm:$0xf]
        %v871 = vld [vmem:[%s1 + $0x98c] sm:$0xff]
        %v872 = vld [vmem:[%s1 + $0x994] sm:$0xff]
        %v873 = vld [vmem:[%s1 + $0x99c] sm:$0xff]
        %v874 = vld [vmem:[%s1 + $0x9a4] sm:$0xff]
        %v875 = vld [vmem:[%s1 + $0x9ac] sm:$0xff]
        %v876 = vld [vmem:[%s1 + $0x9b4] sm:$0xff]
        %v877 = vld [vmem:[%s1 + $0x9bc] sm:$0xf]
        %v878 = vld [vmem:[%s1 + $0x9c0] sm:$0xff]
        %v879 = vld [vmem:[%s1 + $0x9c8] sm:$0xff]
        %v880 = vld [vmem:[%s1 + $0x9d0] sm:$0xff]
        %v881 = vld [vmem:[%s1 + $0x9d8] sm:$0xff]
        %v882 = vld [vmem:[%s1 + $0x9e0] sm:$0xff]
        %v883 = vld [vmem:[%s1 + $0x9e8] sm:$0xff]
        %v884 = vld [vmem:[%s1 + $0x9f0] sm:$0xf]
        %v885 = vld [vmem:[%s1 + $0x9f4] sm:$0xff]
        %v886 = vld [vmem:[%s1 + $0x9fc] sm:$0xff]
        %v887 = vld [vmem:[%s1 + $0xa04] sm:$0xff]
        %v888 = vld [vmem:[%s1 + $0xa0c] sm:$0xff]
        %v889 = vld [vmem:[%s1 + $0xa14] sm:$0xff]
        %v890 = vld [vmem:[%s1 + $0xa1c] sm:$0xff]
        %v891 = vld [vmem:[%s1 + $0xa24] sm:$0xf]
        %v892 = vld [vmem:[%s1 + $0xa28] sm:$0xff]
        %v893 = vld [vmem:[%s1 + $0xa30] sm:$0xff]
        %v894 = vld [vmem:[%s1 + $0xa38] sm:$0xff]
        %v895 = vld [vmem:[%s1 + $0xa40] sm:$0xff]
        %v896 = vld [vmem:[%s1 + $0xa48] sm:$0xff]
        %v897 = vld [vmem:[%s1 + $0xa50] sm:$0xff]
        %v898 = vld [vmem:[%s1 + $0xa58] sm:$0xf]
        %v899 = vld [vmem:[%s1 + $0xa5c] sm:$0xff]
        %v900 = vld [vmem:[%s1 + $0xa64] sm:$0xff]
        %v901 = vld [vmem:[%s1 + $0xa6c] sm:$0xff]
        %v902 = vld [vmem:[%s1 + $0xa74] sm:$0xff]
        %v903 = vld [vmem:[%s1 + $0xa7c] sm:$0xff]
        %v904 = vld [vmem:[%s1 + $0xa84] sm:$0xff]
        %v905 = vld [vmem:[%s1 + $0xa8c] sm:$0xf]
        %v906 = vld [vmem:[%s1 + $0xa90] sm:$0xff]
        %v907 = vld [vmem:[%s1 + $0xa98] sm:$0xff]
        %v908 = vld [vmem:[%s1 + $0xaa0] sm:$0xff]
        %v909 = vld [vmem:[%s1 + $0xaa8] sm:$0xff]
        %v910 = vld [vmem:[%s1 + $0xab0] sm:$0xff]
        %v911 = vld [vmem:[%s1 + $0xab8] sm:$0xff]
        %v912 = vld [vmem:[%s1 + $0xac0] sm:$0xf]
        %v913 = vld [vmem:[%s1 + $0xac4] sm:$0xff]
        %v914 = vld [vmem:[%s1 + $0xacc] sm:$0xff]
        %v915 = vld [vmem:[%s1 + $0xad4] sm:$0xff]
        %v916 = vld [vmem:[%s1 + $0xadc] sm:$0xff]
        %v917 = vld [vmem:[%s1 + $0xae4] sm:$0xff]
        %v918 = vld [vmem:[%s1 + $0xaec] sm:$0xff]
        %v919 = vld [vmem:[%s1 + $0xaf4] sm:$0xf]
        %v920 = vld [vmem:[%s1 + $0xaf8] sm:$0xff]
        %v921 = vld [vmem:[%s1 + $0xb00] sm:$0xff]
        %v922 = vld [vmem:[%s1 + $0xb08] sm:$0xff]
        %v923 = vld [vmem:[%s1 + $0xb10] sm:$0xff]
        %v924 = vld [vmem:[%s1 + $0xb18] sm:$0xff]
        %v925 = vld [vmem:[%s1 + $0xb20] sm:$0xff]
        %v926 = vld [vmem:[%s1 + $0xb28] sm:$0xf]
        %v927 = vld [vmem:[%s1 + $0xb2c] sm:$0xff]
        %v928 = vld [vmem:[%s1 + $0xb34] sm:$0xff]
        %v929 = vld [vmem:[%s1 + $0xb3c] sm:$0xff]
        %v930 = vld [vmem:[%s1 + $0xb44] sm:$0xff]
        %v931 = vld [vmem:[%s1 + $0xb4c] sm:$0xff]
        %v932 = vld [vmem:[%s1 + $0xb54] sm:$0xff]
        %v933 = vld [vmem:[%s1 + $0xb5c] sm:$0xf]
        %v1326 = vunpack.c.l.b16 %v542
        %v1327 = vunpack.c.h.b16 %v542
        %v1328 = vunpack.c.l.b16 %v543
        %v1329 = vunpack.c.h.b16 %v543
        %v1330 = vunpack.c.l.b16 %v544
        %v1331 = vunpack.c.h.b16 %v544
        %v1332 = vunpack.c.l.b16 %v545
        %v1333 = vunpack.c.h.b16 %v545
        %v1334 = vunpack.c.l.b16 %v546
        %v1335 = vunpack.c.h.b16 %v546
        %v1336 = vunpack.c.l.b16 %v547
        %v1337 = vunpack.c.h.b16 %v547
        %v1338 = vunpack.c.l.b16 %v548
        %v1339 = vunpack.c.l.b16 %v549
        %v1340 = vunpack.c.h.b16 %v549
        %v1341 = vunpack.c.l.b16 %v550
        %v1342 = vunpack.c.h.b16 %v550
        %v1343 = vunpack.c.l.b16 %v551
        %v1344 = vunpack.c.h.b16 %v551
        %v1345 = vunpack.c.l.b16 %v552
        %v1346 = vunpack.c.h.b16 %v552
        %v1347 = vunpack.c.l.b16 %v553
        %v1348 = vunpack.c.h.b16 %v553
        %v1349 = vunpack.c.l.b16 %v554
        %v1350 = vunpack.c.h.b16 %v554
        %v1351 = vunpack.c.l.b16 %v555
        %v1352 = vunpack.c.l.b16 %v556
        %v1353 = vunpack.c.h.b16 %v556
        %v1354 = vunpack.c.l.b16 %v557
        %v1355 = vunpack.c.h.b16 %v557
        %v1356 = vunpack.c.l.b16 %v558
        %v1357 = vunpack.c.h.b16 %v558
        %v1358 = vunpack.c.l.b16 %v559
        %v1359 = vunpack.c.h.b16 %v559
        %v1360 = vunpack.c.l.b16 %v560
        %v1361 = vunpack.c.h.b16 %v560
        %v1362 = vunpack.c.l.b16 %v561
        %v1363 = vunpack.c.h.b16 %v561
        %v1364 = vunpack.c.l.b16 %v562
        %v1365 = vunpack.c.l.b16 %v563
        %v1366 = vunpack.c.h.b16 %v563
        %v1367 = vunpack.c.l.b16 %v564
        %v1368 = vunpack.c.h.b16 %v564
        %v1369 = vunpack.c.l.b16 %v565
        %v1370 = vunpack.c.h.b16 %v565
        %v1371 = vunpack.c.l.b16 %v566
        %v1372 = vunpack.c.h.b16 %v566
        %v1373 = vunpack.c.l.b16 %v567
        %v1374 = vunpack.c.h.b16 %v567
        %v1375 = vunpack.c.l.b16 %v568
        %v1376 = vunpack.c.h.b16 %v568
        %v1377 = vunpack.c.l.b16 %v569
        %v1378 = vunpack.c.l.b16 %v570
        %v1379 = vunpack.c.h.b16 %v570
        %v1380 = vunpack.c.l.b16 %v571
        %v1381 = vunpack.c.h.b16 %v571
        %v1382 = vunpack.c.l.b16 %v572
        %v1383 = vunpack.c.h.b16 %v572
        %v1384 = vunpack.c.l.b16 %v573
        %v1385 = vunpack.c.h.b16 %v573
        %v1386 = vunpack.c.l.b16 %v574
        %v1387 = vunpack.c.h.b16 %v574
        %v1388 = vunpack.c.l.b16 %v575
        %v1389 = vunpack.c.h.b16 %v575
        %v1390 = vunpack.c.l.b16 %v576
        %v1391 = vunpack.c.l.b16 %v577
        %v1392 = vunpack.c.h.b16 %v577
        %v1393 = vunpack.c.l.b16 %v578
        %v1394 = vunpack.c.h.b16 %v578
        %v1395 = vunpack.c.l.b16 %v579
        %v1396 = vunpack.c.h.b16 %v579
        %v1397 = vunpack.c.l.b16 %v580
        %v1398 = vunpack.c.h.b16 %v580
        %v1399 = vunpack.c.l.b16 %v581
        %v1400 = vunpack.c.h.b16 %v581
        %v1401 = vunpack.c.l.b16 %v582
        %v1402 = vunpack.c.h.b16 %v582
        %v1403 = vunpack.c.l.b16 %v583
        %v1404 = vunpack.c.l.b16 %v584
        %v1405 = vunpack.c.h.b16 %v584
        %v1406 = vunpack.c.l.b16 %v585
        %v1407 = vunpack.c.h.b16 %v585
        %v1408 = vunpack.c.l.b16 %v586
        %v1409 = vunpack.c.h.b16 %v586
        %v1410 = vunpack.c.l.b16 %v587
        %v1411 = vunpack.c.h.b16 %v587
        %v1412 = vunpack.c.l.b16 %v588
        %v1413 = vunpack.c.h.b16 %v588
        %v1414 = vunpack.c.l.b16 %v589
        %v1415 = vunpack.c.h.b16 %v589
        %v1416 = vunpack.c.l.b16 %v590
        %v1417 = vunpack.c.l.b16 %v591
        %v1418 = vunpack.c.h.b16 %v591
        %v1419 = vunpack.c.l.b16 %v592
        %v1420 = vunpack.c.h.b16 %v592
        %v1421 = vunpack.c.l.b16 %v593
        %v1422 = vunpack.c.h.b16 %v593
        %v1423 = vunpack.c.l.b16 %v594
        %v1424 = vunpack.c.h.b16 %v594
        %v1425 = vunpack.c.l.b16 %v595
        %v1426 = vunpack.c.h.b16 %v595
        %v1427 = vunpack.c.l.b16 %v596
        %v1428 = vunpack.c.h.b16 %v596
        %v1429 = vunpack.c.l.b16 %v597
        %v1430 = vunpack.c.l.b16 %v598
        %v1431 = vunpack.c.h.b16 %v598
        %v1432 = vunpack.c.l.b16 %v599
        %v1433 = vunpack.c.h.b16 %v599
        %v1434 = vunpack.c.l.b16 %v600
        %v1435 = vunpack.c.h.b16 %v600
        %v1436 = vunpack.c.l.b16 %v601
        %v1437 = vunpack.c.h.b16 %v601
        %v1438 = vunpack.c.l.b16 %v602
        %v1439 = vunpack.c.h.b16 %v602
        %v1440 = vunpack.c.l.b16 %v603
        %v1441 = vunpack.c.h.b16 %v603
        %v1442 = vunpack.c.l.b16 %v604
        %v1443 = vunpack.c.l.b16 %v605
        %v1444 = vunpack.c.h.b16 %v605
        %v1445 = vunpack.c.l.b16 %v606
        %v1446 = vunpack.c.h.b16 %v606
        %v1447 = vunpack.c.l.b16 %v607
        %v1448 = vunpack.c.h.b16 %v607
        %v1449 = vunpack.c.l.b16 %v608
        %v1450 = vunpack.c.h.b16 %v608
        %v1451 = vunpack.c.l.b16 %v609
        %v1452 = vunpack.c.h.b16 %v609
        %v1453 = vunpack.c.l.b16 %v610
        %v1454 = vunpack.c.h.b16 %v610
        %v1455 = vunpack.c.l.b16 %v611
        %v1456 = vunpack.c.l.b16 %v612
        %v1457 = vunpack.c.h.b16 %v612
        %v1458 = vunpack.c.l.b16 %v613
        %v1459 = vunpack.c.h.b16 %v613
        %v1460 = vunpack.c.l.b16 %v614
        %v1461 = vunpack.c.h.b16 %v614
        %v1462 = vunpack.c.l.b16 %v615
        %v1463 = vunpack.c.h.b16 %v615
        %v1464 = vunpack.c.l.b16 %v616
        %v1465 = vunpack.c.h.b16 %v616
        %v1466 = vunpack.c.l.b16 %v617
        %v1467 = vunpack.c.h.b16 %v617
        %v1468 = vunpack.c.l.b16 %v618
        %v1469 = vunpack.c.l.b16 %v619
        %v1470 = vunpack.c.h.b16 %v619
        %v1471 = vunpack.c.l.b16 %v620
        %v1472 = vunpack.c.h.b16 %v620
        %v1473 = vunpack.c.l.b16 %v621
        %v1474 = vunpack.c.h.b16 %v621
        %v1475 = vunpack.c.l.b16 %v622
        %v1476 = vunpack.c.h.b16 %v622
        %v1477 = vunpack.c.l.b16 %v623
        %v1478 = vunpack.c.h.b16 %v623
        %v1479 = vunpack.c.l.b16 %v624
        %v1480 = vunpack.c.h.b16 %v624
        %v1481 = vunpack.c.l.b16 %v625
        %v1482 = vunpack.c.l.b16 %v626
        %v1483 = vunpack.c.h.b16 %v626
        %v1484 = vunpack.c.l.b16 %v627
        %v1485 = vunpack.c.h.b16 %v627
        %v1486 = vunpack.c.l.b16 %v628
        %v1487 = vunpack.c.h.b16 %v628
        %v1488 = vunpack.c.l.b16 %v629
        %v1489 = vunpack.c.h.b16 %v629
        %v1490 = vunpack.c.l.b16 %v630
        %v1491 = vunpack.c.h.b16 %v630
        %v1492 = vunpack.c.l.b16 %v631
        %v1493 = vunpack.c.h.b16 %v631
        %v1494 = vunpack.c.l.b16 %v632
        %v1495 = vunpack.c.l.b16 %v633
        %v1496 = vunpack.c.h.b16 %v633
        %v1497 = vunpack.c.l.b16 %v634
        %v1498 = vunpack.c.h.b16 %v634
        %v1499 = vunpack.c.l.b16 %v635
        %v1500 = vunpack.c.h.b16 %v635
        %v1501 = vunpack.c.l.b16 %v636
        %v1502 = vunpack.c.h.b16 %v636
        %v1503 = vunpack.c.l.b16 %v637
        %v1504 = vunpack.c.h.b16 %v637
        %v1505 = vunpack.c.l.b16 %v638
        %v1506 = vunpack.c.h.b16 %v638
        %v1507 = vunpack.c.l.b16 %v639
        %v1508 = vunpack.c.l.b16 %v640
        %v1509 = vunpack.c.h.b16 %v640
        %v1510 = vunpack.c.l.b16 %v641
        %v1511 = vunpack.c.h.b16 %v641
        %v1512 = vunpack.c.l.b16 %v642
        %v1513 = vunpack.c.h.b16 %v642
        %v1514 = vunpack.c.l.b16 %v643
        %v1515 = vunpack.c.h.b16 %v643
        %v1516 = vunpack.c.l.b16 %v644
        %v1517 = vunpack.c.h.b16 %v644
        %v1518 = vunpack.c.l.b16 %v645
        %v1519 = vunpack.c.h.b16 %v645
        %v1520 = vunpack.c.l.b16 %v646
        %v1521 = vunpack.c.l.b16 %v647
        %v1522 = vunpack.c.h.b16 %v647
        %v1523 = vunpack.c.l.b16 %v648
        %v1524 = vunpack.c.h.b16 %v648
        %v1525 = vunpack.c.l.b16 %v649
        %v1526 = vunpack.c.h.b16 %v649
        %v1527 = vunpack.c.l.b16 %v650
        %v1528 = vunpack.c.h.b16 %v650
        %v1529 = vunpack.c.l.b16 %v651
        %v1530 = vunpack.c.h.b16 %v651
        %v1531 = vunpack.c.l.b16 %v652
        %v1532 = vunpack.c.h.b16 %v652
        %v1533 = vunpack.c.l.b16 %v653
        %v1534 = vunpack.c.l.b16 %v654
        %v1535 = vunpack.c.h.b16 %v654
        %v1536 = vunpack.c.l.b16 %v655
        %v1537 = vunpack.c.h.b16 %v655
        %v1538 = vunpack.c.l.b16 %v656
        %v1539 = vunpack.c.h.b16 %v656
        %v1540 = vunpack.c.l.b16 %v657
        %v1541 = vunpack.c.h.b16 %v657
        %v1542 = vunpack.c.l.b16 %v658
        %v1543 = vunpack.c.h.b16 %v658
        %v1544 = vunpack.c.l.b16 %v659
        %v1545 = vunpack.c.h.b16 %v659
        %v1546 = vunpack.c.l.b16 %v660
        %v1547 = vunpack.c.l.b16 %v661
        %v1548 = vunpack.c.h.b16 %v661
        %v1549 = vunpack.c.l.b16 %v662
        %v1550 = vunpack.c.h.b16 %v662
        %v1551 = vunpack.c.l.b16 %v663
        %v1552 = vunpack.c.h.b16 %v663
        %v1553 = vunpack.c.l.b16 %v664
        %v1554 = vunpack.c.h.b16 %v664
        %v1555 = vunpack.c.l.b16 %v665
        %v1556 = vunpack.c.h.b16 %v665
        %v1557 = vunpack.c.l.b16 %v666
        %v1558 = vunpack.c.h.b16 %v666
        %v1559 = vunpack.c.l.b16 %v667
        %v1560 = vunpack.c.l.b16 %v668
        %v1561 = vunpack.c.h.b16 %v668
        %v1562 = vunpack.c.l.b16 %v669
        %v1563 = vunpack.c.h.b16 %v669
        %v1564 = vunpack.c.l.b16 %v670
        %v1565 = vunpack.c.h.b16 %v670
        %v1566 = vunpack.c.l.b16 %v671
        %v1567 = vunpack.c.h.b16 %v671
        %v1568 = vunpack.c.l.b16 %v672
        %v1569 = vunpack.c.h.b16 %v672
        %v1570 = vunpack.c.l.b16 %v673
        %v1571 = vunpack.c.h.b16 %v673
        %v1572 = vunpack.c.l.b16 %v674
        %v1573 = vunpack.c.l.b16 %v675
        %v1574 = vunpack.c.h.b16 %v675
        %v1575 = vunpack.c.l.b16 %v676
        %v1576 = vunpack.c.h.b16 %v676
        %v1577 = vunpack.c.l.b16 %v677
        %v1578 = vunpack.c.h.b16 %v677
        %v1579 = vunpack.c.l.b16 %v678
        %v1580 = vunpack.c.h.b16 %v678
        %v1581 = vunpack.c.l.b16 %v679
        %v1582 = vunpack.c.h.b16 %v679
        %v1583 = vunpack.c.l.b16 %v680
        %v1584 = vunpack.c.h.b16 %v680
        %v1585 = vunpack.c.l.b16 %v681
        %v1586 = vunpack.c.l.b16 %v682
        %v1587 = vunpack.c.h.b16 %v682
        %v1588 = vunpack.c.l.b16 %v683
        %v1589 = vunpack.c.h.b16 %v683
        %v1590 = vunpack.c.l.b16 %v684
        %v1591 = vunpack.c.h.b16 %v684
        %v1592 = vunpack.c.l.b16 %v685
        %v1593 = vunpack.c.h.b16 %v685
        %v1594 = vunpack.c.l.b16 %v686
        %v1595 = vunpack.c.h.b16 %v686
        %v1596 = vunpack.c.l.b16 %v687
        %v1597 = vunpack.c.h.b16 %v687
        %v1598 = vunpack.c.l.b16 %v688
        %v1599 = vunpack.c.l.b16 %v689
        %v1600 = vunpack.c.h.b16 %v689
        %v1601 = vunpack.c.l.b16 %v690
        %v1602 = vunpack.c.h.b16 %v690
        %v1603 = vunpack.c.l.b16 %v691
        %v1604 = vunpack.c.h.b16 %v691
        %v1605 = vunpack.c.l.b16 %v692
        %v1606 = vunpack.c.h.b16 %v692
        %v1607 = vunpack.c.l.b16 %v693
        %v1608 = vunpack.c.h.b16 %v693
        %v1609 = vunpack.c.l.b16 %v694
        %v1610 = vunpack.c.h.b16 %v694
        %v1611 = vunpack.c.l.b16 %v695
        %v1612 = vunpack.c.l.b16 %v696
        %v1613 = vunpack.c.h.b16 %v696
        %v1614 = vunpack.c.l.b16 %v697
        %v1615 = vunpack.c.h.b16 %v697
        %v1616 = vunpack.c.l.b16 %v698
        %v1617 = vunpack.c.h.b16 %v698
        %v1618 = vunpack.c.l.b16 %v699
        %v1619 = vunpack.c.h.b16 %v699
        %v1620 = vunpack.c.l.b16 %v700
        %v1621 = vunpack.c.h.b16 %v700
        %v1622 = vunpack.c.l.b16 %v701
        %v1623 = vunpack.c.h.b16 %v701
        %v1624 = vunpack.c.l.b16 %v702
        %v1625 = vunpack.c.l.b16 %v703
        %v1626 = vunpack.c.h.b16 %v703
        %v1627 = vunpack.c.l.b16 %v704
        %v1628 = vunpack.c.h.b16 %v704
        %v1629 = vunpack.c.l.b16 %v705
        %v1630 = vunpack.c.h.b16 %v705
        %v1631 = vunpack.c.l.b16 %v706
        %v1632 = vunpack.c.h.b16 %v706
        %v1633 = vunpack.c.l.b16 %v707
        %v1634 = vunpack.c.h.b16 %v707
        %v1635 = vunpack.c.l.b16 %v708
        %v1636 = vunpack.c.h.b16 %v708
        %v1637 = vunpack.c.l.b16 %v709
        %v1638 = vunpack.c.l.b16 %v710
        %v1639 = vunpack.c.h.b16 %v710
        %v1640 = vunpack.c.l.b16 %v711
        %v1641 = vunpack.c.h.b16 %v711
        %v1642 = vunpack.c.l.b16 %v712
        %v1643 = vunpack.c.h.b16 %v712
        %v1644 = vunpack.c.l.b16 %v713
        %v1645 = vunpack.c.h.b16 %v713
        %v1646 = vunpack.c.l.b16 %v714
        %v1647 = vunpack.c.h.b16 %v714
        %v1648 = vunpack.c.l.b16 %v715
        %v1649 = vunpack.c.h.b16 %v715
        %v1650 = vunpack.c.l.b16 %v716
        %v1651 = vunpack.c.l.b16 %v717
        %v1652 = vunpack.c.h.b16 %v717
        %v1653 = vunpack.c.l.b16 %v718
        %v1654 = vunpack.c.h.b16 %v718
        %v1655 = vunpack.c.l.b16 %v719
        %v1656 = vunpack.c.h.b16 %v719
        %v1657 = vunpack.c.l.b16 %v720
        %v1658 = vunpack.c.h.b16 %v720
        %v1659 = vunpack.c.l.b16 %v721
        %v1660 = vunpack.c.h.b16 %v721
        %v1661 = vunpack.c.l.b16 %v722
        %v1662 = vunpack.c.h.b16 %v722
        %v1663 = vunpack.c.l.b16 %v723
        %v1664 = vunpack.c.l.b16 %v724
        %v1665 = vunpack.c.h.b16 %v724
        %v1666 = vunpack.c.l.b16 %v725
        %v1667 = vunpack.c.h.b16 %v725
        %v1668 = vunpack.c.l.b16 %v726
        %v1669 = vunpack.c.h.b16 %v726
        %v1670 = vunpack.c.l.b16 %v727
        %v1671 = vunpack.c.h.b16 %v727
        %v1672 = vunpack.c.l.b16 %v728
        %v1673 = vunpack.c.h.b16 %v728
        %v1674 = vunpack.c.l.b16 %v729
        %v1675 = vunpack.c.h.b16 %v729
        %v1676 = vunpack.c.l.b16 %v730
        %v1677 = vunpack.c.l.b16 %v731
        %v1678 = vunpack.c.h.b16 %v731
        %v1679 = vunpack.c.l.b16 %v732
        %v1680 = vunpack.c.h.b16 %v732
        %v1681 = vunpack.c.l.b16 %v733
        %v1682 = vunpack.c.h.b16 %v733
        %v1683 = vunpack.c.l.b16 %v734
        %v1684 = vunpack.c.h.b16 %v734
        %v1685 = vunpack.c.l.b16 %v735
        %v1686 = vunpack.c.h.b16 %v735
        %v1687 = vunpack.c.l.b16 %v736
        %v1688 = vunpack.c.h.b16 %v736
        %v1689 = vunpack.c.l.b16 %v737
        %v1690 = vunpack.c.l.b16 %v738
        %v1691 = vunpack.c.h.b16 %v738
        %v1692 = vunpack.c.l.b16 %v739
        %v1693 = vunpack.c.h.b16 %v739
        %v1694 = vunpack.c.l.b16 %v740
        %v1695 = vunpack.c.h.b16 %v740
        %v1696 = vunpack.c.l.b16 %v741
        %v1697 = vunpack.c.h.b16 %v741
        %v1698 = vunpack.c.l.b16 %v742
        %v1699 = vunpack.c.h.b16 %v742
        %v1700 = vunpack.c.l.b16 %v743
        %v1701 = vunpack.c.h.b16 %v743
        %v1702 = vunpack.c.l.b16 %v744
        %v1703 = vunpack.c.l.b16 %v745
        %v1704 = vunpack.c.h.b16 %v745
        %v1705 = vunpack.c.l.b16 %v746
        %v1706 = vunpack.c.h.b16 %v746
        %v1707 = vunpack.c.l.b16 %v747
        %v1708 = vunpack.c.h.b16 %v747
        %v1709 = vunpack.c.l.b16 %v748
        %v1710 = vunpack.c.h.b16 %v748
        %v1711 = vunpack.c.l.b16 %v749
        %v1712 = vunpack.c.h.b16 %v749
        %v1713 = vunpack.c.l.b16 %v750
        %v1714 = vunpack.c.h.b16 %v750
        %v1715 = vunpack.c.l.b16 %v751
        %v1716 = vunpack.c.l.b16 %v752
        %v1717 = vunpack.c.h.b16 %v752
        %v1718 = vunpack.c.l.b16 %v753
        %v1719 = vunpack.c.h.b16 %v753
        %v1720 = vunpack.c.l.b16 %v754
        %v1721 = vunpack.c.h.b16 %v754
        %v1722 = vunpack.c.l.b16 %v755
        %v1723 = vunpack.c.h.b16 %v755
        %v1724 = vunpack.c.l.b16 %v756
        %v1725 = vunpack.c.h.b16 %v756
        %v1726 = vunpack.c.l.b16 %v757
        %v1727 = vunpack.c.h.b16 %v757
        %v1728 = vunpack.c.l.b16 %v758
        %v1729 = vunpack.c.l.b16 %v759
        %v1730 = vunpack.c.h.b16 %v759
        %v1731 = vunpack.c.l.b16 %v760
        %v1732 = vunpack.c.h.b16 %v760
        %v1733 = vunpack.c.l.b16 %v761
        %v1734 = vunpack.c.h.b16 %v761
        %v1735 = vunpack.c.l.b16 %v762
        %v1736 = vunpack.c.h.b16 %v762
        %v1737 = vunpack.c.l.b16 %v763
        %v1738 = vunpack.c.h.b16 %v763
        %v1739 = vunpack.c.l.b16 %v764
        %v1740 = vunpack.c.h.b16 %v764
        %v1741 = vunpack.c.l.b16 %v765
        %v1742 = vunpack.c.l.b16 %v766
        %v1743 = vunpack.c.h.b16 %v766
        %v1744 = vunpack.c.l.b16 %v767
        %v1745 = vunpack.c.h.b16 %v767
        %v1746 = vunpack.c.l.b16 %v768
        %v1747 = vunpack.c.h.b16 %v768
        %v1748 = vunpack.c.l.b16 %v769
        %v1749 = vunpack.c.h.b16 %v769
        %v1750 = vunpack.c.l.b16 %v770
        %v1751 = vunpack.c.h.b16 %v770
        %v1752 = vunpack.c.l.b16 %v771
        %v1753 = vunpack.c.h.b16 %v771
        %v1754 = vunpack.c.l.b16 %v772
        %v1755 = vunpack.c.l.b16 %v773
        %v1756 = vunpack.c.h.b16 %v773
        %v1757 = vunpack.c.l.b16 %v774
        %v1758 = vunpack.c.h.b16 %v774
        %v1759 = vunpack.c.l.b16 %v775
        %v1760 = vunpack.c.h.b16 %v775
        %v1761 = vunpack.c.l.b16 %v776
        %v1762 = vunpack.c.h.b16 %v776
        %v1763 = vunpack.c.l.b16 %v777
        %v1764 = vunpack.c.h.b16 %v777
        %v1765 = vunpack.c.l.b16 %v778
        %v1766 = vunpack.c.h.b16 %v778
        %v1767 = vunpack.c.l.b16 %v779
        %v1768 = vunpack.c.l.b16 %v780
        %v1769 = vunpack.c.h.b16 %v780
        %v1770 = vunpack.c.l.b16 %v781
        %v1771 = vunpack.c.h.b16 %v781
        %v1772 = vunpack.c.l.b16 %v782
        %v1773 = vunpack.c.h.b16 %v782
        %v1774 = vunpack.c.l.b16 %v783
        %v1775 = vunpack.c.h.b16 %v783
        %v1776 = vunpack.c.l.b16 %v784
        %v1777 = vunpack.c.h.b16 %v784
        %v1778 = vunpack.c.l.b16 %v785
        %v1779 = vunpack.c.h.b16 %v785
        %v1780 = vunpack.c.l.b16 %v786
        %v1781 = vunpack.c.l.b16 %v787
        %v1782 = vunpack.c.h.b16 %v787
        %v1783 = vunpack.c.l.b16 %v788
        %v1784 = vunpack.c.h.b16 %v788
        %v1785 = vunpack.c.l.b16 %v789
        %v1786 = vunpack.c.h.b16 %v789
        %v1787 = vunpack.c.l.b16 %v790
        %v1788 = vunpack.c.h.b16 %v790
        %v1789 = vunpack.c.l.b16 %v791
        %v1790 = vunpack.c.h.b16 %v791
        %v1791 = vunpack.c.l.b16 %v792
        %v1792 = vunpack.c.h.b16 %v792
        %v1793 = vunpack.c.l.b16 %v793
        %v1794 = vunpack.c.l.b16 %v794
        %v1795 = vunpack.c.h.b16 %v794
        %v1796 = vunpack.c.l.b16 %v795
        %v1797 = vunpack.c.h.b16 %v795
        %v1798 = vunpack.c.l.b16 %v796
        %v1799 = vunpack.c.h.b16 %v796
        %v1800 = vunpack.c.l.b16 %v797
        %v1801 = vunpack.c.h.b16 %v797
        %v1802 = vunpack.c.l.b16 %v798
        %v1803 = vunpack.c.h.b16 %v798
        %v1804 = vunpack.c.l.b16 %v799
        %v1805 = vunpack.c.h.b16 %v799
        %v1806 = vunpack.c.l.b16 %v800
        %v1807 = vunpack.c.l.b16 %v801
        %v1808 = vunpack.c.h.b16 %v801
        %v1809 = vunpack.c.l.b16 %v802
        %v1810 = vunpack.c.h.b16 %v802
        %v1811 = vunpack.c.l.b16 %v803
        %v1812 = vunpack.c.h.b16 %v803
        %v1813 = vunpack.c.l.b16 %v804
        %v1814 = vunpack.c.h.b16 %v804
        %v1815 = vunpack.c.l.b16 %v805
        %v1816 = vunpack.c.h.b16 %v805
        %v1817 = vunpack.c.l.b16 %v806
        %v1818 = vunpack.c.h.b16 %v806
        %v1819 = vunpack.c.l.b16 %v807
        %v1820 = vunpack.c.l.b16 %v808
        %v1821 = vunpack.c.h.b16 %v808
        %v1822 = vunpack.c.l.b16 %v809
        %v1823 = vunpack.c.h.b16 %v809
        %v1824 = vunpack.c.l.b16 %v810
        %v1825 = vunpack.c.h.b16 %v810
        %v1826 = vunpack.c.l.b16 %v811
        %v1827 = vunpack.c.h.b16 %v811
        %v1828 = vunpack.c.l.b16 %v812
        %v1829 = vunpack.c.h.b16 %v812
        %v1830 = vunpack.c.l.b16 %v813
        %v1831 = vunpack.c.h.b16 %v813
        %v1832 = vunpack.c.l.b16 %v814
        %v1833 = vunpack.c.l.b16 %v815
        %v1834 = vunpack.c.h.b16 %v815
        %v1835 = vunpack.c.l.b16 %v816
        %v1836 = vunpack.c.h.b16 %v816
        %v1837 = vunpack.c.l.b16 %v817
        %v1838 = vunpack.c.h.b16 %v817
        %v1839 = vunpack.c.l.b16 %v818
        %v1840 = vunpack.c.h.b16 %v818
        %v1841 = vunpack.c.l.b16 %v819
        %v1842 = vunpack.c.h.b16 %v819
        %v1843 = vunpack.c.l.b16 %v820
        %v1844 = vunpack.c.h.b16 %v820
        %v1845 = vunpack.c.l.b16 %v821
        %v1846 = vunpack.c.l.b16 %v822
        %v1847 = vunpack.c.h.b16 %v822
        %v1848 = vunpack.c.l.b16 %v823
        %v1849 = vunpack.c.h.b16 %v823
        %v1850 = vunpack.c.l.b16 %v824
        %v1851 = vunpack.c.h.b16 %v824
        %v1852 = vunpack.c.l.b16 %v825
        %v1853 = vunpack.c.h.b16 %v825
        %v1854 = vunpack.c.l.b16 %v826
        %v1855 = vunpack.c.h.b16 %v826
        %v1856 = vunpack.c.l.b16 %v827
        %v1857 = vunpack.c.h.b16 %v827
        %v1858 = vunpack.c.l.b16 %v828
        %v1859 = vunpack.c.l.b16 %v829
        %v1860 = vunpack.c.h.b16 %v829
        %v1861 = vunpack.c.l.b16 %v830
        %v1862 = vunpack.c.h.b16 %v830
        %v1863 = vunpack.c.l.b16 %v831
        %v1864 = vunpack.c.h.b16 %v831
        %v1865 = vunpack.c.l.b16 %v832
        %v1866 = vunpack.c.h.b16 %v832
        %v1867 = vunpack.c.l.b16 %v833
        %v1868 = vunpack.c.h.b16 %v833
        %v1869 = vunpack.c.l.b16 %v834
        %v1870 = vunpack.c.h.b16 %v834
        %v1871 = vunpack.c.l.b16 %v835
        %v1872 = vunpack.c.l.b16 %v836
        %v1873 = vunpack.c.h.b16 %v836
        %v1874 = vunpack.c.l.b16 %v837
        %v1875 = vunpack.c.h.b16 %v837
        %v1876 = vunpack.c.l.b16 %v838
        %v1877 = vunpack.c.h.b16 %v838
        %v1878 = vunpack.c.l.b16 %v839
        %v1879 = vunpack.c.h.b16 %v839
        %v1880 = vunpack.c.l.b16 %v840
        %v1881 = vunpack.c.h.b16 %v840
        %v1882 = vunpack.c.l.b16 %v841
        %v1883 = vunpack.c.h.b16 %v841
        %v1884 = vunpack.c.l.b16 %v842
        %v1885 = vunpack.c.l.b16 %v843
        %v1886 = vunpack.c.h.b16 %v843
        %v1887 = vunpack.c.l.b16 %v844
        %v1888 = vunpack.c.h.b16 %v844
        %v1889 = vunpack.c.l.b16 %v845
        %v1890 = vunpack.c.h.b16 %v845
        %v1891 = vunpack.c.l.b16 %v846
        %v1892 = vunpack.c.h.b16 %v846
        %v1893 = vunpack.c.l.b16 %v847
        %v1894 = vunpack.c.h.b16 %v847
        %v1895 = vunpack.c.l.b16 %v848
        %v1896 = vunpack.c.h.b16 %v848
        %v1897 = vunpack.c.l.b16 %v849
        %v1898 = vunpack.c.l.b16 %v850
        %v1899 = vunpack.c.h.b16 %v850
        %v1900 = vunpack.c.l.b16 %v851
        %v1901 = vunpack.c.h.b16 %v851
        %v1902 = vunpack.c.l.b16 %v852
        %v1903 = vunpack.c.h.b16 %v852
        %v1904 = vunpack.c.l.b16 %v853
        %v1905 = vunpack.c.h.b16 %v853
        %v1906 = vunpack.c.l.b16 %v854
        %v1907 = vunpack.c.h.b16 %v854
        %v1908 = vunpack.c.l.b16 %v855
        %v1909 = vunpack.c.h.b16 %v855
        %v1910 = vunpack.c.l.b16 %v856
        %v1911 = vunpack.c.l.b16 %v857
        %v1912 = vunpack.c.h.b16 %v857
        %v1913 = vunpack.c.l.b16 %v858
        %v1914 = vunpack.c.h.b16 %v858
        %v1915 = vunpack.c.l.b16 %v859
        %v1916 = vunpack.c.h.b16 %v859
        %v1917 = vunpack.c.l.b16 %v860
        %v1918 = vunpack.c.h.b16 %v860
        %v1919 = vunpack.c.l.b16 %v861
        %v1920 = vunpack.c.h.b16 %v861
        %v1921 = vunpack.c.l.b16 %v862
        %v1922 = vunpack.c.h.b16 %v862
        %v1923 = vunpack.c.l.b16 %v863
        %v1924 = vunpack.c.l.b16 %v864
        %v1925 = vunpack.c.h.b16 %v864
        %v1926 = vunpack.c.l.b16 %v865
        %v1927 = vunpack.c.h.b16 %v865
        %v1928 = vunpack.c.l.b16 %v866
        %v1929 = vunpack.c.h.b16 %v866
        %v1930 = vunpack.c.l.b16 %v867
        %v1931 = vunpack.c.h.b16 %v867
        %v1932 = vunpack.c.l.b16 %v868
        %v1933 = vunpack.c.h.b16 %v868
        %v1934 = vunpack.c.l.b16 %v869
        %v1935 = vunpack.c.h.b16 %v869
        %v1936 = vunpack.c.l.b16 %v870
        %v1937 = vunpack.c.l.b16 %v871
        %v1938 = vunpack.c.h.b16 %v871
        %v1939 = vunpack.c.l.b16 %v872
        %v1940 = vunpack.c.h.b16 %v872
        %v1941 = vunpack.c.l.b16 %v873
        %v1942 = vunpack.c.h.b16 %v873
        %v1943 = vunpack.c.l.b16 %v874
        %v1944 = vunpack.c.h.b16 %v874
        %v1945 = vunpack.c.l.b16 %v875
        %v1946 = vunpack.c.h.b16 %v875
        %v1947 = vunpack.c.l.b16 %v876
        %v1948 = vunpack.c.h.b16 %v876
        %v1949 = vunpack.c.l.b16 %v877
        %v1950 = vunpack.c.l.b16 %v878
        %v1951 = vunpack.c.h.b16 %v878
        %v1952 = vunpack.c.l.b16 %v879
        %v1953 = vunpack.c.h.b16 %v879
        %v1954 = vunpack.c.l.b16 %v880
        %v1955 = vunpack.c.h.b16 %v880
        %v1956 = vunpack.c.l.b16 %v881
        %v1957 = vunpack.c.h.b16 %v881
        %v1958 = vunpack.c.l.b16 %v882
        %v1959 = vunpack.c.h.b16 %v882
        %v1960 = vunpack.c.l.b16 %v883
        %v1961 = vunpack.c.h.b16 %v883
        %v1962 = vunpack.c.l.b16 %v884
        %v1963 = vunpack.c.l.b16 %v885
        %v1964 = vunpack.c.h.b16 %v885
        %v1965 = vunpack.c.l.b16 %v886
        %v1966 = vunpack.c.h.b16 %v886
        %v1967 = vunpack.c.l.b16 %v887
        %v1968 = vunpack.c.h.b16 %v887
        %v1969 = vunpack.c.l.b16 %v888
        %v1970 = vunpack.c.h.b16 %v888
        %v1971 = vunpack.c.l.b16 %v889
        %v1972 = vunpack.c.h.b16 %v889
        %v1973 = vunpack.c.l.b16 %v890
        %v1974 = vunpack.c.h.b16 %v890
        %v1975 = vunpack.c.l.b16 %v891
        %v1976 = vunpack.c.l.b16 %v892
        %v1977 = vunpack.c.h.b16 %v892
        %v1978 = vunpack.c.l.b16 %v893
        %v1979 = vunpack.c.h.b16 %v893
        %v1980 = vunpack.c.l.b16 %v894
        %v1981 = vunpack.c.h.b16 %v894
        %v1982 = vunpack.c.l.b16 %v895
        %v1983 = vunpack.c.h.b16 %v895
        %v1984 = vunpack.c.l.b16 %v896
        %v1985 = vunpack.c.h.b16 %v896
        %v1986 = vunpack.c.l.b16 %v897
        %v1987 = vunpack.c.h.b16 %v897
        %v1988 = vunpack.c.l.b16 %v898
        %v1989 = vunpack.c.l.b16 %v899
        %v1990 = vunpack.c.h.b16 %v899
        %v1991 = vunpack.c.l.b16 %v900
        %v1992 = vunpack.c.h.b16 %v900
        %v1993 = vunpack.c.l.b16 %v901
        %v1994 = vunpack.c.h.b16 %v901
        %v1995 = vunpack.c.l.b16 %v902
        %v1996 = vunpack.c.h.b16 %v902
        %v1997 = vunpack.c.l.b16 %v903
        %v1998 = vunpack.c.h.b16 %v903
        %v1999 = vunpack.c.l.b16 %v904
        %v2000 = vunpack.c.h.b16 %v904
        %v2001 = vunpack.c.l.b16 %v905
        %v2002 = vunpack.c.l.b16 %v906
        %v2003 = vunpack.c.h.b16 %v906
        %v2004 = vunpack.c.l.b16 %v907
        %v2005 = vunpack.c.h.b16 %v907
        %v2006 = vunpack.c.l.b16 %v908
        %v2007 = vunpack.c.h.b16 %v908
        %v2008 = vunpack.c.l.b16 %v909
        %v2009 = vunpack.c.h.b16 %v909
        %v2010 = vunpack.c.l.b16 %v910
        %v2011 = vunpack.c.h.b16 %v910
        %v2012 = vunpack.c.l.b16 %v911
        %v2013 = vunpack.c.h.b16 %v911
        %v2014 = vunpack.c.l.b16 %v912
        %v2015 = vunpack.c.l.b16 %v913
        %v2016 = vunpack.c.h.b16 %v913
        %v2017 = vunpack.c.l.b16 %v914
        %v2018 = vunpack.c.h.b16 %v914
        %v2019 = vunpack.c.l.b16 %v915
        %v2020 = vunpack.c.h.b16 %v915
        %v2021 = vunpack.c.l.b16 %v916
        %v2022 = vunpack.c.h.b16 %v916
        %v2023 = vunpack.c.l.b16 %v917
        %v2024 = vunpack.c.h.b16 %v917
        %v2025 = vunpack.c.l.b16 %v918
        %v2026 = vunpack.c.h.b16 %v918
        %v2027 = vunpack.c.l.b16 %v919
        %v2028 = vunpack.c.l.b16 %v920
        %v2029 = vunpack.c.h.b16 %v920
        %v2030 = vunpack.c.l.b16 %v921
        %v2031 = vunpack.c.h.b16 %v921
        %v2032 = vunpack.c.l.b16 %v922
        %v2033 = vunpack.c.h.b16 %v922
        %v2034 = vunpack.c.l.b16 %v923
        %v2035 = vunpack.c.h.b16 %v923
        %v2036 = vunpack.c.l.b16 %v924
        %v2037 = vunpack.c.h.b16 %v924
        %v2038 = vunpack.c.l.b16 %v925
        %v2039 = vunpack.c.h.b16 %v925
        %v2040 = vunpack.c.l.b16 %v926
        %v2041 = vunpack.c.l.b16 %v927
        %v2042 = vunpack.c.h.b16 %v927
        %v2043 = vunpack.c.l.b16 %v928
        %v2044 = vunpack.c.h.b16 %v928
        %v2045 = vunpack.c.l.b16 %v929
        %v2046 = vunpack.c.h.b16 %v929
        %v2047 = vunpack.c.l.b16 %v930
        %v2048 = vunpack.c.h.b16 %v930
        %v2049 = vunpack.c.l.b16 %v931
        %v2050 = vunpack.c.h.b16 %v931
        %v2051 = vunpack.c.l.b16 %v932
        %v2052 = vunpack.c.h.b16 %v932
        %v2053 = vunpack.c.l.b16 %v933
        %v2054 = vpack.c.b16 %v1339, %v1326
        %v2055 = vpack.c.b16 %v1340, %v1327
        %v2056 = vpack.c.b16 %v1341, %v1328
        %v2057 = vpack.c.b16 %v1342, %v1329
        %v2058 = vpack.c.b16 %v1343, %v1330
        %v2059 = vpack.c.b16 %v1344, %v1331
        %v2060 = vpack.c.b16 %v1345, %v1332
        %v2061 = vpack.c.b16 %v1346, %v1333
        %v2062 = vpack.c.b16 %v1347, %v1334
        %v2063 = vpack.c.b16 %v1348, %v1335
        %v2064 = vpack.c.b16 %v1349, %v1336
        %v2065 = vpack.c.b16 %v1350, %v1337
        %v2066 = vpack.c.b16 %v1351, %v1338
        %v2067 = vpack.c.b16 %v1365, %v1352
        %v2068 = vpack.c.b16 %v1366, %v1353
        %v2069 = vpack.c.b16 %v1367, %v1354
        %v2070 = vpack.c.b16 %v1368, %v1355
        %v2071 = vpack.c.b16 %v1369, %v1356
        %v2072 = vpack.c.b16 %v1370, %v1357
        %v2073 = vpack.c.b16 %v1371, %v1358
        %v2074 = vpack.c.b16 %v1372, %v1359
        %v2075 = vpack.c.b16 %v1373, %v1360
        %v2076 = vpack.c.b16 %v1374, %v1361
        %v2077 = vpack.c.b16 %v1375, %v1362
        %v2078 = vpack.c.b16 %v1376, %v1363
        %v2079 = vpack.c.b16 %v1377, %v1364
        %v2080 = vpack.c.b16 %v1391, %v1378
        %v2081 = vpack.c.b16 %v1392, %v1379
        %v2082 = vpack.c.b16 %v1393, %v1380
        %v2083 = vpack.c.b16 %v1394, %v1381
        %v2084 = vpack.c.b16 %v1395, %v1382
        %v2085 = vpack.c.b16 %v1396, %v1383
        %v2086 = vpack.c.b16 %v1397, %v1384
        %v2087 = vpack.c.b16 %v1398, %v1385
        %v2088 = vpack.c.b16 %v1399, %v1386
        %v2089 = vpack.c.b16 %v1400, %v1387
        %v2090 = vpack.c.b16 %v1401, %v1388
        %v2091 = vpack.c.b16 %v1402, %v1389
        %v2092 = vpack.c.b16 %v1403, %v1390
        %v2093 = vpack.c.b16 %v1417, %v1404
        %v2094 = vpack.c.b16 %v1418, %v1405
        %v2095 = vpack.c.b16 %v1419, %v1406
        %v2096 = vpack.c.b16 %v1420, %v1407
        %v2097 = vpack.c.b16 %v1421, %v1408
        %v2098 = vpack.c.b16 %v1422, %v1409
        %v2099 = vpack.c.b16 %v1423, %v1410
        %v2100 = vpack.c.b16 %v1424, %v1411
        %v2101 = vpack.c.b16 %v1425, %v1412
        %v2102 = vpack.c.b16 %v1426, %v1413
        %v2103 = vpack.c.b16 %v1427, %v1414
        %v2104 = vpack.c.b16 %v1428, %v1415
        %v2105 = vpack.c.b16 %v1429, %v1416
        %v2106 = vpack.c.b16 %v1443, %v1430
        %v2107 = vpack.c.b16 %v1444, %v1431
        %v2108 = vpack.c.b16 %v1445, %v1432
        %v2109 = vpack.c.b16 %v1446, %v1433
        %v2110 = vpack.c.b16 %v1447, %v1434
        %v2111 = vpack.c.b16 %v1448, %v1435
        %v2112 = vpack.c.b16 %v1449, %v1436
        %v2113 = vpack.c.b16 %v1450, %v1437
        %v2114 = vpack.c.b16 %v1451, %v1438
        %v2115 = vpack.c.b16 %v1452, %v1439
        %v2116 = vpack.c.b16 %v1453, %v1440
        %v2117 = vpack.c.b16 %v1454, %v1441
        %v2118 = vpack.c.b16 %v1455, %v1442
        %v2119 = vpack.c.b16 %v1469, %v1456
        %v2120 = vpack.c.b16 %v1470, %v1457
        %v2121 = vpack.c.b16 %v1471, %v1458
        %v2122 = vpack.c.b16 %v1472, %v1459
        %v2123 = vpack.c.b16 %v1473, %v1460
        %v2124 = vpack.c.b16 %v1474, %v1461
        %v2125 = vpack.c.b16 %v1475, %v1462
        %v2126 = vpack.c.b16 %v1476, %v1463
        %v2127 = vpack.c.b16 %v1477, %v1464
        %v2128 = vpack.c.b16 %v1478, %v1465
        %v2129 = vpack.c.b16 %v1479, %v1466
        %v2130 = vpack.c.b16 %v1480, %v1467
        %v2131 = vpack.c.b16 %v1481, %v1468
        %v2132 = vpack.c.b16 %v1495, %v1482
        %v2133 = vpack.c.b16 %v1496, %v1483
        %v2134 = vpack.c.b16 %v1497, %v1484
        %v2135 = vpack.c.b16 %v1498, %v1485
        %v2136 = vpack.c.b16 %v1499, %v1486
        %v2137 = vpack.c.b16 %v1500, %v1487
        %v2138 = vpack.c.b16 %v1501, %v1488
        %v2139 = vpack.c.b16 %v1502, %v1489
        %v2140 = vpack.c.b16 %v1503, %v1490
        %v2141 = vpack.c.b16 %v1504, %v1491
        %v2142 = vpack.c.b16 %v1505, %v1492
        %v2143 = vpack.c.b16 %v1506, %v1493
        %v2144 = vpack.c.b16 %v1507, %v1494
        %v2145 = vpack.c.b16 %v1521, %v1508
        %v2146 = vpack.c.b16 %v1522, %v1509
        %v2147 = vpack.c.b16 %v1523, %v1510
        %v2148 = vpack.c.b16 %v1524, %v1511
        %v2149 = vpack.c.b16 %v1525, %v1512
        %v2150 = vpack.c.b16 %v1526, %v1513
        %v2151 = vpack.c.b16 %v1527, %v1514
        %v2152 = vpack.c.b16 %v1528, %v1515
        %v2153 = vpack.c.b16 %v1529, %v1516
        %v2154 = vpack.c.b16 %v1530, %v1517
        %v2155 = vpack.c.b16 %v1531, %v1518
        %v2156 = vpack.c.b16 %v1532, %v1519
        %v2157 = vpack.c.b16 %v1533, %v1520
        %v2158 = vpack.c.b16 %v1547, %v1534
        %v2159 = vpack.c.b16 %v1548, %v1535
        %v2160 = vpack.c.b16 %v1549, %v1536
        %v2161 = vpack.c.b16 %v1550, %v1537
        %v2162 = vpack.c.b16 %v1551, %v1538
        %v2163 = vpack.c.b16 %v1552, %v1539
        %v2164 = vpack.c.b16 %v1553, %v1540
        %v2165 = vpack.c.b16 %v1554, %v1541
        %v2166 = vpack.c.b16 %v1555, %v1542
        %v2167 = vpack.c.b16 %v1556, %v1543
        %v2168 = vpack.c.b16 %v1557, %v1544
        %v2169 = vpack.c.b16 %v1558, %v1545
        %v2170 = vpack.c.b16 %v1559, %v1546
        %v2171 = vpack.c.b16 %v1573, %v1560
        %v2172 = vpack.c.b16 %v1574, %v1561
        %v2173 = vpack.c.b16 %v1575, %v1562
        %v2174 = vpack.c.b16 %v1576, %v1563
        %v2175 = vpack.c.b16 %v1577, %v1564
        %v2176 = vpack.c.b16 %v1578, %v1565
        %v2177 = vpack.c.b16 %v1579, %v1566
        %v2178 = vpack.c.b16 %v1580, %v1567
        %v2179 = vpack.c.b16 %v1581, %v1568
        %v2180 = vpack.c.b16 %v1582, %v1569
        %v2181 = vpack.c.b16 %v1583, %v1570
        %v2182 = vpack.c.b16 %v1584, %v1571
        %v2183 = vpack.c.b16 %v1585, %v1572
        %v2184 = vpack.c.b16 %v1599, %v1586
        %v2185 = vpack.c.b16 %v1600, %v1587
        %v2186 = vpack.c.b16 %v1601, %v1588
        %v2187 = vpack.c.b16 %v1602, %v1589
        %v2188 = vpack.c.b16 %v1603, %v1590
        %v2189 = vpack.c.b16 %v1604, %v1591
        %v2190 = vpack.c.b16 %v1605, %v1592
        %v2191 = vpack.c.b16 %v1606, %v1593
        %v2192 = vpack.c.b16 %v1607, %v1594
        %v2193 = vpack.c.b16 %v1608, %v1595
        %v2194 = vpack.c.b16 %v1609, %v1596
        %v2195 = vpack.c.b16 %v1610, %v1597
        %v2196 = vpack.c.b16 %v1611, %v1598
        %v2197 = vpack.c.b16 %v1625, %v1612
        %v2198 = vpack.c.b16 %v1626, %v1613
        %v2199 = vpack.c.b16 %v1627, %v1614
        %v2200 = vpack.c.b16 %v1628, %v1615
        %v2201 = vpack.c.b16 %v1629, %v1616
        %v2202 = vpack.c.b16 %v1630, %v1617
        %v2203 = vpack.c.b16 %v1631, %v1618
        %v2204 = vpack.c.b16 %v1632, %v1619
        %v2205 = vpack.c.b16 %v1633, %v1620
        %v2206 = vpack.c.b16 %v1634, %v1621
        %v2207 = vpack.c.b16 %v1635, %v1622
        %v2208 = vpack.c.b16 %v1636, %v1623
        %v2209 = vpack.c.b16 %v1637, %v1624
        %v2210 = vpack.c.b16 %v1651, %v1638
        %v2211 = vpack.c.b16 %v1652, %v1639
        %v2212 = vpack.c.b16 %v1653, %v1640
        %v2213 = vpack.c.b16 %v1654, %v1641
        %v2214 = vpack.c.b16 %v1655, %v1642
        %v2215 = vpack.c.b16 %v1656, %v1643
        %v2216 = vpack.c.b16 %v1657, %v1644
        %v2217 = vpack.c.b16 %v1658, %v1645
        %v2218 = vpack.c.b16 %v1659, %v1646
        %v2219 = vpack.c.b16 %v1660, %v1647
        %v2220 = vpack.c.b16 %v1661, %v1648
        %v2221 = vpack.c.b16 %v1662, %v1649
        %v2222 = vpack.c.b16 %v1663, %v1650
        %v2223 = vpack.c.b16 %v1677, %v1664
        %v2224 = vpack.c.b16 %v1678, %v1665
        %v2225 = vpack.c.b16 %v1679, %v1666
        %v2226 = vpack.c.b16 %v1680, %v1667
        %v2227 = vpack.c.b16 %v1681, %v1668
        %v2228 = vpack.c.b16 %v1682, %v1669
        %v2229 = vpack.c.b16 %v1683, %v1670
        %v2230 = vpack.c.b16 %v1684, %v1671
        %v2231 = vpack.c.b16 %v1685, %v1672
        %v2232 = vpack.c.b16 %v1686, %v1673
        %v2233 = vpack.c.b16 %v1687, %v1674
        %v2234 = vpack.c.b16 %v1688, %v1675
        %v2235 = vpack.c.b16 %v1689, %v1676
        %v2236 = vpack.c.b16 %v1703, %v1690
        %v2237 = vpack.c.b16 %v1704, %v1691
        %v2238 = vpack.c.b16 %v1705, %v1692
        %v2239 = vpack.c.b16 %v1706, %v1693
        %v2240 = vpack.c.b16 %v1707, %v1694
        %v2241 = vpack.c.b16 %v1708, %v1695
        %v2242 = vpack.c.b16 %v1709, %v1696
        %v2243 = vpack.c.b16 %v1710, %v1697
        %v2244 = vpack.c.b16 %v1711, %v1698
        %v2245 = vpack.c.b16 %v1712, %v1699
        %v2246 = vpack.c.b16 %v1713, %v1700
        %v2247 = vpack.c.b16 %v1714, %v1701
        %v2248 = vpack.c.b16 %v1715, %v1702
        %v2249 = vpack.c.b16 %v1729, %v1716
        %v2250 = vpack.c.b16 %v1730, %v1717
        %v2251 = vpack.c.b16 %v1731, %v1718
        %v2252 = vpack.c.b16 %v1732, %v1719
        %v2253 = vpack.c.b16 %v1733, %v1720
        %v2254 = vpack.c.b16 %v1734, %v1721
        %v2255 = vpack.c.b16 %v1735, %v1722
        %v2256 = vpack.c.b16 %v1736, %v1723
        %v2257 = vpack.c.b16 %v1737, %v1724
        %v2258 = vpack.c.b16 %v1738, %v1725
        %v2259 = vpack.c.b16 %v1739, %v1726
        %v2260 = vpack.c.b16 %v1740, %v1727
        %v2261 = vpack.c.b16 %v1741, %v1728
        %v2262 = vpack.c.b16 %v1755, %v1742
        %v2263 = vpack.c.b16 %v1756, %v1743
        %v2264 = vpack.c.b16 %v1757, %v1744
        %v2265 = vpack.c.b16 %v1758, %v1745
        %v2266 = vpack.c.b16 %v1759, %v1746
        %v2267 = vpack.c.b16 %v1760, %v1747
        %v2268 = vpack.c.b16 %v1761, %v1748
        %v2269 = vpack.c.b16 %v1762, %v1749
        %v2270 = vpack.c.b16 %v1763, %v1750
        %v2271 = vpack.c.b16 %v1764, %v1751
        %v2272 = vpack.c.b16 %v1765, %v1752
        %v2273 = vpack.c.b16 %v1766, %v1753
        %v2274 = vpack.c.b16 %v1767, %v1754
        %v2275 = vpack.c.b16 %v1781, %v1768
        %v2276 = vpack.c.b16 %v1782, %v1769
        %v2277 = vpack.c.b16 %v1783, %v1770
        %v2278 = vpack.c.b16 %v1784, %v1771
        %v2279 = vpack.c.b16 %v1785, %v1772
        %v2280 = vpack.c.b16 %v1786, %v1773
        %v2281 = vpack.c.b16 %v1787, %v1774
        %v2282 = vpack.c.b16 %v1788, %v1775
        %v2283 = vpack.c.b16 %v1789, %v1776
        %v2284 = vpack.c.b16 %v1790, %v1777
        %v2285 = vpack.c.b16 %v1791, %v1778
        %v2286 = vpack.c.b16 %v1792, %v1779
        %v2287 = vpack.c.b16 %v1793, %v1780
        %v2288 = vpack.c.b16 %v1807, %v1794
        %v2289 = vpack.c.b16 %v1808, %v1795
        %v2290 = vpack.c.b16 %v1809, %v1796
        %v2291 = vpack.c.b16 %v1810, %v1797
        %v2292 = vpack.c.b16 %v1811, %v1798
        %v2293 = vpack.c.b16 %v1812, %v1799
        %v2294 = vpack.c.b16 %v1813, %v1800
        %v2295 = vpack.c.b16 %v1814, %v1801
        %v2296 = vpack.c.b16 %v1815, %v1802
        %v2297 = vpack.c.b16 %v1816, %v1803
        %v2298 = vpack.c.b16 %v1817, %v1804
        %v2299 = vpack.c.b16 %v1818, %v1805
        %v2300 = vpack.c.b16 %v1819, %v1806
        %v2301 = vpack.c.b16 %v1833, %v1820
        %v2302 = vpack.c.b16 %v1834, %v1821
        %v2303 = vpack.c.b16 %v1835, %v1822
        %v2304 = vpack.c.b16 %v1836, %v1823
        %v2305 = vpack.c.b16 %v1837, %v1824
        %v2306 = vpack.c.b16 %v1838, %v1825
        %v2307 = vpack.c.b16 %v1839, %v1826
        %v2308 = vpack.c.b16 %v1840, %v1827
        %v2309 = vpack.c.b16 %v1841, %v1828
        %v2310 = vpack.c.b16 %v1842, %v1829
        %v2311 = vpack.c.b16 %v1843, %v1830
        %v2312 = vpack.c.b16 %v1844, %v1831
        %v2313 = vpack.c.b16 %v1845, %v1832
        %v2314 = vpack.c.b16 %v1859, %v1846
        %v2315 = vpack.c.b16 %v1860, %v1847
        %v2316 = vpack.c.b16 %v1861, %v1848
        %v2317 = vpack.c.b16 %v1862, %v1849
        %v2318 = vpack.c.b16 %v1863, %v1850
        %v2319 = vpack.c.b16 %v1864, %v1851
        %v2320 = vpack.c.b16 %v1865, %v1852
        %v2321 = vpack.c.b16 %v1866, %v1853
        %v2322 = vpack.c.b16 %v1867, %v1854
        %v2323 = vpack.c.b16 %v1868, %v1855
        %v2324 = vpack.c.b16 %v1869, %v1856
        %v2325 = vpack.c.b16 %v1870, %v1857
        %v2326 = vpack.c.b16 %v1871, %v1858
        %v2327 = vpack.c.b16 %v1885, %v1872
        %v2328 = vpack.c.b16 %v1886, %v1873
        %v2329 = vpack.c.b16 %v1887, %v1874
        %v2330 = vpack.c.b16 %v1888, %v1875
        %v2331 = vpack.c.b16 %v1889, %v1876
        %v2332 = vpack.c.b16 %v1890, %v1877
        %v2333 = vpack.c.b16 %v1891, %v1878
        %v2334 = vpack.c.b16 %v1892, %v1879
        %v2335 = vpack.c.b16 %v1893, %v1880
        %v2336 = vpack.c.b16 %v1894, %v1881
        %v2337 = vpack.c.b16 %v1895, %v1882
        %v2338 = vpack.c.b16 %v1896, %v1883
        %v2339 = vpack.c.b16 %v1897, %v1884
        %v2340 = vpack.c.b16 %v1911, %v1898
        %v2341 = vpack.c.b16 %v1912, %v1899
        %v2342 = vpack.c.b16 %v1913, %v1900
        %v2343 = vpack.c.b16 %v1914, %v1901
        %v2344 = vpack.c.b16 %v1915, %v1902
        %v2345 = vpack.c.b16 %v1916, %v1903
        %v2346 = vpack.c.b16 %v1917, %v1904
        %v2347 = vpack.c.b16 %v1918, %v1905
        %v2348 = vpack.c.b16 %v1919, %v1906
        %v2349 = vpack.c.b16 %v1920, %v1907
        %v2350 = vpack.c.b16 %v1921, %v1908
        %v2351 = vpack.c.b16 %v1922, %v1909
        %v2352 = vpack.c.b16 %v1923, %v1910
        %v2353 = vpack.c.b16 %v1937, %v1924
        %v2354 = vpack.c.b16 %v1938, %v1925
        %v2355 = vpack.c.b16 %v1939, %v1926
        %v2356 = vpack.c.b16 %v1940, %v1927
        %v2357 = vpack.c.b16 %v1941, %v1928
        %v2358 = vpack.c.b16 %v1942, %v1929
        %v2359 = vpack.c.b16 %v1943, %v1930
        %v2360 = vpack.c.b16 %v1944, %v1931
        %v2361 = vpack.c.b16 %v1945, %v1932
        %v2362 = vpack.c.b16 %v1946, %v1933
        %v2363 = vpack.c.b16 %v1947, %v1934
        %v2364 = vpack.c.b16 %v1948, %v1935
        %v2365 = vpack.c.b16 %v1949, %v1936
        %v2366 = vpack.c.b16 %v1963, %v1950
        %v2367 = vpack.c.b16 %v1964, %v1951
        %v2368 = vpack.c.b16 %v1965, %v1952
        %v2369 = vpack.c.b16 %v1966, %v1953
        %v2370 = vpack.c.b16 %v1967, %v1954
        %v2371 = vpack.c.b16 %v1968, %v1955
        %v2372 = vpack.c.b16 %v1969, %v1956
        %v2373 = vpack.c.b16 %v1970, %v1957
        %v2374 = vpack.c.b16 %v1971, %v1958
        %v2375 = vpack.c.b16 %v1972, %v1959
        %v2376 = vpack.c.b16 %v1973, %v1960
        %v2377 = vpack.c.b16 %v1974, %v1961
        %v2378 = vpack.c.b16 %v1975, %v1962
        %v2379 = vpack.c.b16 %v1989, %v1976
        %v2380 = vpack.c.b16 %v1990, %v1977
        %v2381 = vpack.c.b16 %v1991, %v1978
        %v2382 = vpack.c.b16 %v1992, %v1979
        %v2383 = vpack.c.b16 %v1993, %v1980
        %v2384 = vpack.c.b16 %v1994, %v1981
        %v2385 = vpack.c.b16 %v1995, %v1982
        %v2386 = vpack.c.b16 %v1996, %v1983
        %v2387 = vpack.c.b16 %v1997, %v1984
        %v2388 = vpack.c.b16 %v1998, %v1985
        %v2389 = vpack.c.b16 %v1999, %v1986
        %v2390 = vpack.c.b16 %v2000, %v1987
        %v2391 = vpack.c.b16 %v2001, %v1988
        %v2392 = vpack.c.b16 %v2015, %v2002
        %v2393 = vpack.c.b16 %v2016, %v2003
        %v2394 = vpack.c.b16 %v2017, %v2004
        %v2395 = vpack.c.b16 %v2018, %v2005
        %v2396 = vpack.c.b16 %v2019, %v2006
        %v2397 = vpack.c.b16 %v2020, %v2007
        %v2398 = vpack.c.b16 %v2021, %v2008
        %v2399 = vpack.c.b16 %v2022, %v2009
        %v2400 = vpack.c.b16 %v2023, %v2010
        %v2401 = vpack.c.b16 %v2024, %v2011
        %v2402 = vpack.c.b16 %v2025, %v2012
        %v2403 = vpack.c.b16 %v2026, %v2013
        %v2404 = vpack.c.b16 %v2027, %v2014
        %v2405 = vpack.c.b16 %v2041, %v2028
        %v2406 = vpack.c.b16 %v2042, %v2029
        %v2407 = vpack.c.b16 %v2043, %v2030
        %v2408 = vpack.c.b16 %v2044, %v2031
        %v2409 = vpack.c.b16 %v2045, %v2032
        %v2410 = vpack.c.b16 %v2046, %v2033
        %v2411 = vpack.c.b16 %v2047, %v2034
        %v2412 = vpack.c.b16 %v2048, %v2035
        %v2413 = vpack.c.b16 %v2049, %v2036
        %v2414 = vpack.c.b16 %v2050, %v2037
        %v2415 = vpack.c.b16 %v2051, %v2038
        %v2416 = vpack.c.b16 %v2052, %v2039
        %v2417 = vpack.c.b16 %v2053, %v2040
        %vm2754 = vcmask 785408
        %v2756 = vsel %vm2754, %v2066, 0
        %v2759 = vsel %vm2754, %v2079, 0
        %v2762 = vsel %vm2754, %v2092, 0
        %v2765 = vsel %vm2754, %v2105, 0
        %v2768 = vsel %vm2754, %v2118, 0
        %v2771 = vsel %vm2754, %v2131, 0
        %v2774 = vsel %vm2754, %v2144, 0
        %v2777 = vsel %vm2754, %v2157, 0
        %v2780 = vsel %vm2754, %v2170, 0
        %v2783 = vsel %vm2754, %v2183, 0
        %v2786 = vsel %vm2754, %v2196, 0
        %v2789 = vsel %vm2754, %v2209, 0
        %v2792 = vsel %vm2754, %v2222, 0
        %v2795 = vsel %vm2754, %v2235, 0
        %v2798 = vsel %vm2754, %v2248, 0
        %v2801 = vsel %vm2754, %v2261, 0
        %v2804 = vsel %vm2754, %v2274, 0
        %v2807 = vsel %vm2754, %v2287, 0
        %v2810 = vsel %vm2754, %v2300, 0
        %v2813 = vsel %vm2754, %v2313, 0
        %v2816 = vsel %vm2754, %v2326, 0
        %v2819 = vsel %vm2754, %v2339, 0
        %v2822 = vsel %vm2754, %v2352, 0
        %v2825 = vsel %vm2754, %v2365, 0
        %v2828 = vsel %vm2754, %v2378, 0
        %v2831 = vsel %vm2754, %v2391, 0
        %v2834 = vsel %vm2754, %v2404, 0
        %v2837 = vsel %vm2754, %v2417, 0
        %2839 = vmatprep.subr.bf16.mxu0 0
        %2840 = vmatpush1.bf16.msra.mxu0 %v447
        %2841 = vmatprep.subr.bf16.mxu0 0
        %2842 = vmatpush1.bf16.msra.mxu0 %v446
        %2843 = vmatprep.subr.bf16.mxu0 0
        %2844 = vmatpush1.bf16.msra.mxu0 %v445
        %2845 = vmatprep.subr.bf16.mxu0 0
        %2846 = vmatpush1.bf16.msra.mxu0 %v444
        %2847 = vmatprep.subr.bf16.mxu0 0
        %2848 = vmatpush1.bf16.msra.mxu0 %v443
        %2849 = vmatprep.subr.bf16.mxu0 0
        %2850 = vmatpush1.bf16.msra.mxu0 %v442
        %2851 = vmatprep.subr.bf16.mxu0 0
        %2852 = vmatpush1.bf16.msra.mxu0 %v441
        %2853 = vmatprep.subr.bf16.mxu0 0
        %2854 = vmatpush1.bf16.msra.mxu0 %v440
        %2855 = vmatprep.subr.bf16.mxu0 0
        %2856 = vmatpush2.bf16.msra.mxu0 %v455
        %2857 = vmatprep.subr.bf16.mxu0 0
        %2858 = vmatpush2.bf16.msra.mxu0 %v454
        %2859 = vmatprep.subr.bf16.mxu0 0
        %2860 = vmatpush2.bf16.msra.mxu0 %v453
        %2861 = vmatprep.subr.bf16.mxu0 0
        %2862 = vmatpush2.bf16.msra.mxu0 %v452
        %2863 = vmatprep.subr.bf16.mxu0 0
        %2864 = vmatpush2.bf16.msra.mxu0 %v451
        %2865 = vmatprep.subr.bf16.mxu0 0
        %2866 = vmatpush2.bf16.msra.mxu0 %v450
        %2867 = vmatprep.subr.bf16.mxu0 0
        %2868 = vmatpush2.bf16.msra.mxu0 %v449
        %2869 = vmatprep.subr.bf16.mxu0 0
        %2870 = vmatpush2.bf16.msra.mxu0 %v448
        %2871 = vmatprep.mubr.bf16.mxu0 %v2055
        %2872 = vmatmul.mubr.bf16.gmra.mxu0 %v2054
        %v2873 = vpop.f32.mrf.mxu0
        %v2874 = vadd.f32 0.0, %v2873
        %v2875 = vpop.f32.mrf.mxu0
        %v2876 = vpop.f32.mrf.mxu0
        %v2877 = vadd.f32 0.0, %v2876
        %v2878 = vpop.f32.mrf.mxu0
        %2879 = vmatprep.mubr.bf16.mxu0 %v2068
        %2880 = vmatmul.mubr.bf16.gmra.mxu0 %v2067
        %v2881 = vpop.f32.mrf.mxu0
        %v2882 = vadd.f32 0.0, %v2881
        %v2883 = vpop.f32.mrf.mxu0
        %v2884 = vpop.f32.mrf.mxu0
        %v2885 = vadd.f32 0.0, %v2884
        %v2886 = vpop.f32.mrf.mxu0
        %2887 = vmatprep.mubr.bf16.mxu0 %v2081
        %2888 = vmatmul.mubr.bf16.gmra.mxu0 %v2080
        %v2889 = vpop.f32.mrf.mxu0
        %v2890 = vadd.f32 0.0, %v2889
        %v2891 = vpop.f32.mrf.mxu0
        %v2892 = vpop.f32.mrf.mxu0
        %v2893 = vadd.f32 0.0, %v2892
        %v2894 = vpop.f32.mrf.mxu0
        %2895 = vmatprep.mubr.bf16.mxu0 %v2094
        %2896 = vmatmul.mubr.bf16.gmra.mxu0 %v2093
        %v2897 = vpop.f32.mrf.mxu0
        %v2898 = vadd.f32 0.0, %v2897
        %v2899 = vpop.f32.mrf.mxu0
        %v2900 = vpop.f32.mrf.mxu0
        %v2901 = vadd.f32 0.0, %v2900
        %v2902 = vpop.f32.mrf.mxu0
        %2903 = vmatprep.mubr.bf16.mxu0 %v2107
        %2904 = vmatmul.mubr.bf16.gmra.mxu0 %v2106
        %v2905 = vpop.f32.mrf.mxu0
        %v2906 = vadd.f32 0.0, %v2905
        %v2907 = vpop.f32.mrf.mxu0
        %v2908 = vpop.f32.mrf.mxu0
        %v2909 = vadd.f32 0.0, %v2908
        %v2910 = vpop.f32.mrf.mxu0
        %2911 = vmatprep.mubr.bf16.mxu0 %v2120
        %2912 = vmatmul.mubr.bf16.gmra.mxu0 %v2119
        %v2913 = vpop.f32.mrf.mxu0
        %v2914 = vadd.f32 0.0, %v2913
        %v2915 = vpop.f32.mrf.mxu0
        %v2916 = vpop.f32.mrf.mxu0
        %v2917 = vadd.f32 0.0, %v2916
        %v2918 = vpop.f32.mrf.mxu0
        %2919 = vmatprep.mubr.bf16.mxu0 %v2133
        %2920 = vmatmul.mubr.bf16.gmra.mxu0 %v2132
        %v2921 = vpop.f32.mrf.mxu0
        %v2922 = vadd.f32 0.0, %v2921
        %v2923 = vpop.f32.mrf.mxu0
        %v2924 = vpop.f32.mrf.mxu0
        %v2925 = vadd.f32 0.0, %v2924
        %v2926 = vpop.f32.mrf.mxu0
        %2927 = vmatprep.mubr.bf16.mxu0 %v2146
        %2928 = vmatmul.mubr.bf16.gmra.mxu0 %v2145
        %v2929 = vpop.f32.mrf.mxu0
        %v2930 = vadd.f32 0.0, %v2929
        %v2931 = vpop.f32.mrf.mxu0
        %v2932 = vpop.f32.mrf.mxu0
        %v2933 = vadd.f32 0.0, %v2932
        %v2934 = vpop.f32.mrf.mxu0
        %2935 = vmatprep.mubr.bf16.mxu0 %v2159
        %2936 = vmatmul.mubr.bf16.gmra.mxu0 %v2158
        %v2937 = vpop.f32.mrf.mxu0
        %v2938 = vadd.f32 0.0, %v2937
        %v2939 = vpop.f32.mrf.mxu0
        %v2940 = vpop.f32.mrf.mxu0
        %v2941 = vadd.f32 0.0, %v2940
        %v2942 = vpop.f32.mrf.mxu0
        %2943 = vmatprep.mubr.bf16.mxu0 %v2172
        %2944 = vmatmul.mubr.bf16.gmra.mxu0 %v2171
        %v2945 = vpop.f32.mrf.mxu0
        %v2946 = vadd.f32 0.0, %v2945
        %v2947 = vpop.f32.mrf.mxu0
        %v2948 = vpop.f32.mrf.mxu0
        %v2949 = vadd.f32 0.0, %v2948
        %v2950 = vpop.f32.mrf.mxu0
        %2951 = vmatprep.mubr.bf16.mxu0 %v2185
        %2952 = vmatmul.mubr.bf16.gmra.mxu0 %v2184
        %v2953 = vpop.f32.mrf.mxu0
        %v2954 = vadd.f32 0.0, %v2953
        %v2955 = vpop.f32.mrf.mxu0
        %v2956 = vpop.f32.mrf.mxu0
        %v2957 = vadd.f32 0.0, %v2956
        %v2958 = vpop.f32.mrf.mxu0
        %2959 = vmatprep.mubr.bf16.mxu0 %v2198
        %2960 = vmatmul.mubr.bf16.gmra.mxu0 %v2197
        %v2961 = vpop.f32.mrf.mxu0
        %v2962 = vadd.f32 0.0, %v2961
        %v2963 = vpop.f32.mrf.mxu0
        %v2964 = vpop.f32.mrf.mxu0
        %v2965 = vadd.f32 0.0, %v2964
        %v2966 = vpop.f32.mrf.mxu0
        %2967 = vmatprep.mubr.bf16.mxu0 %v2211
        %2968 = vmatmul.mubr.bf16.gmra.mxu0 %v2210
        %v2969 = vpop.f32.mrf.mxu0
        %v2970 = vadd.f32 0.0, %v2969
        %v2971 = vpop.f32.mrf.mxu0
        %v2972 = vpop.f32.mrf.mxu0
        %v2973 = vadd.f32 0.0, %v2972
        %v2974 = vpop.f32.mrf.mxu0
        %2975 = vmatprep.mubr.bf16.mxu0 %v2224
        %2976 = vmatmul.mubr.bf16.gmra.mxu0 %v2223
        %v2977 = vpop.f32.mrf.mxu0
        %v2978 = vadd.f32 0.0, %v2977
        %v2979 = vpop.f32.mrf.mxu0
        %v2980 = vpop.f32.mrf.mxu0
        %v2981 = vadd.f32 0.0, %v2980
        %v2982 = vpop.f32.mrf.mxu0
        %2983 = vmatprep.mubr.bf16.mxu0 %v2237
        %2984 = vmatmul.mubr.bf16.gmra.mxu0 %v2236
        %v2985 = vpop.f32.mrf.mxu0
        %v2986 = vadd.f32 0.0, %v2985
        %v2987 = vpop.f32.mrf.mxu0
        %v2988 = vpop.f32.mrf.mxu0
        %v2989 = vadd.f32 0.0, %v2988
        %v2990 = vpop.f32.mrf.mxu0
        %2991 = vmatprep.mubr.bf16.mxu0 %v2250
        %2992 = vmatmul.mubr.bf16.gmra.mxu0 %v2249
        %v2993 = vpop.f32.mrf.mxu0
        %v2994 = vadd.f32 0.0, %v2993
        %v2995 = vpop.f32.mrf.mxu0
        %v2996 = vpop.f32.mrf.mxu0
        %v2997 = vadd.f32 0.0, %v2996
        %v2998 = vpop.f32.mrf.mxu0
        %2999 = vmatprep.mubr.bf16.mxu0 %v2263
        %3000 = vmatmul.mubr.bf16.gmra.mxu0 %v2262
        %v3001 = vpop.f32.mrf.mxu0
        %v3002 = vadd.f32 0.0, %v3001
        %v3003 = vpop.f32.mrf.mxu0
        %v3004 = vpop.f32.mrf.mxu0
        %v3005 = vadd.f32 0.0, %v3004
        %v3006 = vpop.f32.mrf.mxu0
        %3007 = vmatprep.mubr.bf16.mxu0 %v2276
        %3008 = vmatmul.mubr.bf16.gmra.mxu0 %v2275
        %v3009 = vpop.f32.mrf.mxu0
        %v3010 = vadd.f32 0.0, %v3009
        %v3011 = vpop.f32.mrf.mxu0
        %v3012 = vpop.f32.mrf.mxu0
        %v3013 = vadd.f32 0.0, %v3012
        %v3014 = vpop.f32.mrf.mxu0
        %3015 = vmatprep.mubr.bf16.mxu0 %v2289
        %3016 = vmatmul.mubr.bf16.gmra.mxu0 %v2288
        %v3017 = vpop.f32.mrf.mxu0
        %v3018 = vadd.f32 0.0, %v3017
        %v3019 = vpop.f32.mrf.mxu0
        %v3020 = vpop.f32.mrf.mxu0
        %v3021 = vadd.f32 0.0, %v3020
        %v3022 = vpop.f32.mrf.mxu0
        %3023 = vmatprep.mubr.bf16.mxu0 %v2302
        %3024 = vmatmul.mubr.bf16.gmra.mxu0 %v2301
        %v3025 = vpop.f32.mrf.mxu0
        %v3026 = vadd.f32 0.0, %v3025
        %v3027 = vpop.f32.mrf.mxu0
        %v3028 = vpop.f32.mrf.mxu0
        %v3029 = vadd.f32 0.0, %v3028
        %v3030 = vpop.f32.mrf.mxu0
        %3031 = vmatprep.mubr.bf16.mxu0 %v2315
        %3032 = vmatmul.mubr.bf16.gmra.mxu0 %v2314
        %v3033 = vpop.f32.mrf.mxu0
        %v3034 = vadd.f32 0.0, %v3033
        %v3035 = vpop.f32.mrf.mxu0
        %v3036 = vpop.f32.mrf.mxu0
        %v3037 = vadd.f32 0.0, %v3036
        %v3038 = vpop.f32.mrf.mxu0
        %3039 = vmatprep.mubr.bf16.mxu0 %v2328
        %3040 = vmatmul.mubr.bf16.gmra.mxu0 %v2327
        %v3041 = vpop.f32.mrf.mxu0
        %v3042 = vadd.f32 0.0, %v3041
        %v3043 = vpop.f32.mrf.mxu0
        %v3044 = vpop.f32.mrf.mxu0
        %v3045 = vadd.f32 0.0, %v3044
        %v3046 = vpop.f32.mrf.mxu0
        %3047 = vmatprep.mubr.bf16.mxu0 %v2341
        %3048 = vmatmul.mubr.bf16.gmra.mxu0 %v2340
        %v3049 = vpop.f32.mrf.mxu0
        %v3050 = vadd.f32 0.0, %v3049
        %v3051 = vpop.f32.mrf.mxu0
        %v3052 = vpop.f32.mrf.mxu0
        %v3053 = vadd.f32 0.0, %v3052
        %v3054 = vpop.f32.mrf.mxu0
        %3055 = vmatprep.mubr.bf16.mxu0 %v2354
        %3056 = vmatmul.mubr.bf16.gmra.mxu0 %v2353
        %v3057 = vpop.f32.mrf.mxu0
        %v3058 = vadd.f32 0.0, %v3057
        %v3059 = vpop.f32.mrf.mxu0
        %v3060 = vpop.f32.mrf.mxu0
        %v3061 = vadd.f32 0.0, %v3060
        %v3062 = vpop.f32.mrf.mxu0
        %3063 = vmatprep.mubr.bf16.mxu0 %v2367
        %3064 = vmatmul.mubr.bf16.gmra.mxu0 %v2366
        %v3065 = vpop.f32.mrf.mxu0
        %v3066 = vadd.f32 0.0, %v3065
        %v3067 = vpop.f32.mrf.mxu0
        %v3068 = vpop.f32.mrf.mxu0
        %v3069 = vadd.f32 0.0, %v3068
        %v3070 = vpop.f32.mrf.mxu0
        %3071 = vmatprep.mubr.bf16.mxu0 %v2380
        %3072 = vmatmul.mubr.bf16.gmra.mxu0 %v2379
        %v3073 = vpop.f32.mrf.mxu0
        %v3074 = vadd.f32 0.0, %v3073
        %v3075 = vpop.f32.mrf.mxu0
        %v3076 = vpop.f32.mrf.mxu0
        %v3077 = vadd.f32 0.0, %v3076
        %v3078 = vpop.f32.mrf.mxu0
        %3079 = vmatprep.mubr.bf16.mxu0 %v2393
        %3080 = vmatmul.mubr.bf16.gmra.mxu0 %v2392
        %v3081 = vpop.f32.mrf.mxu0
        %v3082 = vadd.f32 0.0, %v3081
        %v3083 = vpop.f32.mrf.mxu0
        %v3084 = vpop.f32.mrf.mxu0
        %v3085 = vadd.f32 0.0, %v3084
        %v3086 = vpop.f32.mrf.mxu0
        %3087 = vmatprep.mubr.bf16.mxu0 %v2406
        %3088 = vmatmul.mubr.bf16.gmra.mxu0 %v2405
        %v3089 = vpop.f32.mrf.mxu0
        %v3090 = vadd.f32 0.0, %v3089
        %v3091 = vpop.f32.mrf.mxu0
        %v3092 = vpop.f32.mrf.mxu0
        %v3093 = vadd.f32 0.0, %v3092
        %v3094 = vpop.f32.mrf.mxu0
        %3095 = vdwg.mxu0
        %3096 = vmatprep.subr.bf16.mxu0 0
        %3097 = vmatpush1.bf16.msra.mxu0 %v463
        %3098 = vmatprep.subr.bf16.mxu0 0
        %3099 = vmatpush1.bf16.msra.mxu0 %v462
        %3100 = vmatprep.subr.bf16.mxu0 0
        %3101 = vmatpush1.bf16.msra.mxu0 %v461
        %3102 = vmatprep.subr.bf16.mxu0 0
        %3103 = vmatpush1.bf16.msra.mxu0 %v460
        %3104 = vmatprep.subr.bf16.mxu0 0
        %3105 = vmatpush1.bf16.msra.mxu0 %v459
        %3106 = vmatprep.subr.bf16.mxu0 0
        %3107 = vmatpush1.bf16.msra.mxu0 %v458
        %3108 = vmatprep.subr.bf16.mxu0 0
        %3109 = vmatpush1.bf16.msra.mxu0 %v457
        %3110 = vmatprep.subr.bf16.mxu0 0
        %3111 = vmatpush1.bf16.msra.mxu0 %v456
        %3112 = vmatprep.subr.bf16.mxu0 0
        %3113 = vmatpush2.bf16.msra.mxu0 %v471
        %3114 = vmatprep.subr.bf16.mxu0 0
        %3115 = vmatpush2.bf16.msra.mxu0 %v470
        %3116 = vmatprep.subr.bf16.mxu0 0
        %3117 = vmatpush2.bf16.msra.mxu0 %v469
        %3118 = vmatprep.subr.bf16.mxu0 0
        %3119 = vmatpush2.bf16.msra.mxu0 %v468
        %3120 = vmatprep.subr.bf16.mxu0 0
        %3121 = vmatpush2.bf16.msra.mxu0 %v467
        %3122 = vmatprep.subr.bf16.mxu0 0
        %3123 = vmatpush2.bf16.msra.mxu0 %v466
        %3124 = vmatprep.subr.bf16.mxu0 0
        %3125 = vmatpush2.bf16.msra.mxu0 %v465
        %3126 = vmatprep.subr.bf16.mxu0 0
        %3127 = vmatpush2.bf16.msra.mxu0 %v464
        %3128 = vmatprep.mubr.bf16.mxu0 %v2057
        %3129 = vmatmul.mubr.bf16.gmra.mxu0 %v2056
        %v3130 = vpop.f32.mrf.mxu0
        %v3131 = vadd.f32 %v2874, %v3130
        %v3132 = vpop.f32.mrf.mxu0
        %v3133 = vpop.f32.mrf.mxu0
        %v3134 = vadd.f32 %v2877, %v3133
        %v3135 = vpop.f32.mrf.mxu0
        %3136 = vmatprep.mubr.bf16.mxu0 %v2070
        %3137 = vmatmul.mubr.bf16.gmra.mxu0 %v2069
        %v3138 = vpop.f32.mrf.mxu0
        %v3139 = vadd.f32 %v2882, %v3138
        %v3140 = vpop.f32.mrf.mxu0
        %v3141 = vpop.f32.mrf.mxu0
        %v3142 = vadd.f32 %v2885, %v3141
        %v3143 = vpop.f32.mrf.mxu0
        %3144 = vmatprep.mubr.bf16.mxu0 %v2083
        %3145 = vmatmul.mubr.bf16.gmra.mxu0 %v2082
        %v3146 = vpop.f32.mrf.mxu0
        %v3147 = vadd.f32 %v2890, %v3146
        %v3148 = vpop.f32.mrf.mxu0
        %v3149 = vpop.f32.mrf.mxu0
        %v3150 = vadd.f32 %v2893, %v3149
        %v3151 = vpop.f32.mrf.mxu0
        %3152 = vmatprep.mubr.bf16.mxu0 %v2096
        %3153 = vmatmul.mubr.bf16.gmra.mxu0 %v2095
        %v3154 = vpop.f32.mrf.mxu0
        %v3155 = vadd.f32 %v2898, %v3154
        %v3156 = vpop.f32.mrf.mxu0
        %v3157 = vpop.f32.mrf.mxu0
        %v3158 = vadd.f32 %v2901, %v3157
        %v3159 = vpop.f32.mrf.mxu0
        %3160 = vmatprep.mubr.bf16.mxu0 %v2109
        %3161 = vmatmul.mubr.bf16.gmra.mxu0 %v2108
        %v3162 = vpop.f32.mrf.mxu0
        %v3163 = vadd.f32 %v2906, %v3162
        %v3164 = vpop.f32.mrf.mxu0
        %v3165 = vpop.f32.mrf.mxu0
        %v3166 = vadd.f32 %v2909, %v3165
        %v3167 = vpop.f32.mrf.mxu0
        %3168 = vmatprep.mubr.bf16.mxu0 %v2122
        %3169 = vmatmul.mubr.bf16.gmra.mxu0 %v2121
        %v3170 = vpop.f32.mrf.mxu0
        %v3171 = vadd.f32 %v2914, %v3170
        %v3172 = vpop.f32.mrf.mxu0
        %v3173 = vpop.f32.mrf.mxu0
        %v3174 = vadd.f32 %v2917, %v3173
        %v3175 = vpop.f32.mrf.mxu0
        %3176 = vmatprep.mubr.bf16.mxu0 %v2135
        %3177 = vmatmul.mubr.bf16.gmra.mxu0 %v2134
        %v3178 = vpop.f32.mrf.mxu0
        %v3179 = vadd.f32 %v2922, %v3178
        %v3180 = vpop.f32.mrf.mxu0
        %v3181 = vpop.f32.mrf.mxu0
        %v3182 = vadd.f32 %v2925, %v3181
        %v3183 = vpop.f32.mrf.mxu0
        %3184 = vmatprep.mubr.bf16.mxu0 %v2148
        %3185 = vmatmul.mubr.bf16.gmra.mxu0 %v2147
        %v3186 = vpop.f32.mrf.mxu0
        %v3187 = vadd.f32 %v2930, %v3186
        %v3188 = vpop.f32.mrf.mxu0
        %v3189 = vpop.f32.mrf.mxu0
        %v3190 = vadd.f32 %v2933, %v3189
        %v3191 = vpop.f32.mrf.mxu0
        %3192 = vmatprep.mubr.bf16.mxu0 %v2161
        %3193 = vmatmul.mubr.bf16.gmra.mxu0 %v2160
        %v3194 = vpop.f32.mrf.mxu0
        %v3195 = vadd.f32 %v2938, %v3194
        %v3196 = vpop.f32.mrf.mxu0
        %v3197 = vpop.f32.mrf.mxu0
        %v3198 = vadd.f32 %v2941, %v3197
        %v3199 = vpop.f32.mrf.mxu0
        %3200 = vmatprep.mubr.bf16.mxu0 %v2174
        %3201 = vmatmul.mubr.bf16.gmra.mxu0 %v2173
        %v3202 = vpop.f32.mrf.mxu0
        %v3203 = vadd.f32 %v2946, %v3202
        %v3204 = vpop.f32.mrf.mxu0
        %v3205 = vpop.f32.mrf.mxu0
        %v3206 = vadd.f32 %v2949, %v3205
        %v3207 = vpop.f32.mrf.mxu0
        %3208 = vmatprep.mubr.bf16.mxu0 %v2187
        %3209 = vmatmul.mubr.bf16.gmra.mxu0 %v2186
        %v3210 = vpop.f32.mrf.mxu0
        %v3211 = vadd.f32 %v2954, %v3210
        %v3212 = vpop.f32.mrf.mxu0
        %v3213 = vpop.f32.mrf.mxu0
        %v3214 = vadd.f32 %v2957, %v3213
        %v3215 = vpop.f32.mrf.mxu0
        %3216 = vmatprep.mubr.bf16.mxu0 %v2200
        %3217 = vmatmul.mubr.bf16.gmra.mxu0 %v2199
        %v3218 = vpop.f32.mrf.mxu0
        %v3219 = vadd.f32 %v2962, %v3218
        %v3220 = vpop.f32.mrf.mxu0
        %v3221 = vpop.f32.mrf.mxu0
        %v3222 = vadd.f32 %v2965, %v3221
        %v3223 = vpop.f32.mrf.mxu0
        %3224 = vmatprep.mubr.bf16.mxu0 %v2213
        %3225 = vmatmul.mubr.bf16.gmra.mxu0 %v2212
        %v3226 = vpop.f32.mrf.mxu0
        %v3227 = vadd.f32 %v2970, %v3226
        %v3228 = vpop.f32.mrf.mxu0
        %v3229 = vpop.f32.mrf.mxu0
        %v3230 = vadd.f32 %v2973, %v3229
        %v3231 = vpop.f32.mrf.mxu0
        %3232 = vmatprep.mubr.bf16.mxu0 %v2226
        %3233 = vmatmul.mubr.bf16.gmra.mxu0 %v2225
        %v3234 = vpop.f32.mrf.mxu0
        %v3235 = vadd.f32 %v2978, %v3234
        %v3236 = vpop.f32.mrf.mxu0
        %v3237 = vpop.f32.mrf.mxu0
        %v3238 = vadd.f32 %v2981, %v3237
        %v3239 = vpop.f32.mrf.mxu0
        %3240 = vmatprep.mubr.bf16.mxu0 %v2239
        %3241 = vmatmul.mubr.bf16.gmra.mxu0 %v2238
        %v3242 = vpop.f32.mrf.mxu0
        %v3243 = vadd.f32 %v2986, %v3242
        %v3244 = vpop.f32.mrf.mxu0
        %v3245 = vpop.f32.mrf.mxu0
        %v3246 = vadd.f32 %v2989, %v3245
        %v3247 = vpop.f32.mrf.mxu0
        %3248 = vmatprep.mubr.bf16.mxu0 %v2252
        %3249 = vmatmul.mubr.bf16.gmra.mxu0 %v2251
        %v3250 = vpop.f32.mrf.mxu0
        %v3251 = vadd.f32 %v2994, %v3250
        %v3252 = vpop.f32.mrf.mxu0
        %v3253 = vpop.f32.mrf.mxu0
        %v3254 = vadd.f32 %v2997, %v3253
        %v3255 = vpop.f32.mrf.mxu0
        %3256 = vmatprep.mubr.bf16.mxu0 %v2265
        %3257 = vmatmul.mubr.bf16.gmra.mxu0 %v2264
        %v3258 = vpop.f32.mrf.mxu0
        %v3259 = vadd.f32 %v3002, %v3258
        %v3260 = vpop.f32.mrf.mxu0
        %v3261 = vpop.f32.mrf.mxu0
        %v3262 = vadd.f32 %v3005, %v3261
        %v3263 = vpop.f32.mrf.mxu0
        %3264 = vmatprep.mubr.bf16.mxu0 %v2278
        %3265 = vmatmul.mubr.bf16.gmra.mxu0 %v2277
        %v3266 = vpop.f32.mrf.mxu0
        %v3267 = vadd.f32 %v3010, %v3266
        %v3268 = vpop.f32.mrf.mxu0
        %v3269 = vpop.f32.mrf.mxu0
        %v3270 = vadd.f32 %v3013, %v3269
        %v3271 = vpop.f32.mrf.mxu0
        %3272 = vmatprep.mubr.bf16.mxu0 %v2291
        %3273 = vmatmul.mubr.bf16.gmra.mxu0 %v2290
        %v3274 = vpop.f32.mrf.mxu0
        %v3275 = vadd.f32 %v3018, %v3274
        %v3276 = vpop.f32.mrf.mxu0
        %v3277 = vpop.f32.mrf.mxu0
        %v3278 = vadd.f32 %v3021, %v3277
        %v3279 = vpop.f32.mrf.mxu0
        %3280 = vmatprep.mubr.bf16.mxu0 %v2304
        %3281 = vmatmul.mubr.bf16.gmra.mxu0 %v2303
        %v3282 = vpop.f32.mrf.mxu0
        %v3283 = vadd.f32 %v3026, %v3282
        %v3284 = vpop.f32.mrf.mxu0
        %v3285 = vpop.f32.mrf.mxu0
        %v3286 = vadd.f32 %v3029, %v3285
        %v3287 = vpop.f32.mrf.mxu0
        %3288 = vmatprep.mubr.bf16.mxu0 %v2317
        %3289 = vmatmul.mubr.bf16.gmra.mxu0 %v2316
        %v3290 = vpop.f32.mrf.mxu0
        %v3291 = vadd.f32 %v3034, %v3290
        %v3292 = vpop.f32.mrf.mxu0
        %v3293 = vpop.f32.mrf.mxu0
        %v3294 = vadd.f32 %v3037, %v3293
        %v3295 = vpop.f32.mrf.mxu0
        %3296 = vmatprep.mubr.bf16.mxu0 %v2330
        %3297 = vmatmul.mubr.bf16.gmra.mxu0 %v2329
        %v3298 = vpop.f32.mrf.mxu0
        %v3299 = vadd.f32 %v3042, %v3298
        %v3300 = vpop.f32.mrf.mxu0
        %v3301 = vpop.f32.mrf.mxu0
        %v3302 = vadd.f32 %v3045, %v3301
        %v3303 = vpop.f32.mrf.mxu0
        %3304 = vmatprep.mubr.bf16.mxu0 %v2343
        %3305 = vmatmul.mubr.bf16.gmra.mxu0 %v2342
        %v3306 = vpop.f32.mrf.mxu0
        %v3307 = vadd.f32 %v3050, %v3306
        %v3308 = vpop.f32.mrf.mxu0
        %v3309 = vpop.f32.mrf.mxu0
        %v3310 = vadd.f32 %v3053, %v3309
        %v3311 = vpop.f32.mrf.mxu0
        %3312 = vmatprep.mubr.bf16.mxu0 %v2356
        %3313 = vmatmul.mubr.bf16.gmra.mxu0 %v2355
        %v3314 = vpop.f32.mrf.mxu0
        %v3315 = vadd.f32 %v3058, %v3314
        %v3316 = vpop.f32.mrf.mxu0
        %v3317 = vpop.f32.mrf.mxu0
        %v3318 = vadd.f32 %v3061, %v3317
        %v3319 = vpop.f32.mrf.mxu0
        %3320 = vmatprep.mubr.bf16.mxu0 %v2369
        %3321 = vmatmul.mubr.bf16.gmra.mxu0 %v2368
        %v3322 = vpop.f32.mrf.mxu0
        %v3323 = vadd.f32 %v3066, %v3322
        %v3324 = vpop.f32.mrf.mxu0
        %v3325 = vpop.f32.mrf.mxu0
        %v3326 = vadd.f32 %v3069, %v3325
        %v3327 = vpop.f32.mrf.mxu0
        %3328 = vmatprep.mubr.bf16.mxu0 %v2382
        %3329 = vmatmul.mubr.bf16.gmra.mxu0 %v2381
        %v3330 = vpop.f32.mrf.mxu0
        %v3331 = vadd.f32 %v3074, %v3330
        %v3332 = vpop.f32.mrf.mxu0
        %v3333 = vpop.f32.mrf.mxu0
        %v3334 = vadd.f32 %v3077, %v3333
        %v3335 = vpop.f32.mrf.mxu0
        %3336 = vmatprep.mubr.bf16.mxu0 %v2395
        %3337 = vmatmul.mubr.bf16.gmra.mxu0 %v2394
        %v3338 = vpop.f32.mrf.mxu0
        %v3339 = vadd.f32 %v3082, %v3338
        %v3340 = vpop.f32.mrf.mxu0
        %v3341 = vpop.f32.mrf.mxu0
        %v3342 = vadd.f32 %v3085, %v3341
        %v3343 = vpop.f32.mrf.mxu0
        %3344 = vmatprep.mubr.bf16.mxu0 %v2408
        %3345 = vmatmul.mubr.bf16.gmra.mxu0 %v2407
        %v3346 = vpop.f32.mrf.mxu0
        %v3347 = vadd.f32 %v3090, %v3346
        %v3348 = vpop.f32.mrf.mxu0
        %v3349 = vpop.f32.mrf.mxu0
        %v3350 = vadd.f32 %v3093, %v3349
        %v3351 = vpop.f32.mrf.mxu0
        %3352 = vdwg.mxu0
        %3353 = vmatprep.subr.bf16.mxu0 0
        %3354 = vmatpush1.bf16.msra.mxu0 %v479
        %3355 = vmatprep.subr.bf16.mxu0 0
        %3356 = vmatpush1.bf16.msra.mxu0 %v478
        %3357 = vmatprep.subr.bf16.mxu0 0
        %3358 = vmatpush1.bf16.msra.mxu0 %v477
        %3359 = vmatprep.subr.bf16.mxu0 0
        %3360 = vmatpush1.bf16.msra.mxu0 %v476
        %3361 = vmatprep.subr.bf16.mxu0 0
        %3362 = vmatpush1.bf16.msra.mxu0 %v475
        %3363 = vmatprep.subr.bf16.mxu0 0
        %3364 = vmatpush1.bf16.msra.mxu0 %v474
        %3365 = vmatprep.subr.bf16.mxu0 0
        %3366 = vmatpush1.bf16.msra.mxu0 %v473
        %3367 = vmatprep.subr.bf16.mxu0 0
        %3368 = vmatpush1.bf16.msra.mxu0 %v472
        %3369 = vmatprep.subr.bf16.mxu0 0
        %3370 = vmatpush2.bf16.msra.mxu0 %v487
        %3371 = vmatprep.subr.bf16.mxu0 0
        %3372 = vmatpush2.bf16.msra.mxu0 %v486
        %3373 = vmatprep.subr.bf16.mxu0 0
        %3374 = vmatpush2.bf16.msra.mxu0 %v485
        %3375 = vmatprep.subr.bf16.mxu0 0
        %3376 = vmatpush2.bf16.msra.mxu0 %v484
        %3377 = vmatprep.subr.bf16.mxu0 0
        %3378 = vmatpush2.bf16.msra.mxu0 %v483
        %3379 = vmatprep.subr.bf16.mxu0 0
        %3380 = vmatpush2.bf16.msra.mxu0 %v482
        %3381 = vmatprep.subr.bf16.mxu0 0
        %3382 = vmatpush2.bf16.msra.mxu0 %v481
        %3383 = vmatprep.subr.bf16.mxu0 0
        %3384 = vmatpush2.bf16.msra.mxu0 %v480
        %3385 = vmatprep.mubr.bf16.mxu0 %v2059
        %3386 = vmatmul.mubr.bf16.gmra.mxu0 %v2058
        %v3387 = vpop.f32.mrf.mxu0
        %v3388 = vadd.f32 %v3131, %v3387
        %v3389 = vpop.f32.mrf.mxu0
        %v3390 = vpop.f32.mrf.mxu0
        %v3391 = vadd.f32 %v3134, %v3390
        %v3392 = vpop.f32.mrf.mxu0
        %3393 = vmatprep.mubr.bf16.mxu0 %v2072
        %3394 = vmatmul.mubr.bf16.gmra.mxu0 %v2071
        %v3395 = vpop.f32.mrf.mxu0
        %v3396 = vadd.f32 %v3139, %v3395
        %v3397 = vpop.f32.mrf.mxu0
        %v3398 = vpop.f32.mrf.mxu0
        %v3399 = vadd.f32 %v3142, %v3398
        %v3400 = vpop.f32.mrf.mxu0
        %3401 = vmatprep.mubr.bf16.mxu0 %v2085
        %3402 = vmatmul.mubr.bf16.gmra.mxu0 %v2084
        %v3403 = vpop.f32.mrf.mxu0
        %v3404 = vadd.f32 %v3147, %v3403
        %v3405 = vpop.f32.mrf.mxu0
        %v3406 = vpop.f32.mrf.mxu0
        %v3407 = vadd.f32 %v3150, %v3406
        %v3408 = vpop.f32.mrf.mxu0
        %3409 = vmatprep.mubr.bf16.mxu0 %v2098
        %3410 = vmatmul.mubr.bf16.gmra.mxu0 %v2097
        %v3411 = vpop.f32.mrf.mxu0
        %v3412 = vadd.f32 %v3155, %v3411
        %v3413 = vpop.f32.mrf.mxu0
        %v3414 = vpop.f32.mrf.mxu0
        %v3415 = vadd.f32 %v3158, %v3414
        %v3416 = vpop.f32.mrf.mxu0
        %3417 = vmatprep.mubr.bf16.mxu0 %v2111
        %3418 = vmatmul.mubr.bf16.gmra.mxu0 %v2110
        %v3419 = vpop.f32.mrf.mxu0
        %v3420 = vadd.f32 %v3163, %v3419
        %v3421 = vpop.f32.mrf.mxu0
        %v3422 = vpop.f32.mrf.mxu0
        %v3423 = vadd.f32 %v3166, %v3422
        %v3424 = vpop.f32.mrf.mxu0
        %3425 = vmatprep.mubr.bf16.mxu0 %v2124
        %3426 = vmatmul.mubr.bf16.gmra.mxu0 %v2123
        %v3427 = vpop.f32.mrf.mxu0
        %v3428 = vadd.f32 %v3171, %v3427
        %v3429 = vpop.f32.mrf.mxu0
        %v3430 = vpop.f32.mrf.mxu0
        %v3431 = vadd.f32 %v3174, %v3430
        %v3432 = vpop.f32.mrf.mxu0
        %3433 = vmatprep.mubr.bf16.mxu0 %v2137
        %3434 = vmatmul.mubr.bf16.gmra.mxu0 %v2136
        %v3435 = vpop.f32.mrf.mxu0
        %v3436 = vadd.f32 %v3179, %v3435
        %v3437 = vpop.f32.mrf.mxu0
        %v3438 = vpop.f32.mrf.mxu0
        %v3439 = vadd.f32 %v3182, %v3438
        %v3440 = vpop.f32.mrf.mxu0
        %3441 = vmatprep.mubr.bf16.mxu0 %v2150
        %3442 = vmatmul.mubr.bf16.gmra.mxu0 %v2149
        %v3443 = vpop.f32.mrf.mxu0
        %v3444 = vadd.f32 %v3187, %v3443
        %v3445 = vpop.f32.mrf.mxu0
        %v3446 = vpop.f32.mrf.mxu0
        %v3447 = vadd.f32 %v3190, %v3446
        %v3448 = vpop.f32.mrf.mxu0
        %3449 = vmatprep.mubr.bf16.mxu0 %v2163
        %3450 = vmatmul.mubr.bf16.gmra.mxu0 %v2162
        %v3451 = vpop.f32.mrf.mxu0
        %v3452 = vadd.f32 %v3195, %v3451
        %v3453 = vpop.f32.mrf.mxu0
        %v3454 = vpop.f32.mrf.mxu0
        %v3455 = vadd.f32 %v3198, %v3454
        %v3456 = vpop.f32.mrf.mxu0
        %3457 = vmatprep.mubr.bf16.mxu0 %v2176
        %3458 = vmatmul.mubr.bf16.gmra.mxu0 %v2175
        %v3459 = vpop.f32.mrf.mxu0
        %v3460 = vadd.f32 %v3203, %v3459
        %v3461 = vpop.f32.mrf.mxu0
        %v3462 = vpop.f32.mrf.mxu0
        %v3463 = vadd.f32 %v3206, %v3462
        %v3464 = vpop.f32.mrf.mxu0
        %3465 = vmatprep.mubr.bf16.mxu0 %v2189
        %3466 = vmatmul.mubr.bf16.gmra.mxu0 %v2188
        %v3467 = vpop.f32.mrf.mxu0
        %v3468 = vadd.f32 %v3211, %v3467
        %v3469 = vpop.f32.mrf.mxu0
        %v3470 = vpop.f32.mrf.mxu0
        %v3471 = vadd.f32 %v3214, %v3470
        %v3472 = vpop.f32.mrf.mxu0
        %3473 = vmatprep.mubr.bf16.mxu0 %v2202
        %3474 = vmatmul.mubr.bf16.gmra.mxu0 %v2201
        %v3475 = vpop.f32.mrf.mxu0
        %v3476 = vadd.f32 %v3219, %v3475
        %v3477 = vpop.f32.mrf.mxu0
        %v3478 = vpop.f32.mrf.mxu0
        %v3479 = vadd.f32 %v3222, %v3478
        %v3480 = vpop.f32.mrf.mxu0
        %3481 = vmatprep.mubr.bf16.mxu0 %v2215
        %3482 = vmatmul.mubr.bf16.gmra.mxu0 %v2214
        %v3483 = vpop.f32.mrf.mxu0
        %v3484 = vadd.f32 %v3227, %v3483
        %v3485 = vpop.f32.mrf.mxu0
        %v3486 = vpop.f32.mrf.mxu0
        %v3487 = vadd.f32 %v3230, %v3486
        %v3488 = vpop.f32.mrf.mxu0
        %3489 = vmatprep.mubr.bf16.mxu0 %v2228
        %3490 = vmatmul.mubr.bf16.gmra.mxu0 %v2227
        %v3491 = vpop.f32.mrf.mxu0
        %v3492 = vadd.f32 %v3235, %v3491
        %v3493 = vpop.f32.mrf.mxu0
        %v3494 = vpop.f32.mrf.mxu0
        %v3495 = vadd.f32 %v3238, %v3494
        %v3496 = vpop.f32.mrf.mxu0
        %3497 = vmatprep.mubr.bf16.mxu0 %v2241
        %3498 = vmatmul.mubr.bf16.gmra.mxu0 %v2240
        %v3499 = vpop.f32.mrf.mxu0
        %v3500 = vadd.f32 %v3243, %v3499
        %v3501 = vpop.f32.mrf.mxu0
        %v3502 = vpop.f32.mrf.mxu0
        %v3503 = vadd.f32 %v3246, %v3502
        %v3504 = vpop.f32.mrf.mxu0
        %3505 = vmatprep.mubr.bf16.mxu0 %v2254
        %3506 = vmatmul.mubr.bf16.gmra.mxu0 %v2253
        %v3507 = vpop.f32.mrf.mxu0
        %v3508 = vadd.f32 %v3251, %v3507
        %v3509 = vpop.f32.mrf.mxu0
        %v3510 = vpop.f32.mrf.mxu0
        %v3511 = vadd.f32 %v3254, %v3510
        %v3512 = vpop.f32.mrf.mxu0
        %3513 = vmatprep.mubr.bf16.mxu0 %v2267
        %3514 = vmatmul.mubr.bf16.gmra.mxu0 %v2266
        %v3515 = vpop.f32.mrf.mxu0
        %v3516 = vadd.f32 %v3259, %v3515
        %v3517 = vpop.f32.mrf.mxu0
        %v3518 = vpop.f32.mrf.mxu0
        %v3519 = vadd.f32 %v3262, %v3518
        %v3520 = vpop.f32.mrf.mxu0
        %3521 = vmatprep.mubr.bf16.mxu0 %v2280
        %3522 = vmatmul.mubr.bf16.gmra.mxu0 %v2279
        %v3523 = vpop.f32.mrf.mxu0
        %v3524 = vadd.f32 %v3267, %v3523
        %v3525 = vpop.f32.mrf.mxu0
        %v3526 = vpop.f32.mrf.mxu0
        %v3527 = vadd.f32 %v3270, %v3526
        %v3528 = vpop.f32.mrf.mxu0
        %3529 = vmatprep.mubr.bf16.mxu0 %v2293
        %3530 = vmatmul.mubr.bf16.gmra.mxu0 %v2292
        %v3531 = vpop.f32.mrf.mxu0
        %v3532 = vadd.f32 %v3275, %v3531
        %v3533 = vpop.f32.mrf.mxu0
        %v3534 = vpop.f32.mrf.mxu0
        %v3535 = vadd.f32 %v3278, %v3534
        %v3536 = vpop.f32.mrf.mxu0
        %3537 = vmatprep.mubr.bf16.mxu0 %v2306
        %3538 = vmatmul.mubr.bf16.gmra.mxu0 %v2305
        %v3539 = vpop.f32.mrf.mxu0
        %v3540 = vadd.f32 %v3283, %v3539
        %v3541 = vpop.f32.mrf.mxu0
        %v3542 = vpop.f32.mrf.mxu0
        %v3543 = vadd.f32 %v3286, %v3542
        %v3544 = vpop.f32.mrf.mxu0
        %3545 = vmatprep.mubr.bf16.mxu0 %v2319
        %3546 = vmatmul.mubr.bf16.gmra.mxu0 %v2318
        %v3547 = vpop.f32.mrf.mxu0
        %v3548 = vadd.f32 %v3291, %v3547
        %v3549 = vpop.f32.mrf.mxu0
        %v3550 = vpop.f32.mrf.mxu0
        %v3551 = vadd.f32 %v3294, %v3550
        %v3552 = vpop.f32.mrf.mxu0
        %3553 = vmatprep.mubr.bf16.mxu0 %v2332
        %3554 = vmatmul.mubr.bf16.gmra.mxu0 %v2331
        %v3555 = vpop.f32.mrf.mxu0
        %v3556 = vadd.f32 %v3299, %v3555
        %v3557 = vpop.f32.mrf.mxu0
        %v3558 = vpop.f32.mrf.mxu0
        %v3559 = vadd.f32 %v3302, %v3558
        %v3560 = vpop.f32.mrf.mxu0
        %3561 = vmatprep.mubr.bf16.mxu0 %v2345
        %3562 = vmatmul.mubr.bf16.gmra.mxu0 %v2344
        %v3563 = vpop.f32.mrf.mxu0
        %v3564 = vadd.f32 %v3307, %v3563
        %v3565 = vpop.f32.mrf.mxu0
        %v3566 = vpop.f32.mrf.mxu0
        %v3567 = vadd.f32 %v3310, %v3566
        %v3568 = vpop.f32.mrf.mxu0
        %3569 = vmatprep.mubr.bf16.mxu0 %v2358
        %3570 = vmatmul.mubr.bf16.gmra.mxu0 %v2357
        %v3571 = vpop.f32.mrf.mxu0
        %v3572 = vadd.f32 %v3315, %v3571
        %v3573 = vpop.f32.mrf.mxu0
        %v3574 = vpop.f32.mrf.mxu0
        %v3575 = vadd.f32 %v3318, %v3574
        %v3576 = vpop.f32.mrf.mxu0
        %3577 = vmatprep.mubr.bf16.mxu0 %v2371
        %3578 = vmatmul.mubr.bf16.gmra.mxu0 %v2370
        %v3579 = vpop.f32.mrf.mxu0
        %v3580 = vadd.f32 %v3323, %v3579
        %v3581 = vpop.f32.mrf.mxu0
        %v3582 = vpop.f32.mrf.mxu0
        %v3583 = vadd.f32 %v3326, %v3582
        %v3584 = vpop.f32.mrf.mxu0
        %3585 = vmatprep.mubr.bf16.mxu0 %v2384
        %3586 = vmatmul.mubr.bf16.gmra.mxu0 %v2383
        %v3587 = vpop.f32.mrf.mxu0
        %v3588 = vadd.f32 %v3331, %v3587
        %v3589 = vpop.f32.mrf.mxu0
        %v3590 = vpop.f32.mrf.mxu0
        %v3591 = vadd.f32 %v3334, %v3590
        %v3592 = vpop.f32.mrf.mxu0
        %3593 = vmatprep.mubr.bf16.mxu0 %v2397
        %3594 = vmatmul.mubr.bf16.gmra.mxu0 %v2396
        %v3595 = vpop.f32.mrf.mxu0
        %v3596 = vadd.f32 %v3339, %v3595
        %v3597 = vpop.f32.mrf.mxu0
        %v3598 = vpop.f32.mrf.mxu0
        %v3599 = vadd.f32 %v3342, %v3598
        %v3600 = vpop.f32.mrf.mxu0
        %3601 = vmatprep.mubr.bf16.mxu0 %v2410
        %3602 = vmatmul.mubr.bf16.gmra.mxu0 %v2409
        %v3603 = vpop.f32.mrf.mxu0
        %v3604 = vadd.f32 %v3347, %v3603
        %v3605 = vpop.f32.mrf.mxu0
        %v3606 = vpop.f32.mrf.mxu0
        %v3607 = vadd.f32 %v3350, %v3606
        %v3608 = vpop.f32.mrf.mxu0
        %3609 = vdwg.mxu0
        %3610 = vmatprep.subr.bf16.mxu0 0
        %3611 = vmatpush1.bf16.msra.mxu0 %v495
        %3612 = vmatprep.subr.bf16.mxu0 0
        %3613 = vmatpush1.bf16.msra.mxu0 %v494
        %3614 = vmatprep.subr.bf16.mxu0 0
        %3615 = vmatpush1.bf16.msra.mxu0 %v493
        %3616 = vmatprep.subr.bf16.mxu0 0
        %3617 = vmatpush1.bf16.msra.mxu0 %v492
        %3618 = vmatprep.subr.bf16.mxu0 0
        %3619 = vmatpush1.bf16.msra.mxu0 %v491
        %3620 = vmatprep.subr.bf16.mxu0 0
        %3621 = vmatpush1.bf16.msra.mxu0 %v490
        %3622 = vmatprep.subr.bf16.mxu0 0
        %3623 = vmatpush1.bf16.msra.mxu0 %v489
        %3624 = vmatprep.subr.bf16.mxu0 0
        %3625 = vmatpush1.bf16.msra.mxu0 %v488
        %3626 = vmatprep.subr.bf16.mxu0 0
        %3627 = vmatpush2.bf16.msra.mxu0 %v503
        %3628 = vmatprep.subr.bf16.mxu0 0
        %3629 = vmatpush2.bf16.msra.mxu0 %v502
        %3630 = vmatprep.subr.bf16.mxu0 0
        %3631 = vmatpush2.bf16.msra.mxu0 %v501
        %3632 = vmatprep.subr.bf16.mxu0 0
        %3633 = vmatpush2.bf16.msra.mxu0 %v500
        %3634 = vmatprep.subr.bf16.mxu0 0
        %3635 = vmatpush2.bf16.msra.mxu0 %v499
        %3636 = vmatprep.subr.bf16.mxu0 0
        %3637 = vmatpush2.bf16.msra.mxu0 %v498
        %3638 = vmatprep.subr.bf16.mxu0 0
        %3639 = vmatpush2.bf16.msra.mxu0 %v497
        %3640 = vmatprep.subr.bf16.mxu0 0
        %3641 = vmatpush2.bf16.msra.mxu0 %v496
        %3642 = vmatprep.mubr.bf16.mxu0 %v2061
        %3643 = vmatmul.mubr.bf16.gmra.mxu0 %v2060
        %v3644 = vpop.f32.mrf.mxu0
        %v3645 = vadd.f32 %v3388, %v3644
        %v3646 = vpop.f32.mrf.mxu0
        %v3647 = vpop.f32.mrf.mxu0
        %v3648 = vadd.f32 %v3391, %v3647
        %v3649 = vpop.f32.mrf.mxu0
        %3650 = vmatprep.mubr.bf16.mxu0 %v2074
        %3651 = vmatmul.mubr.bf16.gmra.mxu0 %v2073
        %v3652 = vpop.f32.mrf.mxu0
        %v3653 = vadd.f32 %v3396, %v3652
        %v3654 = vpop.f32.mrf.mxu0
        %v3655 = vpop.f32.mrf.mxu0
        %v3656 = vadd.f32 %v3399, %v3655
        %v3657 = vpop.f32.mrf.mxu0
        %3658 = vmatprep.mubr.bf16.mxu0 %v2087
        %3659 = vmatmul.mubr.bf16.gmra.mxu0 %v2086
        %v3660 = vpop.f32.mrf.mxu0
        %v3661 = vadd.f32 %v3404, %v3660
        %v3662 = vpop.f32.mrf.mxu0
        %v3663 = vpop.f32.mrf.mxu0
        %v3664 = vadd.f32 %v3407, %v3663
        %v3665 = vpop.f32.mrf.mxu0
        %3666 = vmatprep.mubr.bf16.mxu0 %v2100
        %3667 = vmatmul.mubr.bf16.gmra.mxu0 %v2099
        %v3668 = vpop.f32.mrf.mxu0
        %v3669 = vadd.f32 %v3412, %v3668
        %v3670 = vpop.f32.mrf.mxu0
        %v3671 = vpop.f32.mrf.mxu0
        %v3672 = vadd.f32 %v3415, %v3671
        %v3673 = vpop.f32.mrf.mxu0
        %3674 = vmatprep.mubr.bf16.mxu0 %v2113
        %3675 = vmatmul.mubr.bf16.gmra.mxu0 %v2112
        %v3676 = vpop.f32.mrf.mxu0
        %v3677 = vadd.f32 %v3420, %v3676
        %v3678 = vpop.f32.mrf.mxu0
        %v3679 = vpop.f32.mrf.mxu0
        %v3680 = vadd.f32 %v3423, %v3679
        %v3681 = vpop.f32.mrf.mxu0
        %3682 = vmatprep.mubr.bf16.mxu0 %v2126
        %3683 = vmatmul.mubr.bf16.gmra.mxu0 %v2125
        %v3684 = vpop.f32.mrf.mxu0
        %v3685 = vadd.f32 %v3428, %v3684
        %v3686 = vpop.f32.mrf.mxu0
        %v3687 = vpop.f32.mrf.mxu0
        %v3688 = vadd.f32 %v3431, %v3687
        %v3689 = vpop.f32.mrf.mxu0
        %3690 = vmatprep.mubr.bf16.mxu0 %v2139
        %3691 = vmatmul.mubr.bf16.gmra.mxu0 %v2138
        %v3692 = vpop.f32.mrf.mxu0
        %v3693 = vadd.f32 %v3436, %v3692
        %v3694 = vpop.f32.mrf.mxu0
        %v3695 = vpop.f32.mrf.mxu0
        %v3696 = vadd.f32 %v3439, %v3695
        %v3697 = vpop.f32.mrf.mxu0
        %3698 = vmatprep.mubr.bf16.mxu0 %v2152
        %3699 = vmatmul.mubr.bf16.gmra.mxu0 %v2151
        %v3700 = vpop.f32.mrf.mxu0
        %v3701 = vadd.f32 %v3444, %v3700
        %v3702 = vpop.f32.mrf.mxu0
        %v3703 = vpop.f32.mrf.mxu0
        %v3704 = vadd.f32 %v3447, %v3703
        %v3705 = vpop.f32.mrf.mxu0
        %3706 = vmatprep.mubr.bf16.mxu0 %v2165
        %3707 = vmatmul.mubr.bf16.gmra.mxu0 %v2164
        %v3708 = vpop.f32.mrf.mxu0
        %v3709 = vadd.f32 %v3452, %v3708
        %v3710 = vpop.f32.mrf.mxu0
        %v3711 = vpop.f32.mrf.mxu0
        %v3712 = vadd.f32 %v3455, %v3711
        %v3713 = vpop.f32.mrf.mxu0
        %3714 = vmatprep.mubr.bf16.mxu0 %v2178
        %3715 = vmatmul.mubr.bf16.gmra.mxu0 %v2177
        %v3716 = vpop.f32.mrf.mxu0
        %v3717 = vadd.f32 %v3460, %v3716
        %v3718 = vpop.f32.mrf.mxu0
        %v3719 = vpop.f32.mrf.mxu0
        %v3720 = vadd.f32 %v3463, %v3719
        %v3721 = vpop.f32.mrf.mxu0
        %3722 = vmatprep.mubr.bf16.mxu0 %v2191
        %3723 = vmatmul.mubr.bf16.gmra.mxu0 %v2190
        %v3724 = vpop.f32.mrf.mxu0
        %v3725 = vadd.f32 %v3468, %v3724
        %v3726 = vpop.f32.mrf.mxu0
        %v3727 = vpop.f32.mrf.mxu0
        %v3728 = vadd.f32 %v3471, %v3727
        %v3729 = vpop.f32.mrf.mxu0
        %3730 = vmatprep.mubr.bf16.mxu0 %v2204
        %3731 = vmatmul.mubr.bf16.gmra.mxu0 %v2203
        %v3732 = vpop.f32.mrf.mxu0
        %v3733 = vadd.f32 %v3476, %v3732
        %v3734 = vpop.f32.mrf.mxu0
        %v3735 = vpop.f32.mrf.mxu0
        %v3736 = vadd.f32 %v3479, %v3735
        %v3737 = vpop.f32.mrf.mxu0
        %3738 = vmatprep.mubr.bf16.mxu0 %v2217
        %3739 = vmatmul.mubr.bf16.gmra.mxu0 %v2216
        %v3740 = vpop.f32.mrf.mxu0
        %v3741 = vadd.f32 %v3484, %v3740
        %v3742 = vpop.f32.mrf.mxu0
        %v3743 = vpop.f32.mrf.mxu0
        %v3744 = vadd.f32 %v3487, %v3743
        %v3745 = vpop.f32.mrf.mxu0
        %3746 = vmatprep.mubr.bf16.mxu0 %v2230
        %3747 = vmatmul.mubr.bf16.gmra.mxu0 %v2229
        %v3748 = vpop.f32.mrf.mxu0
        %v3749 = vadd.f32 %v3492, %v3748
        %v3750 = vpop.f32.mrf.mxu0
        %v3751 = vpop.f32.mrf.mxu0
        %v3752 = vadd.f32 %v3495, %v3751
        %v3753 = vpop.f32.mrf.mxu0
        %3754 = vmatprep.mubr.bf16.mxu0 %v2243
        %3755 = vmatmul.mubr.bf16.gmra.mxu0 %v2242
        %v3756 = vpop.f32.mrf.mxu0
        %v3757 = vadd.f32 %v3500, %v3756
        %v3758 = vpop.f32.mrf.mxu0
        %v3759 = vpop.f32.mrf.mxu0
        %v3760 = vadd.f32 %v3503, %v3759
        %v3761 = vpop.f32.mrf.mxu0
        %3762 = vmatprep.mubr.bf16.mxu0 %v2256
        %3763 = vmatmul.mubr.bf16.gmra.mxu0 %v2255
        %v3764 = vpop.f32.mrf.mxu0
        %v3765 = vadd.f32 %v3508, %v3764
        %v3766 = vpop.f32.mrf.mxu0
        %v3767 = vpop.f32.mrf.mxu0
        %v3768 = vadd.f32 %v3511, %v3767
        %v3769 = vpop.f32.mrf.mxu0
        %3770 = vmatprep.mubr.bf16.mxu0 %v2269
        %3771 = vmatmul.mubr.bf16.gmra.mxu0 %v2268
        %v3772 = vpop.f32.mrf.mxu0
        %v3773 = vadd.f32 %v3516, %v3772
        %v3774 = vpop.f32.mrf.mxu0
        %v3775 = vpop.f32.mrf.mxu0
        %v3776 = vadd.f32 %v3519, %v3775
        %v3777 = vpop.f32.mrf.mxu0
        %3778 = vmatprep.mubr.bf16.mxu0 %v2282
        %3779 = vmatmul.mubr.bf16.gmra.mxu0 %v2281
        %v3780 = vpop.f32.mrf.mxu0
        %v3781 = vadd.f32 %v3524, %v3780
        %v3782 = vpop.f32.mrf.mxu0
        %v3783 = vpop.f32.mrf.mxu0
        %v3784 = vadd.f32 %v3527, %v3783
        %v3785 = vpop.f32.mrf.mxu0
        %3786 = vmatprep.mubr.bf16.mxu0 %v2295
        %3787 = vmatmul.mubr.bf16.gmra.mxu0 %v2294
        %v3788 = vpop.f32.mrf.mxu0
        %v3789 = vadd.f32 %v3532, %v3788
        %v3790 = vpop.f32.mrf.mxu0
        %v3791 = vpop.f32.mrf.mxu0
        %v3792 = vadd.f32 %v3535, %v3791
        %v3793 = vpop.f32.mrf.mxu0
        %3794 = vmatprep.mubr.bf16.mxu0 %v2308
        %3795 = vmatmul.mubr.bf16.gmra.mxu0 %v2307
        %v3796 = vpop.f32.mrf.mxu0
        %v3797 = vadd.f32 %v3540, %v3796
        %v3798 = vpop.f32.mrf.mxu0
        %v3799 = vpop.f32.mrf.mxu0
        %v3800 = vadd.f32 %v3543, %v3799
        %v3801 = vpop.f32.mrf.mxu0
        %3802 = vmatprep.mubr.bf16.mxu0 %v2321
        %3803 = vmatmul.mubr.bf16.gmra.mxu0 %v2320
        %v3804 = vpop.f32.mrf.mxu0
        %v3805 = vadd.f32 %v3548, %v3804
        %v3806 = vpop.f32.mrf.mxu0
        %v3807 = vpop.f32.mrf.mxu0
        %v3808 = vadd.f32 %v3551, %v3807
        %v3809 = vpop.f32.mrf.mxu0
        %3810 = vmatprep.mubr.bf16.mxu0 %v2334
        %3811 = vmatmul.mubr.bf16.gmra.mxu0 %v2333
        %v3812 = vpop.f32.mrf.mxu0
        %v3813 = vadd.f32 %v3556, %v3812
        %v3814 = vpop.f32.mrf.mxu0
        %v3815 = vpop.f32.mrf.mxu0
        %v3816 = vadd.f32 %v3559, %v3815
        %v3817 = vpop.f32.mrf.mxu0
        %3818 = vmatprep.mubr.bf16.mxu0 %v2347
        %3819 = vmatmul.mubr.bf16.gmra.mxu0 %v2346
        %v3820 = vpop.f32.mrf.mxu0
        %v3821 = vadd.f32 %v3564, %v3820
        %v3822 = vpop.f32.mrf.mxu0
        %v3823 = vpop.f32.mrf.mxu0
        %v3824 = vadd.f32 %v3567, %v3823
        %v3825 = vpop.f32.mrf.mxu0
        %3826 = vmatprep.mubr.bf16.mxu0 %v2360
        %3827 = vmatmul.mubr.bf16.gmra.mxu0 %v2359
        %v3828 = vpop.f32.mrf.mxu0
        %v3829 = vadd.f32 %v3572, %v3828
        %v3830 = vpop.f32.mrf.mxu0
        %v3831 = vpop.f32.mrf.mxu0
        %v3832 = vadd.f32 %v3575, %v3831
        %v3833 = vpop.f32.mrf.mxu0
        %3834 = vmatprep.mubr.bf16.mxu0 %v2373
        %3835 = vmatmul.mubr.bf16.gmra.mxu0 %v2372
        %v3836 = vpop.f32.mrf.mxu0
        %v3837 = vadd.f32 %v3580, %v3836
        %v3838 = vpop.f32.mrf.mxu0
        %v3839 = vpop.f32.mrf.mxu0
        %v3840 = vadd.f32 %v3583, %v3839
        %v3841 = vpop.f32.mrf.mxu0
        %3842 = vmatprep.mubr.bf16.mxu0 %v2386
        %3843 = vmatmul.mubr.bf16.gmra.mxu0 %v2385
        %v3844 = vpop.f32.mrf.mxu0
        %v3845 = vadd.f32 %v3588, %v3844
        %v3846 = vpop.f32.mrf.mxu0
        %v3847 = vpop.f32.mrf.mxu0
        %v3848 = vadd.f32 %v3591, %v3847
        %v3849 = vpop.f32.mrf.mxu0
        %3850 = vmatprep.mubr.bf16.mxu0 %v2399
        %3851 = vmatmul.mubr.bf16.gmra.mxu0 %v2398
        %v3852 = vpop.f32.mrf.mxu0
        %v3853 = vadd.f32 %v3596, %v3852
        %v3854 = vpop.f32.mrf.mxu0
        %v3855 = vpop.f32.mrf.mxu0
        %v3856 = vadd.f32 %v3599, %v3855
        %v3857 = vpop.f32.mrf.mxu0
        %3858 = vmatprep.mubr.bf16.mxu0 %v2412
        %3859 = vmatmul.mubr.bf16.gmra.mxu0 %v2411
        %v3860 = vpop.f32.mrf.mxu0
        %v3861 = vadd.f32 %v3604, %v3860
        %v3862 = vpop.f32.mrf.mxu0
        %v3863 = vpop.f32.mrf.mxu0
        %v3864 = vadd.f32 %v3607, %v3863
        %v3865 = vpop.f32.mrf.mxu0
        %3866 = vdwg.mxu0
        %3867 = vmatprep.subr.bf16.mxu0 0
        %3868 = vmatpush1.bf16.msra.mxu0 %v511
        %3869 = vmatprep.subr.bf16.mxu0 0
        %3870 = vmatpush1.bf16.msra.mxu0 %v510
        %3871 = vmatprep.subr.bf16.mxu0 0
        %3872 = vmatpush1.bf16.msra.mxu0 %v509
        %3873 = vmatprep.subr.bf16.mxu0 0
        %3874 = vmatpush1.bf16.msra.mxu0 %v508
        %3875 = vmatprep.subr.bf16.mxu0 0
        %3876 = vmatpush1.bf16.msra.mxu0 %v507
        %3877 = vmatprep.subr.bf16.mxu0 0
        %3878 = vmatpush1.bf16.msra.mxu0 %v506
        %3879 = vmatprep.subr.bf16.mxu0 0
        %3880 = vmatpush1.bf16.msra.mxu0 %v505
        %3881 = vmatprep.subr.bf16.mxu0 0
        %3882 = vmatpush1.bf16.msra.mxu0 %v504
        %3883 = vmatprep.subr.bf16.mxu0 0
        %3884 = vmatpush2.bf16.msra.mxu0 %v519
        %3885 = vmatprep.subr.bf16.mxu0 0
        %3886 = vmatpush2.bf16.msra.mxu0 %v518
        %3887 = vmatprep.subr.bf16.mxu0 0
        %3888 = vmatpush2.bf16.msra.mxu0 %v517
        %3889 = vmatprep.subr.bf16.mxu0 0
        %3890 = vmatpush2.bf16.msra.mxu0 %v516
        %3891 = vmatprep.subr.bf16.mxu0 0
        %3892 = vmatpush2.bf16.msra.mxu0 %v515
        %3893 = vmatprep.subr.bf16.mxu0 0
        %3894 = vmatpush2.bf16.msra.mxu0 %v514
        %3895 = vmatprep.subr.bf16.mxu0 0
        %3896 = vmatpush2.bf16.msra.mxu0 %v513
        %3897 = vmatprep.subr.bf16.mxu0 0
        %3898 = vmatpush2.bf16.msra.mxu0 %v512
        %3899 = vmatprep.mubr.bf16.mxu0 %v2063
        %3900 = vmatmul.mubr.bf16.gmra.mxu0 %v2062
        %v3901 = vpop.f32.mrf.mxu0
        %v3902 = vadd.f32 %v3645, %v3901
        %v3903 = vpop.f32.mrf.mxu0
        %v3904 = vpop.f32.mrf.mxu0
        %v3905 = vadd.f32 %v3648, %v3904
        %v3906 = vpop.f32.mrf.mxu0
        %3907 = vmatprep.mubr.bf16.mxu0 %v2076
        %3908 = vmatmul.mubr.bf16.gmra.mxu0 %v2075
        %v3909 = vpop.f32.mrf.mxu0
        %v3910 = vadd.f32 %v3653, %v3909
        %v3911 = vpop.f32.mrf.mxu0
        %v3912 = vpop.f32.mrf.mxu0
        %v3913 = vadd.f32 %v3656, %v3912
        %v3914 = vpop.f32.mrf.mxu0
        %3915 = vmatprep.mubr.bf16.mxu0 %v2089
        %3916 = vmatmul.mubr.bf16.gmra.mxu0 %v2088
        %v3917 = vpop.f32.mrf.mxu0
        %v3918 = vadd.f32 %v3661, %v3917
        %v3919 = vpop.f32.mrf.mxu0
        %v3920 = vpop.f32.mrf.mxu0
        %v3921 = vadd.f32 %v3664, %v3920
        %v3922 = vpop.f32.mrf.mxu0
        %3923 = vmatprep.mubr.bf16.mxu0 %v2102
        %3924 = vmatmul.mubr.bf16.gmra.mxu0 %v2101
        %v3925 = vpop.f32.mrf.mxu0
        %v3926 = vadd.f32 %v3669, %v3925
        %v3927 = vpop.f32.mrf.mxu0
        %v3928 = vpop.f32.mrf.mxu0
        %v3929 = vadd.f32 %v3672, %v3928
        %v3930 = vpop.f32.mrf.mxu0
        %3931 = vmatprep.mubr.bf16.mxu0 %v2115
        %3932 = vmatmul.mubr.bf16.gmra.mxu0 %v2114
        %v3933 = vpop.f32.mrf.mxu0
        %v3934 = vadd.f32 %v3677, %v3933
        %v3935 = vpop.f32.mrf.mxu0
        %v3936 = vpop.f32.mrf.mxu0
        %v3937 = vadd.f32 %v3680, %v3936
        %v3938 = vpop.f32.mrf.mxu0
        %3939 = vmatprep.mubr.bf16.mxu0 %v2128
        %3940 = vmatmul.mubr.bf16.gmra.mxu0 %v2127
        %v3941 = vpop.f32.mrf.mxu0
        %v3942 = vadd.f32 %v3685, %v3941
        %v3943 = vpop.f32.mrf.mxu0
        %v3944 = vpop.f32.mrf.mxu0
        %v3945 = vadd.f32 %v3688, %v3944
        %v3946 = vpop.f32.mrf.mxu0
        %3947 = vmatprep.mubr.bf16.mxu0 %v2141
        %3948 = vmatmul.mubr.bf16.gmra.mxu0 %v2140
        %v3949 = vpop.f32.mrf.mxu0
        %v3950 = vadd.f32 %v3693, %v3949
        %v3951 = vpop.f32.mrf.mxu0
        %v3952 = vpop.f32.mrf.mxu0
        %v3953 = vadd.f32 %v3696, %v3952
        %v3954 = vpop.f32.mrf.mxu0
        %3955 = vmatprep.mubr.bf16.mxu0 %v2154
        %3956 = vmatmul.mubr.bf16.gmra.mxu0 %v2153
        %v3957 = vpop.f32.mrf.mxu0
        %v3958 = vadd.f32 %v3701, %v3957
        %v3959 = vpop.f32.mrf.mxu0
        %v3960 = vpop.f32.mrf.mxu0
        %v3961 = vadd.f32 %v3704, %v3960
        %v3962 = vpop.f32.mrf.mxu0
        %3963 = vmatprep.mubr.bf16.mxu0 %v2167
        %3964 = vmatmul.mubr.bf16.gmra.mxu0 %v2166
        %v3965 = vpop.f32.mrf.mxu0
        %v3966 = vadd.f32 %v3709, %v3965
        %v3967 = vpop.f32.mrf.mxu0
        %v3968 = vpop.f32.mrf.mxu0
        %v3969 = vadd.f32 %v3712, %v3968
        %v3970 = vpop.f32.mrf.mxu0
        %3971 = vmatprep.mubr.bf16.mxu0 %v2180
        %3972 = vmatmul.mubr.bf16.gmra.mxu0 %v2179
        %v3973 = vpop.f32.mrf.mxu0
        %v3974 = vadd.f32 %v3717, %v3973
        %v3975 = vpop.f32.mrf.mxu0
        %v3976 = vpop.f32.mrf.mxu0
        %v3977 = vadd.f32 %v3720, %v3976
        %v3978 = vpop.f32.mrf.mxu0
        %3979 = vmatprep.mubr.bf16.mxu0 %v2193
        %3980 = vmatmul.mubr.bf16.gmra.mxu0 %v2192
        %v3981 = vpop.f32.mrf.mxu0
        %v3982 = vadd.f32 %v3725, %v3981
        %v3983 = vpop.f32.mrf.mxu0
        %v3984 = vpop.f32.mrf.mxu0
        %v3985 = vadd.f32 %v3728, %v3984
        %v3986 = vpop.f32.mrf.mxu0
        %3987 = vmatprep.mubr.bf16.mxu0 %v2206
        %3988 = vmatmul.mubr.bf16.gmra.mxu0 %v2205
        %v3989 = vpop.f32.mrf.mxu0
        %v3990 = vadd.f32 %v3733, %v3989
        %v3991 = vpop.f32.mrf.mxu0
        %v3992 = vpop.f32.mrf.mxu0
        %v3993 = vadd.f32 %v3736, %v3992
        %v3994 = vpop.f32.mrf.mxu0
        %3995 = vmatprep.mubr.bf16.mxu0 %v2219
        %3996 = vmatmul.mubr.bf16.gmra.mxu0 %v2218
        %v3997 = vpop.f32.mrf.mxu0
        %v3998 = vadd.f32 %v3741, %v3997
        %v3999 = vpop.f32.mrf.mxu0
        %v4000 = vpop.f32.mrf.mxu0
        %v4001 = vadd.f32 %v3744, %v4000
        %v4002 = vpop.f32.mrf.mxu0
        %4003 = vmatprep.mubr.bf16.mxu0 %v2232
        %4004 = vmatmul.mubr.bf16.gmra.mxu0 %v2231
        %v4005 = vpop.f32.mrf.mxu0
        %v4006 = vadd.f32 %v3749, %v4005
        %v4007 = vpop.f32.mrf.mxu0
        %v4008 = vpop.f32.mrf.mxu0
        %v4009 = vadd.f32 %v3752, %v4008
        %v4010 = vpop.f32.mrf.mxu0
        %4011 = vmatprep.mubr.bf16.mxu0 %v2245
        %4012 = vmatmul.mubr.bf16.gmra.mxu0 %v2244
        %v4013 = vpop.f32.mrf.mxu0
        %v4014 = vadd.f32 %v3757, %v4013
        %v4015 = vpop.f32.mrf.mxu0
        %v4016 = vpop.f32.mrf.mxu0
        %v4017 = vadd.f32 %v3760, %v4016
        %v4018 = vpop.f32.mrf.mxu0
        %4019 = vmatprep.mubr.bf16.mxu0 %v2258
        %4020 = vmatmul.mubr.bf16.gmra.mxu0 %v2257
        %v4021 = vpop.f32.mrf.mxu0
        %v4022 = vadd.f32 %v3765, %v4021
        %v4023 = vpop.f32.mrf.mxu0
        %v4024 = vpop.f32.mrf.mxu0
        %v4025 = vadd.f32 %v3768, %v4024
        %v4026 = vpop.f32.mrf.mxu0
        %4027 = vmatprep.mubr.bf16.mxu0 %v2271
        %4028 = vmatmul.mubr.bf16.gmra.mxu0 %v2270
        %v4029 = vpop.f32.mrf.mxu0
        %v4030 = vadd.f32 %v3773, %v4029
        %v4031 = vpop.f32.mrf.mxu0
        %v4032 = vpop.f32.mrf.mxu0
        %v4033 = vadd.f32 %v3776, %v4032
        %v4034 = vpop.f32.mrf.mxu0
        %4035 = vmatprep.mubr.bf16.mxu0 %v2284
        %4036 = vmatmul.mubr.bf16.gmra.mxu0 %v2283
        %v4037 = vpop.f32.mrf.mxu0
        %v4038 = vadd.f32 %v3781, %v4037
        %v4039 = vpop.f32.mrf.mxu0
        %v4040 = vpop.f32.mrf.mxu0
        %v4041 = vadd.f32 %v3784, %v4040
        %v4042 = vpop.f32.mrf.mxu0
        %4043 = vmatprep.mubr.bf16.mxu0 %v2297
        %4044 = vmatmul.mubr.bf16.gmra.mxu0 %v2296
        %v4045 = vpop.f32.mrf.mxu0
        %v4046 = vadd.f32 %v3789, %v4045
        %v4047 = vpop.f32.mrf.mxu0
        %v4048 = vpop.f32.mrf.mxu0
        %v4049 = vadd.f32 %v3792, %v4048
        %v4050 = vpop.f32.mrf.mxu0
        %4051 = vmatprep.mubr.bf16.mxu0 %v2310
        %4052 = vmatmul.mubr.bf16.gmra.mxu0 %v2309
        %v4053 = vpop.f32.mrf.mxu0
        %v4054 = vadd.f32 %v3797, %v4053
        %v4055 = vpop.f32.mrf.mxu0
        %v4056 = vpop.f32.mrf.mxu0
        %v4057 = vadd.f32 %v3800, %v4056
        %v4058 = vpop.f32.mrf.mxu0
        %4059 = vmatprep.mubr.bf16.mxu0 %v2323
        %4060 = vmatmul.mubr.bf16.gmra.mxu0 %v2322
        %v4061 = vpop.f32.mrf.mxu0
        %v4062 = vadd.f32 %v3805, %v4061
        %v4063 = vpop.f32.mrf.mxu0
        %v4064 = vpop.f32.mrf.mxu0
        %v4065 = vadd.f32 %v3808, %v4064
        %v4066 = vpop.f32.mrf.mxu0
        %4067 = vmatprep.mubr.bf16.mxu0 %v2336
        %4068 = vmatmul.mubr.bf16.gmra.mxu0 %v2335
        %v4069 = vpop.f32.mrf.mxu0
        %v4070 = vadd.f32 %v3813, %v4069
        %v4071 = vpop.f32.mrf.mxu0
        %v4072 = vpop.f32.mrf.mxu0
        %v4073 = vadd.f32 %v3816, %v4072
        %v4074 = vpop.f32.mrf.mxu0
        %4075 = vmatprep.mubr.bf16.mxu0 %v2349
        %4076 = vmatmul.mubr.bf16.gmra.mxu0 %v2348
        %v4077 = vpop.f32.mrf.mxu0
        %v4078 = vadd.f32 %v3821, %v4077
        %v4079 = vpop.f32.mrf.mxu0
        %v4080 = vpop.f32.mrf.mxu0
        %v4081 = vadd.f32 %v3824, %v4080
        %v4082 = vpop.f32.mrf.mxu0
        %4083 = vmatprep.mubr.bf16.mxu0 %v2362
        %4084 = vmatmul.mubr.bf16.gmra.mxu0 %v2361
        %v4085 = vpop.f32.mrf.mxu0
        %v4086 = vadd.f32 %v3829, %v4085
        %v4087 = vpop.f32.mrf.mxu0
        %v4088 = vpop.f32.mrf.mxu0
        %v4089 = vadd.f32 %v3832, %v4088
        %v4090 = vpop.f32.mrf.mxu0
        %4091 = vmatprep.mubr.bf16.mxu0 %v2375
        %4092 = vmatmul.mubr.bf16.gmra.mxu0 %v2374
        %v4093 = vpop.f32.mrf.mxu0
        %v4094 = vadd.f32 %v3837, %v4093
        %v4095 = vpop.f32.mrf.mxu0
        %v4096 = vpop.f32.mrf.mxu0
        %v4097 = vadd.f32 %v3840, %v4096
        %v4098 = vpop.f32.mrf.mxu0
        %4099 = vmatprep.mubr.bf16.mxu0 %v2388
        %4100 = vmatmul.mubr.bf16.gmra.mxu0 %v2387
        %v4101 = vpop.f32.mrf.mxu0
        %v4102 = vadd.f32 %v3845, %v4101
        %v4103 = vpop.f32.mrf.mxu0
        %v4104 = vpop.f32.mrf.mxu0
        %v4105 = vadd.f32 %v3848, %v4104
        %v4106 = vpop.f32.mrf.mxu0
        %4107 = vmatprep.mubr.bf16.mxu0 %v2401
        %4108 = vmatmul.mubr.bf16.gmra.mxu0 %v2400
        %v4109 = vpop.f32.mrf.mxu0
        %v4110 = vadd.f32 %v3853, %v4109
        %v4111 = vpop.f32.mrf.mxu0
        %v4112 = vpop.f32.mrf.mxu0
        %v4113 = vadd.f32 %v3856, %v4112
        %v4114 = vpop.f32.mrf.mxu0
        %4115 = vmatprep.mubr.bf16.mxu0 %v2414
        %4116 = vmatmul.mubr.bf16.gmra.mxu0 %v2413
        %v4117 = vpop.f32.mrf.mxu0
        %v4118 = vadd.f32 %v3861, %v4117
        %v4119 = vpop.f32.mrf.mxu0
        %v4120 = vpop.f32.mrf.mxu0
        %v4121 = vadd.f32 %v3864, %v4120
        %v4122 = vpop.f32.mrf.mxu0
        %4123 = vdwg.mxu0
        %4124 = vmatprep.subr.bf16.mxu0 0
        %4125 = vmatpush1.bf16.msra.mxu0 %v527
        %4126 = vmatprep.subr.bf16.mxu0 0
        %4127 = vmatpush1.bf16.msra.mxu0 %v526
        %4128 = vmatprep.subr.bf16.mxu0 0
        %4129 = vmatpush1.bf16.msra.mxu0 %v525
        %4130 = vmatprep.subr.bf16.mxu0 0
        %4131 = vmatpush1.bf16.msra.mxu0 %v524
        %4132 = vmatprep.subr.bf16.mxu0 0
        %4133 = vmatpush1.bf16.msra.mxu0 %v523
        %4134 = vmatprep.subr.bf16.mxu0 0
        %4135 = vmatpush1.bf16.msra.mxu0 %v522
        %4136 = vmatprep.subr.bf16.mxu0 0
        %4137 = vmatpush1.bf16.msra.mxu0 %v521
        %4138 = vmatprep.subr.bf16.mxu0 0
        %4139 = vmatpush1.bf16.msra.mxu0 %v520
        %4140 = vmatprep.subr.bf16.mxu0 0
        %4141 = vmatpush2.bf16.msra.mxu0 %v535
        %4142 = vmatprep.subr.bf16.mxu0 0
        %4143 = vmatpush2.bf16.msra.mxu0 %v534
        %4144 = vmatprep.subr.bf16.mxu0 0
        %4145 = vmatpush2.bf16.msra.mxu0 %v533
        %4146 = vmatprep.subr.bf16.mxu0 0
        %4147 = vmatpush2.bf16.msra.mxu0 %v532
        %4148 = vmatprep.subr.bf16.mxu0 0
        %4149 = vmatpush2.bf16.msra.mxu0 %v531
        %4150 = vmatprep.subr.bf16.mxu0 0
        %4151 = vmatpush2.bf16.msra.mxu0 %v530
        %4152 = vmatprep.subr.bf16.mxu0 0
        %4153 = vmatpush2.bf16.msra.mxu0 %v529
        %4154 = vmatprep.subr.bf16.mxu0 0
        %4155 = vmatpush2.bf16.msra.mxu0 %v528
        %4156 = vmatprep.mubr.bf16.mxu0 %v2065
        %4157 = vmatmul.mubr.bf16.gmra.mxu0 %v2064
        %v4158 = vpop.f32.mrf.mxu0
        %v4159 = vadd.f32 %v3902, %v4158
        %v4160 = vpop.f32.mrf.mxu0
        %v4161 = vpop.f32.mrf.mxu0
        %v4162 = vadd.f32 %v3905, %v4161
        %v4163 = vpop.f32.mrf.mxu0
        %4164 = vmatprep.mubr.bf16.mxu0 %v2078
        %4165 = vmatmul.mubr.bf16.gmra.mxu0 %v2077
        %v4166 = vpop.f32.mrf.mxu0
        %v4167 = vadd.f32 %v3910, %v4166
        %v4168 = vpop.f32.mrf.mxu0
        %v4169 = vpop.f32.mrf.mxu0
        %v4170 = vadd.f32 %v3913, %v4169
        %v4171 = vpop.f32.mrf.mxu0
        %4172 = vmatprep.mubr.bf16.mxu0 %v2091
        %4173 = vmatmul.mubr.bf16.gmra.mxu0 %v2090
        %v4174 = vpop.f32.mrf.mxu0
        %v4175 = vadd.f32 %v3918, %v4174
        %v4176 = vpop.f32.mrf.mxu0
        %v4177 = vpop.f32.mrf.mxu0
        %v4178 = vadd.f32 %v3921, %v4177
        %v4179 = vpop.f32.mrf.mxu0
        %4180 = vmatprep.mubr.bf16.mxu0 %v2104
        %4181 = vmatmul.mubr.bf16.gmra.mxu0 %v2103
        %v4182 = vpop.f32.mrf.mxu0
        %v4183 = vadd.f32 %v3926, %v4182
        %v4184 = vpop.f32.mrf.mxu0
        %v4185 = vpop.f32.mrf.mxu0
        %v4186 = vadd.f32 %v3929, %v4185
        %v4187 = vpop.f32.mrf.mxu0
        %4188 = vmatprep.mubr.bf16.mxu0 %v2117
        %4189 = vmatmul.mubr.bf16.gmra.mxu0 %v2116
        %v4190 = vpop.f32.mrf.mxu0
        %v4191 = vadd.f32 %v3934, %v4190
        %v4192 = vpop.f32.mrf.mxu0
        %v4193 = vpop.f32.mrf.mxu0
        %v4194 = vadd.f32 %v3937, %v4193
        %v4195 = vpop.f32.mrf.mxu0
        %4196 = vmatprep.mubr.bf16.mxu0 %v2130
        %4197 = vmatmul.mubr.bf16.gmra.mxu0 %v2129
        %v4198 = vpop.f32.mrf.mxu0
        %v4199 = vadd.f32 %v3942, %v4198
        %v4200 = vpop.f32.mrf.mxu0
        %v4201 = vpop.f32.mrf.mxu0
        %v4202 = vadd.f32 %v3945, %v4201
        %v4203 = vpop.f32.mrf.mxu0
        %4204 = vmatprep.mubr.bf16.mxu0 %v2143
        %4205 = vmatmul.mubr.bf16.gmra.mxu0 %v2142
        %v4206 = vpop.f32.mrf.mxu0
        %v4207 = vadd.f32 %v3950, %v4206
        %v4208 = vpop.f32.mrf.mxu0
        %v4209 = vpop.f32.mrf.mxu0
        %v4210 = vadd.f32 %v3953, %v4209
        %v4211 = vpop.f32.mrf.mxu0
        %4212 = vmatprep.mubr.bf16.mxu0 %v2156
        %4213 = vmatmul.mubr.bf16.gmra.mxu0 %v2155
        %v4214 = vpop.f32.mrf.mxu0
        %v4215 = vadd.f32 %v3958, %v4214
        %v4216 = vpop.f32.mrf.mxu0
        %v4217 = vpop.f32.mrf.mxu0
        %v4218 = vadd.f32 %v3961, %v4217
        %v4219 = vpop.f32.mrf.mxu0
        %4220 = vmatprep.mubr.bf16.mxu0 %v2169
        %4221 = vmatmul.mubr.bf16.gmra.mxu0 %v2168
        %v4222 = vpop.f32.mrf.mxu0
        %v4223 = vadd.f32 %v3966, %v4222
        %v4224 = vpop.f32.mrf.mxu0
        %v4225 = vpop.f32.mrf.mxu0
        %v4226 = vadd.f32 %v3969, %v4225
        %v4227 = vpop.f32.mrf.mxu0
        %4228 = vmatprep.mubr.bf16.mxu0 %v2182
        %4229 = vmatmul.mubr.bf16.gmra.mxu0 %v2181
        %v4230 = vpop.f32.mrf.mxu0
        %v4231 = vadd.f32 %v3974, %v4230
        %v4232 = vpop.f32.mrf.mxu0
        %v4233 = vpop.f32.mrf.mxu0
        %v4234 = vadd.f32 %v3977, %v4233
        %v4235 = vpop.f32.mrf.mxu0
        %4236 = vmatprep.mubr.bf16.mxu0 %v2195
        %4237 = vmatmul.mubr.bf16.gmra.mxu0 %v2194
        %v4238 = vpop.f32.mrf.mxu0
        %v4239 = vadd.f32 %v3982, %v4238
        %v4240 = vpop.f32.mrf.mxu0
        %v4241 = vpop.f32.mrf.mxu0
        %v4242 = vadd.f32 %v3985, %v4241
        %v4243 = vpop.f32.mrf.mxu0
        %4244 = vmatprep.mubr.bf16.mxu0 %v2208
        %4245 = vmatmul.mubr.bf16.gmra.mxu0 %v2207
        %v4246 = vpop.f32.mrf.mxu0
        %v4247 = vadd.f32 %v3990, %v4246
        %v4248 = vpop.f32.mrf.mxu0
        %v4249 = vpop.f32.mrf.mxu0
        %v4250 = vadd.f32 %v3993, %v4249
        %v4251 = vpop.f32.mrf.mxu0
        %4252 = vmatprep.mubr.bf16.mxu0 %v2221
        %4253 = vmatmul.mubr.bf16.gmra.mxu0 %v2220
        %v4254 = vpop.f32.mrf.mxu0
        %v4255 = vadd.f32 %v3998, %v4254
        %v4256 = vpop.f32.mrf.mxu0
        %v4257 = vpop.f32.mrf.mxu0
        %v4258 = vadd.f32 %v4001, %v4257
        %v4259 = vpop.f32.mrf.mxu0
        %4260 = vmatprep.mubr.bf16.mxu0 %v2234
        %4261 = vmatmul.mubr.bf16.gmra.mxu0 %v2233
        %v4262 = vpop.f32.mrf.mxu0
        %v4263 = vadd.f32 %v4006, %v4262
        %v4264 = vpop.f32.mrf.mxu0
        %v4265 = vpop.f32.mrf.mxu0
        %v4266 = vadd.f32 %v4009, %v4265
        %v4267 = vpop.f32.mrf.mxu0
        %4268 = vmatprep.mubr.bf16.mxu0 %v2247
        %4269 = vmatmul.mubr.bf16.gmra.mxu0 %v2246
        %v4270 = vpop.f32.mrf.mxu0
        %v4271 = vadd.f32 %v4014, %v4270
        %v4272 = vpop.f32.mrf.mxu0
        %v4273 = vpop.f32.mrf.mxu0
        %v4274 = vadd.f32 %v4017, %v4273
        %v4275 = vpop.f32.mrf.mxu0
        %4276 = vmatprep.mubr.bf16.mxu0 %v2260
        %4277 = vmatmul.mubr.bf16.gmra.mxu0 %v2259
        %v4278 = vpop.f32.mrf.mxu0
        %v4279 = vadd.f32 %v4022, %v4278
        %v4280 = vpop.f32.mrf.mxu0
        %v4281 = vpop.f32.mrf.mxu0
        %v4282 = vadd.f32 %v4025, %v4281
        %v4283 = vpop.f32.mrf.mxu0
        %4284 = vmatprep.mubr.bf16.mxu0 %v2273
        %4285 = vmatmul.mubr.bf16.gmra.mxu0 %v2272
        %v4286 = vpop.f32.mrf.mxu0
        %v4287 = vadd.f32 %v4030, %v4286
        %v4288 = vpop.f32.mrf.mxu0
        %v4289 = vpop.f32.mrf.mxu0
        %v4290 = vadd.f32 %v4033, %v4289
        %v4291 = vpop.f32.mrf.mxu0
        %4292 = vmatprep.mubr.bf16.mxu0 %v2286
        %4293 = vmatmul.mubr.bf16.gmra.mxu0 %v2285
        %v4294 = vpop.f32.mrf.mxu0
        %v4295 = vadd.f32 %v4038, %v4294
        %v4296 = vpop.f32.mrf.mxu0
        %v4297 = vpop.f32.mrf.mxu0
        %v4298 = vadd.f32 %v4041, %v4297
        %v4299 = vpop.f32.mrf.mxu0
        %4300 = vmatprep.mubr.bf16.mxu0 %v2299
        %4301 = vmatmul.mubr.bf16.gmra.mxu0 %v2298
        %v4302 = vpop.f32.mrf.mxu0
        %v4303 = vadd.f32 %v4046, %v4302
        %v4304 = vpop.f32.mrf.mxu0
        %v4305 = vpop.f32.mrf.mxu0
        %v4306 = vadd.f32 %v4049, %v4305
        %v4307 = vpop.f32.mrf.mxu0
        %4308 = vmatprep.mubr.bf16.mxu0 %v2312
        %4309 = vmatmul.mubr.bf16.gmra.mxu0 %v2311
        %v4310 = vpop.f32.mrf.mxu0
        %v4311 = vadd.f32 %v4054, %v4310
        %v4312 = vpop.f32.mrf.mxu0
        %v4313 = vpop.f32.mrf.mxu0
        %v4314 = vadd.f32 %v4057, %v4313
        %v4315 = vpop.f32.mrf.mxu0
        %4316 = vmatprep.mubr.bf16.mxu0 %v2325
        %4317 = vmatmul.mubr.bf16.gmra.mxu0 %v2324
        %v4318 = vpop.f32.mrf.mxu0
        %v4319 = vadd.f32 %v4062, %v4318
        %v4320 = vpop.f32.mrf.mxu0
        %v4321 = vpop.f32.mrf.mxu0
        %v4322 = vadd.f32 %v4065, %v4321
        %v4323 = vpop.f32.mrf.mxu0
        %4324 = vmatprep.mubr.bf16.mxu0 %v2338
        %4325 = vmatmul.mubr.bf16.gmra.mxu0 %v2337
        %v4326 = vpop.f32.mrf.mxu0
        %v4327 = vadd.f32 %v4070, %v4326
        %v4328 = vpop.f32.mrf.mxu0
        %v4329 = vpop.f32.mrf.mxu0
        %v4330 = vadd.f32 %v4073, %v4329
        %v4331 = vpop.f32.mrf.mxu0
        %4332 = vmatprep.mubr.bf16.mxu0 %v2351
        %4333 = vmatmul.mubr.bf16.gmra.mxu0 %v2350
        %v4334 = vpop.f32.mrf.mxu0
        %v4335 = vadd.f32 %v4078, %v4334
        %v4336 = vpop.f32.mrf.mxu0
        %v4337 = vpop.f32.mrf.mxu0
        %v4338 = vadd.f32 %v4081, %v4337
        %v4339 = vpop.f32.mrf.mxu0
        %4340 = vmatprep.mubr.bf16.mxu0 %v2364
        %4341 = vmatmul.mubr.bf16.gmra.mxu0 %v2363
        %v4342 = vpop.f32.mrf.mxu0
        %v4343 = vadd.f32 %v4086, %v4342
        %v4344 = vpop.f32.mrf.mxu0
        %v4345 = vpop.f32.mrf.mxu0
        %v4346 = vadd.f32 %v4089, %v4345
        %v4347 = vpop.f32.mrf.mxu0
        %4348 = vmatprep.mubr.bf16.mxu0 %v2377
        %4349 = vmatmul.mubr.bf16.gmra.mxu0 %v2376
        %v4350 = vpop.f32.mrf.mxu0
        %v4351 = vadd.f32 %v4094, %v4350
        %v4352 = vpop.f32.mrf.mxu0
        %v4353 = vpop.f32.mrf.mxu0
        %v4354 = vadd.f32 %v4097, %v4353
        %v4355 = vpop.f32.mrf.mxu0
        %4356 = vmatprep.mubr.bf16.mxu0 %v2390
        %4357 = vmatmul.mubr.bf16.gmra.mxu0 %v2389
        %v4358 = vpop.f32.mrf.mxu0
        %v4359 = vadd.f32 %v4102, %v4358
        %v4360 = vpop.f32.mrf.mxu0
        %v4361 = vpop.f32.mrf.mxu0
        %v4362 = vadd.f32 %v4105, %v4361
        %v4363 = vpop.f32.mrf.mxu0
        %4364 = vmatprep.mubr.bf16.mxu0 %v2403
        %4365 = vmatmul.mubr.bf16.gmra.mxu0 %v2402
        %v4366 = vpop.f32.mrf.mxu0
        %v4367 = vadd.f32 %v4110, %v4366
        %v4368 = vpop.f32.mrf.mxu0
        %v4369 = vpop.f32.mrf.mxu0
        %v4370 = vadd.f32 %v4113, %v4369
        %v4371 = vpop.f32.mrf.mxu0
        %4372 = vmatprep.mubr.bf16.mxu0 %v2416
        %4373 = vmatmul.mubr.bf16.gmra.mxu0 %v2415
        %v4374 = vpop.f32.mrf.mxu0
        %v4375 = vadd.f32 %v4118, %v4374
        %v4376 = vpop.f32.mrf.mxu0
        %v4377 = vpop.f32.mrf.mxu0
        %v4378 = vadd.f32 %v4121, %v4377
        %v4379 = vpop.f32.mrf.mxu0
        %4380 = vdwg.mxu0
        %4381 = vmatprep.subr.bf16.mxu0 0
        %4382 = vmatpush1.bf16.msra.mxu0 0
        %4383 = vmatprep.subr.bf16.mxu0 0
        %4384 = vmatpush1.bf16.msra.mxu0 0
        %4385 = vmatprep.subr.bf16.mxu0 0
        %4386 = vmatpush1.bf16.msra.mxu0 %v541
        %4387 = vmatprep.subr.bf16.mxu0 0
        %4388 = vmatpush1.bf16.msra.mxu0 %v540
        %4389 = vmatprep.subr.bf16.mxu0 0
        %4390 = vmatpush1.bf16.msra.mxu0 %v539
        %4391 = vmatprep.subr.bf16.mxu0 0
        %4392 = vmatpush1.bf16.msra.mxu0 %v538
        %4393 = vmatprep.subr.bf16.mxu0 0
        %4394 = vmatpush1.bf16.msra.mxu0 %v537
        %4395 = vmatprep.subr.bf16.mxu0 0
        %4396 = vmatpush1.bf16.msra.mxu0 %v536
        %4397 = vmatprep.subr.bf16.mxu0 0
        %4398 = vmatpush2.bf16.msra.mxu0 0
        %4399 = vmatprep.subr.bf16.mxu0 0
        %4400 = vmatpush2.bf16.msra.mxu0 0
        %4401 = vmatprep.subr.bf16.mxu0 0
        %4402 = vmatpush2.bf16.msra.mxu0 0
        %4403 = vmatprep.subr.bf16.mxu0 0
        %4404 = vmatpush2.bf16.msra.mxu0 0
        %4405 = vmatprep.subr.bf16.mxu0 0
        %4406 = vmatpush2.bf16.msra.mxu0 0
        %4407 = vmatprep.subr.bf16.mxu0 0
        %4408 = vmatpush2.bf16.msra.mxu0 0
        %4409 = vmatprep.subr.bf16.mxu0 0
        %4410 = vmatpush2.bf16.msra.mxu0 0
        %4411 = vmatprep.subr.bf16.mxu0 0
        %4412 = vmatpush2.bf16.msra.mxu0 0
        %4413 = vmatprep.mubr.bf16.mxu0 0
        %4414 = vmatmul.mubr.bf16.gmra.mxu0 %v2756
        %v4415 = vpop.f32.mrf.mxu0
        %v4416 = vadd.f32 %v4159, %v4415
        %v4417 = vpop.f32.mrf.mxu0
        %v4418 = vpop.f32.mrf.mxu0
        %v4419 = vadd.f32 %v4162, %v4418
        %v4420 = vpop.f32.mrf.mxu0
        %4421 = vmatprep.mubr.bf16.mxu0 0
        %4422 = vmatmul.mubr.bf16.gmra.mxu0 %v2759
        %v4423 = vpop.f32.mrf.mxu0
        %v4424 = vadd.f32 %v4167, %v4423
        %v4425 = vpop.f32.mrf.mxu0
        %v4426 = vpop.f32.mrf.mxu0
        %v4427 = vadd.f32 %v4170, %v4426
        %v4428 = vpop.f32.mrf.mxu0
        %4429 = vmatprep.mubr.bf16.mxu0 0
        %4430 = vmatmul.mubr.bf16.gmra.mxu0 %v2762
        %v4431 = vpop.f32.mrf.mxu0
        %v4432 = vadd.f32 %v4175, %v4431
        %v4433 = vpop.f32.mrf.mxu0
        %v4434 = vpop.f32.mrf.mxu0
        %v4435 = vadd.f32 %v4178, %v4434
        %v4436 = vpop.f32.mrf.mxu0
        %4437 = vmatprep.mubr.bf16.mxu0 0
        %4438 = vmatmul.mubr.bf16.gmra.mxu0 %v2765
        %v4439 = vpop.f32.mrf.mxu0
        %v4440 = vadd.f32 %v4183, %v4439
        %v4441 = vpop.f32.mrf.mxu0
        %v4442 = vpop.f32.mrf.mxu0
        %v4443 = vadd.f32 %v4186, %v4442
        %v4444 = vpop.f32.mrf.mxu0
        %4445 = vmatprep.mubr.bf16.mxu0 0
        %4446 = vmatmul.mubr.bf16.gmra.mxu0 %v2768
        %v4447 = vpop.f32.mrf.mxu0
        %v4448 = vadd.f32 %v4191, %v4447
        %v4449 = vpop.f32.mrf.mxu0
        %v4450 = vpop.f32.mrf.mxu0
        %v4451 = vadd.f32 %v4194, %v4450
        %v4452 = vpop.f32.mrf.mxu0
        %4453 = vmatprep.mubr.bf16.mxu0 0
        %4454 = vmatmul.mubr.bf16.gmra.mxu0 %v2771
        %v4455 = vpop.f32.mrf.mxu0
        %v4456 = vadd.f32 %v4199, %v4455
        %v4457 = vpop.f32.mrf.mxu0
        %v4458 = vpop.f32.mrf.mxu0
        %v4459 = vadd.f32 %v4202, %v4458
        %v4460 = vpop.f32.mrf.mxu0
        %4461 = vmatprep.mubr.bf16.mxu0 0
        %4462 = vmatmul.mubr.bf16.gmra.mxu0 %v2774
        %v4463 = vpop.f32.mrf.mxu0
        %v4464 = vadd.f32 %v4207, %v4463
        %v4465 = vpop.f32.mrf.mxu0
        %v4466 = vpop.f32.mrf.mxu0
        %v4467 = vadd.f32 %v4210, %v4466
        %v4468 = vpop.f32.mrf.mxu0
        %4469 = vmatprep.mubr.bf16.mxu0 0
        %4470 = vmatmul.mubr.bf16.gmra.mxu0 %v2777
        %v4471 = vpop.f32.mrf.mxu0
        %v4472 = vadd.f32 %v4215, %v4471
        %v4473 = vpop.f32.mrf.mxu0
        %v4474 = vpop.f32.mrf.mxu0
        %v4475 = vadd.f32 %v4218, %v4474
        %v4476 = vpop.f32.mrf.mxu0
        %4477 = vmatprep.mubr.bf16.mxu0 0
        %4478 = vmatmul.mubr.bf16.gmra.mxu0 %v2780
        %v4479 = vpop.f32.mrf.mxu0
        %v4480 = vadd.f32 %v4223, %v4479
        %v4481 = vpop.f32.mrf.mxu0
        %v4482 = vpop.f32.mrf.mxu0
        %v4483 = vadd.f32 %v4226, %v4482
        %v4484 = vpop.f32.mrf.mxu0
        %4485 = vmatprep.mubr.bf16.mxu0 0
        %4486 = vmatmul.mubr.bf16.gmra.mxu0 %v2783
        %v4487 = vpop.f32.mrf.mxu0
        %v4488 = vadd.f32 %v4231, %v4487
        %v4489 = vpop.f32.mrf.mxu0
        %v4490 = vpop.f32.mrf.mxu0
        %v4491 = vadd.f32 %v4234, %v4490
        %v4492 = vpop.f32.mrf.mxu0
        %4493 = vmatprep.mubr.bf16.mxu0 0
        %4494 = vmatmul.mubr.bf16.gmra.mxu0 %v2786
        %v4495 = vpop.f32.mrf.mxu0
        %v4496 = vadd.f32 %v4239, %v4495
        %v4497 = vpop.f32.mrf.mxu0
        %v4498 = vpop.f32.mrf.mxu0
        %v4499 = vadd.f32 %v4242, %v4498
        %v4500 = vpop.f32.mrf.mxu0
        %4501 = vmatprep.mubr.bf16.mxu0 0
        %4502 = vmatmul.mubr.bf16.gmra.mxu0 %v2789
        %v4503 = vpop.f32.mrf.mxu0
        %v4504 = vadd.f32 %v4247, %v4503
        %v4505 = vpop.f32.mrf.mxu0
        %v4506 = vpop.f32.mrf.mxu0
        %v4507 = vadd.f32 %v4250, %v4506
        %v4508 = vpop.f32.mrf.mxu0
        %4509 = vmatprep.mubr.bf16.mxu0 0
        %4510 = vmatmul.mubr.bf16.gmra.mxu0 %v2792
        %v4511 = vpop.f32.mrf.mxu0
        %v4512 = vadd.f32 %v4255, %v4511
        %v4513 = vpop.f32.mrf.mxu0
        %v4514 = vpop.f32.mrf.mxu0
        %v4515 = vadd.f32 %v4258, %v4514
        %v4516 = vpop.f32.mrf.mxu0
        %4517 = vmatprep.mubr.bf16.mxu0 0
        %4518 = vmatmul.mubr.bf16.gmra.mxu0 %v2795
        %v4519 = vpop.f32.mrf.mxu0
        %v4520 = vadd.f32 %v4263, %v4519
        %v4521 = vpop.f32.mrf.mxu0
        %v4522 = vpop.f32.mrf.mxu0
        %v4523 = vadd.f32 %v4266, %v4522
        %v4524 = vpop.f32.mrf.mxu0
        %4525 = vmatprep.mubr.bf16.mxu0 0
        %4526 = vmatmul.mubr.bf16.gmra.mxu0 %v2798
        %v4527 = vpop.f32.mrf.mxu0
        %v4528 = vadd.f32 %v4271, %v4527
        %v4529 = vpop.f32.mrf.mxu0
        %v4530 = vpop.f32.mrf.mxu0
        %v4531 = vadd.f32 %v4274, %v4530
        %v4532 = vpop.f32.mrf.mxu0
        %4533 = vmatprep.mubr.bf16.mxu0 0
        %4534 = vmatmul.mubr.bf16.gmra.mxu0 %v2801
        %v4535 = vpop.f32.mrf.mxu0
        %v4536 = vadd.f32 %v4279, %v4535
        %v4537 = vpop.f32.mrf.mxu0
        %v4538 = vpop.f32.mrf.mxu0
        %v4539 = vadd.f32 %v4282, %v4538
        %v4540 = vpop.f32.mrf.mxu0
        %4541 = vmatprep.mubr.bf16.mxu0 0
        %4542 = vmatmul.mubr.bf16.gmra.mxu0 %v2804
        %v4543 = vpop.f32.mrf.mxu0
        %v4544 = vadd.f32 %v4287, %v4543
        %v4545 = vpop.f32.mrf.mxu0
        %v4546 = vpop.f32.mrf.mxu0
        %v4547 = vadd.f32 %v4290, %v4546
        %v4548 = vpop.f32.mrf.mxu0
        %4549 = vmatprep.mubr.bf16.mxu0 0
        %4550 = vmatmul.mubr.bf16.gmra.mxu0 %v2807
        %v4551 = vpop.f32.mrf.mxu0
        %v4552 = vadd.f32 %v4295, %v4551
        %v4553 = vpop.f32.mrf.mxu0
        %v4554 = vpop.f32.mrf.mxu0
        %v4555 = vadd.f32 %v4298, %v4554
        %v4556 = vpop.f32.mrf.mxu0
        %4557 = vmatprep.mubr.bf16.mxu0 0
        %4558 = vmatmul.mubr.bf16.gmra.mxu0 %v2810
        %v4559 = vpop.f32.mrf.mxu0
        %v4560 = vadd.f32 %v4303, %v4559
        %v4561 = vpop.f32.mrf.mxu0
        %v4562 = vpop.f32.mrf.mxu0
        %v4563 = vadd.f32 %v4306, %v4562
        %v4564 = vpop.f32.mrf.mxu0
        %4565 = vmatprep.mubr.bf16.mxu0 0
        %4566 = vmatmul.mubr.bf16.gmra.mxu0 %v2813
        %v4567 = vpop.f32.mrf.mxu0
        %v4568 = vadd.f32 %v4311, %v4567
        %v4569 = vpop.f32.mrf.mxu0
        %v4570 = vpop.f32.mrf.mxu0
        %v4571 = vadd.f32 %v4314, %v4570
        %v4572 = vpop.f32.mrf.mxu0
        %4573 = vmatprep.mubr.bf16.mxu0 0
        %4574 = vmatmul.mubr.bf16.gmra.mxu0 %v2816
        %v4575 = vpop.f32.mrf.mxu0
        %v4576 = vadd.f32 %v4319, %v4575
        %v4577 = vpop.f32.mrf.mxu0
        %v4578 = vpop.f32.mrf.mxu0
        %v4579 = vadd.f32 %v4322, %v4578
        %v4580 = vpop.f32.mrf.mxu0
        %4581 = vmatprep.mubr.bf16.mxu0 0
        %4582 = vmatmul.mubr.bf16.gmra.mxu0 %v2819
        %v4583 = vpop.f32.mrf.mxu0
        %v4584 = vadd.f32 %v4327, %v4583
        %v4585 = vpop.f32.mrf.mxu0
        %v4586 = vpop.f32.mrf.mxu0
        %v4587 = vadd.f32 %v4330, %v4586
        %v4588 = vpop.f32.mrf.mxu0
        %4589 = vmatprep.mubr.bf16.mxu0 0
        %4590 = vmatmul.mubr.bf16.gmra.mxu0 %v2822
        %v4591 = vpop.f32.mrf.mxu0
        %v4592 = vadd.f32 %v4335, %v4591
        %v4593 = vpop.f32.mrf.mxu0
        %v4594 = vpop.f32.mrf.mxu0
        %v4595 = vadd.f32 %v4338, %v4594
        %v4596 = vpop.f32.mrf.mxu0
        %4597 = vmatprep.mubr.bf16.mxu0 0
        %4598 = vmatmul.mubr.bf16.gmra.mxu0 %v2825
        %v4599 = vpop.f32.mrf.mxu0
        %v4600 = vadd.f32 %v4343, %v4599
        %v4601 = vpop.f32.mrf.mxu0
        %v4602 = vpop.f32.mrf.mxu0
        %v4603 = vadd.f32 %v4346, %v4602
        %v4604 = vpop.f32.mrf.mxu0
        %4605 = vmatprep.mubr.bf16.mxu0 0
        %4606 = vmatmul.mubr.bf16.gmra.mxu0 %v2828
        %v4607 = vpop.f32.mrf.mxu0
        %v4608 = vadd.f32 %v4351, %v4607
        %v4609 = vpop.f32.mrf.mxu0
        %v4610 = vpop.f32.mrf.mxu0
        %v4611 = vadd.f32 %v4354, %v4610
        %v4612 = vpop.f32.mrf.mxu0
        %4613 = vmatprep.mubr.bf16.mxu0 0
        %4614 = vmatmul.mubr.bf16.gmra.mxu0 %v2831
        %v4615 = vpop.f32.mrf.mxu0
        %v4616 = vadd.f32 %v4359, %v4615
        %v4617 = vpop.f32.mrf.mxu0
        %v4618 = vpop.f32.mrf.mxu0
        %v4619 = vadd.f32 %v4362, %v4618
        %v4620 = vpop.f32.mrf.mxu0
        %4621 = vmatprep.mubr.bf16.mxu0 0
        %4622 = vmatmul.mubr.bf16.gmra.mxu0 %v2834
        %v4623 = vpop.f32.mrf.mxu0
        %v4624 = vadd.f32 %v4367, %v4623
        %v4625 = vpop.f32.mrf.mxu0
        %v4626 = vpop.f32.mrf.mxu0
        %v4627 = vadd.f32 %v4370, %v4626
        %v4628 = vpop.f32.mrf.mxu0
        %4629 = vmatprep.mubr.bf16.mxu0 0
        %4630 = vmatmul.mubr.bf16.gmra.mxu0 %v2837
        %v4631 = vpop.f32.mrf.mxu0
        %v4632 = vadd.f32 %v4375, %v4631
        %v4633 = vpop.f32.mrf.mxu0
        %v4634 = vpop.f32.mrf.mxu0
        %v4635 = vadd.f32 %v4378, %v4634
        %v4636 = vpop.f32.mrf.mxu0
        %4637 = vdwg.mxu0
        %vm4638 = vcmask 400384
        %v4639 = vsel %vm4638, %v4416, 0.0
        %4640 = vadd.xlane.f32.xlu0 %v4639
        %v4641 = vpop.xlane.xlu0 %4640
        %v4642 = vsel %vm4638, %v4419, 0.0
        %4643 = vadd.xlane.f32.xlu0 %v4642
        %v4644 = vpop.xlane.xlu0 %4643
        %v4645 = vsel %vm4638, %v4424, 0.0
        %4646 = vadd.xlane.f32.xlu0 %v4645
        %v4647 = vpop.xlane.xlu0 %4646
        %v4648 = vsel %vm4638, %v4427, 0.0
        %4649 = vadd.xlane.f32.xlu0 %v4648
        %v4650 = vpop.xlane.xlu0 %4649
        %v4651 = vsel %vm4638, %v4432, 0.0
        %4652 = vadd.xlane.f32.xlu0 %v4651
        %v4653 = vpop.xlane.xlu0 %4652
        %v4654 = vsel %vm4638, %v4435, 0.0
        %4655 = vadd.xlane.f32.xlu0 %v4654
        %v4656 = vpop.xlane.xlu0 %4655
        %v4657 = vsel %vm4638, %v4440, 0.0
        %4658 = vadd.xlane.f32.xlu0 %v4657
        %v4659 = vpop.xlane.xlu0 %4658
        %v4660 = vsel %vm4638, %v4443, 0.0
        %4661 = vadd.xlane.f32.xlu0 %v4660
        %v4662 = vpop.xlane.xlu0 %4661
        %v4663 = vsel %vm4638, %v4448, 0.0
        %4664 = vadd.xlane.f32.xlu0 %v4663
        %v4665 = vpop.xlane.xlu0 %4664
        %v4666 = vsel %vm4638, %v4451, 0.0
        %4667 = vadd.xlane.f32.xlu0 %v4666
        %v4668 = vpop.xlane.xlu0 %4667
        %v4669 = vsel %vm4638, %v4456, 0.0
        %4670 = vadd.xlane.f32.xlu0 %v4669
        %v4671 = vpop.xlane.xlu0 %4670
        %v4672 = vsel %vm4638, %v4459, 0.0
        %4673 = vadd.xlane.f32.xlu0 %v4672
        %v4674 = vpop.xlane.xlu0 %4673
        %v4675 = vsel %vm4638, %v4464, 0.0
        %4676 = vadd.xlane.f32.xlu0 %v4675
        %v4677 = vpop.xlane.xlu0 %4676
        %v4678 = vsel %vm4638, %v4467, 0.0
        %4679 = vadd.xlane.f32.xlu0 %v4678
        %v4680 = vpop.xlane.xlu0 %4679
        %v4681 = vsel %vm4638, %v4472, 0.0
        %4682 = vadd.xlane.f32.xlu0 %v4681
        %v4683 = vpop.xlane.xlu0 %4682
        %v4684 = vsel %vm4638, %v4475, 0.0
        %4685 = vadd.xlane.f32.xlu0 %v4684
        %v4686 = vpop.xlane.xlu0 %4685
        %v4687 = vsel %vm4638, %v4480, 0.0
        %4688 = vadd.xlane.f32.xlu0 %v4687
        %v4689 = vpop.xlane.xlu0 %4688
        %v4690 = vsel %vm4638, %v4483, 0.0
        %4691 = vadd.xlane.f32.xlu0 %v4690
        %v4692 = vpop.xlane.xlu0 %4691
        %v4693 = vsel %vm4638, %v4488, 0.0
        %4694 = vadd.xlane.f32.xlu0 %v4693
        %v4695 = vpop.xlane.xlu0 %4694
        %v4696 = vsel %vm4638, %v4491, 0.0
        %4697 = vadd.xlane.f32.xlu0 %v4696
        %v4698 = vpop.xlane.xlu0 %4697
        %v4699 = vsel %vm4638, %v4496, 0.0
        %4700 = vadd.xlane.f32.xlu0 %v4699
        %v4701 = vpop.xlane.xlu0 %4700
        %v4702 = vsel %vm4638, %v4499, 0.0
        %4703 = vadd.xlane.f32.xlu0 %v4702
        %v4704 = vpop.xlane.xlu0 %4703
        %v4705 = vsel %vm4638, %v4504, 0.0
        %4706 = vadd.xlane.f32.xlu0 %v4705
        %v4707 = vpop.xlane.xlu0 %4706
        %v4708 = vsel %vm4638, %v4507, 0.0
        %4709 = vadd.xlane.f32.xlu0 %v4708
        %v4710 = vpop.xlane.xlu0 %4709
        %v4711 = vsel %vm4638, %v4512, 0.0
        %4712 = vadd.xlane.f32.xlu0 %v4711
        %v4713 = vpop.xlane.xlu0 %4712
        %v4714 = vsel %vm4638, %v4515, 0.0
        %4715 = vadd.xlane.f32.xlu0 %v4714
        %v4716 = vpop.xlane.xlu0 %4715
        %v4717 = vsel %vm4638, %v4520, 0.0
        %4718 = vadd.xlane.f32.xlu0 %v4717
        %v4719 = vpop.xlane.xlu0 %4718
        %v4720 = vsel %vm4638, %v4523, 0.0
        %4721 = vadd.xlane.f32.xlu0 %v4720
        %v4722 = vpop.xlane.xlu0 %4721
        %v4723 = vsel %vm4638, %v4528, 0.0
        %4724 = vadd.xlane.f32.xlu0 %v4723
        %v4725 = vpop.xlane.xlu0 %4724
        %v4726 = vsel %vm4638, %v4531, 0.0
        %4727 = vadd.xlane.f32.xlu0 %v4726
        %v4728 = vpop.xlane.xlu0 %4727
        %v4729 = vsel %vm4638, %v4536, 0.0
        %4730 = vadd.xlane.f32.xlu0 %v4729
        %v4731 = vpop.xlane.xlu0 %4730
        %v4732 = vsel %vm4638, %v4539, 0.0
        %4733 = vadd.xlane.f32.xlu0 %v4732
        %v4734 = vpop.xlane.xlu0 %4733
        %v4735 = vsel %vm4638, %v4544, 0.0
        %4736 = vadd.xlane.f32.xlu0 %v4735
        %v4737 = vpop.xlane.xlu0 %4736
        %v4738 = vsel %vm4638, %v4547, 0.0
        %4739 = vadd.xlane.f32.xlu0 %v4738
        %v4740 = vpop.xlane.xlu0 %4739
        %v4741 = vsel %vm4638, %v4552, 0.0
        %4742 = vadd.xlane.f32.xlu0 %v4741
        %v4743 = vpop.xlane.xlu0 %4742
        %v4744 = vsel %vm4638, %v4555, 0.0
        %4745 = vadd.xlane.f32.xlu0 %v4744
        %v4746 = vpop.xlane.xlu0 %4745
        %v4747 = vsel %vm4638, %v4560, 0.0
        %4748 = vadd.xlane.f32.xlu0 %v4747
        %v4749 = vpop.xlane.xlu0 %4748
        %v4750 = vsel %vm4638, %v4563, 0.0
        %4751 = vadd.xlane.f32.xlu0 %v4750
        %v4752 = vpop.xlane.xlu0 %4751
        %v4753 = vsel %vm4638, %v4568, 0.0
        %4754 = vadd.xlane.f32.xlu0 %v4753
        %v4755 = vpop.xlane.xlu0 %4754
        %v4756 = vsel %vm4638, %v4571, 0.0
        %4757 = vadd.xlane.f32.xlu0 %v4756
        %v4758 = vpop.xlane.xlu0 %4757
        %v4759 = vsel %vm4638, %v4576, 0.0
        %4760 = vadd.xlane.f32.xlu0 %v4759
        %v4761 = vpop.xlane.xlu0 %4760
        %v4762 = vsel %vm4638, %v4579, 0.0
        %4763 = vadd.xlane.f32.xlu0 %v4762
        %v4764 = vpop.xlane.xlu0 %4763
        %v4765 = vsel %vm4638, %v4584, 0.0
        %4766 = vadd.xlane.f32.xlu0 %v4765
        %v4767 = vpop.xlane.xlu0 %4766
        %v4768 = vsel %vm4638, %v4587, 0.0
        %4769 = vadd.xlane.f32.xlu0 %v4768
        %v4770 = vpop.xlane.xlu0 %4769
        %v4771 = vsel %vm4638, %v4592, 0.0
        %4772 = vadd.xlane.f32.xlu0 %v4771
        %v4773 = vpop.xlane.xlu0 %4772
        %v4774 = vsel %vm4638, %v4595, 0.0
        %4775 = vadd.xlane.f32.xlu0 %v4774
        %v4776 = vpop.xlane.xlu0 %4775
        %v4777 = vsel %vm4638, %v4600, 0.0
        %4778 = vadd.xlane.f32.xlu0 %v4777
        %v4779 = vpop.xlane.xlu0 %4778
        %v4780 = vsel %vm4638, %v4603, 0.0
        %4781 = vadd.xlane.f32.xlu0 %v4780
        %v4782 = vpop.xlane.xlu0 %4781
        %v4783 = vsel %vm4638, %v4608, 0.0
        %4784 = vadd.xlane.f32.xlu0 %v4783
        %v4785 = vpop.xlane.xlu0 %4784
        %v4786 = vsel %vm4638, %v4611, 0.0
        %4787 = vadd.xlane.f32.xlu0 %v4786
        %v4788 = vpop.xlane.xlu0 %4787
        %v4789 = vsel %vm4638, %v4616, 0.0
        %4790 = vadd.xlane.f32.xlu0 %v4789
        %v4791 = vpop.xlane.xlu0 %4790
        %v4792 = vsel %vm4638, %v4619, 0.0
        %4793 = vadd.xlane.f32.xlu0 %v4792
        %v4794 = vpop.xlane.xlu0 %4793
        %v4795 = vsel %vm4638, %v4624, 0.0
        %4796 = vadd.xlane.f32.xlu0 %v4795
        %v4797 = vpop.xlane.xlu0 %4796
        %v4798 = vsel %vm4638, %v4627, 0.0
        %4799 = vadd.xlane.f32.xlu0 %v4798
        %v4800 = vpop.xlane.xlu0 %4799
        %v4801 = vsel %vm4638, %v4632, 0.0
        %4802 = vadd.xlane.f32.xlu0 %v4801
        %v4803 = vpop.xlane.xlu0 %4802
        %v4804 = vsel %vm4638, %v4635, 0.0
        %4805 = vadd.xlane.f32.xlu0 %v4804
        %v4806 = vpop.xlane.xlu0 %4805
        %v4807 = vrcp.pop 49.0
        %v4808 = vmul.f32 %v4641, %v4807
        %v4809 = vmul.f32 %v4644, %v4807
        %v4810 = vmul.f32 %v4647, %v4807
        %v4811 = vmul.f32 %v4650, %v4807
        %v4812 = vmul.f32 %v4653, %v4807
        %v4813 = vmul.f32 %v4656, %v4807
        %v4814 = vmul.f32 %v4659, %v4807
        %v4815 = vmul.f32 %v4662, %v4807
        %v4816 = vmul.f32 %v4665, %v4807
        %v4817 = vmul.f32 %v4668, %v4807
        %v4818 = vmul.f32 %v4671, %v4807
        %v4819 = vmul.f32 %v4674, %v4807
        %v4820 = vmul.f32 %v4677, %v4807
        %v4821 = vmul.f32 %v4680, %v4807
        %v4822 = vmul.f32 %v4683, %v4807
        %v4823 = vmul.f32 %v4686, %v4807
        %v4824 = vmul.f32 %v4689, %v4807
        %v4825 = vmul.f32 %v4692, %v4807
        %v4826 = vmul.f32 %v4695, %v4807
        %v4827 = vmul.f32 %v4698, %v4807
        %v4828 = vmul.f32 %v4701, %v4807
        %v4829 = vmul.f32 %v4704, %v4807
        %v4830 = vmul.f32 %v4707, %v4807
        %v4831 = vmul.f32 %v4710, %v4807
        %v4832 = vmul.f32 %v4713, %v4807
        %v4833 = vmul.f32 %v4716, %v4807
        %v4834 = vmul.f32 %v4719, %v4807
        %v4835 = vmul.f32 %v4722, %v4807
        %v4836 = vmul.f32 %v4725, %v4807
        %v4837 = vmul.f32 %v4728, %v4807
        %v4838 = vmul.f32 %v4731, %v4807
        %v4839 = vmul.f32 %v4734, %v4807
        %v4840 = vmul.f32 %v4737, %v4807
        %v4841 = vmul.f32 %v4740, %v4807
        %v4842 = vmul.f32 %v4743, %v4807
        %v4843 = vmul.f32 %v4746, %v4807
        %v4844 = vmul.f32 %v4749, %v4807
        %v4845 = vmul.f32 %v4752, %v4807
        %v4846 = vmul.f32 %v4755, %v4807
        %v4847 = vmul.f32 %v4758, %v4807
        %v4848 = vmul.f32 %v4761, %v4807
        %v4849 = vmul.f32 %v4764, %v4807
        %v4850 = vmul.f32 %v4767, %v4807
        %v4851 = vmul.f32 %v4770, %v4807
        %v4852 = vmul.f32 %v4773, %v4807
        %v4853 = vmul.f32 %v4776, %v4807
        %v4854 = vmul.f32 %v4779, %v4807
        %v4855 = vmul.f32 %v4782, %v4807
        %v4856 = vmul.f32 %v4785, %v4807
        %v4857 = vmul.f32 %v4788, %v4807
        %v4858 = vmul.f32 %v4791, %v4807
        %v4859 = vmul.f32 %v4794, %v4807
        %v4860 = vmul.f32 %v4797, %v4807
        %v4861 = vmul.f32 %v4800, %v4807
        %v4862 = vmul.f32 %v4803, %v4807
        %v4863 = vmul.f32 %v4806, %v4807
        %v4864 = vsub.f32 %v4416, %v4808
        %v4865 = vsub.f32 %v4419, %v4809
        %v4866 = vsub.f32 %v4424, %v4810
        %v4867 = vsub.f32 %v4427, %v4811
        %v4868 = vsub.f32 %v4432, %v4812
        %v4869 = vsub.f32 %v4435, %v4813
        %v4870 = vsub.f32 %v4440, %v4814
        %v4871 = vsub.f32 %v4443, %v4815
        %v4872 = vsub.f32 %v4448, %v4816
        %v4873 = vsub.f32 %v4451, %v4817
        %v4874 = vsub.f32 %v4456, %v4818
        %v4875 = vsub.f32 %v4459, %v4819
        %v4876 = vsub.f32 %v4464, %v4820
        %v4877 = vsub.f32 %v4467, %v4821
        %v4878 = vsub.f32 %v4472, %v4822
        %v4879 = vsub.f32 %v4475, %v4823
        %v4880 = vsub.f32 %v4480, %v4824
        %v4881 = vsub.f32 %v4483, %v4825
        %v4882 = vsub.f32 %v4488, %v4826
        %v4883 = vsub.f32 %v4491, %v4827
        %v4884 = vsub.f32 %v4496, %v4828
        %v4885 = vsub.f32 %v4499, %v4829
        %v4886 = vsub.f32 %v4504, %v4830
        %v4887 = vsub.f32 %v4507, %v4831
        %v4888 = vsub.f32 %v4512, %v4832
        %v4889 = vsub.f32 %v4515, %v4833
        %v4890 = vsub.f32 %v4520, %v4834
        %v4891 = vsub.f32 %v4523, %v4835
        %v4892 = vsub.f32 %v4528, %v4836
        %v4893 = vsub.f32 %v4531, %v4837
        %v4894 = vsub.f32 %v4536, %v4838
        %v4895 = vsub.f32 %v4539, %v4839
        %v4896 = vsub.f32 %v4544, %v4840
        %v4897 = vsub.f32 %v4547, %v4841
        %v4898 = vsub.f32 %v4552, %v4842
        %v4899 = vsub.f32 %v4555, %v4843
        %v4900 = vsub.f32 %v4560, %v4844
        %v4901 = vsub.f32 %v4563, %v4845
        %v4902 = vsub.f32 %v4568, %v4846
        %v4903 = vsub.f32 %v4571, %v4847
        %v4904 = vsub.f32 %v4576, %v4848
        %v4905 = vsub.f32 %v4579, %v4849
        %v4906 = vsub.f32 %v4584, %v4850
        %v4907 = vsub.f32 %v4587, %v4851
        %v4908 = vsub.f32 %v4592, %v4852
        %v4909 = vsub.f32 %v4595, %v4853
        %v4910 = vsub.f32 %v4600, %v4854
        %v4911 = vsub.f32 %v4603, %v4855
        %v4912 = vsub.f32 %v4608, %v4856
        %v4913 = vsub.f32 %v4611, %v4857
        %v4914 = vsub.f32 %v4616, %v4858
        %v4915 = vsub.f32 %v4619, %v4859
        %v4916 = vsub.f32 %v4624, %v4860
        %v4917 = vsub.f32 %v4627, %v4861
        %v4918 = vsub.f32 %v4632, %v4862
        %v4919 = vsub.f32 %v4635, %v4863
        %v4920 = vmul.f32 %v4864, %v4864
        %v4921 = vmul.f32 %v4865, %v4865
        %v4922 = vmul.f32 %v4866, %v4866
        %v4923 = vmul.f32 %v4867, %v4867
        %v4924 = vmul.f32 %v4868, %v4868
        %v4925 = vmul.f32 %v4869, %v4869
        %v4926 = vmul.f32 %v4870, %v4870
        %v4927 = vmul.f32 %v4871, %v4871
        %v4928 = vmul.f32 %v4872, %v4872
        %v4929 = vmul.f32 %v4873, %v4873
        %v4930 = vmul.f32 %v4874, %v4874
        %v4931 = vmul.f32 %v4875, %v4875
        %v4932 = vmul.f32 %v4876, %v4876
        %v4933 = vmul.f32 %v4877, %v4877
        %v4934 = vmul.f32 %v4878, %v4878
        %v4935 = vmul.f32 %v4879, %v4879
        %v4936 = vmul.f32 %v4880, %v4880
        %v4937 = vmul.f32 %v4881, %v4881
        %v4938 = vmul.f32 %v4882, %v4882
        %v4939 = vmul.f32 %v4883, %v4883
        %v4940 = vmul.f32 %v4884, %v4884
        %v4941 = vmul.f32 %v4885, %v4885
        %v4942 = vmul.f32 %v4886, %v4886
        %v4943 = vmul.f32 %v4887, %v4887
        %v4944 = vmul.f32 %v4888, %v4888
        %v4945 = vmul.f32 %v4889, %v4889
        %v4946 = vmul.f32 %v4890, %v4890
        %v4947 = vmul.f32 %v4891, %v4891
        %v4948 = vmul.f32 %v4892, %v4892
        %v4949 = vmul.f32 %v4893, %v4893
        %v4950 = vmul.f32 %v4894, %v4894
        %v4951 = vmul.f32 %v4895, %v4895
        %v4952 = vmul.f32 %v4896, %v4896
        %v4953 = vmul.f32 %v4897, %v4897
        %v4954 = vmul.f32 %v4898, %v4898
        %v4955 = vmul.f32 %v4899, %v4899
        %v4956 = vmul.f32 %v4900, %v4900
        %v4957 = vmul.f32 %v4901, %v4901
        %v4958 = vmul.f32 %v4902, %v4902
        %v4959 = vmul.f32 %v4903, %v4903
        %v4960 = vmul.f32 %v4904, %v4904
        %v4961 = vmul.f32 %v4905, %v4905
        %v4962 = vmul.f32 %v4906, %v4906
        %v4963 = vmul.f32 %v4907, %v4907
        %v4964 = vmul.f32 %v4908, %v4908
        %v4965 = vmul.f32 %v4909, %v4909
        %v4966 = vmul.f32 %v4910, %v4910
        %v4967 = vmul.f32 %v4911, %v4911
        %v4968 = vmul.f32 %v4912, %v4912
        %v4969 = vmul.f32 %v4913, %v4913
        %v4970 = vmul.f32 %v4914, %v4914
        %v4971 = vmul.f32 %v4915, %v4915
        %v4972 = vmul.f32 %v4916, %v4916
        %v4973 = vmul.f32 %v4917, %v4917
        %v4974 = vmul.f32 %v4918, %v4918
        %v4975 = vmul.f32 %v4919, %v4919
        %v4976 = vsel %vm4638, %v4920, 0.0
        %4977 = vadd.xlane.f32.xlu0 %v4976
        %v4978 = vpop.xlane.xlu0 %4977
        %v4979 = vsel %vm4638, %v4921, 0.0
        %4980 = vadd.xlane.f32.xlu0 %v4979
        %v4981 = vpop.xlane.xlu0 %4980
        %v4982 = vsel %vm4638, %v4922, 0.0
        %4983 = vadd.xlane.f32.xlu0 %v4982
        %v4984 = vpop.xlane.xlu0 %4983
        %v4985 = vsel %vm4638, %v4923, 0.0
        %4986 = vadd.xlane.f32.xlu0 %v4985
        %v4987 = vpop.xlane.xlu0 %4986
        %v4988 = vsel %vm4638, %v4924, 0.0
        %4989 = vadd.xlane.f32.xlu0 %v4988
        %v4990 = vpop.xlane.xlu0 %4989
        %v4991 = vsel %vm4638, %v4925, 0.0
        %4992 = vadd.xlane.f32.xlu0 %v4991
        %v4993 = vpop.xlane.xlu0 %4992
        %v4994 = vsel %vm4638, %v4926, 0.0
        %4995 = vadd.xlane.f32.xlu0 %v4994
        %v4996 = vpop.xlane.xlu0 %4995
        %v4997 = vsel %vm4638, %v4927, 0.0
        %4998 = vadd.xlane.f32.xlu0 %v4997
        %v4999 = vpop.xlane.xlu0 %4998
        %v5000 = vsel %vm4638, %v4928, 0.0
        %5001 = vadd.xlane.f32.xlu0 %v5000
        %v5002 = vpop.xlane.xlu0 %5001
        %v5003 = vsel %vm4638, %v4929, 0.0
        %5004 = vadd.xlane.f32.xlu0 %v5003
        %v5005 = vpop.xlane.xlu0 %5004
        %v5006 = vsel %vm4638, %v4930, 0.0
        %5007 = vadd.xlane.f32.xlu0 %v5006
        %v5008 = vpop.xlane.xlu0 %5007
        %v5009 = vsel %vm4638, %v4931, 0.0
        %5010 = vadd.xlane.f32.xlu0 %v5009
        %v5011 = vpop.xlane.xlu0 %5010
        %v5012 = vsel %vm4638, %v4932, 0.0
        %5013 = vadd.xlane.f32.xlu0 %v5012
        %v5014 = vpop.xlane.xlu0 %5013
        %v5015 = vsel %vm4638, %v4933, 0.0
        %5016 = vadd.xlane.f32.xlu0 %v5015
        %v5017 = vpop.xlane.xlu0 %5016
        %v5018 = vsel %vm4638, %v4934, 0.0
        %5019 = vadd.xlane.f32.xlu0 %v5018
        %v5020 = vpop.xlane.xlu0 %5019
        %v5021 = vsel %vm4638, %v4935, 0.0
        %5022 = vadd.xlane.f32.xlu0 %v5021
        %v5023 = vpop.xlane.xlu0 %5022
        %v5024 = vsel %vm4638, %v4936, 0.0
        %5025 = vadd.xlane.f32.xlu0 %v5024
        %v5026 = vpop.xlane.xlu0 %5025
        %v5027 = vsel %vm4638, %v4937, 0.0
        %5028 = vadd.xlane.f32.xlu0 %v5027
        %v5029 = vpop.xlane.xlu0 %5028
        %v5030 = vsel %vm4638, %v4938, 0.0
        %5031 = vadd.xlane.f32.xlu0 %v5030
        %v5032 = vpop.xlane.xlu0 %5031
        %v5033 = vsel %vm4638, %v4939, 0.0
        %5034 = vadd.xlane.f32.xlu0 %v5033
        %v5035 = vpop.xlane.xlu0 %5034
        %v5036 = vsel %vm4638, %v4940, 0.0
        %5037 = vadd.xlane.f32.xlu0 %v5036
        %v5038 = vpop.xlane.xlu0 %5037
        %v5039 = vsel %vm4638, %v4941, 0.0
        %5040 = vadd.xlane.f32.xlu0 %v5039
        %v5041 = vpop.xlane.xlu0 %5040
        %v5042 = vsel %vm4638, %v4942, 0.0
        %5043 = vadd.xlane.f32.xlu0 %v5042
        %v5044 = vpop.xlane.xlu0 %5043
        %v5045 = vsel %vm4638, %v4943, 0.0
        %5046 = vadd.xlane.f32.xlu0 %v5045
        %v5047 = vpop.xlane.xlu0 %5046
        %v5048 = vsel %vm4638, %v4944, 0.0
        %5049 = vadd.xlane.f32.xlu0 %v5048
        %v5050 = vpop.xlane.xlu0 %5049
        %v5051 = vsel %vm4638, %v4945, 0.0
        %5052 = vadd.xlane.f32.xlu0 %v5051
        %v5053 = vpop.xlane.xlu0 %5052
        %v5054 = vsel %vm4638, %v4946, 0.0
        %5055 = vadd.xlane.f32.xlu0 %v5054
        %v5056 = vpop.xlane.xlu0 %5055
        %v5057 = vsel %vm4638, %v4947, 0.0
        %5058 = vadd.xlane.f32.xlu0 %v5057
        %v5059 = vpop.xlane.xlu0 %5058
        %v5060 = vsel %vm4638, %v4948, 0.0
        %5061 = vadd.xlane.f32.xlu0 %v5060
        %v5062 = vpop.xlane.xlu0 %5061
        %v5063 = vsel %vm4638, %v4949, 0.0
        %5064 = vadd.xlane.f32.xlu0 %v5063
        %v5065 = vpop.xlane.xlu0 %5064
        %v5066 = vsel %vm4638, %v4950, 0.0
        %5067 = vadd.xlane.f32.xlu0 %v5066
        %v5068 = vpop.xlane.xlu0 %5067
        %v5069 = vsel %vm4638, %v4951, 0.0
        %5070 = vadd.xlane.f32.xlu0 %v5069
        %v5071 = vpop.xlane.xlu0 %5070
        %v5072 = vsel %vm4638, %v4952, 0.0
        %5073 = vadd.xlane.f32.xlu0 %v5072
        %v5074 = vpop.xlane.xlu0 %5073
        %v5075 = vsel %vm4638, %v4953, 0.0
        %5076 = vadd.xlane.f32.xlu0 %v5075
        %v5077 = vpop.xlane.xlu0 %5076
        %v5078 = vsel %vm4638, %v4954, 0.0
        %5079 = vadd.xlane.f32.xlu0 %v5078
        %v5080 = vpop.xlane.xlu0 %5079
        %v5081 = vsel %vm4638, %v4955, 0.0
        %5082 = vadd.xlane.f32.xlu0 %v5081
        %v5083 = vpop.xlane.xlu0 %5082
        %v5084 = vsel %vm4638, %v4956, 0.0
        %5085 = vadd.xlane.f32.xlu0 %v5084
        %v5086 = vpop.xlane.xlu0 %5085
        %v5087 = vsel %vm4638, %v4957, 0.0
        %5088 = vadd.xlane.f32.xlu0 %v5087
        %v5089 = vpop.xlane.xlu0 %5088
        %v5090 = vsel %vm4638, %v4958, 0.0
        %5091 = vadd.xlane.f32.xlu0 %v5090
        %v5092 = vpop.xlane.xlu0 %5091
        %v5093 = vsel %vm4638, %v4959, 0.0
        %5094 = vadd.xlane.f32.xlu0 %v5093
        %v5095 = vpop.xlane.xlu0 %5094
        %v5096 = vsel %vm4638, %v4960, 0.0
        %5097 = vadd.xlane.f32.xlu0 %v5096
        %v5098 = vpop.xlane.xlu0 %5097
        %v5099 = vsel %vm4638, %v4961, 0.0
        %5100 = vadd.xlane.f32.xlu0 %v5099
        %v5101 = vpop.xlane.xlu0 %5100
        %v5102 = vsel %vm4638, %v4962, 0.0
        %5103 = vadd.xlane.f32.xlu0 %v5102
        %v5104 = vpop.xlane.xlu0 %5103
        %v5105 = vsel %vm4638, %v4963, 0.0
        %5106 = vadd.xlane.f32.xlu0 %v5105
        %v5107 = vpop.xlane.xlu0 %5106
        %v5108 = vsel %vm4638, %v4964, 0.0
        %5109 = vadd.xlane.f32.xlu0 %v5108
        %v5110 = vpop.xlane.xlu0 %5109
        %v5111 = vsel %vm4638, %v4965, 0.0
        %5112 = vadd.xlane.f32.xlu0 %v5111
        %v5113 = vpop.xlane.xlu0 %5112
        %v5114 = vsel %vm4638, %v4966, 0.0
        %5115 = vadd.xlane.f32.xlu0 %v5114
        %v5116 = vpop.xlane.xlu0 %5115
        %v5117 = vsel %vm4638, %v4967, 0.0
        %5118 = vadd.xlane.f32.xlu0 %v5117
        %v5119 = vpop.xlane.xlu0 %5118
        %v5120 = vsel %vm4638, %v4968, 0.0
        %5121 = vadd.xlane.f32.xlu0 %v5120
        %v5122 = vpop.xlane.xlu0 %5121
        %v5123 = vsel %vm4638, %v4969, 0.0
        %5124 = vadd.xlane.f32.xlu0 %v5123
        %v5125 = vpop.xlane.xlu0 %5124
        %v5126 = vsel %vm4638, %v4970, 0.0
        %5127 = vadd.xlane.f32.xlu0 %v5126
        %v5128 = vpop.xlane.xlu0 %5127
        %v5129 = vsel %vm4638, %v4971, 0.0
        %5130 = vadd.xlane.f32.xlu0 %v5129
        %v5131 = vpop.xlane.xlu0 %5130
        %v5132 = vsel %vm4638, %v4972, 0.0
        %5133 = vadd.xlane.f32.xlu0 %v5132
        %v5134 = vpop.xlane.xlu0 %5133
        %v5135 = vsel %vm4638, %v4973, 0.0
        %5136 = vadd.xlane.f32.xlu0 %v5135
        %v5137 = vpop.xlane.xlu0 %5136
        %v5138 = vsel %vm4638, %v4974, 0.0
        %5139 = vadd.xlane.f32.xlu0 %v5138
        %v5140 = vpop.xlane.xlu0 %5139
        %v5141 = vsel %vm4638, %v4975, 0.0
        %5142 = vadd.xlane.f32.xlu0 %v5141
        %v5143 = vpop.xlane.xlu0 %5142
        %v5144 = vmul.f32 %v4978, %v4807
        %v5145 = vmul.f32 %v4981, %v4807
        %v5146 = vmul.f32 %v4984, %v4807
        %v5147 = vmul.f32 %v4987, %v4807
        %v5148 = vmul.f32 %v4990, %v4807
        %v5149 = vmul.f32 %v4993, %v4807
        %v5150 = vmul.f32 %v4996, %v4807
        %v5151 = vmul.f32 %v4999, %v4807
        %v5152 = vmul.f32 %v5002, %v4807
        %v5153 = vmul.f32 %v5005, %v4807
        %v5154 = vmul.f32 %v5008, %v4807
        %v5155 = vmul.f32 %v5011, %v4807
        %v5156 = vmul.f32 %v5014, %v4807
        %v5157 = vmul.f32 %v5017, %v4807
        %v5158 = vmul.f32 %v5020, %v4807
        %v5159 = vmul.f32 %v5023, %v4807
        %v5160 = vmul.f32 %v5026, %v4807
        %v5161 = vmul.f32 %v5029, %v4807
        %v5162 = vmul.f32 %v5032, %v4807
        %v5163 = vmul.f32 %v5035, %v4807
        %v5164 = vmul.f32 %v5038, %v4807
        %v5165 = vmul.f32 %v5041, %v4807
        %v5166 = vmul.f32 %v5044, %v4807
        %v5167 = vmul.f32 %v5047, %v4807
        %v5168 = vmul.f32 %v5050, %v4807
        %v5169 = vmul.f32 %v5053, %v4807
        %v5170 = vmul.f32 %v5056, %v4807
        %v5171 = vmul.f32 %v5059, %v4807
        %v5172 = vmul.f32 %v5062, %v4807
        %v5173 = vmul.f32 %v5065, %v4807
        %v5174 = vmul.f32 %v5068, %v4807
        %v5175 = vmul.f32 %v5071, %v4807
        %v5176 = vmul.f32 %v5074, %v4807
        %v5177 = vmul.f32 %v5077, %v4807
        %v5178 = vmul.f32 %v5080, %v4807
        %v5179 = vmul.f32 %v5083, %v4807
        %v5180 = vmul.f32 %v5086, %v4807
        %v5181 = vmul.f32 %v5089, %v4807
        %v5182 = vmul.f32 %v5092, %v4807
        %v5183 = vmul.f32 %v5095, %v4807
        %v5184 = vmul.f32 %v5098, %v4807
        %v5185 = vmul.f32 %v5101, %v4807
        %v5186 = vmul.f32 %v5104, %v4807
        %v5187 = vmul.f32 %v5107, %v4807
        %v5188 = vmul.f32 %v5110, %v4807
        %v5189 = vmul.f32 %v5113, %v4807
        %v5190 = vmul.f32 %v5116, %v4807
        %v5191 = vmul.f32 %v5119, %v4807
        %v5192 = vmul.f32 %v5122, %v4807
        %v5193 = vmul.f32 %v5125, %v4807
        %v5194 = vmul.f32 %v5128, %v4807
        %v5195 = vmul.f32 %v5131, %v4807
        %v5196 = vmul.f32 %v5134, %v4807
        %v5197 = vmul.f32 %v5137, %v4807
        %v5198 = vmul.f32 %v5140, %v4807
        %v5199 = vmul.f32 %v5143, %v4807
        %v5200 = vld [vmem:[%s2] sm:$0xff]
        %v5201 = vld [vmem:[%s2 + $0x8] sm:$0xff]
        %v5202 = vld [vmem:[%s2 + $0x10] sm:$0xff]
        %v5203 = vld [vmem:[%s2 + $0x18] sm:$0xff]
        %v5204 = vld [vmem:[%s2 + $0x20] sm:$0xff]
        %v5205 = vld [vmem:[%s2 + $0x28] sm:$0xff]
        %v5206 = vld [vmem:[%s2 + $0x30] sm:$0xff]
        %v5207 = vld [vmem:[%s2 + $0x38] sm:$0xff]
        %v5208 = vld [vmem:[%s2 + $0x40] sm:$0xff]
        %v5209 = vld [vmem:[%s2 + $0x48] sm:$0xff]
        %v5210 = vld [vmem:[%s2 + $0x50] sm:$0xff]
        %v5211 = vld [vmem:[%s2 + $0x58] sm:$0xff]
        %v5212 = vld [vmem:[%s2 + $0x60] sm:$0xff]
        %v5213 = vld [vmem:[%s2 + $0x68] sm:$0xff]
        %v5214 = vld [vmem:[%s2 + $0x70] sm:$0xff]
        %v5215 = vld [vmem:[%s2 + $0x78] sm:$0xff]
        %v5216 = vld [vmem:[%s2 + $0x80] sm:$0xff]
        %v5217 = vld [vmem:[%s2 + $0x88] sm:$0xff]
        %v5218 = vld [vmem:[%s2 + $0x90] sm:$0xff]
        %v5219 = vld [vmem:[%s2 + $0x98] sm:$0xff]
        %v5220 = vld [vmem:[%s2 + $0xa0] sm:$0xff]
        %v5221 = vld [vmem:[%s2 + $0xa8] sm:$0xff]
        %v5222 = vld [vmem:[%s2 + $0xb0] sm:$0xff]
        %v5223 = vld [vmem:[%s2 + $0xb8] sm:$0xff]
        %v5224 = vld [vmem:[%s2 + $0xc0] sm:$0xff]
        %v5225 = vld [vmem:[%s2 + $0xc8] sm:$0xff]
        %v5226 = vld [vmem:[%s2 + $0xd0] sm:$0xff]
        %v5227 = vld [vmem:[%s2 + $0xd8] sm:$0xff]
        %v5228 = vld [vmem:[%s2 + $0xe0] sm:$0xff]
        %v5229 = vld [vmem:[%s2 + $0xe8] sm:$0xff]
        %v5230 = vld [vmem:[%s2 + $0xf0] sm:$0xff]
        %v5231 = vld [vmem:[%s2 + $0xf8] sm:$0xff]
        %v5232 = vld [vmem:[%s2 + $0x100] sm:$0xff]
        %v5233 = vld [vmem:[%s2 + $0x108] sm:$0xff]
        %v5234 = vld [vmem:[%s2 + $0x110] sm:$0xff]
        %v5235 = vld [vmem:[%s2 + $0x118] sm:$0xff]
        %v5236 = vld [vmem:[%s2 + $0x120] sm:$0xff]
        %v5237 = vld [vmem:[%s2 + $0x128] sm:$0xff]
        %v5238 = vld [vmem:[%s2 + $0x130] sm:$0xff]
        %v5239 = vld [vmem:[%s2 + $0x138] sm:$0xff]
        %v5240 = vld [vmem:[%s2 + $0x140] sm:$0xff]
        %v5241 = vld [vmem:[%s2 + $0x148] sm:$0xff]
        %v5242 = vld [vmem:[%s2 + $0x150] sm:$0xff]
        %v5243 = vld [vmem:[%s2 + $0x158] sm:$0xff]
        %v5244 = vld [vmem:[%s2 + $0x160] sm:$0xff]
        %v5245 = vld [vmem:[%s2 + $0x168] sm:$0xff]
        %v5246 = vld [vmem:[%s2 + $0x170] sm:$0xff]
        %v5247 = vld [vmem:[%s2 + $0x178] sm:$0xff]
        %v5248 = vld [vmem:[%s2 + $0x180] sm:$0xff]
        %v5249 = vld [vmem:[%s2 + $0x188] sm:$0xff]
        %v5250 = vld [vmem:[%s2 + $0x190] sm:$0xff]
        %v5251 = vld [vmem:[%s2 + $0x198] sm:$0xff]
        %v5252 = vld [vmem:[%s2 + $0x1a0] sm:$0xff]
        %v5253 = vld [vmem:[%s2 + $0x1a8] sm:$0xff]
        %v5254 = vld [vmem:[%s2 + $0x1b0] sm:$0xff]
        %v5255 = vld [vmem:[%s2 + $0x1b8] sm:$0xff]
        %v5256 = vadd.f32 %v5144, 1e-05
        %v5257 = vadd.f32 %v5145, 1e-05
        %v5258 = vadd.f32 %v5146, 1e-05
        %v5259 = vadd.f32 %v5147, 1e-05
        %v5260 = vadd.f32 %v5148, 1e-05
        %v5261 = vadd.f32 %v5149, 1e-05
        %v5262 = vadd.f32 %v5150, 1e-05
        %v5263 = vadd.f32 %v5151, 1e-05
        %v5264 = vadd.f32 %v5152, 1e-05
        %v5265 = vadd.f32 %v5153, 1e-05
        %v5266 = vadd.f32 %v5154, 1e-05
        %v5267 = vadd.f32 %v5155, 1e-05
        %v5268 = vadd.f32 %v5156, 1e-05
        %v5269 = vadd.f32 %v5157, 1e-05
        %v5270 = vadd.f32 %v5158, 1e-05
        %v5271 = vadd.f32 %v5159, 1e-05
        %v5272 = vadd.f32 %v5160, 1e-05
        %v5273 = vadd.f32 %v5161, 1e-05
        %v5274 = vadd.f32 %v5162, 1e-05
        %v5275 = vadd.f32 %v5163, 1e-05
        %v5276 = vadd.f32 %v5164, 1e-05
        %v5277 = vadd.f32 %v5165, 1e-05
        %v5278 = vadd.f32 %v5166, 1e-05
        %v5279 = vadd.f32 %v5167, 1e-05
        %v5280 = vadd.f32 %v5168, 1e-05
        %v5281 = vadd.f32 %v5169, 1e-05
        %v5282 = vadd.f32 %v5170, 1e-05
        %v5283 = vadd.f32 %v5171, 1e-05
        %v5284 = vadd.f32 %v5172, 1e-05
        %v5285 = vadd.f32 %v5173, 1e-05
        %v5286 = vadd.f32 %v5174, 1e-05
        %v5287 = vadd.f32 %v5175, 1e-05
        %v5288 = vadd.f32 %v5176, 1e-05
        %v5289 = vadd.f32 %v5177, 1e-05
        %v5290 = vadd.f32 %v5178, 1e-05
        %v5291 = vadd.f32 %v5179, 1e-05
        %v5292 = vadd.f32 %v5180, 1e-05
        %v5293 = vadd.f32 %v5181, 1e-05
        %v5294 = vadd.f32 %v5182, 1e-05
        %v5295 = vadd.f32 %v5183, 1e-05
        %v5296 = vadd.f32 %v5184, 1e-05
        %v5297 = vadd.f32 %v5185, 1e-05
        %v5298 = vadd.f32 %v5186, 1e-05
        %v5299 = vadd.f32 %v5187, 1e-05
        %v5300 = vadd.f32 %v5188, 1e-05
        %v5301 = vadd.f32 %v5189, 1e-05
        %v5302 = vadd.f32 %v5190, 1e-05
        %v5303 = vadd.f32 %v5191, 1e-05
        %v5304 = vadd.f32 %v5192, 1e-05
        %v5305 = vadd.f32 %v5193, 1e-05
        %v5306 = vadd.f32 %v5194, 1e-05
        %v5307 = vadd.f32 %v5195, 1e-05
        %v5308 = vadd.f32 %v5196, 1e-05
        %v5309 = vadd.f32 %v5197, 1e-05
        %v5310 = vadd.f32 %v5198, 1e-05
        %v5311 = vadd.f32 %v5199, 1e-05
        %v5312 = vrsqrt.pop %v5256
        %v5313 = vrsqrt.pop %v5257
        %v5314 = vrsqrt.pop %v5258
        %v5315 = vrsqrt.pop %v5259
        %v5316 = vrsqrt.pop %v5260
        %v5317 = vrsqrt.pop %v5261
        %v5318 = vrsqrt.pop %v5262
        %v5319 = vrsqrt.pop %v5263
        %v5320 = vrsqrt.pop %v5264
        %v5321 = vrsqrt.pop %v5265
        %v5322 = vrsqrt.pop %v5266
        %v5323 = vrsqrt.pop %v5267
        %v5324 = vrsqrt.pop %v5268
        %v5325 = vrsqrt.pop %v5269
        %v5326 = vrsqrt.pop %v5270
        %v5327 = vrsqrt.pop %v5271
        %v5328 = vrsqrt.pop %v5272
        %v5329 = vrsqrt.pop %v5273
        %v5330 = vrsqrt.pop %v5274
        %v5331 = vrsqrt.pop %v5275
        %v5332 = vrsqrt.pop %v5276
        %v5333 = vrsqrt.pop %v5277
        %v5334 = vrsqrt.pop %v5278
        %v5335 = vrsqrt.pop %v5279
        %v5336 = vrsqrt.pop %v5280
        %v5337 = vrsqrt.pop %v5281
        %v5338 = vrsqrt.pop %v5282
        %v5339 = vrsqrt.pop %v5283
        %v5340 = vrsqrt.pop %v5284
        %v5341 = vrsqrt.pop %v5285
        %v5342 = vrsqrt.pop %v5286
        %v5343 = vrsqrt.pop %v5287
        %v5344 = vrsqrt.pop %v5288
        %v5345 = vrsqrt.pop %v5289
        %v5346 = vrsqrt.pop %v5290
        %v5347 = vrsqrt.pop %v5291
        %v5348 = vrsqrt.pop %v5292
        %v5349 = vrsqrt.pop %v5293
        %v5350 = vrsqrt.pop %v5294
        %v5351 = vrsqrt.pop %v5295
        %v5352 = vrsqrt.pop %v5296
        %v5353 = vrsqrt.pop %v5297
        %v5354 = vrsqrt.pop %v5298
        %v5355 = vrsqrt.pop %v5299
        %v5356 = vrsqrt.pop %v5300
        %v5357 = vrsqrt.pop %v5301
        %v5358 = vrsqrt.pop %v5302
        %v5359 = vrsqrt.pop %v5303
        %v5360 = vrsqrt.pop %v5304
        %v5361 = vrsqrt.pop %v5305
        %v5362 = vrsqrt.pop %v5306
        %v5363 = vrsqrt.pop %v5307
        %v5364 = vrsqrt.pop %v5308
        %v5365 = vrsqrt.pop %v5309
        %v5366 = vrsqrt.pop %v5310
        %v5367 = vrsqrt.pop %v5311
        %v5368 = vmul.f32 %v5200, %v5312
        %v5369 = vmul.f32 %v5201, %v5313
        %v5370 = vmul.f32 %v5202, %v5314
        %v5371 = vmul.f32 %v5203, %v5315
        %v5372 = vmul.f32 %v5204, %v5316
        %v5373 = vmul.f32 %v5205, %v5317
        %v5374 = vmul.f32 %v5206, %v5318
        %v5375 = vmul.f32 %v5207, %v5319
        %v5376 = vmul.f32 %v5208, %v5320
        %v5377 = vmul.f32 %v5209, %v5321
        %v5378 = vmul.f32 %v5210, %v5322
        %v5379 = vmul.f32 %v5211, %v5323
        %v5380 = vmul.f32 %v5212, %v5324
        %v5381 = vmul.f32 %v5213, %v5325
        %v5382 = vmul.f32 %v5214, %v5326
        %v5383 = vmul.f32 %v5215, %v5327
        %v5384 = vmul.f32 %v5216, %v5328
        %v5385 = vmul.f32 %v5217, %v5329
        %v5386 = vmul.f32 %v5218, %v5330
        %v5387 = vmul.f32 %v5219, %v5331
        %v5388 = vmul.f32 %v5220, %v5332
        %v5389 = vmul.f32 %v5221, %v5333
        %v5390 = vmul.f32 %v5222, %v5334
        %v5391 = vmul.f32 %v5223, %v5335
        %v5392 = vmul.f32 %v5224, %v5336
        %v5393 = vmul.f32 %v5225, %v5337
        %v5394 = vmul.f32 %v5226, %v5338
        %v5395 = vmul.f32 %v5227, %v5339
        %v5396 = vmul.f32 %v5228, %v5340
        %v5397 = vmul.f32 %v5229, %v5341
        %v5398 = vmul.f32 %v5230, %v5342
        %v5399 = vmul.f32 %v5231, %v5343
        %v5400 = vmul.f32 %v5232, %v5344
        %v5401 = vmul.f32 %v5233, %v5345
        %v5402 = vmul.f32 %v5234, %v5346
        %v5403 = vmul.f32 %v5235, %v5347
        %v5404 = vmul.f32 %v5236, %v5348
        %v5405 = vmul.f32 %v5237, %v5349
        %v5406 = vmul.f32 %v5238, %v5350
        %v5407 = vmul.f32 %v5239, %v5351
        %v5408 = vmul.f32 %v5240, %v5352
        %v5409 = vmul.f32 %v5241, %v5353
        %v5410 = vmul.f32 %v5242, %v5354
        %v5411 = vmul.f32 %v5243, %v5355
        %v5412 = vmul.f32 %v5244, %v5356
        %v5413 = vmul.f32 %v5245, %v5357
        %v5414 = vmul.f32 %v5246, %v5358
        %v5415 = vmul.f32 %v5247, %v5359
        %v5416 = vmul.f32 %v5248, %v5360
        %v5417 = vmul.f32 %v5249, %v5361
        %v5418 = vmul.f32 %v5250, %v5362
        %v5419 = vmul.f32 %v5251, %v5363
        %v5420 = vmul.f32 %v5252, %v5364
        %v5421 = vmul.f32 %v5253, %v5365
        %v5422 = vmul.f32 %v5254, %v5366
        %v5423 = vmul.f32 %v5255, %v5367
        %v5424 = vmul.f32 %v4808, %v5368
        %v5425 = vmul.f32 %v4809, %v5369
        %v5426 = vmul.f32 %v4810, %v5370
        %v5427 = vmul.f32 %v4811, %v5371
        %v5428 = vmul.f32 %v4812, %v5372
        %v5429 = vmul.f32 %v4813, %v5373
        %v5430 = vmul.f32 %v4814, %v5374
        %v5431 = vmul.f32 %v4815, %v5375
        %v5432 = vmul.f32 %v4816, %v5376
        %v5433 = vmul.f32 %v4817, %v5377
        %v5434 = vmul.f32 %v4818, %v5378
        %v5435 = vmul.f32 %v4819, %v5379
        %v5436 = vmul.f32 %v4820, %v5380
        %v5437 = vmul.f32 %v4821, %v5381
        %v5438 = vmul.f32 %v4822, %v5382
        %v5439 = vmul.f32 %v4823, %v5383
        %v5440 = vmul.f32 %v4824, %v5384
        %v5441 = vmul.f32 %v4825, %v5385
        %v5442 = vmul.f32 %v4826, %v5386
        %v5443 = vmul.f32 %v4827, %v5387
        %v5444 = vmul.f32 %v4828, %v5388
        %v5445 = vmul.f32 %v4829, %v5389
        %v5446 = vmul.f32 %v4830, %v5390
        %v5447 = vmul.f32 %v4831, %v5391
        %v5448 = vmul.f32 %v4832, %v5392
        %v5449 = vmul.f32 %v4833, %v5393
        %v5450 = vmul.f32 %v4834, %v5394
        %v5451 = vmul.f32 %v4835, %v5395
        %v5452 = vmul.f32 %v4836, %v5396
        %v5453 = vmul.f32 %v4837, %v5397
        %v5454 = vmul.f32 %v4838, %v5398
        %v5455 = vmul.f32 %v4839, %v5399
        %v5456 = vmul.f32 %v4840, %v5400
        %v5457 = vmul.f32 %v4841, %v5401
        %v5458 = vmul.f32 %v4842, %v5402
        %v5459 = vmul.f32 %v4843, %v5403
        %v5460 = vmul.f32 %v4844, %v5404
        %v5461 = vmul.f32 %v4845, %v5405
        %v5462 = vmul.f32 %v4846, %v5406
        %v5463 = vmul.f32 %v4847, %v5407
        %v5464 = vmul.f32 %v4848, %v5408
        %v5465 = vmul.f32 %v4849, %v5409
        %v5466 = vmul.f32 %v4850, %v5410
        %v5467 = vmul.f32 %v4851, %v5411
        %v5468 = vmul.f32 %v4852, %v5412
        %v5469 = vmul.f32 %v4853, %v5413
        %v5470 = vmul.f32 %v4854, %v5414
        %v5471 = vmul.f32 %v4855, %v5415
        %v5472 = vmul.f32 %v4856, %v5416
        %v5473 = vmul.f32 %v4857, %v5417
        %v5474 = vmul.f32 %v4858, %v5418
        %v5475 = vmul.f32 %v4859, %v5419
        %v5476 = vmul.f32 %v4860, %v5420
        %v5477 = vmul.f32 %v4861, %v5421
        %v5478 = vmul.f32 %v4862, %v5422
        %v5479 = vmul.f32 %v4863, %v5423
        %5536 = vrot.lane.b32.xlu0 %v5424, 1
        %v5537 = vpop.permute.xlu0 %5536
        %5538 = vrot.lane.b32.xlu0 %v5425, 1
        %v5539 = vpop.permute.xlu0 %5538
        %5540 = vrot.lane.b32.xlu0 %v5426, 1
        %v5541 = vpop.permute.xlu0 %5540
        %5542 = vrot.lane.b32.xlu0 %v5427, 1
        %v5543 = vpop.permute.xlu0 %5542
        %5544 = vrot.lane.b32.xlu0 %v5428, 1
        %v5545 = vpop.permute.xlu0 %5544
        %5546 = vrot.lane.b32.xlu0 %v5429, 1
        %v5547 = vpop.permute.xlu0 %5546
        %5548 = vrot.lane.b32.xlu0 %v5430, 1
        %v5549 = vpop.permute.xlu0 %5548
        %5550 = vrot.lane.b32.xlu0 %v5431, 1
        %v5551 = vpop.permute.xlu0 %5550
        %5552 = vrot.lane.b32.xlu0 %v5432, 1
        %v5553 = vpop.permute.xlu0 %5552
        %5554 = vrot.lane.b32.xlu0 %v5433, 1
        %v5555 = vpop.permute.xlu0 %5554
        %5556 = vrot.lane.b32.xlu0 %v5434, 1
        %v5557 = vpop.permute.xlu0 %5556
        %5558 = vrot.lane.b32.xlu0 %v5435, 1
        %v5559 = vpop.permute.xlu0 %5558
        %5560 = vrot.lane.b32.xlu0 %v5436, 1
        %v5561 = vpop.permute.xlu0 %5560
        %5562 = vrot.lane.b32.xlu0 %v5437, 1
        %v5563 = vpop.permute.xlu0 %5562
        %5564 = vrot.lane.b32.xlu0 %v5438, 1
        %v5565 = vpop.permute.xlu0 %5564
        %5566 = vrot.lane.b32.xlu0 %v5439, 1
        %v5567 = vpop.permute.xlu0 %5566
        %5568 = vrot.lane.b32.xlu0 %v5440, 1
        %v5569 = vpop.permute.xlu0 %5568
        %5570 = vrot.lane.b32.xlu0 %v5441, 1
        %v5571 = vpop.permute.xlu0 %5570
        %5572 = vrot.lane.b32.xlu0 %v5442, 1
        %v5573 = vpop.permute.xlu0 %5572
        %5574 = vrot.lane.b32.xlu0 %v5443, 1
        %v5575 = vpop.permute.xlu0 %5574
        %5576 = vrot.lane.b32.xlu0 %v5444, 1
        %v5577 = vpop.permute.xlu0 %5576
        %5578 = vrot.lane.b32.xlu0 %v5445, 1
        %v5579 = vpop.permute.xlu0 %5578
        %5580 = vrot.lane.b32.xlu0 %v5446, 1
        %v5581 = vpop.permute.xlu0 %5580
        %5582 = vrot.lane.b32.xlu0 %v5447, 1
        %v5583 = vpop.permute.xlu0 %5582
        %5584 = vrot.lane.b32.xlu0 %v5448, 1
        %v5585 = vpop.permute.xlu0 %5584
        %5586 = vrot.lane.b32.xlu0 %v5449, 1
        %v5587 = vpop.permute.xlu0 %5586
        %5588 = vrot.lane.b32.xlu0 %v5450, 1
        %v5589 = vpop.permute.xlu0 %5588
        %5590 = vrot.lane.b32.xlu0 %v5451, 1
        %v5591 = vpop.permute.xlu0 %5590
        %5592 = vrot.lane.b32.xlu0 %v5452, 1
        %v5593 = vpop.permute.xlu0 %5592
        %5594 = vrot.lane.b32.xlu0 %v5453, 1
        %v5595 = vpop.permute.xlu0 %5594
        %5596 = vrot.lane.b32.xlu0 %v5454, 1
        %v5597 = vpop.permute.xlu0 %5596
        %5598 = vrot.lane.b32.xlu0 %v5455, 1
        %v5599 = vpop.permute.xlu0 %5598
        %5600 = vrot.lane.b32.xlu0 %v5456, 1
        %v5601 = vpop.permute.xlu0 %5600
        %5602 = vrot.lane.b32.xlu0 %v5457, 1
        %v5603 = vpop.permute.xlu0 %5602
        %5604 = vrot.lane.b32.xlu0 %v5458, 1
        %v5605 = vpop.permute.xlu0 %5604
        %5606 = vrot.lane.b32.xlu0 %v5459, 1
        %v5607 = vpop.permute.xlu0 %5606
        %5608 = vrot.lane.b32.xlu0 %v5460, 1
        %v5609 = vpop.permute.xlu0 %5608
        %5610 = vrot.lane.b32.xlu0 %v5461, 1
        %v5611 = vpop.permute.xlu0 %5610
        %5612 = vrot.lane.b32.xlu0 %v5462, 1
        %v5613 = vpop.permute.xlu0 %5612
        %5614 = vrot.lane.b32.xlu0 %v5463, 1
        %v5615 = vpop.permute.xlu0 %5614
        %5616 = vrot.lane.b32.xlu0 %v5464, 1
        %v5617 = vpop.permute.xlu0 %5616
        %5618 = vrot.lane.b32.xlu0 %v5465, 1
        %v5619 = vpop.permute.xlu0 %5618
        %5620 = vrot.lane.b32.xlu0 %v5466, 1
        %v5621 = vpop.permute.xlu0 %5620
        %5622 = vrot.lane.b32.xlu0 %v5467, 1
        %v5623 = vpop.permute.xlu0 %5622
        %5624 = vrot.lane.b32.xlu0 %v5468, 1
        %v5625 = vpop.permute.xlu0 %5624
        %5626 = vrot.lane.b32.xlu0 %v5469, 1
        %v5627 = vpop.permute.xlu0 %5626
        %5628 = vrot.lane.b32.xlu0 %v5470, 1
        %v5629 = vpop.permute.xlu0 %5628
        %5630 = vrot.lane.b32.xlu0 %v5471, 1
        %v5631 = vpop.permute.xlu0 %5630
        %5632 = vrot.lane.b32.xlu0 %v5472, 1
        %v5633 = vpop.permute.xlu0 %5632
        %5634 = vrot.lane.b32.xlu0 %v5473, 1
        %v5635 = vpop.permute.xlu0 %5634
        %5636 = vrot.lane.b32.xlu0 %v5474, 1
        %v5637 = vpop.permute.xlu0 %5636
        %5638 = vrot.lane.b32.xlu0 %v5475, 1
        %v5639 = vpop.permute.xlu0 %5638
        %5640 = vrot.lane.b32.xlu0 %v5476, 1
        %v5641 = vpop.permute.xlu0 %5640
        %5642 = vrot.lane.b32.xlu0 %v5477, 1
        %v5643 = vpop.permute.xlu0 %5642
        %5644 = vrot.lane.b32.xlu0 %v5478, 1
        %v5645 = vpop.permute.xlu0 %5644
        %5646 = vrot.lane.b32.xlu0 %v5479, 1
        %v5647 = vpop.permute.xlu0 %5646
        %v5704 = vsub.f32 %v5200, %v5537
        %v5705 = vsub.f32 %v5201, %v5539
        %v5706 = vsub.f32 %v5202, %v5541
        %v5707 = vsub.f32 %v5203, %v5543
        %v5708 = vsub.f32 %v5204, %v5545
        %v5709 = vsub.f32 %v5205, %v5547
        %v5710 = vsub.f32 %v5206, %v5549
        %v5711 = vsub.f32 %v5207, %v5551
        %v5712 = vsub.f32 %v5208, %v5553
        %v5713 = vsub.f32 %v5209, %v5555
        %v5714 = vsub.f32 %v5210, %v5557
        %v5715 = vsub.f32 %v5211, %v5559
        %v5716 = vsub.f32 %v5212, %v5561
        %v5717 = vsub.f32 %v5213, %v5563
        %v5718 = vsub.f32 %v5214, %v5565
        %v5719 = vsub.f32 %v5215, %v5567
        %v5720 = vsub.f32 %v5216, %v5569
        %v5721 = vsub.f32 %v5217, %v5571
        %v5722 = vsub.f32 %v5218, %v5573
        %v5723 = vsub.f32 %v5219, %v5575
        %v5724 = vsub.f32 %v5220, %v5577
        %v5725 = vsub.f32 %v5221, %v5579
        %v5726 = vsub.f32 %v5222, %v5581
        %v5727 = vsub.f32 %v5223, %v5583
        %v5728 = vsub.f32 %v5224, %v5585
        %v5729 = vsub.f32 %v5225, %v5587
        %v5730 = vsub.f32 %v5226, %v5589
        %v5731 = vsub.f32 %v5227, %v5591
        %v5732 = vsub.f32 %v5228, %v5593
        %v5733 = vsub.f32 %v5229, %v5595
        %v5734 = vsub.f32 %v5230, %v5597
        %v5735 = vsub.f32 %v5231, %v5599
        %v5736 = vsub.f32 %v5232, %v5601
        %v5737 = vsub.f32 %v5233, %v5603
        %v5738 = vsub.f32 %v5234, %v5605
        %v5739 = vsub.f32 %v5235, %v5607
        %v5740 = vsub.f32 %v5236, %v5609
        %v5741 = vsub.f32 %v5237, %v5611
        %v5742 = vsub.f32 %v5238, %v5613
        %v5743 = vsub.f32 %v5239, %v5615
        %v5744 = vsub.f32 %v5240, %v5617
        %v5745 = vsub.f32 %v5241, %v5619
        %v5746 = vsub.f32 %v5242, %v5621
        %v5747 = vsub.f32 %v5243, %v5623
        %v5748 = vsub.f32 %v5244, %v5625
        %v5749 = vsub.f32 %v5245, %v5627
        %v5750 = vsub.f32 %v5246, %v5629
        %v5751 = vsub.f32 %v5247, %v5631
        %v5752 = vsub.f32 %v5248, %v5633
        %v5753 = vsub.f32 %v5249, %v5635
        %v5754 = vsub.f32 %v5250, %v5637
        %v5755 = vsub.f32 %v5251, %v5639
        %v5756 = vsub.f32 %v5252, %v5641
        %v5757 = vsub.f32 %v5253, %v5643
        %v5758 = vsub.f32 %v5254, %v5645
        %v5759 = vsub.f32 %v5255, %v5647
        %5761 = vset.pattern.permute.xlu0 0
        %5762 = vperm.xlu0 %5761, %v5368
        %v5763 = vpop.permute.xlu0 %5762
        %5766 = vset.pattern.permute.xlu0 0
        %5767 = vperm.xlu0 %5766, %v5369
        %v5768 = vpop.permute.xlu0 %5767
        %5771 = vset.pattern.permute.xlu0 0
        %5772 = vperm.xlu0 %5771, %v5370
        %v5773 = vpop.permute.xlu0 %5772
        %5776 = vset.pattern.permute.xlu0 0
        %5777 = vperm.xlu0 %5776, %v5371
        %v5778 = vpop.permute.xlu0 %5777
        %5781 = vset.pattern.permute.xlu0 0
        %5782 = vperm.xlu0 %5781, %v5372
        %v5783 = vpop.permute.xlu0 %5782
        %5786 = vset.pattern.permute.xlu0 0
        %5787 = vperm.xlu0 %5786, %v5373
        %v5788 = vpop.permute.xlu0 %5787
        %5791 = vset.pattern.permute.xlu0 0
        %5792 = vperm.xlu0 %5791, %v5374
        %v5793 = vpop.permute.xlu0 %5792
        %5796 = vset.pattern.permute.xlu0 0
        %5797 = vperm.xlu0 %5796, %v5375
        %v5798 = vpop.permute.xlu0 %5797
        %5801 = vset.pattern.permute.xlu0 0
        %5802 = vperm.xlu0 %5801, %v5376
        %v5803 = vpop.permute.xlu0 %5802
        %5806 = vset.pattern.permute.xlu0 0
        %5807 = vperm.xlu0 %5806, %v5377
        %v5808 = vpop.permute.xlu0 %5807
        %5811 = vset.pattern.permute.xlu0 0
        %5812 = vperm.xlu0 %5811, %v5378
        %v5813 = vpop.permute.xlu0 %5812
        %5816 = vset.pattern.permute.xlu0 0
        %5817 = vperm.xlu0 %5816, %v5379
        %v5818 = vpop.permute.xlu0 %5817
        %5821 = vset.pattern.permute.xlu0 0
        %5822 = vperm.xlu0 %5821, %v5380
        %v5823 = vpop.permute.xlu0 %5822
        %5826 = vset.pattern.permute.xlu0 0
        %5827 = vperm.xlu0 %5826, %v5381
        %v5828 = vpop.permute.xlu0 %5827
        %5831 = vset.pattern.permute.xlu0 0
        %5832 = vperm.xlu0 %5831, %v5382
        %v5833 = vpop.permute.xlu0 %5832
        %5836 = vset.pattern.permute.xlu0 0
        %5837 = vperm.xlu0 %5836, %v5383
        %v5838 = vpop.permute.xlu0 %5837
        %5841 = vset.pattern.permute.xlu0 0
        %5842 = vperm.xlu0 %5841, %v5384
        %v5843 = vpop.permute.xlu0 %5842
        %5846 = vset.pattern.permute.xlu0 0
        %5847 = vperm.xlu0 %5846, %v5385
        %v5848 = vpop.permute.xlu0 %5847
        %5851 = vset.pattern.permute.xlu0 0
        %5852 = vperm.xlu0 %5851, %v5386
        %v5853 = vpop.permute.xlu0 %5852
        %5856 = vset.pattern.permute.xlu0 0
        %5857 = vperm.xlu0 %5856, %v5387
        %v5858 = vpop.permute.xlu0 %5857
        %5861 = vset.pattern.permute.xlu0 0
        %5862 = vperm.xlu0 %5861, %v5388
        %v5863 = vpop.permute.xlu0 %5862
        %5866 = vset.pattern.permute.xlu0 0
        %5867 = vperm.xlu0 %5866, %v5389
        %v5868 = vpop.permute.xlu0 %5867
        %5871 = vset.pattern.permute.xlu0 0
        %5872 = vperm.xlu0 %5871, %v5390
        %v5873 = vpop.permute.xlu0 %5872
        %5876 = vset.pattern.permute.xlu0 0
        %5877 = vperm.xlu0 %5876, %v5391
        %v5878 = vpop.permute.xlu0 %5877
        %5881 = vset.pattern.permute.xlu0 0
        %5882 = vperm.xlu0 %5881, %v5392
        %v5883 = vpop.permute.xlu0 %5882
        %5886 = vset.pattern.permute.xlu0 0
        %5887 = vperm.xlu0 %5886, %v5393
        %v5888 = vpop.permute.xlu0 %5887
        %5891 = vset.pattern.permute.xlu0 0
        %5892 = vperm.xlu0 %5891, %v5394
        %v5893 = vpop.permute.xlu0 %5892
        %5896 = vset.pattern.permute.xlu0 0
        %5897 = vperm.xlu0 %5896, %v5395
        %v5898 = vpop.permute.xlu0 %5897
        %5901 = vset.pattern.permute.xlu0 0
        %5902 = vperm.xlu0 %5901, %v5396
        %v5903 = vpop.permute.xlu0 %5902
        %5906 = vset.pattern.permute.xlu0 0
        %5907 = vperm.xlu0 %5906, %v5397
        %v5908 = vpop.permute.xlu0 %5907
        %5911 = vset.pattern.permute.xlu0 0
        %5912 = vperm.xlu0 %5911, %v5398
        %v5913 = vpop.permute.xlu0 %5912
        %5916 = vset.pattern.permute.xlu0 0
        %5917 = vperm.xlu0 %5916, %v5399
        %v5918 = vpop.permute.xlu0 %5917
        %5921 = vset.pattern.permute.xlu0 0
        %5922 = vperm.xlu0 %5921, %v5400
        %v5923 = vpop.permute.xlu0 %5922
        %5926 = vset.pattern.permute.xlu0 0
        %5927 = vperm.xlu0 %5926, %v5401
        %v5928 = vpop.permute.xlu0 %5927
        %5931 = vset.pattern.permute.xlu0 0
        %5932 = vperm.xlu0 %5931, %v5402
        %v5933 = vpop.permute.xlu0 %5932
        %5936 = vset.pattern.permute.xlu0 0
        %5937 = vperm.xlu0 %5936, %v5403
        %v5938 = vpop.permute.xlu0 %5937
        %5941 = vset.pattern.permute.xlu0 0
        %5942 = vperm.xlu0 %5941, %v5404
        %v5943 = vpop.permute.xlu0 %5942
        %5946 = vset.pattern.permute.xlu0 0
        %5947 = vperm.xlu0 %5946, %v5405
        %v5948 = vpop.permute.xlu0 %5947
        %5951 = vset.pattern.permute.xlu0 0
        %5952 = vperm.xlu0 %5951, %v5406
        %v5953 = vpop.permute.xlu0 %5952
        %5956 = vset.pattern.permute.xlu0 0
        %5957 = vperm.xlu0 %5956, %v5407
        %v5958 = vpop.permute.xlu0 %5957
        %5961 = vset.pattern.permute.xlu0 0
        %5962 = vperm.xlu0 %5961, %v5408
        %v5963 = vpop.permute.xlu0 %5962
        %5966 = vset.pattern.permute.xlu0 0
        %5967 = vperm.xlu0 %5966, %v5409
        %v5968 = vpop.permute.xlu0 %5967
        %5971 = vset.pattern.permute.xlu0 0
        %5972 = vperm.xlu0 %5971, %v5410
        %v5973 = vpop.permute.xlu0 %5972
        %5976 = vset.pattern.permute.xlu0 0
        %5977 = vperm.xlu0 %5976, %v5411
        %v5978 = vpop.permute.xlu0 %5977
        %5981 = vset.pattern.permute.xlu0 0
        %5982 = vperm.xlu0 %5981, %v5412
        %v5983 = vpop.permute.xlu0 %5982
        %5986 = vset.pattern.permute.xlu0 0
        %5987 = vperm.xlu0 %5986, %v5413
        %v5988 = vpop.permute.xlu0 %5987
        %5991 = vset.pattern.permute.xlu0 0
        %5992 = vperm.xlu0 %5991, %v5414
        %v5993 = vpop.permute.xlu0 %5992
        %5996 = vset.pattern.permute.xlu0 0
        %5997 = vperm.xlu0 %5996, %v5415
        %v5998 = vpop.permute.xlu0 %5997
        %6001 = vset.pattern.permute.xlu0 0
        %6002 = vperm.xlu0 %6001, %v5416
        %v6003 = vpop.permute.xlu0 %6002
        %6006 = vset.pattern.permute.xlu0 0
        %6007 = vperm.xlu0 %6006, %v5417
        %v6008 = vpop.permute.xlu0 %6007
        %6011 = vset.pattern.permute.xlu0 0
        %6012 = vperm.xlu0 %6011, %v5418
        %v6013 = vpop.permute.xlu0 %6012
        %6016 = vset.pattern.permute.xlu0 0
        %6017 = vperm.xlu0 %6016, %v5419
        %v6018 = vpop.permute.xlu0 %6017
        %6021 = vset.pattern.permute.xlu0 0
        %6022 = vperm.xlu0 %6021, %v5420
        %v6023 = vpop.permute.xlu0 %6022
        %6026 = vset.pattern.permute.xlu0 0
        %6027 = vperm.xlu0 %6026, %v5421
        %v6028 = vpop.permute.xlu0 %6027
        %6031 = vset.pattern.permute.xlu0 0
        %6032 = vperm.xlu0 %6031, %v5422
        %v6033 = vpop.permute.xlu0 %6032
        %6036 = vset.pattern.permute.xlu0 0
        %6037 = vperm.xlu0 %6036, %v5423
        %v6038 = vpop.permute.xlu0 %6037
        %v6040 = vmul.f32 %v4416, %v5763
        %v6041 = vmul.f32 %v4419, %v5768
        %v6042 = vmul.f32 %v4424, %v5773
        %v6043 = vmul.f32 %v4427, %v5778
        %v6044 = vmul.f32 %v4432, %v5783
        %v6045 = vmul.f32 %v4435, %v5788
        %v6046 = vmul.f32 %v4440, %v5793
        %v6047 = vmul.f32 %v4443, %v5798
        %v6048 = vmul.f32 %v4448, %v5803
        %v6049 = vmul.f32 %v4451, %v5808
        %v6050 = vmul.f32 %v4456, %v5813
        %v6051 = vmul.f32 %v4459, %v5818
        %v6052 = vmul.f32 %v4464, %v5823
        %v6053 = vmul.f32 %v4467, %v5828
        %v6054 = vmul.f32 %v4472, %v5833
        %v6055 = vmul.f32 %v4475, %v5838
        %v6056 = vmul.f32 %v4480, %v5843
        %v6057 = vmul.f32 %v4483, %v5848
        %v6058 = vmul.f32 %v4488, %v5853
        %v6059 = vmul.f32 %v4491, %v5858
        %v6060 = vmul.f32 %v4496, %v5863
        %v6061 = vmul.f32 %v4499, %v5868
        %v6062 = vmul.f32 %v4504, %v5873
        %v6063 = vmul.f32 %v4507, %v5878
        %v6064 = vmul.f32 %v4512, %v5883
        %v6065 = vmul.f32 %v4515, %v5888
        %v6066 = vmul.f32 %v4520, %v5893
        %v6067 = vmul.f32 %v4523, %v5898
        %v6068 = vmul.f32 %v4528, %v5903
        %v6069 = vmul.f32 %v4531, %v5908
        %v6070 = vmul.f32 %v4536, %v5913
        %v6071 = vmul.f32 %v4539, %v5918
        %v6072 = vmul.f32 %v4544, %v5923
        %v6073 = vmul.f32 %v4547, %v5928
        %v6074 = vmul.f32 %v4552, %v5933
        %v6075 = vmul.f32 %v4555, %v5938
        %v6076 = vmul.f32 %v4560, %v5943
        %v6077 = vmul.f32 %v4563, %v5948
        %v6078 = vmul.f32 %v4568, %v5953
        %v6079 = vmul.f32 %v4571, %v5958
        %v6080 = vmul.f32 %v4576, %v5963
        %v6081 = vmul.f32 %v4579, %v5968
        %v6082 = vmul.f32 %v4584, %v5973
        %v6083 = vmul.f32 %v4587, %v5978
        %v6084 = vmul.f32 %v4592, %v5983
        %v6085 = vmul.f32 %v4595, %v5988
        %v6086 = vmul.f32 %v4600, %v5993
        %v6087 = vmul.f32 %v4603, %v5998
        %v6088 = vmul.f32 %v4608, %v6003
        %v6089 = vmul.f32 %v4611, %v6008
        %v6090 = vmul.f32 %v4616, %v6013
        %v6091 = vmul.f32 %v4619, %v6018
        %v6092 = vmul.f32 %v4624, %v6023
        %v6093 = vmul.f32 %v4627, %v6028
        %v6094 = vmul.f32 %v4632, %v6033
        %v6095 = vmul.f32 %v4635, %v6038
        %6097 = vset.pattern.permute.xlu0 1
        %6098 = vperm.xlu0 %6097, %v5704
        %v6099 = vpop.permute.xlu0 %6098
        %6102 = vset.pattern.permute.xlu0 1
        %6103 = vperm.xlu0 %6102, %v5705
        %v6104 = vpop.permute.xlu0 %6103
        %6107 = vset.pattern.permute.xlu0 1
        %6108 = vperm.xlu0 %6107, %v5706
        %v6109 = vpop.permute.xlu0 %6108
        %6112 = vset.pattern.permute.xlu0 1
        %6113 = vperm.xlu0 %6112, %v5707
        %v6114 = vpop.permute.xlu0 %6113
        %6117 = vset.pattern.permute.xlu0 1
        %6118 = vperm.xlu0 %6117, %v5708
        %v6119 = vpop.permute.xlu0 %6118
        %6122 = vset.pattern.permute.xlu0 1
        %6123 = vperm.xlu0 %6122, %v5709
        %v6124 = vpop.permute.xlu0 %6123
        %6127 = vset.pattern.permute.xlu0 1
        %6128 = vperm.xlu0 %6127, %v5710
        %v6129 = vpop.permute.xlu0 %6128
        %6132 = vset.pattern.permute.xlu0 1
        %6133 = vperm.xlu0 %6132, %v5711
        %v6134 = vpop.permute.xlu0 %6133
        %6137 = vset.pattern.permute.xlu0 1
        %6138 = vperm.xlu0 %6137, %v5712
        %v6139 = vpop.permute.xlu0 %6138
        %6142 = vset.pattern.permute.xlu0 1
        %6143 = vperm.xlu0 %6142, %v5713
        %v6144 = vpop.permute.xlu0 %6143
        %6147 = vset.pattern.permute.xlu0 1
        %6148 = vperm.xlu0 %6147, %v5714
        %v6149 = vpop.permute.xlu0 %6148
        %6152 = vset.pattern.permute.xlu0 1
        %6153 = vperm.xlu0 %6152, %v5715
        %v6154 = vpop.permute.xlu0 %6153
        %6157 = vset.pattern.permute.xlu0 1
        %6158 = vperm.xlu0 %6157, %v5716
        %v6159 = vpop.permute.xlu0 %6158
        %6162 = vset.pattern.permute.xlu0 1
        %6163 = vperm.xlu0 %6162, %v5717
        %v6164 = vpop.permute.xlu0 %6163
        %6167 = vset.pattern.permute.xlu0 1
        %6168 = vperm.xlu0 %6167, %v5718
        %v6169 = vpop.permute.xlu0 %6168
        %6172 = vset.pattern.permute.xlu0 1
        %6173 = vperm.xlu0 %6172, %v5719
        %v6174 = vpop.permute.xlu0 %6173
        %6177 = vset.pattern.permute.xlu0 1
        %6178 = vperm.xlu0 %6177, %v5720
        %v6179 = vpop.permute.xlu0 %6178
        %6182 = vset.pattern.permute.xlu0 1
        %6183 = vperm.xlu0 %6182, %v5721
        %v6184 = vpop.permute.xlu0 %6183
        %6187 = vset.pattern.permute.xlu0 1
        %6188 = vperm.xlu0 %6187, %v5722
        %v6189 = vpop.permute.xlu0 %6188
        %6192 = vset.pattern.permute.xlu0 1
        %6193 = vperm.xlu0 %6192, %v5723
        %v6194 = vpop.permute.xlu0 %6193
        %6197 = vset.pattern.permute.xlu0 1
        %6198 = vperm.xlu0 %6197, %v5724
        %v6199 = vpop.permute.xlu0 %6198
        %6202 = vset.pattern.permute.xlu0 1
        %6203 = vperm.xlu0 %6202, %v5725
        %v6204 = vpop.permute.xlu0 %6203
        %6207 = vset.pattern.permute.xlu0 1
        %6208 = vperm.xlu0 %6207, %v5726
        %v6209 = vpop.permute.xlu0 %6208
        %6212 = vset.pattern.permute.xlu0 1
        %6213 = vperm.xlu0 %6212, %v5727
        %v6214 = vpop.permute.xlu0 %6213
        %6217 = vset.pattern.permute.xlu0 1
        %6218 = vperm.xlu0 %6217, %v5728
        %v6219 = vpop.permute.xlu0 %6218
        %6222 = vset.pattern.permute.xlu0 1
        %6223 = vperm.xlu0 %6222, %v5729
        %v6224 = vpop.permute.xlu0 %6223
        %6227 = vset.pattern.permute.xlu0 1
        %6228 = vperm.xlu0 %6227, %v5730
        %v6229 = vpop.permute.xlu0 %6228
        %6232 = vset.pattern.permute.xlu0 1
        %6233 = vperm.xlu0 %6232, %v5731
        %v6234 = vpop.permute.xlu0 %6233
        %6237 = vset.pattern.permute.xlu0 1
        %6238 = vperm.xlu0 %6237, %v5732
        %v6239 = vpop.permute.xlu0 %6238
        %6242 = vset.pattern.permute.xlu0 1
        %6243 = vperm.xlu0 %6242, %v5733
        %v6244 = vpop.permute.xlu0 %6243
        %6247 = vset.pattern.permute.xlu0 1
        %6248 = vperm.xlu0 %6247, %v5734
        %v6249 = vpop.permute.xlu0 %6248
        %6252 = vset.pattern.permute.xlu0 1
        %6253 = vperm.xlu0 %6252, %v5735
        %v6254 = vpop.permute.xlu0 %6253
        %6257 = vset.pattern.permute.xlu0 1
        %6258 = vperm.xlu0 %6257, %v5736
        %v6259 = vpop.permute.xlu0 %6258
        %6262 = vset.pattern.permute.xlu0 1
        %6263 = vperm.xlu0 %6262, %v5737
        %v6264 = vpop.permute.xlu0 %6263
        %6267 = vset.pattern.permute.xlu0 1
        %6268 = vperm.xlu0 %6267, %v5738
        %v6269 = vpop.permute.xlu0 %6268
        %6272 = vset.pattern.permute.xlu0 1
        %6273 = vperm.xlu0 %6272, %v5739
        %v6274 = vpop.permute.xlu0 %6273
        %6277 = vset.pattern.permute.xlu0 1
        %6278 = vperm.xlu0 %6277, %v5740
        %v6279 = vpop.permute.xlu0 %6278
        %6282 = vset.pattern.permute.xlu0 1
        %6283 = vperm.xlu0 %6282, %v5741
        %v6284 = vpop.permute.xlu0 %6283
        %6287 = vset.pattern.permute.xlu0 1
        %6288 = vperm.xlu0 %6287, %v5742
        %v6289 = vpop.permute.xlu0 %6288
        %6292 = vset.pattern.permute.xlu0 1
        %6293 = vperm.xlu0 %6292, %v5743
        %v6294 = vpop.permute.xlu0 %6293
        %6297 = vset.pattern.permute.xlu0 1
        %6298 = vperm.xlu0 %6297, %v5744
        %v6299 = vpop.permute.xlu0 %6298
        %6302 = vset.pattern.permute.xlu0 1
        %6303 = vperm.xlu0 %6302, %v5745
        %v6304 = vpop.permute.xlu0 %6303
        %6307 = vset.pattern.permute.xlu0 1
        %6308 = vperm.xlu0 %6307, %v5746
        %v6309 = vpop.permute.xlu0 %6308
        %6312 = vset.pattern.permute.xlu0 1
        %6313 = vperm.xlu0 %6312, %v5747
        %v6314 = vpop.permute.xlu0 %6313
        %6317 = vset.pattern.permute.xlu0 1
        %6318 = vperm.xlu0 %6317, %v5748
        %v6319 = vpop.permute.xlu0 %6318
        %6322 = vset.pattern.permute.xlu0 1
        %6323 = vperm.xlu0 %6322, %v5749
        %v6324 = vpop.permute.xlu0 %6323
        %6327 = vset.pattern.permute.xlu0 1
        %6328 = vperm.xlu0 %6327, %v5750
        %v6329 = vpop.permute.xlu0 %6328
        %6332 = vset.pattern.permute.xlu0 1
        %6333 = vperm.xlu0 %6332, %v5751
        %v6334 = vpop.permute.xlu0 %6333
        %6337 = vset.pattern.permute.xlu0 1
        %6338 = vperm.xlu0 %6337, %v5752
        %v6339 = vpop.permute.xlu0 %6338
        %6342 = vset.pattern.permute.xlu0 1
        %6343 = vperm.xlu0 %6342, %v5753
        %v6344 = vpop.permute.xlu0 %6343
        %6347 = vset.pattern.permute.xlu0 1
        %6348 = vperm.xlu0 %6347, %v5754
        %v6349 = vpop.permute.xlu0 %6348
        %6352 = vset.pattern.permute.xlu0 1
        %6353 = vperm.xlu0 %6352, %v5755
        %v6354 = vpop.permute.xlu0 %6353
        %6357 = vset.pattern.permute.xlu0 1
        %6358 = vperm.xlu0 %6357, %v5756
        %v6359 = vpop.permute.xlu0 %6358
        %6362 = vset.pattern.permute.xlu0 1
        %6363 = vperm.xlu0 %6362, %v5757
        %v6364 = vpop.permute.xlu0 %6363
        %6367 = vset.pattern.permute.xlu0 1
        %6368 = vperm.xlu0 %6367, %v5758
        %v6369 = vpop.permute.xlu0 %6368
        %6372 = vset.pattern.permute.xlu0 1
        %6373 = vperm.xlu0 %6372, %v5759
        %v6374 = vpop.permute.xlu0 %6373
        %v6376 = vadd.f32 %v6040, %v6099
        %v6377 = vadd.f32 %v6041, %v6104
        %v6378 = vadd.f32 %v6042, %v6109
        %v6379 = vadd.f32 %v6043, %v6114
        %v6380 = vadd.f32 %v6044, %v6119
        %v6381 = vadd.f32 %v6045, %v6124
        %v6382 = vadd.f32 %v6046, %v6129
        %v6383 = vadd.f32 %v6047, %v6134
        %v6384 = vadd.f32 %v6048, %v6139
        %v6385 = vadd.f32 %v6049, %v6144
        %v6386 = vadd.f32 %v6050, %v6149
        %v6387 = vadd.f32 %v6051, %v6154
        %v6388 = vadd.f32 %v6052, %v6159
        %v6389 = vadd.f32 %v6053, %v6164
        %v6390 = vadd.f32 %v6054, %v6169
        %v6391 = vadd.f32 %v6055, %v6174
        %v6392 = vadd.f32 %v6056, %v6179
        %v6393 = vadd.f32 %v6057, %v6184
        %v6394 = vadd.f32 %v6058, %v6189
        %v6395 = vadd.f32 %v6059, %v6194
        %v6396 = vadd.f32 %v6060, %v6199
        %v6397 = vadd.f32 %v6061, %v6204
        %v6398 = vadd.f32 %v6062, %v6209
        %v6399 = vadd.f32 %v6063, %v6214
        %v6400 = vadd.f32 %v6064, %v6219
        %v6401 = vadd.f32 %v6065, %v6224
        %v6402 = vadd.f32 %v6066, %v6229
        %v6403 = vadd.f32 %v6067, %v6234
        %v6404 = vadd.f32 %v6068, %v6239
        %v6405 = vadd.f32 %v6069, %v6244
        %v6406 = vadd.f32 %v6070, %v6249
        %v6407 = vadd.f32 %v6071, %v6254
        %v6408 = vadd.f32 %v6072, %v6259
        %v6409 = vadd.f32 %v6073, %v6264
        %v6410 = vadd.f32 %v6074, %v6269
        %v6411 = vadd.f32 %v6075, %v6274
        %v6412 = vadd.f32 %v6076, %v6279
        %v6413 = vadd.f32 %v6077, %v6284
        %v6414 = vadd.f32 %v6078, %v6289
        %v6415 = vadd.f32 %v6079, %v6294
        %v6416 = vadd.f32 %v6080, %v6299
        %v6417 = vadd.f32 %v6081, %v6304
        %v6418 = vadd.f32 %v6082, %v6309
        %v6419 = vadd.f32 %v6083, %v6314
        %v6420 = vadd.f32 %v6084, %v6319
        %v6421 = vadd.f32 %v6085, %v6324
        %v6422 = vadd.f32 %v6086, %v6329
        %v6423 = vadd.f32 %v6087, %v6334
        %v6424 = vadd.f32 %v6088, %v6339
        %v6425 = vadd.f32 %v6089, %v6344
        %v6426 = vadd.f32 %v6090, %v6349
        %v6427 = vadd.f32 %v6091, %v6354
        %v6428 = vadd.f32 %v6092, %v6359
        %v6429 = vadd.f32 %v6093, %v6364
        %v6430 = vadd.f32 %v6094, %v6369
        %v6431 = vadd.f32 %v6095, %v6374
        %v6432 = vld [vmem:[%s3] sm:$0xff]
        %v6433 = vld [vmem:[%s3 + $0x8] sm:$0xff]
        %v6434 = vld [vmem:[%s3 + $0x10] sm:$0xff]
        %v6435 = vld [vmem:[%s3 + $0x18] sm:$0xff]
        %v6436 = vld [vmem:[%s3 + $0x20] sm:$0xff]
        %v6437 = vld [vmem:[%s3 + $0x28] sm:$0xff]
        %v6438 = vld [vmem:[%s3 + $0x30] sm:$0xff]
        %v6439 = vld [vmem:[%s3 + $0x38] sm:$0xff]
        %v6440 = vld [vmem:[%s3 + $0x40] sm:$0xff]
        %v6441 = vld [vmem:[%s3 + $0x48] sm:$0xff]
        %v6442 = vld [vmem:[%s3 + $0x50] sm:$0xff]
        %v6443 = vld [vmem:[%s3 + $0x58] sm:$0xff]
        %v6444 = vld [vmem:[%s3 + $0x60] sm:$0xff]
        %v6445 = vld [vmem:[%s3 + $0x68] sm:$0xff]
        %v6446 = vld [vmem:[%s3 + $0x70] sm:$0xff]
        %v6447 = vld [vmem:[%s3 + $0x78] sm:$0xff]
        %v6448 = vld [vmem:[%s3 + $0x80] sm:$0xff]
        %v6449 = vld [vmem:[%s3 + $0x88] sm:$0xff]
        %v6450 = vld [vmem:[%s3 + $0x90] sm:$0xff]
        %v6451 = vld [vmem:[%s3 + $0x98] sm:$0xff]
        %v6452 = vld [vmem:[%s3 + $0xa0] sm:$0xff]
        %v6453 = vld [vmem:[%s3 + $0xa8] sm:$0xff]
        %v6454 = vld [vmem:[%s3 + $0xb0] sm:$0xff]
        %v6455 = vld [vmem:[%s3 + $0xb8] sm:$0xff]
        %v6456 = vld [vmem:[%s3 + $0xc0] sm:$0xff]
        %v6457 = vld [vmem:[%s3 + $0xc8] sm:$0xff]
        %v6458 = vld [vmem:[%s3 + $0xd0] sm:$0xff]
        %v6459 = vld [vmem:[%s3 + $0xd8] sm:$0xff]
        %v6460 = vld [vmem:[%s3 + $0xe0] sm:$0xff]
        %v6461 = vld [vmem:[%s3 + $0xe8] sm:$0xff]
        %v6462 = vld [vmem:[%s3 + $0xf0] sm:$0xff]
        %v6463 = vld [vmem:[%s3 + $0xf8] sm:$0xff]
        %v6464 = vld [vmem:[%s3 + $0x100] sm:$0xff]
        %v6465 = vld [vmem:[%s3 + $0x108] sm:$0xff]
        %v6466 = vld [vmem:[%s3 + $0x110] sm:$0xff]
        %v6467 = vld [vmem:[%s3 + $0x118] sm:$0xff]
        %v6468 = vld [vmem:[%s3 + $0x120] sm:$0xff]
        %v6469 = vld [vmem:[%s3 + $0x128] sm:$0xff]
        %v6470 = vld [vmem:[%s3 + $0x130] sm:$0xff]
        %v6471 = vld [vmem:[%s3 + $0x138] sm:$0xff]
        %v6472 = vld [vmem:[%s3 + $0x140] sm:$0xff]
        %v6473 = vld [vmem:[%s3 + $0x148] sm:$0xff]
        %v6474 = vld [vmem:[%s3 + $0x150] sm:$0xff]
        %v6475 = vld [vmem:[%s3 + $0x158] sm:$0xff]
        %v6476 = vld [vmem:[%s3 + $0x160] sm:$0xff]
        %v6477 = vld [vmem:[%s3 + $0x168] sm:$0xff]
        %v6478 = vld [vmem:[%s3 + $0x170] sm:$0xff]
        %v6479 = vld [vmem:[%s3 + $0x178] sm:$0xff]
        %v6480 = vld [vmem:[%s3 + $0x180] sm:$0xff]
        %v6481 = vld [vmem:[%s3 + $0x188] sm:$0xff]
        %v6482 = vld [vmem:[%s3 + $0x190] sm:$0xff]
        %v6483 = vld [vmem:[%s3 + $0x198] sm:$0xff]
        %v6484 = vld [vmem:[%s3 + $0x1a0] sm:$0xff]
        %v6485 = vld [vmem:[%s3 + $0x1a8] sm:$0xff]
        %v6486 = vld [vmem:[%s3 + $0x1b0] sm:$0xff]
        %v6487 = vld [vmem:[%s3 + $0x1b8] sm:$0xff]
        %v6488 = vadd.f32 %v6376, %v6432
        %v6489 = vadd.f32 %v6377, %v6433
        %v6490 = vadd.f32 %v6378, %v6434
        %v6491 = vadd.f32 %v6379, %v6435
        %v6492 = vadd.f32 %v6380, %v6436
        %v6493 = vadd.f32 %v6381, %v6437
        %v6494 = vadd.f32 %v6382, %v6438
        %v6495 = vadd.f32 %v6383, %v6439
        %v6496 = vadd.f32 %v6384, %v6440
        %v6497 = vadd.f32 %v6385, %v6441
        %v6498 = vadd.f32 %v6386, %v6442
        %v6499 = vadd.f32 %v6387, %v6443
        %v6500 = vadd.f32 %v6388, %v6444
        %v6501 = vadd.f32 %v6389, %v6445
        %v6502 = vadd.f32 %v6390, %v6446
        %v6503 = vadd.f32 %v6391, %v6447
        %v6504 = vadd.f32 %v6392, %v6448
        %v6505 = vadd.f32 %v6393, %v6449
        %v6506 = vadd.f32 %v6394, %v6450
        %v6507 = vadd.f32 %v6395, %v6451
        %v6508 = vadd.f32 %v6396, %v6452
        %v6509 = vadd.f32 %v6397, %v6453
        %v6510 = vadd.f32 %v6398, %v6454
        %v6511 = vadd.f32 %v6399, %v6455
        %v6512 = vadd.f32 %v6400, %v6456
        %v6513 = vadd.f32 %v6401, %v6457
        %v6514 = vadd.f32 %v6402, %v6458
        %v6515 = vadd.f32 %v6403, %v6459
        %v6516 = vadd.f32 %v6404, %v6460
        %v6517 = vadd.f32 %v6405, %v6461
        %v6518 = vadd.f32 %v6406, %v6462
        %v6519 = vadd.f32 %v6407, %v6463
        %v6520 = vadd.f32 %v6408, %v6464
        %v6521 = vadd.f32 %v6409, %v6465
        %v6522 = vadd.f32 %v6410, %v6466
        %v6523 = vadd.f32 %v6411, %v6467
        %v6524 = vadd.f32 %v6412, %v6468
        %v6525 = vadd.f32 %v6413, %v6469
        %v6526 = vadd.f32 %v6414, %v6470
        %v6527 = vadd.f32 %v6415, %v6471
        %v6528 = vadd.f32 %v6416, %v6472
        %v6529 = vadd.f32 %v6417, %v6473
        %v6530 = vadd.f32 %v6418, %v6474
        %v6531 = vadd.f32 %v6419, %v6475
        %v6532 = vadd.f32 %v6420, %v6476
        %v6533 = vadd.f32 %v6421, %v6477
        %v6534 = vadd.f32 %v6422, %v6478
        %v6535 = vadd.f32 %v6423, %v6479
        %v6536 = vadd.f32 %v6424, %v6480
        %v6537 = vadd.f32 %v6425, %v6481
        %v6538 = vadd.f32 %v6426, %v6482
        %v6539 = vadd.f32 %v6427, %v6483
        %v6540 = vadd.f32 %v6428, %v6484
        %v6541 = vadd.f32 %v6429, %v6485
        %v6542 = vadd.f32 %v6430, %v6486
        %v6543 = vadd.f32 %v6431, %v6487
        %v6544 = vpack.c.bf16 %v6489, %v6488
        %v6545 = vpack.c.bf16 %v6491, %v6490
        %v6546 = vpack.c.bf16 %v6493, %v6492
        %v6547 = vpack.c.bf16 %v6495, %v6494
        %v6548 = vpack.c.bf16 %v6497, %v6496
        %v6549 = vpack.c.bf16 %v6499, %v6498
        %v6550 = vpack.c.bf16 %v6501, %v6500
        %v6551 = vpack.c.bf16 %v6503, %v6502
        %v6552 = vpack.c.bf16 %v6505, %v6504
        %v6553 = vpack.c.bf16 %v6507, %v6506
        %v6554 = vpack.c.bf16 %v6509, %v6508
        %v6555 = vpack.c.bf16 %v6511, %v6510
        %v6556 = vpack.c.bf16 %v6513, %v6512
        %v6557 = vpack.c.bf16 %v6515, %v6514
        %v6558 = vpack.c.bf16 %v6517, %v6516
        %v6559 = vpack.c.bf16 %v6519, %v6518
        %v6560 = vpack.c.bf16 %v6521, %v6520
        %v6561 = vpack.c.bf16 %v6523, %v6522
        %v6562 = vpack.c.bf16 %v6525, %v6524
        %v6563 = vpack.c.bf16 %v6527, %v6526
        %v6564 = vpack.c.bf16 %v6529, %v6528
        %v6565 = vpack.c.bf16 %v6531, %v6530
        %v6566 = vpack.c.bf16 %v6533, %v6532
        %v6567 = vpack.c.bf16 %v6535, %v6534
        %v6568 = vpack.c.bf16 %v6537, %v6536
        %v6569 = vpack.c.bf16 %v6539, %v6538
        %v6570 = vpack.c.bf16 %v6541, %v6540
        %v6571 = vpack.c.bf16 %v6543, %v6542
        %v6600 = vunpack.c.l.b16 %v6544
        %v6601 = vunpack.c.h.b16 %v6544
        %v6602 = vunpack.c.l.b16 %v6545
        %v6603 = vunpack.c.h.b16 %v6545
        %v6604 = vunpack.c.l.b16 %v6546
        %v6605 = vunpack.c.h.b16 %v6546
        %v6606 = vunpack.c.l.b16 %v6547
        %v6607 = vunpack.c.h.b16 %v6547
        %v6608 = vunpack.c.l.b16 %v6548
        %v6609 = vunpack.c.h.b16 %v6548
        %v6610 = vunpack.c.l.b16 %v6549
        %v6611 = vunpack.c.h.b16 %v6549
        %v6612 = vunpack.c.l.b16 %v6550
        %v6613 = vunpack.c.h.b16 %v6550
        %v6614 = vunpack.c.l.b16 %v6551
        %v6615 = vunpack.c.h.b16 %v6551
        %v6616 = vunpack.c.l.b16 %v6552
        %v6617 = vunpack.c.h.b16 %v6552
        %v6618 = vunpack.c.l.b16 %v6553
        %v6619 = vunpack.c.h.b16 %v6553
        %v6620 = vunpack.c.l.b16 %v6554
        %v6621 = vunpack.c.h.b16 %v6554
        %v6622 = vunpack.c.l.b16 %v6555
        %v6623 = vunpack.c.h.b16 %v6555
        %v6624 = vunpack.c.l.b16 %v6556
        %v6625 = vunpack.c.h.b16 %v6556
        %v6626 = vunpack.c.l.b16 %v6557
        %v6627 = vunpack.c.h.b16 %v6557
        %v6628 = vunpack.c.l.b16 %v6558
        %v6629 = vunpack.c.h.b16 %v6558
        %v6630 = vunpack.c.l.b16 %v6559
        %v6631 = vunpack.c.h.b16 %v6559
        %v6632 = vunpack.c.l.b16 %v6560
        %v6633 = vunpack.c.h.b16 %v6560
        %v6634 = vunpack.c.l.b16 %v6561
        %v6635 = vunpack.c.h.b16 %v6561
        %v6636 = vunpack.c.l.b16 %v6562
        %v6637 = vunpack.c.h.b16 %v6562
        %v6638 = vunpack.c.l.b16 %v6563
        %v6639 = vunpack.c.h.b16 %v6563
        %v6640 = vunpack.c.l.b16 %v6564
        %v6641 = vunpack.c.h.b16 %v6564
        %v6642 = vunpack.c.l.b16 %v6565
        %v6643 = vunpack.c.h.b16 %v6565
        %v6644 = vunpack.c.l.b16 %v6566
        %v6645 = vunpack.c.h.b16 %v6566
        %v6646 = vunpack.c.l.b16 %v6567
        %v6647 = vunpack.c.h.b16 %v6567
        %v6648 = vunpack.c.l.b16 %v6568
        %v6649 = vunpack.c.h.b16 %v6568
        %v6650 = vunpack.c.l.b16 %v6569
        %v6651 = vunpack.c.h.b16 %v6569
        %v6652 = vunpack.c.l.b16 %v6570
        %v6653 = vunpack.c.h.b16 %v6570
        %v6654 = vunpack.c.l.b16 %v6571
        %v6655 = vunpack.c.h.b16 %v6571
        %v6656 = vpack.c.b16 %v6600, %v6600
        %v6657 = vpack.c.b16 %v6601, %v6601
        %v6658 = vpack.c.b16 %v6602, %v6602
        %v6659 = vpack.c.b16 %v6603, %v6603
        %v6660 = vpack.c.b16 %v6604, %v6604
        %v6661 = vpack.c.b16 %v6605, %v6605
        %v6662 = vpack.c.b16 %v6606, %v6606
        %v6663 = vpack.c.b16 %v6607, %v6607
        %v6664 = vpack.c.b16 %v6608, %v6608
        %v6665 = vpack.c.b16 %v6609, %v6609
        %v6666 = vpack.c.b16 %v6610, %v6610
        %v6667 = vpack.c.b16 %v6611, %v6611
        %v6668 = vpack.c.b16 %v6612, %v6612
        %v6669 = vpack.c.b16 %v6613, %v6613
        %v6670 = vpack.c.b16 %v6614, %v6614
        %v6671 = vpack.c.b16 %v6615, %v6615
        %v6672 = vpack.c.b16 %v6616, %v6616
        %v6673 = vpack.c.b16 %v6617, %v6617
        %v6674 = vpack.c.b16 %v6618, %v6618
        %v6675 = vpack.c.b16 %v6619, %v6619
        %v6676 = vpack.c.b16 %v6620, %v6620
        %v6677 = vpack.c.b16 %v6621, %v6621
        %v6678 = vpack.c.b16 %v6622, %v6622
        %v6679 = vpack.c.b16 %v6623, %v6623
        %v6680 = vpack.c.b16 %v6624, %v6624
        %v6681 = vpack.c.b16 %v6625, %v6625
        %v6682 = vpack.c.b16 %v6626, %v6626
        %v6683 = vpack.c.b16 %v6627, %v6627
        %v6684 = vpack.c.b16 %v6628, %v6628
        %v6685 = vpack.c.b16 %v6629, %v6629
        %v6686 = vpack.c.b16 %v6630, %v6630
        %v6687 = vpack.c.b16 %v6631, %v6631
        %v6688 = vpack.c.b16 %v6632, %v6632
        %v6689 = vpack.c.b16 %v6633, %v6633
        %v6690 = vpack.c.b16 %v6634, %v6634
        %v6691 = vpack.c.b16 %v6635, %v6635
        %v6692 = vpack.c.b16 %v6636, %v6636
        %v6693 = vpack.c.b16 %v6637, %v6637
        %v6694 = vpack.c.b16 %v6638, %v6638
        %v6695 = vpack.c.b16 %v6639, %v6639
        %v6696 = vpack.c.b16 %v6640, %v6640
        %v6697 = vpack.c.b16 %v6641, %v6641
        %v6698 = vpack.c.b16 %v6642, %v6642
        %v6699 = vpack.c.b16 %v6643, %v6643
        %v6700 = vpack.c.b16 %v6644, %v6644
        %v6701 = vpack.c.b16 %v6645, %v6645
        %v6702 = vpack.c.b16 %v6646, %v6646
        %v6703 = vpack.c.b16 %v6647, %v6647
        %v6704 = vpack.c.b16 %v6648, %v6648
        %v6705 = vpack.c.b16 %v6649, %v6649
        %v6706 = vpack.c.b16 %v6650, %v6650
        %v6707 = vpack.c.b16 %v6651, %v6651
        %v6708 = vpack.c.b16 %v6652, %v6652
        %v6709 = vpack.c.b16 %v6653, %v6653
        %v6710 = vpack.c.b16 %v6654, %v6654
        %v6711 = vpack.c.b16 %v6655, %v6655
        %vm6768 = vcmask 396288
        %6769 = vst.msk [vmem:[#allocation2] sm:$0xf] %vm6768, %v6656
        %6770 = vst.msk [vmem:[#allocation2 + $0x4] sm:$0xf] %vm6768, %v6657
        %6771 = vst.msk [vmem:[#allocation2 + $0x8] sm:$0xf] %vm6768, %v6658
        %6772 = vst.msk [vmem:[#allocation2 + $0xc] sm:$0xf] %vm6768, %v6659
        %6773 = vst.msk [vmem:[#allocation2 + $0x10] sm:$0xf] %vm6768, %v6660
        %6774 = vst.msk [vmem:[#allocation2 + $0x14] sm:$0xf] %vm6768, %v6661
        %6775 = vst.msk [vmem:[#allocation2 + $0x18] sm:$0xf] %vm6768, %v6662
        %6776 = vst.msk [vmem:[#allocation2 + $0x1c] sm:$0xf] %vm6768, %v6663
        %6777 = vst.msk [vmem:[#allocation2 + $0x20] sm:$0xf] %vm6768, %v6664
        %6778 = vst.msk [vmem:[#allocation2 + $0x24] sm:$0xf] %vm6768, %v6665
        %6779 = vst.msk [vmem:[#allocation2 + $0x28] sm:$0xf] %vm6768, %v6666
        %6780 = vst.msk [vmem:[#allocation2 + $0x2c] sm:$0xf] %vm6768, %v6667
        %6781 = vst.msk [vmem:[#allocation2 + $0x30] sm:$0xf] %vm6768, %v6668
        %6782 = vst.msk [vmem:[#allocation2 + $0x34] sm:$0xf] %vm6768, %v6669
        %6783 = vst.msk [vmem:[#allocation2 + $0x38] sm:$0xf] %vm6768, %v6670
        %6784 = vst.msk [vmem:[#allocation2 + $0x3c] sm:$0xf] %vm6768, %v6671
        %6785 = vst.msk [vmem:[#allocation2 + $0x40] sm:$0xf] %vm6768, %v6672
        %6786 = vst.msk [vmem:[#allocation2 + $0x44] sm:$0xf] %vm6768, %v6673
        %6787 = vst.msk [vmem:[#allocation2 + $0x48] sm:$0xf] %vm6768, %v6674
        %6788 = vst.msk [vmem:[#allocation2 + $0x4c] sm:$0xf] %vm6768, %v6675
        %6789 = vst.msk [vmem:[#allocation2 + $0x50] sm:$0xf] %vm6768, %v6676
        %6790 = vst.msk [vmem:[#allocation2 + $0x54] sm:$0xf] %vm6768, %v6677
        %6791 = vst.msk [vmem:[#allocation2 + $0x58] sm:$0xf] %vm6768, %v6678
        %6792 = vst.msk [vmem:[#allocation2 + $0x5c] sm:$0xf] %vm6768, %v6679
        %6793 = vst.msk [vmem:[#allocation2 + $0x60] sm:$0xf] %vm6768, %v6680
        %6794 = vst.msk [vmem:[#allocation2 + $0x64] sm:$0xf] %vm6768, %v6681
        %6795 = vst.msk [vmem:[#allocation2 + $0x68] sm:$0xf] %vm6768, %v6682
        %6796 = vst.msk [vmem:[#allocation2 + $0x6c] sm:$0xf] %vm6768, %v6683
        %6797 = vst.msk [vmem:[#allocation2 + $0x70] sm:$0xf] %vm6768, %v6684
        %6798 = vst.msk [vmem:[#allocation2 + $0x74] sm:$0xf] %vm6768, %v6685
        %6799 = vst.msk [vmem:[#allocation2 + $0x78] sm:$0xf] %vm6768, %v6686
        %6800 = vst.msk [vmem:[#allocation2 + $0x7c] sm:$0xf] %vm6768, %v6687
        %6801 = vst.msk [vmem:[#allocation2 + $0x80] sm:$0xf] %vm6768, %v6688
        %6802 = vst.msk [vmem:[#allocation2 + $0x84] sm:$0xf] %vm6768, %v6689
        %6803 = vst.msk [vmem:[#allocation2 + $0x88] sm:$0xf] %vm6768, %v6690
        %6804 = vst.msk [vmem:[#allocation2 + $0x8c] sm:$0xf] %vm6768, %v6691
        %6805 = vst.msk [vmem:[#allocation2 + $0x90] sm:$0xf] %vm6768, %v6692
        %6806 = vst.msk [vmem:[#allocation2 + $0x94] sm:$0xf] %vm6768, %v6693
        %6807 = vst.msk [vmem:[#allocation2 + $0x98] sm:$0xf] %vm6768, %v6694
        %6808 = vst.msk [vmem:[#allocation2 + $0x9c] sm:$0xf] %vm6768, %v6695
        %6809 = vst.msk [vmem:[#allocation2 + $0xa0] sm:$0xf] %vm6768, %v6696
        %6810 = vst.msk [vmem:[#allocation2 + $0xa4] sm:$0xf] %vm6768, %v6697
        %6811 = vst.msk [vmem:[#allocation2 + $0xa8] sm:$0xf] %vm6768, %v6698
        %6812 = vst.msk [vmem:[#allocation2 + $0xac] sm:$0xf] %vm6768, %v6699
        %6813 = vst.msk [vmem:[#allocation2 + $0xb0] sm:$0xf] %vm6768, %v6700
        %6814 = vst.msk [vmem:[#allocation2 + $0xb4] sm:$0xf] %vm6768, %v6701
        %6815 = vst.msk [vmem:[#allocation2 + $0xb8] sm:$0xf] %vm6768, %v6702
        %6816 = vst.msk [vmem:[#allocation2 + $0xbc] sm:$0xf] %vm6768, %v6703
        %6817 = vst.msk [vmem:[#allocation2 + $0xc0] sm:$0xf] %vm6768, %v6704
        %6818 = vst.msk [vmem:[#allocation2 + $0xc4] sm:$0xf] %vm6768, %v6705
        %6819 = vst.msk [vmem:[#allocation2 + $0xc8] sm:$0xf] %vm6768, %v6706
        %6820 = vst.msk [vmem:[#allocation2 + $0xcc] sm:$0xf] %vm6768, %v6707
        %6821 = vst.msk [vmem:[#allocation2 + $0xd0] sm:$0xf] %vm6768, %v6708
        %6822 = vst.msk [vmem:[#allocation2 + $0xd4] sm:$0xf] %vm6768, %v6709
        %6823 = vst.msk [vmem:[#allocation2 + $0xd8] sm:$0xf] %vm6768, %v6710
        %6824 = vst.msk [vmem:[#allocation2 + $0xdc] sm:$0xf] %vm6768, %v6711
      $region44: #{fused_forward.1} parent=39 // pred_fallthru
        _
      %v6825 = vld [vmem:[%s223] sm:$0xff]
      %v6826 = vld [vmem:[%s223 + $0x8] sm:$0xff]
      %v6827 = vld [vmem:[%s223 + $0x10] sm:$0xff]
      %v6828 = vld [vmem:[%s223 + $0x18] sm:$0xff]
      %v6829 = vld [vmem:[%s223 + $0x20] sm:$0xff]
      %v6830 = vld [vmem:[%s223 + $0x28] sm:$0xff]
      %v6831 = vld [vmem:[%s223 + $0x30] sm:$0xff]
      %v6832 = vld [vmem:[%s223 + $0x38] sm:$0xff]
      %v6833 = vld [vmem:[%s223 + $0x40] sm:$0xff]
      %v6834 = vld [vmem:[%s223 + $0x48] sm:$0xff]
      %v6835 = vld [vmem:[%s223 + $0x50] sm:$0xff]
      %v6836 = vld [vmem:[%s223 + $0x58] sm:$0xff]
      %v6837 = vld [vmem:[%s223 + $0x60] sm:$0xff]
      %v6838 = vld [vmem:[%s223 + $0x68] sm:$0xff]
      %v6839 = vld [vmem:[%s223 + $0x70] sm:$0xff]
      %v6840 = vld [vmem:[%s223 + $0x78] sm:$0xff]
      %v6841 = vld [vmem:[%s223 + $0x80] sm:$0xff]
      %v6842 = vld [vmem:[%s223 + $0x88] sm:$0xff]
      %v6843 = vld [vmem:[%s223 + $0x90] sm:$0xff]
      %v6844 = vld [vmem:[%s223 + $0x98] sm:$0xff]
      %v6845 = vld [vmem:[%s223 + $0xa0] sm:$0xff]
      %v6846 = vld [vmem:[%s223 + $0xa8] sm:$0xff]
      %v6847 = vld [vmem:[%s223 + $0xb0] sm:$0xff]
      %v6848 = vld [vmem:[%s223 + $0xb8] sm:$0xff]
      %v6849 = vld [vmem:[%s223 + $0xc0] sm:$0xff]
      %v6850 = vld [vmem:[%s223 + $0xc8] sm:$0xff]
      %v6851 = vld [vmem:[%s223 + $0xd0] sm:$0xff]
      %v6852 = vld [vmem:[%s223 + $0xd8] sm:$0xff]
      %v6853 = vld [vmem:[%s223 + $0xe0] sm:$0xff]
      %v6854 = vld [vmem:[%s223 + $0xe8] sm:$0xff]
      %v6855 = vld [vmem:[%s223 + $0xf0] sm:$0xff]
      %v6856 = vld [vmem:[%s223 + $0xf8] sm:$0xff]
      %v6857 = vld [vmem:[%s223 + $0x100] sm:$0xff]
      %v6858 = vld [vmem:[%s223 + $0x108] sm:$0xff]
      %v6859 = vld [vmem:[%s223 + $0x110] sm:$0xff]
      %v6860 = vld [vmem:[%s223 + $0x118] sm:$0xff]
      %v6861 = vld [vmem:[%s223 + $0x120] sm:$0xff]
      %v6862 = vld [vmem:[%s223 + $0x128] sm:$0xff]
      %v6863 = vld [vmem:[%s223 + $0x130] sm:$0xff]
      %v6864 = vld [vmem:[%s223 + $0x138] sm:$0xff]
      %v6865 = vld [vmem:[%s223 + $0x140] sm:$0xff]
      %v6866 = vld [vmem:[%s223 + $0x148] sm:$0xff]
      %v6867 = vld [vmem:[%s223 + $0x150] sm:$0xff]
      %v6868 = vld [vmem:[%s223 + $0x158] sm:$0xff]
      %v6869 = vld [vmem:[%s223 + $0x160] sm:$0xff]
      %v6870 = vld [vmem:[%s223 + $0x168] sm:$0xff]
      %v6871 = vld [vmem:[%s223 + $0x170] sm:$0xff]
      %v6872 = vld [vmem:[%s223 + $0x178] sm:$0xff]
      %v6873 = vld [vmem:[%s223 + $0x180] sm:$0xff]
      %v6874 = vld [vmem:[%s223 + $0x188] sm:$0xff]
      %v6875 = vld [vmem:[%s223 + $0x190] sm:$0xff]
      %v6876 = vld [vmem:[%s223 + $0x198] sm:$0xff]
      %v6877 = vld [vmem:[%s223 + $0x1a0] sm:$0xff]
      %v6878 = vld [vmem:[%s223 + $0x1a8] sm:$0xff]
      %v6879 = vld [vmem:[%s223 + $0x1b0] sm:$0xff]
      %v6880 = vld [vmem:[%s223 + $0x1b8] sm:$0xff]
      %v6881 = vld [vmem:[%s223 + $0x1c0] sm:$0xff]
      %v6882 = vld [vmem:[%s223 + $0x1c8] sm:$0xff]
      %v6883 = vld [vmem:[%s223 + $0x1d0] sm:$0xff]
      %v6884 = vld [vmem:[%s223 + $0x1d8] sm:$0xff]
      %v6885 = vld [vmem:[%s223 + $0x1e0] sm:$0xff]
      %v6886 = vld [vmem:[%s223 + $0x1e8] sm:$0xff]
      %v6887 = vld [vmem:[%s223 + $0x1f0] sm:$0xff]
      %v6888 = vld [vmem:[%s223 + $0x1f8] sm:$0xff]
      %v6889 = vld [vmem:[%s223 + $0x200] sm:$0xff]
      %v6890 = vld [vmem:[%s223 + $0x208] sm:$0xff]
      %v6891 = vld [vmem:[%s223 + $0x210] sm:$0xff]
      %v6892 = vld [vmem:[%s223 + $0x218] sm:$0xff]
      %v6893 = vld [vmem:[%s223 + $0x220] sm:$0xff]
      %v6894 = vld [vmem:[%s223 + $0x228] sm:$0xff]
      %v6895 = vld [vmem:[%s223 + $0x230] sm:$0xff]
      %v6896 = vld [vmem:[%s223 + $0x238] sm:$0xff]
      %v6897 = vld [vmem:[%s223 + $0x240] sm:$0xff]
      %v6898 = vld [vmem:[%s223 + $0x248] sm:$0xff]
      %v6899 = vld [vmem:[%s223 + $0x250] sm:$0xff]
      %v6900 = vld [vmem:[%s223 + $0x258] sm:$0xff]
      %v6901 = vld [vmem:[%s223 + $0x260] sm:$0xff]
      %v6902 = vld [vmem:[%s223 + $0x268] sm:$0xff]
      %v6903 = vld [vmem:[%s223 + $0x270] sm:$0xff]
      %v6904 = vld [vmem:[%s223 + $0x278] sm:$0xff]
      %v6905 = vld [vmem:[%s223 + $0x280] sm:$0xff]
      %v6906 = vld [vmem:[%s223 + $0x288] sm:$0xff]
      %v6907 = vld [vmem:[%s223 + $0x290] sm:$0xff]
      %v6908 = vld [vmem:[%s223 + $0x298] sm:$0xff]
      %v6909 = vld [vmem:[%s223 + $0x2a0] sm:$0xff]
      %v6910 = vld [vmem:[%s223 + $0x2a8] sm:$0xff]
      %v6911 = vld [vmem:[%s223 + $0x2b0] sm:$0xff]
      %v6912 = vld [vmem:[%s223 + $0x2b8] sm:$0xff]
      %v6913 = vld [vmem:[%s223 + $0x2c0] sm:$0xff]
      %v6914 = vld [vmem:[%s223 + $0x2c8] sm:$0xff]
      %v6915 = vld [vmem:[%s223 + $0x2d0] sm:$0xff]
      %v6916 = vld [vmem:[%s223 + $0x2d8] sm:$0xff]
      %v6917 = vld [vmem:[%s223 + $0x2e0] sm:$0xff]
      %v6918 = vld [vmem:[%s223 + $0x2e8] sm:$0xff]
      %v6919 = vld [vmem:[%s223 + $0x2f0] sm:$0xff]
      %v6920 = vld [vmem:[%s223 + $0x2f8] sm:$0xff]
      %v6921 = vld [vmem:[%s223 + $0x300] sm:$0xff]
      %v6922 = vld [vmem:[%s223 + $0x308] sm:$0xff]
      %v6923 = vld [vmem:[%s223 + $0x310] sm:$0xff]
      %v6924 = vld [vmem:[%s223 + $0x318] sm:$0xff]
      %v6925 = vld [vmem:[%s223 + $0x320] sm:$0xff]
      %v6926 = vld [vmem:[%s223 + $0x328] sm:$0xff]
      %v6927 = vld [vmem:[%s223 + $0x330] sm:$0xff]
      %v6928 = vld [vmem:[%s223 + $0x338] sm:$0xff]
      %v6929 = vld [vmem:[%s223 + $0x340] sm:$0xff]
      %v6930 = vld [vmem:[%s223 + $0x348] sm:$0xff]
      %v6931 = vld [vmem:[%s223 + $0x350] sm:$0xff]
      %v6932 = vld [vmem:[%s223 + $0x358] sm:$0xff]
      %v6933 = vld [vmem:[%s223 + $0x360] sm:$0xff]
      %v6934 = vld [vmem:[%s223 + $0x368] sm:$0xff]
      %v6935 = vld [vmem:[%s223 + $0x370] sm:$0xff]
      %v6936 = vld [vmem:[%s223 + $0x378] sm:$0xff]
      %v6937 = vld [vmem:[#allocation2] sm:$0xf]
      %v6938 = vld [vmem:[#allocation2 + $0x4] sm:$0xf]
      %v6939 = vld [vmem:[#allocation2 + $0x8] sm:$0xf]
      %v6940 = vld [vmem:[#allocation2 + $0xc] sm:$0xf]
      %v6941 = vld [vmem:[#allocation2 + $0x10] sm:$0xf]
      %v6942 = vld [vmem:[#allocation2 + $0x14] sm:$0xf]
      %v6943 = vld [vmem:[#allocation2 + $0x18] sm:$0xf]
      %v6944 = vld [vmem:[#allocation2 + $0x1c] sm:$0xf]
      %v6945 = vld [vmem:[#allocation2 + $0x20] sm:$0xf]
      %v6946 = vld [vmem:[#allocation2 + $0x24] sm:$0xf]
      %v6947 = vld [vmem:[#allocation2 + $0x28] sm:$0xf]
      %v6948 = vld [vmem:[#allocation2 + $0x2c] sm:$0xf]
      %v6949 = vld [vmem:[#allocation2 + $0x30] sm:$0xf]
      %v6950 = vld [vmem:[#allocation2 + $0x34] sm:$0xf]
      %v6951 = vld [vmem:[#allocation2 + $0x38] sm:$0xf]
      %v6952 = vld [vmem:[#allocation2 + $0x3c] sm:$0xf]
      %v6953 = vld [vmem:[#allocation2 + $0x40] sm:$0xf]
      %v6954 = vld [vmem:[#allocation2 + $0x44] sm:$0xf]
      %v6955 = vld [vmem:[#allocation2 + $0x48] sm:$0xf]
      %v6956 = vld [vmem:[#allocation2 + $0x4c] sm:$0xf]
      %v6957 = vld [vmem:[#allocation2 + $0x50] sm:$0xf]
      %v6958 = vld [vmem:[#allocation2 + $0x54] sm:$0xf]
      %v6959 = vld [vmem:[#allocation2 + $0x58] sm:$0xf]
      %v6960 = vld [vmem:[#allocation2 + $0x5c] sm:$0xf]
      %v6961 = vld [vmem:[#allocation2 + $0x60] sm:$0xf]
      %v6962 = vld [vmem:[#allocation2 + $0x64] sm:$0xf]
      %v6963 = vld [vmem:[#allocation2 + $0x68] sm:$0xf]
      %v6964 = vld [vmem:[#allocation2 + $0x6c] sm:$0xf]
      %v6965 = vld [vmem:[#allocation2 + $0x70] sm:$0xf]
      %v6966 = vld [vmem:[#allocation2 + $0x74] sm:$0xf]
      %v6967 = vld [vmem:[#allocation2 + $0x78] sm:$0xf]
      %v6968 = vld [vmem:[#allocation2 + $0x7c] sm:$0xf]
      %v6969 = vld [vmem:[#allocation2 + $0x80] sm:$0xf]
      %v6970 = vld [vmem:[#allocation2 + $0x84] sm:$0xf]
      %v6971 = vld [vmem:[#allocation2 + $0x88] sm:$0xf]
      %v6972 = vld [vmem:[#allocation2 + $0x8c] sm:$0xf]
      %v6973 = vld [vmem:[#allocation2 + $0x90] sm:$0xf]
      %v6974 = vld [vmem:[#allocation2 + $0x94] sm:$0xf]
      %v6975 = vld [vmem:[#allocation2 + $0x98] sm:$0xf]
      %v6976 = vld [vmem:[#allocation2 + $0x9c] sm:$0xf]
      %v6977 = vld [vmem:[#allocation2 + $0xa0] sm:$0xf]
      %v6978 = vld [vmem:[#allocation2 + $0xa4] sm:$0xf]
      %v6979 = vld [vmem:[#allocation2 + $0xa8] sm:$0xf]
      %v6980 = vld [vmem:[#allocation2 + $0xac] sm:$0xf]
      %v6981 = vld [vmem:[#allocation2 + $0xb0] sm:$0xf]
      %v6982 = vld [vmem:[#allocation2 + $0xb4] sm:$0xf]
      %v6983 = vld [vmem:[#allocation2 + $0xb8] sm:$0xf]
      %v6984 = vld [vmem:[#allocation2 + $0xbc] sm:$0xf]
      %v6985 = vld [vmem:[#allocation2 + $0xc0] sm:$0xf]
      %v6986 = vld [vmem:[#allocation2 + $0xc4] sm:$0xf]
      %v6987 = vld [vmem:[#allocation2 + $0xc8] sm:$0xf]
      %v6988 = vld [vmem:[#allocation2 + $0xcc] sm:$0xf]
      %v6989 = vld [vmem:[#allocation2 + $0xd0] sm:$0xf]
      %v6990 = vld [vmem:[#allocation2 + $0xd4] sm:$0xf]
      %v6991 = vld [vmem:[#allocation2 + $0xd8] sm:$0xf]
      %v6992 = vld [vmem:[#allocation2 + $0xdc] sm:$0xf]
      %v7105 = vunpack.c.l.b16 %v6825
      %v7106 = vunpack.c.h.b16 %v6825
      %v7107 = vunpack.c.l.b16 %v6826
      %v7108 = vunpack.c.h.b16 %v6826
      %v7109 = vunpack.c.l.b16 %v6827
      %v7110 = vunpack.c.h.b16 %v6827
      %v7111 = vunpack.c.l.b16 %v6828
      %v7112 = vunpack.c.h.b16 %v6828
      %v7113 = vunpack.c.l.b16 %v6829
      %v7114 = vunpack.c.h.b16 %v6829
      %v7115 = vunpack.c.l.b16 %v6830
      %v7116 = vunpack.c.h.b16 %v6830
      %v7117 = vunpack.c.l.b16 %v6831
      %v7118 = vunpack.c.h.b16 %v6831
      %v7119 = vunpack.c.l.b16 %v6832
      %v7120 = vunpack.c.h.b16 %v6832
      %v7121 = vunpack.c.l.b16 %v6833
      %v7122 = vunpack.c.h.b16 %v6833
      %v7123 = vunpack.c.l.b16 %v6834
      %v7124 = vunpack.c.h.b16 %v6834
      %v7125 = vunpack.c.l.b16 %v6835
      %v7126 = vunpack.c.h.b16 %v6835
      %v7127 = vunpack.c.l.b16 %v6836
      %v7128 = vunpack.c.h.b16 %v6836
      %v7129 = vunpack.c.l.b16 %v6837
      %v7130 = vunpack.c.h.b16 %v6837
      %v7131 = vunpack.c.l.b16 %v6838
      %v7132 = vunpack.c.h.b16 %v6838
      %v7133 = vunpack.c.l.b16 %v6839
      %v7134 = vunpack.c.h.b16 %v6839
      %v7135 = vunpack.c.l.b16 %v6840
      %v7136 = vunpack.c.h.b16 %v6840
      %v7137 = vunpack.c.l.b16 %v6841
      %v7138 = vunpack.c.h.b16 %v6841
      %v7139 = vunpack.c.l.b16 %v6842
      %v7140 = vunpack.c.h.b16 %v6842
      %v7141 = vunpack.c.l.b16 %v6843
      %v7142 = vunpack.c.h.b16 %v6843
      %v7143 = vunpack.c.l.b16 %v6844
      %v7144 = vunpack.c.h.b16 %v6844
      %v7145 = vunpack.c.l.b16 %v6845
      %v7146 = vunpack.c.h.b16 %v6845
      %v7147 = vunpack.c.l.b16 %v6846
      %v7148 = vunpack.c.h.b16 %v6846
      %v7149 = vunpack.c.l.b16 %v6847
      %v7150 = vunpack.c.h.b16 %v6847
      %v7151 = vunpack.c.l.b16 %v6848
      %v7152 = vunpack.c.h.b16 %v6848
      %v7153 = vunpack.c.l.b16 %v6849
      %v7154 = vunpack.c.h.b16 %v6849
      %v7155 = vunpack.c.l.b16 %v6850
      %v7156 = vunpack.c.h.b16 %v6850
      %v7157 = vunpack.c.l.b16 %v6851
      %v7158 = vunpack.c.h.b16 %v6851
      %v7159 = vunpack.c.l.b16 %v6852
      %v7160 = vunpack.c.h.b16 %v6852
      %v7161 = vunpack.c.l.b16 %v6853
      %v7162 = vunpack.c.h.b16 %v6853
      %v7163 = vunpack.c.l.b16 %v6854
      %v7164 = vunpack.c.h.b16 %v6854
      %v7165 = vunpack.c.l.b16 %v6855
      %v7166 = vunpack.c.h.b16 %v6855
      %v7167 = vunpack.c.l.b16 %v6856
      %v7168 = vunpack.c.h.b16 %v6856
      %v7169 = vunpack.c.l.b16 %v6857
      %v7170 = vunpack.c.h.b16 %v6857
      %v7171 = vunpack.c.l.b16 %v6858
      %v7172 = vunpack.c.h.b16 %v6858
      %v7173 = vunpack.c.l.b16 %v6859
      %v7174 = vunpack.c.h.b16 %v6859
      %v7175 = vunpack.c.l.b16 %v6860
      %v7176 = vunpack.c.h.b16 %v6860
      %v7177 = vunpack.c.l.b16 %v6861
      %v7178 = vunpack.c.h.b16 %v6861
      %v7179 = vunpack.c.l.b16 %v6862
      %v7180 = vunpack.c.h.b16 %v6862
      %v7181 = vunpack.c.l.b16 %v6863
      %v7182 = vunpack.c.h.b16 %v6863
      %v7183 = vunpack.c.l.b16 %v6864
      %v7184 = vunpack.c.h.b16 %v6864
      %v7185 = vunpack.c.l.b16 %v6865
      %v7186 = vunpack.c.h.b16 %v6865
      %v7187 = vunpack.c.l.b16 %v6866
      %v7188 = vunpack.c.h.b16 %v6866
      %v7189 = vunpack.c.l.b16 %v6867
      %v7190 = vunpack.c.h.b16 %v6867
      %v7191 = vunpack.c.l.b16 %v6868
      %v7192 = vunpack.c.h.b16 %v6868
      %v7193 = vunpack.c.l.b16 %v6869
      %v7194 = vunpack.c.h.b16 %v6869
      %v7195 = vunpack.c.l.b16 %v6870
      %v7196 = vunpack.c.h.b16 %v6870
      %v7197 = vunpack.c.l.b16 %v6871
      %v7198 = vunpack.c.h.b16 %v6871
      %v7199 = vunpack.c.l.b16 %v6872
      %v7200 = vunpack.c.h.b16 %v6872
      %v7201 = vunpack.c.l.b16 %v6873
      %v7202 = vunpack.c.h.b16 %v6873
      %v7203 = vunpack.c.l.b16 %v6874
      %v7204 = vunpack.c.h.b16 %v6874
      %v7205 = vunpack.c.l.b16 %v6875
      %v7206 = vunpack.c.h.b16 %v6875
      %v7207 = vunpack.c.l.b16 %v6876
      %v7208 = vunpack.c.h.b16 %v6876
      %v7209 = vunpack.c.l.b16 %v6877
      %v7210 = vunpack.c.h.b16 %v6877
      %v7211 = vunpack.c.l.b16 %v6878
      %v7212 = vunpack.c.h.b16 %v6878
      %v7213 = vunpack.c.l.b16 %v6879
      %v7214 = vunpack.c.h.b16 %v6879
      %v7215 = vunpack.c.l.b16 %v6880
      %v7216 = vunpack.c.h.b16 %v6880
      %v7217 = vunpack.c.l.b16 %v6881
      %v7218 = vunpack.c.h.b16 %v6881
      %v7219 = vunpack.c.l.b16 %v6882
      %v7220 = vunpack.c.h.b16 %v6882
      %v7221 = vunpack.c.l.b16 %v6883
      %v7222 = vunpack.c.h.b16 %v6883
      %v7223 = vunpack.c.l.b16 %v6884
      %v7224 = vunpack.c.h.b16 %v6884
      %v7225 = vunpack.c.l.b16 %v6885
      %v7226 = vunpack.c.h.b16 %v6885
      %v7227 = vunpack.c.l.b16 %v6886
      %v7228 = vunpack.c.h.b16 %v6886
      %v7229 = vunpack.c.l.b16 %v6887
      %v7230 = vunpack.c.h.b16 %v6887
      %v7231 = vunpack.c.l.b16 %v6888
      %v7232 = vunpack.c.h.b16 %v6888
      %v7233 = vunpack.c.l.b16 %v6889
      %v7234 = vunpack.c.h.b16 %v6889
      %v7235 = vunpack.c.l.b16 %v6890
      %v7236 = vunpack.c.h.b16 %v6890
      %v7237 = vunpack.c.l.b16 %v6891
      %v7238 = vunpack.c.h.b16 %v6891
      %v7239 = vunpack.c.l.b16 %v6892
      %v7240 = vunpack.c.h.b16 %v6892
      %v7241 = vunpack.c.l.b16 %v6893
      %v7242 = vunpack.c.h.b16 %v6893
      %v7243 = vunpack.c.l.b16 %v6894
      %v7244 = vunpack.c.h.b16 %v6894
      %v7245 = vunpack.c.l.b16 %v6895
      %v7246 = vunpack.c.h.b16 %v6895
      %v7247 = vunpack.c.l.b16 %v6896
      %v7248 = vunpack.c.h.b16 %v6896
      %v7249 = vunpack.c.l.b16 %v6897
      %v7250 = vunpack.c.h.b16 %v6897
      %v7251 = vunpack.c.l.b16 %v6898
      %v7252 = vunpack.c.h.b16 %v6898
      %v7253 = vunpack.c.l.b16 %v6899
      %v7254 = vunpack.c.h.b16 %v6899
      %v7255 = vunpack.c.l.b16 %v6900
      %v7256 = vunpack.c.h.b16 %v6900
      %v7257 = vunpack.c.l.b16 %v6901
      %v7258 = vunpack.c.h.b16 %v6901
      %v7259 = vunpack.c.l.b16 %v6902
      %v7260 = vunpack.c.h.b16 %v6902
      %v7261 = vunpack.c.l.b16 %v6903
      %v7262 = vunpack.c.h.b16 %v6903
      %v7263 = vunpack.c.l.b16 %v6904
      %v7264 = vunpack.c.h.b16 %v6904
      %v7265 = vunpack.c.l.b16 %v6905
      %v7266 = vunpack.c.h.b16 %v6905
      %v7267 = vunpack.c.l.b16 %v6906
      %v7268 = vunpack.c.h.b16 %v6906
      %v7269 = vunpack.c.l.b16 %v6907
      %v7270 = vunpack.c.h.b16 %v6907
      %v7271 = vunpack.c.l.b16 %v6908
      %v7272 = vunpack.c.h.b16 %v6908
      %v7273 = vunpack.c.l.b16 %v6909
      %v7274 = vunpack.c.h.b16 %v6909
      %v7275 = vunpack.c.l.b16 %v6910
      %v7276 = vunpack.c.h.b16 %v6910
      %v7277 = vunpack.c.l.b16 %v6911
      %v7278 = vunpack.c.h.b16 %v6911
      %v7279 = vunpack.c.l.b16 %v6912
      %v7280 = vunpack.c.h.b16 %v6912
      %v7281 = vunpack.c.l.b16 %v6913
      %v7282 = vunpack.c.h.b16 %v6913
      %v7283 = vunpack.c.l.b16 %v6914
      %v7284 = vunpack.c.h.b16 %v6914
      %v7285 = vunpack.c.l.b16 %v6915
      %v7286 = vunpack.c.h.b16 %v6915
      %v7287 = vunpack.c.l.b16 %v6916
      %v7288 = vunpack.c.h.b16 %v6916
      %v7289 = vunpack.c.l.b16 %v6917
      %v7290 = vunpack.c.h.b16 %v6917
      %v7291 = vunpack.c.l.b16 %v6918
      %v7292 = vunpack.c.h.b16 %v6918
      %v7293 = vunpack.c.l.b16 %v6919
      %v7294 = vunpack.c.h.b16 %v6919
      %v7295 = vunpack.c.l.b16 %v6920
      %v7296 = vunpack.c.h.b16 %v6920
      %v7297 = vunpack.c.l.b16 %v6921
      %v7298 = vunpack.c.h.b16 %v6921
      %v7299 = vunpack.c.l.b16 %v6922
      %v7300 = vunpack.c.h.b16 %v6922
      %v7301 = vunpack.c.l.b16 %v6923
      %v7302 = vunpack.c.h.b16 %v6923
      %v7303 = vunpack.c.l.b16 %v6924
      %v7304 = vunpack.c.h.b16 %v6924
      %v7305 = vunpack.c.l.b16 %v6925
      %v7306 = vunpack.c.h.b16 %v6925
      %v7307 = vunpack.c.l.b16 %v6926
      %v7308 = vunpack.c.h.b16 %v6926
      %v7309 = vunpack.c.l.b16 %v6927
      %v7310 = vunpack.c.h.b16 %v6927
      %v7311 = vunpack.c.l.b16 %v6928
      %v7312 = vunpack.c.h.b16 %v6928
      %v7313 = vunpack.c.l.b16 %v6929
      %v7314 = vunpack.c.h.b16 %v6929
      %v7315 = vunpack.c.l.b16 %v6930
      %v7316 = vunpack.c.h.b16 %v6930
      %v7317 = vunpack.c.l.b16 %v6931
      %v7318 = vunpack.c.h.b16 %v6931
      %v7319 = vunpack.c.l.b16 %v6932
      %v7320 = vunpack.c.h.b16 %v6932
      %v7321 = vunpack.c.l.b16 %v6933
      %v7322 = vunpack.c.h.b16 %v6933
      %v7323 = vunpack.c.l.b16 %v6934
      %v7324 = vunpack.c.h.b16 %v6934
      %v7325 = vunpack.c.l.b16 %v6935
      %v7326 = vunpack.c.h.b16 %v6935
      %v7327 = vunpack.c.l.b16 %v6936
      %v7328 = vunpack.c.h.b16 %v6936
      %v7329 = vpack.c.b16 %v7109, %v7105
      %v7330 = vpack.c.b16 %v7110, %v7106
      %v7331 = vpack.c.b16 %v7111, %v7107
      %v7332 = vpack.c.b16 %v7112, %v7108
      %v7333 = vpack.c.b16 %v7117, %v7113
      %v7334 = vpack.c.b16 %v7118, %v7114
      %v7335 = vpack.c.b16 %v7119, %v7115
      %v7336 = vpack.c.b16 %v7120, %v7116
      %v7337 = vpack.c.b16 %v7125, %v7121
      %v7338 = vpack.c.b16 %v7126, %v7122
      %v7339 = vpack.c.b16 %v7127, %v7123
      %v7340 = vpack.c.b16 %v7128, %v7124
      %v7341 = vpack.c.b16 %v7133, %v7129
      %v7342 = vpack.c.b16 %v7134, %v7130
      %v7343 = vpack.c.b16 %v7135, %v7131
      %v7344 = vpack.c.b16 %v7136, %v7132
      %v7345 = vpack.c.b16 %v7141, %v7137
      %v7346 = vpack.c.b16 %v7142, %v7138
      %v7347 = vpack.c.b16 %v7143, %v7139
      %v7348 = vpack.c.b16 %v7144, %v7140
      %v7349 = vpack.c.b16 %v7149, %v7145
      %v7350 = vpack.c.b16 %v7150, %v7146
      %v7351 = vpack.c.b16 %v7151, %v7147
      %v7352 = vpack.c.b16 %v7152, %v7148
      %v7353 = vpack.c.b16 %v7157, %v7153
      %v7354 = vpack.c.b16 %v7158, %v7154
      %v7355 = vpack.c.b16 %v7159, %v7155
      %v7356 = vpack.c.b16 %v7160, %v7156
      %v7357 = vpack.c.b16 %v7165, %v7161
      %v7358 = vpack.c.b16 %v7166, %v7162
      %v7359 = vpack.c.b16 %v7167, %v7163
      %v7360 = vpack.c.b16 %v7168, %v7164
      %v7361 = vpack.c.b16 %v7173, %v7169
      %v7362 = vpack.c.b16 %v7174, %v7170
      %v7363 = vpack.c.b16 %v7175, %v7171
      %v7364 = vpack.c.b16 %v7176, %v7172
      %v7365 = vpack.c.b16 %v7181, %v7177
      %v7366 = vpack.c.b16 %v7182, %v7178
      %v7367 = vpack.c.b16 %v7183, %v7179
      %v7368 = vpack.c.b16 %v7184, %v7180
      %v7369 = vpack.c.b16 %v7189, %v7185
      %v7370 = vpack.c.b16 %v7190, %v7186
      %v7371 = vpack.c.b16 %v7191, %v7187
      %v7372 = vpack.c.b16 %v7192, %v7188
      %v7373 = vpack.c.b16 %v7197, %v7193
      %v7374 = vpack.c.b16 %v7198, %v7194
      %v7375 = vpack.c.b16 %v7199, %v7195
      %v7376 = vpack.c.b16 %v7200, %v7196
      %v7377 = vpack.c.b16 %v7205, %v7201
      %v7378 = vpack.c.b16 %v7206, %v7202
      %v7379 = vpack.c.b16 %v7207, %v7203
      %v7380 = vpack.c.b16 %v7208, %v7204
      %v7381 = vpack.c.b16 %v7213, %v7209
      %v7382 = vpack.c.b16 %v7214, %v7210
      %v7383 = vpack.c.b16 %v7215, %v7211
      %v7384 = vpack.c.b16 %v7216, %v7212
      %v7385 = vpack.c.b16 %v7221, %v7217
      %v7386 = vpack.c.b16 %v7222, %v7218
      %v7387 = vpack.c.b16 %v7223, %v7219
      %v7388 = vpack.c.b16 %v7224, %v7220
      %v7389 = vpack.c.b16 %v7229, %v7225
      %v7390 = vpack.c.b16 %v7230, %v7226
      %v7391 = vpack.c.b16 %v7231, %v7227
      %v7392 = vpack.c.b16 %v7232, %v7228
      %v7393 = vpack.c.b16 %v7237, %v7233
      %v7394 = vpack.c.b16 %v7238, %v7234
      %v7395 = vpack.c.b16 %v7239, %v7235
      %v7396 = vpack.c.b16 %v7240, %v7236
      %v7397 = vpack.c.b16 %v7245, %v7241
      %v7398 = vpack.c.b16 %v7246, %v7242
      %v7399 = vpack.c.b16 %v7247, %v7243
      %v7400 = vpack.c.b16 %v7248, %v7244
      %v7401 = vpack.c.b16 %v7253, %v7249
      %v7402 = vpack.c.b16 %v7254, %v7250
      %v7403 = vpack.c.b16 %v7255, %v7251
      %v7404 = vpack.c.b16 %v7256, %v7252
      %v7405 = vpack.c.b16 %v7261, %v7257
      %v7406 = vpack.c.b16 %v7262, %v7258
      %v7407 = vpack.c.b16 %v7263, %v7259
      %v7408 = vpack.c.b16 %v7264, %v7260
      %v7409 = vpack.c.b16 %v7269, %v7265
      %v7410 = vpack.c.b16 %v7270, %v7266
      %v7411 = vpack.c.b16 %v7271, %v7267
      %v7412 = vpack.c.b16 %v7272, %v7268
      %v7413 = vpack.c.b16 %v7277, %v7273
      %v7414 = vpack.c.b16 %v7278, %v7274
      %v7415 = vpack.c.b16 %v7279, %v7275
      %v7416 = vpack.c.b16 %v7280, %v7276
      %v7417 = vpack.c.b16 %v7285, %v7281
      %v7418 = vpack.c.b16 %v7286, %v7282
      %v7419 = vpack.c.b16 %v7287, %v7283
      %v7420 = vpack.c.b16 %v7288, %v7284
      %v7421 = vpack.c.b16 %v7293, %v7289
      %v7422 = vpack.c.b16 %v7294, %v7290
      %v7423 = vpack.c.b16 %v7295, %v7291
      %v7424 = vpack.c.b16 %v7296, %v7292
      %v7425 = vpack.c.b16 %v7301, %v7297
      %v7426 = vpack.c.b16 %v7302, %v7298
      %v7427 = vpack.c.b16 %v7303, %v7299
      %v7428 = vpack.c.b16 %v7304, %v7300
      %v7429 = vpack.c.b16 %v7309, %v7305
      %v7430 = vpack.c.b16 %v7310, %v7306
      %v7431 = vpack.c.b16 %v7311, %v7307
      %v7432 = vpack.c.b16 %v7312, %v7308
      %v7433 = vpack.c.b16 %v7317, %v7313
      %v7434 = vpack.c.b16 %v7318, %v7314
      %v7435 = vpack.c.b16 %v7319, %v7315
      %v7436 = vpack.c.b16 %v7320, %v7316
      %v7437 = vpack.c.b16 %v7325, %v7321
      %v7438 = vpack.c.b16 %v7326, %v7322
      %v7439 = vpack.c.b16 %v7327, %v7323
      %v7440 = vpack.c.b16 %v7328, %v7324
      %v7581 = vunpack.c.l.b16 %v6937
      %v7582 = vunpack.c.l.b16 %v6938
      %v7583 = vunpack.c.l.b16 %v6939
      %v7584 = vunpack.c.l.b16 %v6940
      %v7585 = vunpack.c.l.b16 %v6941
      %v7586 = vunpack.c.l.b16 %v6942
      %v7587 = vunpack.c.l.b16 %v6943
      %v7588 = vunpack.c.l.b16 %v6944
      %v7589 = vunpack.c.l.b16 %v6945
      %v7590 = vunpack.c.l.b16 %v6946
      %v7591 = vunpack.c.l.b16 %v6947
      %v7592 = vunpack.c.l.b16 %v6948
      %v7593 = vunpack.c.l.b16 %v6949
      %v7594 = vunpack.c.l.b16 %v6950
      %v7595 = vunpack.c.l.b16 %v6951
      %v7596 = vunpack.c.l.b16 %v6952
      %v7597 = vunpack.c.l.b16 %v6953
      %v7598 = vunpack.c.l.b16 %v6954
      %v7599 = vunpack.c.l.b16 %v6955
      %v7600 = vunpack.c.l.b16 %v6956
      %v7601 = vunpack.c.l.b16 %v6957
      %v7602 = vunpack.c.l.b16 %v6958
      %v7603 = vunpack.c.l.b16 %v6959
      %v7604 = vunpack.c.l.b16 %v6960
      %v7605 = vunpack.c.l.b16 %v6961
      %v7606 = vunpack.c.l.b16 %v6962
      %v7607 = vunpack.c.l.b16 %v6963
      %v7608 = vunpack.c.l.b16 %v6964
      %v7609 = vunpack.c.l.b16 %v6965
      %v7610 = vunpack.c.l.b16 %v6966
      %v7611 = vunpack.c.l.b16 %v6967
      %v7612 = vunpack.c.l.b16 %v6968
      %v7613 = vunpack.c.l.b16 %v6969
      %v7614 = vunpack.c.l.b16 %v6970
      %v7615 = vunpack.c.l.b16 %v6971
      %v7616 = vunpack.c.l.b16 %v6972
      %v7617 = vunpack.c.l.b16 %v6973
      %v7618 = vunpack.c.l.b16 %v6974
      %v7619 = vunpack.c.l.b16 %v6975
      %v7620 = vunpack.c.l.b16 %v6976
      %v7621 = vunpack.c.l.b16 %v6977
      %v7622 = vunpack.c.l.b16 %v6978
      %v7623 = vunpack.c.l.b16 %v6979
      %v7624 = vunpack.c.l.b16 %v6980
      %v7625 = vunpack.c.l.b16 %v6981
      %v7626 = vunpack.c.l.b16 %v6982
      %v7627 = vunpack.c.l.b16 %v6983
      %v7628 = vunpack.c.l.b16 %v6984
      %v7629 = vunpack.c.l.b16 %v6985
      %v7630 = vunpack.c.l.b16 %v6986
      %v7631 = vunpack.c.l.b16 %v6987
      %v7632 = vunpack.c.l.b16 %v6988
      %v7633 = vunpack.c.l.b16 %v6989
      %v7634 = vunpack.c.l.b16 %v6990
      %v7635 = vunpack.c.l.b16 %v6991
      %v7636 = vunpack.c.l.b16 %v6992
      %v7637 = vpack.c.b16 %v7582, %v7581
      %v7638 = vpack.c.b16 %v7584, %v7583
      %v7639 = vpack.c.b16 %v7586, %v7585
      %v7640 = vpack.c.b16 %v7588, %v7587
      %v7641 = vpack.c.b16 %v7590, %v7589
      %v7642 = vpack.c.b16 %v7592, %v7591
      %v7643 = vpack.c.b16 %v7594, %v7593
      %v7644 = vpack.c.b16 %v7596, %v7595
      %v7645 = vpack.c.b16 %v7598, %v7597
      %v7646 = vpack.c.b16 %v7600, %v7599
      %v7647 = vpack.c.b16 %v7602, %v7601
      %v7648 = vpack.c.b16 %v7604, %v7603
      %v7649 = vpack.c.b16 %v7606, %v7605
      %v7650 = vpack.c.b16 %v7608, %v7607
      %v7651 = vpack.c.b16 %v7610, %v7609
      %v7652 = vpack.c.b16 %v7612, %v7611
      %v7653 = vpack.c.b16 %v7614, %v7613
      %v7654 = vpack.c.b16 %v7616, %v7615
      %v7655 = vpack.c.b16 %v7618, %v7617
      %v7656 = vpack.c.b16 %v7620, %v7619
      %v7657 = vpack.c.b16 %v7622, %v7621
      %v7658 = vpack.c.b16 %v7624, %v7623
      %v7659 = vpack.c.b16 %v7626, %v7625
      %v7660 = vpack.c.b16 %v7628, %v7627
      %v7661 = vpack.c.b16 %v7630, %v7629
      %v7662 = vpack.c.b16 %v7632, %v7631
      %v7663 = vpack.c.b16 %v7634, %v7633
      %v7664 = vpack.c.b16 %v7636, %v7635
      %vm7693 = vcmask 523264
      %v7695 = vsel %vm7693, %v7332, 0
      %v7698 = vsel %vm7693, %v7336, 0
      %v7701 = vsel %vm7693, %v7340, 0
      %v7704 = vsel %vm7693, %v7344, 0
      %v7707 = vsel %vm7693, %v7348, 0
      %v7710 = vsel %vm7693, %v7352, 0
      %v7713 = vsel %vm7693, %v7356, 0
      %v7716 = vsel %vm7693, %v7360, 0
      %v7719 = vsel %vm7693, %v7364, 0
      %v7722 = vsel %vm7693, %v7368, 0
      %v7725 = vsel %vm7693, %v7372, 0
      %v7728 = vsel %vm7693, %v7376, 0
      %v7731 = vsel %vm7693, %v7380, 0
      %v7734 = vsel %vm7693, %v7384, 0
      %v7737 = vsel %vm7693, %v7388, 0
      %v7740 = vsel %vm7693, %v7392, 0
      %v7743 = vsel %vm7693, %v7396, 0
      %v7746 = vsel %vm7693, %v7400, 0
      %v7749 = vsel %vm7693, %v7404, 0
      %v7752 = vsel %vm7693, %v7408, 0
      %v7755 = vsel %vm7693, %v7412, 0
      %v7758 = vsel %vm7693, %v7416, 0
      %v7761 = vsel %vm7693, %v7420, 0
      %v7764 = vsel %vm7693, %v7424, 0
      %v7767 = vsel %vm7693, %v7428, 0
      %v7770 = vsel %vm7693, %v7432, 0
      %v7773 = vsel %vm7693, %v7436, 0
      %v7776 = vsel %vm7693, %v7440, 0
      %7778 = vmatprep.subr.bf16.mxu0 0
      %7779 = vmatpush1.bf16.msra.mxu0 %v7644
      %7780 = vmatprep.subr.bf16.mxu0 0
      %7781 = vmatpush1.bf16.msra.mxu0 %v7643
      %7782 = vmatprep.subr.bf16.mxu0 0
      %7783 = vmatpush1.bf16.msra.mxu0 %v7642
      %7784 = vmatprep.subr.bf16.mxu0 0
      %7785 = vmatpush1.bf16.msra.mxu0 %v7641
      %7786 = vmatprep.subr.bf16.mxu0 0
      %7787 = vmatpush1.bf16.msra.mxu0 %v7640
      %7788 = vmatprep.subr.bf16.mxu0 0
      %7789 = vmatpush1.bf16.msra.mxu0 %v7639
      %7790 = vmatprep.subr.bf16.mxu0 0
      %7791 = vmatpush1.bf16.msra.mxu0 %v7638
      %7792 = vmatprep.subr.bf16.mxu0 0
      %7793 = vmatpush1.bf16.msra.mxu0 %v7637
      %7794 = vmatprep.subr.bf16.mxu0 0
      %7795 = vmatpush2.bf16.msra.mxu0 %v7652
      %7796 = vmatprep.subr.bf16.mxu0 0
      %7797 = vmatpush2.bf16.msra.mxu0 %v7651
      %7798 = vmatprep.subr.bf16.mxu0 0
      %7799 = vmatpush2.bf16.msra.mxu0 %v7650
      %7800 = vmatprep.subr.bf16.mxu0 0
      %7801 = vmatpush2.bf16.msra.mxu0 %v7649
      %7802 = vmatprep.subr.bf16.mxu0 0
      %7803 = vmatpush2.bf16.msra.mxu0 %v7648
      %7804 = vmatprep.subr.bf16.mxu0 0
      %7805 = vmatpush2.bf16.msra.mxu0 %v7647
      %7806 = vmatprep.subr.bf16.mxu0 0
      %7807 = vmatpush2.bf16.msra.mxu0 %v7646
      %7808 = vmatprep.subr.bf16.mxu0 0
      %7809 = vmatpush2.bf16.msra.mxu0 %v7645
      %7810 = vmatprep.mubr.bf16.mxu0 %v7330
      %7811 = vmatmul.mubr.bf16.gmra.mxu0 %v7329
      %v7812 = vpop.f32.mrf.mxu0
      %v7813 = vadd.f32 0.0, %v7812
      %v7814 = vpop.f32.mrf.mxu0
      %v7815 = vpop.f32.mrf.mxu0
      %v7816 = vadd.f32 0.0, %v7815
      %v7817 = vpop.f32.mrf.mxu0
      %7818 = vmatprep.mubr.bf16.mxu0 %v7334
      %7819 = vmatmul.mubr.bf16.gmra.mxu0 %v7333
      %v7820 = vpop.f32.mrf.mxu0
      %v7821 = vadd.f32 0.0, %v7820
      %v7822 = vpop.f32.mrf.mxu0
      %v7823 = vpop.f32.mrf.mxu0
      %v7824 = vadd.f32 0.0, %v7823
      %v7825 = vpop.f32.mrf.mxu0
      %7826 = vmatprep.mubr.bf16.mxu0 %v7338
      %7827 = vmatmul.mubr.bf16.gmra.mxu0 %v7337
      %v7828 = vpop.f32.mrf.mxu0
      %v7829 = vadd.f32 0.0, %v7828
      %v7830 = vpop.f32.mrf.mxu0
      %v7831 = vpop.f32.mrf.mxu0
      %v7832 = vadd.f32 0.0, %v7831
      %v7833 = vpop.f32.mrf.mxu0
      %7834 = vmatprep.mubr.bf16.mxu0 %v7342
      %7835 = vmatmul.mubr.bf16.gmra.mxu0 %v7341
      %v7836 = vpop.f32.mrf.mxu0
      %v7837 = vadd.f32 0.0, %v7836
      %v7838 = vpop.f32.mrf.mxu0
      %v7839 = vpop.f32.mrf.mxu0
      %v7840 = vadd.f32 0.0, %v7839
      %v7841 = vpop.f32.mrf.mxu0
      %7842 = vmatprep.mubr.bf16.mxu0 %v7346
      %7843 = vmatmul.mubr.bf16.gmra.mxu0 %v7345
      %v7844 = vpop.f32.mrf.mxu0
      %v7845 = vadd.f32 0.0, %v7844
      %v7846 = vpop.f32.mrf.mxu0
      %v7847 = vpop.f32.mrf.mxu0
      %v7848 = vadd.f32 0.0, %v7847
      %v7849 = vpop.f32.mrf.mxu0
      %7850 = vmatprep.mubr.bf16.mxu0 %v7350
      %7851 = vmatmul.mubr.bf16.gmra.mxu0 %v7349
      %v7852 = vpop.f32.mrf.mxu0
      %v7853 = vadd.f32 0.0, %v7852
      %v7854 = vpop.f32.mrf.mxu0
      %v7855 = vpop.f32.mrf.mxu0
      %v7856 = vadd.f32 0.0, %v7855
      %v7857 = vpop.f32.mrf.mxu0
      %7858 = vmatprep.mubr.bf16.mxu0 %v7354
      %7859 = vmatmul.mubr.bf16.gmra.mxu0 %v7353
      %v7860 = vpop.f32.mrf.mxu0
      %v7861 = vadd.f32 0.0, %v7860
      %v7862 = vpop.f32.mrf.mxu0
      %v7863 = vpop.f32.mrf.mxu0
      %v7864 = vadd.f32 0.0, %v7863
      %v7865 = vpop.f32.mrf.mxu0
      %7866 = vmatprep.mubr.bf16.mxu0 %v7358
      %7867 = vmatmul.mubr.bf16.gmra.mxu0 %v7357
      %v7868 = vpop.f32.mrf.mxu0
      %v7869 = vadd.f32 0.0, %v7868
      %v7870 = vpop.f32.mrf.mxu0
      %v7871 = vpop.f32.mrf.mxu0
      %v7872 = vadd.f32 0.0, %v7871
      %v7873 = vpop.f32.mrf.mxu0
      %7874 = vmatprep.mubr.bf16.mxu0 %v7362
      %7875 = vmatmul.mubr.bf16.gmra.mxu0 %v7361
      %v7876 = vpop.f32.mrf.mxu0
      %v7877 = vadd.f32 0.0, %v7876
      %v7878 = vpop.f32.mrf.mxu0
      %v7879 = vpop.f32.mrf.mxu0
      %v7880 = vadd.f32 0.0, %v7879
      %v7881 = vpop.f32.mrf.mxu0
      %7882 = vmatprep.mubr.bf16.mxu0 %v7366
      %7883 = vmatmul.mubr.bf16.gmra.mxu0 %v7365
      %v7884 = vpop.f32.mrf.mxu0
      %v7885 = vadd.f32 0.0, %v7884
      %v7886 = vpop.f32.mrf.mxu0
      %v7887 = vpop.f32.mrf.mxu0
      %v7888 = vadd.f32 0.0, %v7887
      %v7889 = vpop.f32.mrf.mxu0
      %7890 = vmatprep.mubr.bf16.mxu0 %v7370
      %7891 = vmatmul.mubr.bf16.gmra.mxu0 %v7369
      %v7892 = vpop.f32.mrf.mxu0
      %v7893 = vadd.f32 0.0, %v7892
      %v7894 = vpop.f32.mrf.mxu0
      %v7895 = vpop.f32.mrf.mxu0
      %v7896 = vadd.f32 0.0, %v7895
      %v7897 = vpop.f32.mrf.mxu0
      %7898 = vmatprep.mubr.bf16.mxu0 %v7374
      %7899 = vmatmul.mubr.bf16.gmra.mxu0 %v7373
      %v7900 = vpop.f32.mrf.mxu0
      %v7901 = vadd.f32 0.0, %v7900
      %v7902 = vpop.f32.mrf.mxu0
      %v7903 = vpop.f32.mrf.mxu0
      %v7904 = vadd.f32 0.0, %v7903
      %v7905 = vpop.f32.mrf.mxu0
      %7906 = vmatprep.mubr.bf16.mxu0 %v7378
      %7907 = vmatmul.mubr.bf16.gmra.mxu0 %v7377
      %v7908 = vpop.f32.mrf.mxu0
      %v7909 = vadd.f32 0.0, %v7908
      %v7910 = vpop.f32.mrf.mxu0
      %v7911 = vpop.f32.mrf.mxu0
      %v7912 = vadd.f32 0.0, %v7911
      %v7913 = vpop.f32.mrf.mxu0
      %7914 = vmatprep.mubr.bf16.mxu0 %v7382
      %7915 = vmatmul.mubr.bf16.gmra.mxu0 %v7381
      %v7916 = vpop.f32.mrf.mxu0
      %v7917 = vadd.f32 0.0, %v7916
      %v7918 = vpop.f32.mrf.mxu0
      %v7919 = vpop.f32.mrf.mxu0
      %v7920 = vadd.f32 0.0, %v7919
      %v7921 = vpop.f32.mrf.mxu0
      %7922 = vmatprep.mubr.bf16.mxu0 %v7386
      %7923 = vmatmul.mubr.bf16.gmra.mxu0 %v7385
      %v7924 = vpop.f32.mrf.mxu0
      %v7925 = vadd.f32 0.0, %v7924
      %v7926 = vpop.f32.mrf.mxu0
      %v7927 = vpop.f32.mrf.mxu0
      %v7928 = vadd.f32 0.0, %v7927
      %v7929 = vpop.f32.mrf.mxu0
      %7930 = vmatprep.mubr.bf16.mxu0 %v7390
      %7931 = vmatmul.mubr.bf16.gmra.mxu0 %v7389
      %v7932 = vpop.f32.mrf.mxu0
      %v7933 = vadd.f32 0.0, %v7932
      %v7934 = vpop.f32.mrf.mxu0
      %v7935 = vpop.f32.mrf.mxu0
      %v7936 = vadd.f32 0.0, %v7935
      %v7937 = vpop.f32.mrf.mxu0
      %7938 = vmatprep.mubr.bf16.mxu0 %v7394
      %7939 = vmatmul.mubr.bf16.gmra.mxu0 %v7393
      %v7940 = vpop.f32.mrf.mxu0
      %v7941 = vadd.f32 0.0, %v7940
      %v7942 = vpop.f32.mrf.mxu0
      %v7943 = vpop.f32.mrf.mxu0
      %v7944 = vadd.f32 0.0, %v7943
      %v7945 = vpop.f32.mrf.mxu0
      %7946 = vmatprep.mubr.bf16.mxu0 %v7398
      %7947 = vmatmul.mubr.bf16.gmra.mxu0 %v7397
      %v7948 = vpop.f32.mrf.mxu0
      %v7949 = vadd.f32 0.0, %v7948
      %v7950 = vpop.f32.mrf.mxu0
      %v7951 = vpop.f32.mrf.mxu0
      %v7952 = vadd.f32 0.0, %v7951
      %v7953 = vpop.f32.mrf.mxu0
      %7954 = vmatprep.mubr.bf16.mxu0 %v7402
      %7955 = vmatmul.mubr.bf16.gmra.mxu0 %v7401
      %v7956 = vpop.f32.mrf.mxu0
      %v7957 = vadd.f32 0.0, %v7956
      %v7958 = vpop.f32.mrf.mxu0
      %v7959 = vpop.f32.mrf.mxu0
      %v7960 = vadd.f32 0.0, %v7959
      %v7961 = vpop.f32.mrf.mxu0
      %7962 = vmatprep.mubr.bf16.mxu0 %v7406
      %7963 = vmatmul.mubr.bf16.gmra.mxu0 %v7405
      %v7964 = vpop.f32.mrf.mxu0
      %v7965 = vadd.f32 0.0, %v7964
      %v7966 = vpop.f32.mrf.mxu0
      %v7967 = vpop.f32.mrf.mxu0
      %v7968 = vadd.f32 0.0, %v7967
      %v7969 = vpop.f32.mrf.mxu0
      %7970 = vmatprep.mubr.bf16.mxu0 %v7410
      %7971 = vmatmul.mubr.bf16.gmra.mxu0 %v7409
      %v7972 = vpop.f32.mrf.mxu0
      %v7973 = vadd.f32 0.0, %v7972
      %v7974 = vpop.f32.mrf.mxu0
      %v7975 = vpop.f32.mrf.mxu0
      %v7976 = vadd.f32 0.0, %v7975
      %v7977 = vpop.f32.mrf.mxu0
      %7978 = vmatprep.mubr.bf16.mxu0 %v7414
      %7979 = vmatmul.mubr.bf16.gmra.mxu0 %v7413
      %v7980 = vpop.f32.mrf.mxu0
      %v7981 = vadd.f32 0.0, %v7980
      %v7982 = vpop.f32.mrf.mxu0
      %v7983 = vpop.f32.mrf.mxu0
      %v7984 = vadd.f32 0.0, %v7983
      %v7985 = vpop.f32.mrf.mxu0
      %7986 = vmatprep.mubr.bf16.mxu0 %v7418
      %7987 = vmatmul.mubr.bf16.gmra.mxu0 %v7417
      %v7988 = vpop.f32.mrf.mxu0
      %v7989 = vadd.f32 0.0, %v7988
      %v7990 = vpop.f32.mrf.mxu0
      %v7991 = vpop.f32.mrf.mxu0
      %v7992 = vadd.f32 0.0, %v7991
      %v7993 = vpop.f32.mrf.mxu0
      %7994 = vmatprep.mubr.bf16.mxu0 %v7422
      %7995 = vmatmul.mubr.bf16.gmra.mxu0 %v7421
      %v7996 = vpop.f32.mrf.mxu0
      %v7997 = vadd.f32 0.0, %v7996
      %v7998 = vpop.f32.mrf.mxu0
      %v7999 = vpop.f32.mrf.mxu0
      %v8000 = vadd.f32 0.0, %v7999
      %v8001 = vpop.f32.mrf.mxu0
      %8002 = vmatprep.mubr.bf16.mxu0 %v7426
      %8003 = vmatmul.mubr.bf16.gmra.mxu0 %v7425
      %v8004 = vpop.f32.mrf.mxu0
      %v8005 = vadd.f32 0.0, %v8004
      %v8006 = vpop.f32.mrf.mxu0
      %v8007 = vpop.f32.mrf.mxu0
      %v8008 = vadd.f32 0.0, %v8007
      %v8009 = vpop.f32.mrf.mxu0
      %8010 = vmatprep.mubr.bf16.mxu0 %v7430
      %8011 = vmatmul.mubr.bf16.gmra.mxu0 %v7429
      %v8012 = vpop.f32.mrf.mxu0
      %v8013 = vadd.f32 0.0, %v8012
      %v8014 = vpop.f32.mrf.mxu0
      %v8015 = vpop.f32.mrf.mxu0
      %v8016 = vadd.f32 0.0, %v8015
      %v8017 = vpop.f32.mrf.mxu0
      %8018 = vmatprep.mubr.bf16.mxu0 %v7434
      %8019 = vmatmul.mubr.bf16.gmra.mxu0 %v7433
      %v8020 = vpop.f32.mrf.mxu0
      %v8021 = vadd.f32 0.0, %v8020
      %v8022 = vpop.f32.mrf.mxu0
      %v8023 = vpop.f32.mrf.mxu0
      %v8024 = vadd.f32 0.0, %v8023
      %v8025 = vpop.f32.mrf.mxu0
      %8026 = vmatprep.mubr.bf16.mxu0 %v7438
      %8027 = vmatmul.mubr.bf16.gmra.mxu0 %v7437
      %v8028 = vpop.f32.mrf.mxu0
      %v8029 = vadd.f32 0.0, %v8028
      %v8030 = vpop.f32.mrf.mxu0
      %v8031 = vpop.f32.mrf.mxu0
      %v8032 = vadd.f32 0.0, %v8031
      %v8033 = vpop.f32.mrf.mxu0
      %8034 = vdwg.mxu0
      %8035 = vmatprep.subr.bf16.mxu0 0
      %8036 = vmatpush1.bf16.msra.mxu0 %v7660
      %8037 = vmatprep.subr.bf16.mxu0 0
      %8038 = vmatpush1.bf16.msra.mxu0 %v7659
      %8039 = vmatprep.subr.bf16.mxu0 0
      %8040 = vmatpush1.bf16.msra.mxu0 %v7658
      %8041 = vmatprep.subr.bf16.mxu0 0
      %8042 = vmatpush1.bf16.msra.mxu0 %v7657
      %8043 = vmatprep.subr.bf16.mxu0 0
      %8044 = vmatpush1.bf16.msra.mxu0 %v7656
      %8045 = vmatprep.subr.bf16.mxu0 0
      %8046 = vmatpush1.bf16.msra.mxu0 %v7655
      %8047 = vmatprep.subr.bf16.mxu0 0
      %8048 = vmatpush1.bf16.msra.mxu0 %v7654
      %8049 = vmatprep.subr.bf16.mxu0 0
      %8050 = vmatpush1.bf16.msra.mxu0 %v7653
      %8051 = vmatprep.subr.bf16.mxu0 0
      %8052 = vmatpush2.bf16.msra.mxu0 0
      %8053 = vmatprep.subr.bf16.mxu0 0
      %8054 = vmatpush2.bf16.msra.mxu0 0
      %8055 = vmatprep.subr.bf16.mxu0 0
      %8056 = vmatpush2.bf16.msra.mxu0 0
      %8057 = vmatprep.subr.bf16.mxu0 0
      %8058 = vmatpush2.bf16.msra.mxu0 0
      %8059 = vmatprep.subr.bf16.mxu0 0
      %8060 = vmatpush2.bf16.msra.mxu0 %v7664
      %8061 = vmatprep.subr.bf16.mxu0 0
      %8062 = vmatpush2.bf16.msra.mxu0 %v7663
      %8063 = vmatprep.subr.bf16.mxu0 0
      %8064 = vmatpush2.bf16.msra.mxu0 %v7662
      %8065 = vmatprep.subr.bf16.mxu0 0
      %8066 = vmatpush2.bf16.msra.mxu0 %v7661
      %8067 = vmatprep.mubr.bf16.mxu0 %v7695
      %8068 = vmatmul.mubr.bf16.gmra.mxu0 %v7331
      %v8069 = vpop.f32.mrf.mxu0
      %v8070 = vadd.f32 %v7813, %v8069
      %v8071 = vpop.f32.mrf.mxu0
      %v8072 = vpop.f32.mrf.mxu0
      %v8073 = vadd.f32 %v7816, %v8072
      %v8074 = vpop.f32.mrf.mxu0
      %8075 = vmatprep.mubr.bf16.mxu0 %v7698
      %8076 = vmatmul.mubr.bf16.gmra.mxu0 %v7335
      %v8077 = vpop.f32.mrf.mxu0
      %v8078 = vadd.f32 %v7821, %v8077
      %v8079 = vpop.f32.mrf.mxu0
      %v8080 = vpop.f32.mrf.mxu0
      %v8081 = vadd.f32 %v7824, %v8080
      %v8082 = vpop.f32.mrf.mxu0
      %8083 = vmatprep.mubr.bf16.mxu0 %v7701
      %8084 = vmatmul.mubr.bf16.gmra.mxu0 %v7339
      %v8085 = vpop.f32.mrf.mxu0
      %v8086 = vadd.f32 %v7829, %v8085
      %v8087 = vpop.f32.mrf.mxu0
      %v8088 = vpop.f32.mrf.mxu0
      %v8089 = vadd.f32 %v7832, %v8088
      %v8090 = vpop.f32.mrf.mxu0
      %8091 = vmatprep.mubr.bf16.mxu0 %v7704
      %8092 = vmatmul.mubr.bf16.gmra.mxu0 %v7343
      %v8093 = vpop.f32.mrf.mxu0
      %v8094 = vadd.f32 %v7837, %v8093
      %v8095 = vpop.f32.mrf.mxu0
      %v8096 = vpop.f32.mrf.mxu0
      %v8097 = vadd.f32 %v7840, %v8096
      %v8098 = vpop.f32.mrf.mxu0
      %8099 = vmatprep.mubr.bf16.mxu0 %v7707
      %8100 = vmatmul.mubr.bf16.gmra.mxu0 %v7347
      %v8101 = vpop.f32.mrf.mxu0
      %v8102 = vadd.f32 %v7845, %v8101
      %v8103 = vpop.f32.mrf.mxu0
      %v8104 = vpop.f32.mrf.mxu0
      %v8105 = vadd.f32 %v7848, %v8104
      %v8106 = vpop.f32.mrf.mxu0
      %8107 = vmatprep.mubr.bf16.mxu0 %v7710
      %8108 = vmatmul.mubr.bf16.gmra.mxu0 %v7351
      %v8109 = vpop.f32.mrf.mxu0
      %v8110 = vadd.f32 %v7853, %v8109
      %v8111 = vpop.f32.mrf.mxu0
      %v8112 = vpop.f32.mrf.mxu0
      %v8113 = vadd.f32 %v7856, %v8112
      %v8114 = vpop.f32.mrf.mxu0
      %8115 = vmatprep.mubr.bf16.mxu0 %v7713
      %8116 = vmatmul.mubr.bf16.gmra.mxu0 %v7355
      %v8117 = vpop.f32.mrf.mxu0
      %v8118 = vadd.f32 %v7861, %v8117
      %v8119 = vpop.f32.mrf.mxu0
      %v8120 = vpop.f32.mrf.mxu0
      %v8121 = vadd.f32 %v7864, %v8120
      %v8122 = vpop.f32.mrf.mxu0
      %8123 = vmatprep.mubr.bf16.mxu0 %v7716
      %8124 = vmatmul.mubr.bf16.gmra.mxu0 %v7359
      %v8125 = vpop.f32.mrf.mxu0
      %v8126 = vadd.f32 %v7869, %v8125
      %v8127 = vpop.f32.mrf.mxu0
      %v8128 = vpop.f32.mrf.mxu0
      %v8129 = vadd.f32 %v7872, %v8128
      %v8130 = vpop.f32.mrf.mxu0
      %8131 = vmatprep.mubr.bf16.mxu0 %v7719
      %8132 = vmatmul.mubr.bf16.gmra.mxu0 %v7363
      %v8133 = vpop.f32.mrf.mxu0
      %v8134 = vadd.f32 %v7877, %v8133
      %v8135 = vpop.f32.mrf.mxu0
      %v8136 = vpop.f32.mrf.mxu0
      %v8137 = vadd.f32 %v7880, %v8136
      %v8138 = vpop.f32.mrf.mxu0
      %8139 = vmatprep.mubr.bf16.mxu0 %v7722
      %8140 = vmatmul.mubr.bf16.gmra.mxu0 %v7367
      %v8141 = vpop.f32.mrf.mxu0
      %v8142 = vadd.f32 %v7885, %v8141
      %v8143 = vpop.f32.mrf.mxu0
      %v8144 = vpop.f32.mrf.mxu0
      %v8145 = vadd.f32 %v7888, %v8144
      %v8146 = vpop.f32.mrf.mxu0
      %8147 = vmatprep.mubr.bf16.mxu0 %v7725
      %8148 = vmatmul.mubr.bf16.gmra.mxu0 %v7371
      %v8149 = vpop.f32.mrf.mxu0
      %v8150 = vadd.f32 %v7893, %v8149
      %v8151 = vpop.f32.mrf.mxu0
      %v8152 = vpop.f32.mrf.mxu0
      %v8153 = vadd.f32 %v7896, %v8152
      %v8154 = vpop.f32.mrf.mxu0
      %8155 = vmatprep.mubr.bf16.mxu0 %v7728
      %8156 = vmatmul.mubr.bf16.gmra.mxu0 %v7375
      %v8157 = vpop.f32.mrf.mxu0
      %v8158 = vadd.f32 %v7901, %v8157
      %v8159 = vpop.f32.mrf.mxu0
      %v8160 = vpop.f32.mrf.mxu0
      %v8161 = vadd.f32 %v7904, %v8160
      %v8162 = vpop.f32.mrf.mxu0
      %8163 = vmatprep.mubr.bf16.mxu0 %v7731
      %8164 = vmatmul.mubr.bf16.gmra.mxu0 %v7379
      %v8165 = vpop.f32.mrf.mxu0
      %v8166 = vadd.f32 %v7909, %v8165
      %v8167 = vpop.f32.mrf.mxu0
      %v8168 = vpop.f32.mrf.mxu0
      %v8169 = vadd.f32 %v7912, %v8168
      %v8170 = vpop.f32.mrf.mxu0
      %8171 = vmatprep.mubr.bf16.mxu0 %v7734
      %8172 = vmatmul.mubr.bf16.gmra.mxu0 %v7383
      %v8173 = vpop.f32.mrf.mxu0
      %v8174 = vadd.f32 %v7917, %v8173
      %v8175 = vpop.f32.mrf.mxu0
      %v8176 = vpop.f32.mrf.mxu0
      %v8177 = vadd.f32 %v7920, %v8176
      %v8178 = vpop.f32.mrf.mxu0
      %8179 = vmatprep.mubr.bf16.mxu0 %v7737
      %8180 = vmatmul.mubr.bf16.gmra.mxu0 %v7387
      %v8181 = vpop.f32.mrf.mxu0
      %v8182 = vadd.f32 %v7925, %v8181
      %v8183 = vpop.f32.mrf.mxu0
      %v8184 = vpop.f32.mrf.mxu0
      %v8185 = vadd.f32 %v7928, %v8184
      %v8186 = vpop.f32.mrf.mxu0
      %8187 = vmatprep.mubr.bf16.mxu0 %v7740
      %8188 = vmatmul.mubr.bf16.gmra.mxu0 %v7391
      %v8189 = vpop.f32.mrf.mxu0
      %v8190 = vadd.f32 %v7933, %v8189
      %v8191 = vpop.f32.mrf.mxu0
      %v8192 = vpop.f32.mrf.mxu0
      %v8193 = vadd.f32 %v7936, %v8192
      %v8194 = vpop.f32.mrf.mxu0
      %8195 = vmatprep.mubr.bf16.mxu0 %v7743
      %8196 = vmatmul.mubr.bf16.gmra.mxu0 %v7395
      %v8197 = vpop.f32.mrf.mxu0
      %v8198 = vadd.f32 %v7941, %v8197
      %v8199 = vpop.f32.mrf.mxu0
      %v8200 = vpop.f32.mrf.mxu0
      %v8201 = vadd.f32 %v7944, %v8200
      %v8202 = vpop.f32.mrf.mxu0
      %8203 = vmatprep.mubr.bf16.mxu0 %v7746
      %8204 = vmatmul.mubr.bf16.gmra.mxu0 %v7399
      %v8205 = vpop.f32.mrf.mxu0
      %v8206 = vadd.f32 %v7949, %v8205
      %v8207 = vpop.f32.mrf.mxu0
      %v8208 = vpop.f32.mrf.mxu0
      %v8209 = vadd.f32 %v7952, %v8208
      %v8210 = vpop.f32.mrf.mxu0
      %8211 = vmatprep.mubr.bf16.mxu0 %v7749
      %8212 = vmatmul.mubr.bf16.gmra.mxu0 %v7403
      %v8213 = vpop.f32.mrf.mxu0
      %v8214 = vadd.f32 %v7957, %v8213
      %v8215 = vpop.f32.mrf.mxu0
      %v8216 = vpop.f32.mrf.mxu0
      %v8217 = vadd.f32 %v7960, %v8216
      %v8218 = vpop.f32.mrf.mxu0
      %8219 = vmatprep.mubr.bf16.mxu0 %v7752
      %8220 = vmatmul.mubr.bf16.gmra.mxu0 %v7407
      %v8221 = vpop.f32.mrf.mxu0
      %v8222 = vadd.f32 %v7965, %v8221
      %v8223 = vpop.f32.mrf.mxu0
      %v8224 = vpop.f32.mrf.mxu0
      %v8225 = vadd.f32 %v7968, %v8224
      %v8226 = vpop.f32.mrf.mxu0
      %8227 = vmatprep.mubr.bf16.mxu0 %v7755
      %8228 = vmatmul.mubr.bf16.gmra.mxu0 %v7411
      %v8229 = vpop.f32.mrf.mxu0
      %v8230 = vadd.f32 %v7973, %v8229
      %v8231 = vpop.f32.mrf.mxu0
      %v8232 = vpop.f32.mrf.mxu0
      %v8233 = vadd.f32 %v7976, %v8232
      %v8234 = vpop.f32.mrf.mxu0
      %8235 = vmatprep.mubr.bf16.mxu0 %v7758
      %8236 = vmatmul.mubr.bf16.gmra.mxu0 %v7415
      %v8237 = vpop.f32.mrf.mxu0
      %v8238 = vadd.f32 %v7981, %v8237
      %v8239 = vpop.f32.mrf.mxu0
      %v8240 = vpop.f32.mrf.mxu0
      %v8241 = vadd.f32 %v7984, %v8240
      %v8242 = vpop.f32.mrf.mxu0
      %8243 = vmatprep.mubr.bf16.mxu0 %v7761
      %8244 = vmatmul.mubr.bf16.gmra.mxu0 %v7419
      %v8245 = vpop.f32.mrf.mxu0
      %v8246 = vadd.f32 %v7989, %v8245
      %v8247 = vpop.f32.mrf.mxu0
      %v8248 = vpop.f32.mrf.mxu0
      %v8249 = vadd.f32 %v7992, %v8248
      %v8250 = vpop.f32.mrf.mxu0
      %8251 = vmatprep.mubr.bf16.mxu0 %v7764
      %8252 = vmatmul.mubr.bf16.gmra.mxu0 %v7423
      %v8253 = vpop.f32.mrf.mxu0
      %v8254 = vadd.f32 %v7997, %v8253
      %v8255 = vpop.f32.mrf.mxu0
      %v8256 = vpop.f32.mrf.mxu0
      %v8257 = vadd.f32 %v8000, %v8256
      %v8258 = vpop.f32.mrf.mxu0
      %8259 = vmatprep.mubr.bf16.mxu0 %v7767
      %8260 = vmatmul.mubr.bf16.gmra.mxu0 %v7427
      %v8261 = vpop.f32.mrf.mxu0
      %v8262 = vadd.f32 %v8005, %v8261
      %v8263 = vpop.f32.mrf.mxu0
      %v8264 = vpop.f32.mrf.mxu0
      %v8265 = vadd.f32 %v8008, %v8264
      %v8266 = vpop.f32.mrf.mxu0
      %8267 = vmatprep.mubr.bf16.mxu0 %v7770
      %8268 = vmatmul.mubr.bf16.gmra.mxu0 %v7431
      %v8269 = vpop.f32.mrf.mxu0
      %v8270 = vadd.f32 %v8013, %v8269
      %v8271 = vpop.f32.mrf.mxu0
      %v8272 = vpop.f32.mrf.mxu0
      %v8273 = vadd.f32 %v8016, %v8272
      %v8274 = vpop.f32.mrf.mxu0
      %8275 = vmatprep.mubr.bf16.mxu0 %v7773
      %8276 = vmatmul.mubr.bf16.gmra.mxu0 %v7435
      %v8277 = vpop.f32.mrf.mxu0
      %v8278 = vadd.f32 %v8021, %v8277
      %v8279 = vpop.f32.mrf.mxu0
      %v8280 = vpop.f32.mrf.mxu0
      %v8281 = vadd.f32 %v8024, %v8280
      %v8282 = vpop.f32.mrf.mxu0
      %8283 = vmatprep.mubr.bf16.mxu0 %v7776
      %8284 = vmatmul.mubr.bf16.gmra.mxu0 %v7439
      %v8285 = vpop.f32.mrf.mxu0
      %v8286 = vadd.f32 %v8029, %v8285
      %v8287 = vpop.f32.mrf.mxu0
      %v8288 = vpop.f32.mrf.mxu0
      %v8289 = vadd.f32 %v8032, %v8288
      %v8290 = vpop.f32.mrf.mxu0
      %8291 = vdwg.mxu0
      %vm8292 = vcmask 400384
      %8293 = vst.msk [vmem:[%s229] sm:$0xff] %vm8292, %v8070
      %8294 = vst.msk [vmem:[%s229 + $0x8] sm:$0xff] %vm8292, %v8073
      %8295 = vst.msk [vmem:[%s229 + $0x10] sm:$0xff] %vm8292, %v8078
      %8296 = vst.msk [vmem:[%s229 + $0x18] sm:$0xff] %vm8292, %v8081
      %8297 = vst.msk [vmem:[%s229 + $0x20] sm:$0xff] %vm8292, %v8086
      %8298 = vst.msk [vmem:[%s229 + $0x28] sm:$0xff] %vm8292, %v8089
      %8299 = vst.msk [vmem:[%s229 + $0x30] sm:$0xff] %vm8292, %v8094
      %8300 = vst.msk [vmem:[%s229 + $0x38] sm:$0xff] %vm8292, %v8097
      %8301 = vst.msk [vmem:[%s229 + $0x40] sm:$0xff] %vm8292, %v8102
      %8302 = vst.msk [vmem:[%s229 + $0x48] sm:$0xff] %vm8292, %v8105
      %8303 = vst.msk [vmem:[%s229 + $0x50] sm:$0xff] %vm8292, %v8110
      %8304 = vst.msk [vmem:[%s229 + $0x58] sm:$0xff] %vm8292, %v8113
      %8305 = vst.msk [vmem:[%s229 + $0x60] sm:$0xff] %vm8292, %v8118
      %8306 = vst.msk [vmem:[%s229 + $0x68] sm:$0xff] %vm8292, %v8121
      %8307 = vst.msk [vmem:[%s229 + $0x70] sm:$0xff] %vm8292, %v8126
      %8308 = vst.msk [vmem:[%s229 + $0x78] sm:$0xff] %vm8292, %v8129
      %8309 = vst.msk [vmem:[%s229 + $0x80] sm:$0xff] %vm8292, %v8134
      %8310 = vst.msk [vmem:[%s229 + $0x88] sm:$0xff] %vm8292, %v8137
      %8311 = vst.msk [vmem:[%s229 + $0x90] sm:$0xff] %vm8292, %v8142
      %8312 = vst.msk [vmem:[%s229 + $0x98] sm:$0xff] %vm8292, %v8145
      %8313 = vst.msk [vmem:[%s229 + $0xa0] sm:$0xff] %vm8292, %v8150
      %8314 = vst.msk [vmem:[%s229 + $0xa8] sm:$0xff] %vm8292, %v8153
      %8315 = vst.msk [vmem:[%s229 + $0xb0] sm:$0xff] %vm8292, %v8158
      %8316 = vst.msk [vmem:[%s229 + $0xb8] sm:$0xff] %vm8292, %v8161
      %8317 = vst.msk [vmem:[%s229 + $0xc0] sm:$0xff] %vm8292, %v8166
      %8318 = vst.msk [vmem:[%s229 + $0xc8] sm:$0xff] %vm8292, %v8169
      %8319 = vst.msk [vmem:[%s229 + $0xd0] sm:$0xff] %vm8292, %v8174
      %8320 = vst.msk [vmem:[%s229 + $0xd8] sm:$0xff] %vm8292, %v8177
      %8321 = vst.msk [vmem:[%s229 + $0xe0] sm:$0xff] %vm8292, %v8182
      %8322 = vst.msk [vmem:[%s229 + $0xe8] sm:$0xff] %vm8292, %v8185
      %8323 = vst.msk [vmem:[%s229 + $0xf0] sm:$0xff] %vm8292, %v8190
      %8324 = vst.msk [vmem:[%s229 + $0xf8] sm:$0xff] %vm8292, %v8193
      %8325 = vst.msk [vmem:[%s229 + $0x100] sm:$0xff] %vm8292, %v8198
      %8326 = vst.msk [vmem:[%s229 + $0x108] sm:$0xff] %vm8292, %v8201
      %8327 = vst.msk [vmem:[%s229 + $0x110] sm:$0xff] %vm8292, %v8206
      %8328 = vst.msk [vmem:[%s229 + $0x118] sm:$0xff] %vm8292, %v8209
      %8329 = vst.msk [vmem:[%s229 + $0x120] sm:$0xff] %vm8292, %v8214
      %8330 = vst.msk [vmem:[%s229 + $0x128] sm:$0xff] %vm8292, %v8217
      %8331 = vst.msk [vmem:[%s229 + $0x130] sm:$0xff] %vm8292, %v8222
      %8332 = vst.msk [vmem:[%s229 + $0x138] sm:$0xff] %vm8292, %v8225
      %8333 = vst.msk [vmem:[%s229 + $0x140] sm:$0xff] %vm8292, %v8230
      %8334 = vst.msk [vmem:[%s229 + $0x148] sm:$0xff] %vm8292, %v8233
      %8335 = vst.msk [vmem:[%s229 + $0x150] sm:$0xff] %vm8292, %v8238
      %8336 = vst.msk [vmem:[%s229 + $0x158] sm:$0xff] %vm8292, %v8241
      %8337 = vst.msk [vmem:[%s229 + $0x160] sm:$0xff] %vm8292, %v8246
      %8338 = vst.msk [vmem:[%s229 + $0x168] sm:$0xff] %vm8292, %v8249
      %8339 = vst.msk [vmem:[%s229 + $0x170] sm:$0xff] %vm8292, %v8254
      %8340 = vst.msk [vmem:[%s229 + $0x178] sm:$0xff] %vm8292, %v8257
      %8341 = vst.msk [vmem:[%s229 + $0x180] sm:$0xff] %vm8292, %v8262
      %8342 = vst.msk [vmem:[%s229 + $0x188] sm:$0xff] %vm8292, %v8265
      %8343 = vst.msk [vmem:[%s229 + $0x190] sm:$0xff] %vm8292, %v8270
      %8344 = vst.msk [vmem:[%s229 + $0x198] sm:$0xff] %vm8292, %v8273
      %8345 = vst.msk [vmem:[%s229 + $0x1a0] sm:$0xff] %vm8292, %v8278
      %8346 = vst.msk [vmem:[%s229 + $0x1a8] sm:$0xff] %vm8292, %v8281
      %8347 = vst.msk [vmem:[%s229 + $0x1b0] sm:$0xff] %vm8292, %v8286
      %8348 = vst.msk [vmem:[%s229 + $0x1b8] sm:$0xff] %vm8292, %v8289
      %s8349 = smul.u32 56, %s16
      %p8350 = scmp.lt.s32.totalorder %s8349, 223
      %s8351 = scalar_select %p8350, %s8349, 223
      %s8352 = smul.addr %s8351, 8
      %s8353 = scalar_lea.vmem %s5, %s8352
      // Predicated region
      $region45: #{fused_forward.1} parent=39 // pred_check
        %p8354 = pneg %p144
      $region46: #{fused_forward.1} parent=39 // pred_check_branch
        %8356 = sbr.rel (%p8354) target = $region48
      $region47: #{fused_forward.1} parent=39 // pred_region
        %s8357 = smul.u32 56, %s16
      $region48: #{fused_forward.1} parent=39 // pred_fallthru
        _
    $region40: #{fused_forward.1} parent=5 // pred_fallthru
      _
    %p8358 = scmp.le.s32.totalorder 2, %s11
    // Predicated region
    $region49: #{fused_forward.1} parent=5 // pred_check
      %p8359 = pneg %p8358
    $region50: #{fused_forward.1} parent=5 // pred_check_branch
      %8361 = sbr.rel (%p8359) target = $region52
    $region51: #{fused_forward.1} parent=5 // pred_region
      %s8362 = ssub.s32 %s11, 2
      // Predicated region
      $region53: #{fused_forward.1} parent=51 // pred_check
        %p8363 = pneg %p150
      $region54: #{fused_forward.1} parent=51 // pred_check_branch
        %8365 = sbr.rel (%p8363) target = $region56
      $region55: #{fused_forward.1} parent=51 // pred_region
        %s8366 = smul.u32 56, %s17
        %p8367 = scmp.lt.s32.totalorder %s8366, 223
        %s8368 = scalar_select %p8367, %s8366, 223
        %s8369 = smul.addr %s8368, 8
        %s8370 = scalar_lea.vmem %s5, %s8369
      $region56: #{fused_forward.1} parent=51 // pred_fallthru
        _
    $region52: #{fused_forward.1} parent=5 // pred_fallthru
      _
  $region6: #{fused_forward.1} parent=0 // loop_footer
    %s15 = sadd.s32 1, %s11
  $region7: #{fused_forward.1} parent=0 // loop_footer_branch
    %10 = sbr.rel target = $region3
  $region8: #{fused_forward.1} parent=0 // loop_exit
    _

</llo_original>
